<compile_context>
chip_gen: v6e
topology: v6e:2x2x1
jax: 0.10.0
libtpu: 0.0.40
codegen_flags: <defaults>
</compile_context>

<pallas_src>
import jax
import jax.numpy as jnp
from jax.experimental import pallas as pl
from jax.experimental.pallas import tpu as pltpu


POOLED1 = 224   # pooled conv1 grid flattened as 14 rows x 16 cols (cols 0,15 = guards)
PADDED1 = 272   # pooled conv1 + zero halo: 17 rows x 16 cols (VMEM scratch)


# ----------------------------- Pallas kernels -----------------------------

def fused_cnn_kernel(x4_ref, w1e_ref, b1e_ref, w2f_ref, b2_ref,
                     c1_ref, c2_ref, x1p_ref, lhs1_ref, lhs2_ref):
    """conv1+ReLU+pool1 and conv2+ReLU+pool2 for one batch tile.

    x4_ref  : (Bt, 256, 4)    polyphase planes of the zero-padded 28x28 input,
                              stored as 16 rows x 16 cols, plane index on lanes
    w1e_ref : (16, 64)        conv1 weight remapped to (shift, plane) K and the
                              4 pool taps stacked on N (host-built)
    b1e_ref : (1, 64)         conv1 bias tiled over the 4 pool taps
    w2f_ref : (144, 32)       conv2 weight, rows = (tap, cin)
    b2_ref  : (1, 32)
    c1_ref  : (Bt, 224, 16)   pooled conv1 activation (valid at cols 1..14 of each row)
    c2_ref  : (Bt, 7, 15, 32) pooled conv2 activation (valid values at even cols)
    x1p_ref : (Bt, 272, 16)   VMEM scratch: zero-padded pooled conv1 (halo grid)
    lhs1_ref: (Bt*224, 16)    VMEM scratch: conv1 im2col
    lhs2_ref: (Bt*224, 144)   VMEM scratch: conv2 im2col
    """
    bt = c1_ref.shape[0]
    m = bt * POOLED1

    # ---- conv1 im2col from 4 shifted slices of the polyphase input ----------
    for t, off in enumerate((0, 1, 16, 17)):          # spatial shifts (qh, qw) in {0,1}^2
        lhs1_ref[:, 4 * t:4 * t + 4] = (
            x4_ref[:, off:off + POOLED1, :].reshape(m, 4))

    # ---- conv1 + ReLU + 2x2 max-pool: ONE (Bt*224,16) @ (16,64) matmul ------
    y = jnp.dot(lhs1_ref[...], w1e_ref[...], preferred_element_type=jnp.float32)
    y = jnp.maximum(y + b1e_ref[...], 0.0)                        # ReLU
    y1 = jnp.maximum(jnp.maximum(y[:, 0:16], y[:, 16:32]),        # max over the 4
                     jnp.maximum(y[:, 32:48], y[:, 48:64]))       # pool-tap lane groups
    y1 = y1.reshape(bt, POOLED1, 16)
    c1_ref[...] = y1.astype(c1_ref.dtype)

    # ---- stage pooled conv1 into the zero-padded halo scratch ---------------
    # Guard columns 0 and 15 of every 16-wide row must stay zero (conv2 padding).
    col = jax.lax.broadcasted_iota(jnp.int32, (bt, POOLED1, 16), 1) % 16
    y1m = jnp.where((col >= 1) & (col <= 14), y1, 0.0)
    x1p_ref[:, 0:16, :] = jnp.zeros((bt, 16, 16), jnp.float32)            # top halo row
    x1p_ref[:, 240:PADDED1, :] = jnp.zeros((bt, PADDED1 - 240, 16), jnp.float32)
    x1p_ref[:, 16:240, :] = y1m                       # single sublane-aligned bulk store

    # ---- conv2 im2col from 9 shifted halo slices, then ONE K=144 matmul -----
    for dy in range(3):
        for dx in range(3):
            k = dy * 3 + dx
            s = dy * 16 + dx
            lhs2_ref[:, 16 * k:16 * k + 16] = (
                x1p_ref[:, s:s + POOLED1, :].reshape(m, 16))
    y2 = jnp.dot(lhs2_ref[...], w2f_ref[...], preferred_element_type=jnp.float32)
    y2 = jnp.maximum(y2 + b2_ref[...], 0.0)                       # ReLU, (Bt*224, 32)

    # ---- 2x2 max-pool on the padded 14x16 grid ------------------------------
    y2 = y2.reshape(bt, 7, 32, 32)                    # slab = rows (2g, 2g+1) x 16 cols
    hmax = jnp.maximum(y2[:, :, 0:16, :], y2[:, :, 16:32, :])     # pool over H
    wmax = jnp.maximum(hmax[:, :, 0:15, :], hmax[:, :, 1:16, :])  # pairwise max over W
    c2_ref[...] = wmax.astype(c2_ref.dtype)           # valid pooled values at even cols


def linear_kernel(x_ref, w_ref, b_ref, o_ref):
    """Fully-connected layer: o = x @ w + b."""
    o_ref[...] = (jnp.dot(x_ref[...], w_ref[...],
                          preferred_element_type=jnp.float32)
                  + b_ref[...]).astype(o_ref.dtype)


# ------------------------------ Pallas wrappers ----------------------------

def _pick_batch_tile(batch):
    # ~1.2 MB of VMEM per batch element (blocks + im2col scratch + temporaries);
    # a tile of 8 stays well inside every generation's scoped-VMEM budget.
    cap = min(8, batch)
    for cand in range(cap, 0, -1):
        if batch % cand == 0:
            return cand
    return 1


def _fc_batch_tile(batch):
    if batch <= 1024:
        return batch          # single grid step: no per-step pipeline overhead
    for cand in range(1024, 0, -1):
        if batch % cand == 0:
            return cand
    return 1


def fused_conv_layers(x4, w1e, b1e, w2f, b2, batch, bt):
    """x4: (B, 256, 4); returns ((B, 224, 16), (B, 7, 15, 32))."""
    grid = (batch // bt,)
    return pl.pallas_call(
        fused_cnn_kernel,
        out_shape=(jax.ShapeDtypeStruct((batch, POOLED1, 16), jnp.float32),
                   jax.ShapeDtypeStruct((batch, 7, 15, 32), jnp.float32)),
        grid=grid,
        in_specs=[
            pl.BlockSpec((bt, 256, 4), lambda i: (i, 0, 0)),
            pl.BlockSpec((16, 64), lambda i: (0, 0)),
            pl.BlockSpec((1, 64), lambda i: (0, 0)),
            pl.BlockSpec((144, 32), lambda i: (0, 0)),
            pl.BlockSpec((1, 32), lambda i: (0, 0)),
        ],
        out_specs=(
            pl.BlockSpec((bt, POOLED1, 16), lambda i: (i, 0, 0)),
            pl.BlockSpec((bt, 7, 15, 32), lambda i: (i, 0, 0, 0)),
        ),
        scratch_shapes=[
            pltpu.VMEM((bt, PADDED1, 16), jnp.float32),       # halo-padded conv1 act
            pltpu.VMEM((bt * POOLED1, 16), jnp.float32),      # conv1 im2col
            pltpu.VMEM((bt * POOLED1, 144), jnp.float32),     # conv2 im2col
        ],
        compiler_params=pltpu.CompilerParams(
            dimension_semantics=("parallel",),
            vmem_limit_bytes=32 * 1024 * 1024),
    )(x4, w1e, b1e.reshape(1, 64), w2f, b2.reshape(1, 32))


def linear(x, w_mat, bias, bt):
    """x: (B, Din); w_mat: (Din, Dout); bias: (Dout,)."""
    batch, din = x.shape
    dout = w_mat.shape[1]
    grid = (batch // bt,)
    return pl.pallas_call(
        linear_kernel,
        out_shape=jax.ShapeDtypeStruct((batch, dout), jnp.float32),
        grid=grid,
        in_specs=[
            pl.BlockSpec((bt, din), lambda i: (i, 0)),
            pl.BlockSpec((din, dout), lambda i: (0, 0)),
            pl.BlockSpec((1, dout), lambda i: (0, 0)),
        ],
        out_specs=pl.BlockSpec((bt, dout), lambda i: (i, 0)),
        compiler_params=pltpu.CompilerParams(dimension_semantics=("parallel",)),
    )(x, w_mat, bias.reshape(1, dout))


# ------------------------------ JAX glue -----------------------------------

def conv1_polyphase_input(x_nchw):
    """(B,1,28,28) -> (B,256,4): even/odd polyphase split of the zero-padded
    input; each 15x15 plane is stored on a 16x16 grid (col 0 and row 15 are
    zero pads), flattened onto sublanes with the 4 planes on lanes."""
    batch = x_nchw.shape[0]
    xp = jnp.pad(x_nchw[:, 0], ((0, 0), (1, 1), (1, 1)))              # (B, 30, 30)
    planes = jnp.stack([xp[:, sh::2, sw::2]
                        for sh in (0, 1) for sw in (0, 1)], axis=-1)  # (B, 15, 15, 4)
    planes = jnp.pad(planes, ((0, 0), (0, 1), (1, 0), (0, 0)))        # (B, 16, 16, 4)
    return planes.reshape(batch, 256, 4)


def conv1_pool_weight(w1):
    """(16,1,3,3) -> (16,64): remap the 9 conv taps onto (spatial shift x
    polyphase plane) K=16 and stack the 4 pool taps on the output dim."""
    w = jnp.zeros((16, 64), w1.dtype)
    for i in range(2):
        for j in range(2):
            n0 = 16 * (2 * i + j)
            for dy in range(3):
                for dx in range(3):
                    rh, rw = i + dy, j + dx
                    k = 4 * (2 * (rh // 2) + (rw // 2)) + 2 * (rh % 2) + (rw % 2)
                    w = w.at[k, n0:n0 + 16].add(w1[:, 0, dy, dx])
    return w


def conv2_weight(w2):
    """(Cout=32, Cin=16, 3, 3) -> (144, 32), rows ordered (dy*3+dx)*16 + cin."""
    return jnp.transpose(w2, (2, 3, 1, 0)).reshape(9 * 16, 32)


def fc_w_channels_last(wf):
    """(10, 32*7*7) acting on NCHW flatten -> (7*7*32, 10) acting on NHWC flatten."""
    w4 = wf.reshape(10, 32, 7, 7)
    return jnp.transpose(w4, (2, 3, 1, 0)).reshape(7 * 7 * 32, 10)


def init_torch_params(key):
    ks = jax.random.split(key, 6)
    return {
        "w1": jax.random.normal(ks[0], (16, 1, 3, 3), jnp.float32) * 0.1,
        "b1": jax.random.normal(ks[1], (16,), jnp.float32) * 0.1,
        "w2": jax.random.normal(ks[2], (32, 16, 3, 3), jnp.float32) * 0.05,
        "b2": jax.random.normal(ks[3], (32,), jnp.float32) * 0.05,
        "wf": jax.random.normal(ks[4], (10, 7 * 7 * 32), jnp.float32) * 0.02,
        "bf": jax.random.normal(ks[5], (10,), jnp.float32) * 0.02,
    }


def prepare_params(tp):
    return {
        "w1e": conv1_pool_weight(tp["w1"]),        # (16, 64)
        "b1e": jnp.tile(tp["b1"], 4),              # (64,)
        "w2f": conv2_weight(tp["w2"]),             # (144, 32)
        "b2": tp["b2"],
        "wfm": fc_w_channels_last(tp["wf"]),       # (1568, 10)
        "bf": tp["bf"],
    }


def cnn_forward(x_nchw, params):
    """Reproduces CNN.forward: returns (logits, conv1_output, conv2_output)."""
    batch = x_nchw.shape[0]
    assert x_nchw.shape[1:] == (1, 28, 28), "architecture requires (B,1,28,28)"
    bt = _pick_batch_tile(batch)

    x4 = conv1_polyphase_input(x_nchw)                         # (B, 256, 4)
    c1_raw, c2_raw = fused_conv_layers(x4, params["w1e"], params["b1e"],
                                       params["w2f"], params["b2"], batch, bt)

    # conv1 output: (B,224,16) -> (B,14,16,16), valid cols 1..14 -> NCHW
    c1_nhwc = c1_raw.reshape(batch, 14, 16, 16)[:, :, 1:15, :]
    conv1_output = jnp.transpose(c1_nhwc, (0, 3, 1, 2))        # (B,16,14,14)

    # conv2 output: (B,7,15,32), valid pooled values at even cols -> NHWC -> NCHW
    c2_nhwc = c2_raw[:, :, 0:14:2, :]                          # (B,7,7,32)
    conv2_output = jnp.transpose(c2_nhwc, (0, 3, 1, 2))        # (B,32,7,7)

    # fc: channels-last flatten; the NCHW-flatten permutation is baked into wfm.
    flat = c2_nhwc.reshape(batch, 7 * 7 * 32)
    logits = linear(flat, params["wfm"], params["bf"], _fc_batch_tile(batch))
    return logits, conv1_output, conv2_output


# ------------------------------ pure-JAX reference --------------------------

def cnn_reference(x, tp):
    dn = ("NCHW", "OIHW", "NCHW")
    hi = jax.lax.Precision.HIGHEST

    y = jax.lax.conv_general_dilated(x, tp["w1"], (1, 1), ((1, 1), (1, 1)),
                                     dimension_numbers=dn, precision=hi)
    y = jnp.maximum(y + tp["b1"][None, :, None, None], 0.0)
    c1 = y.reshape(y.shape[0], 16, 14, 2, 14, 2).max(axis=(3, 5))

    y = jax.lax.conv_general_dilated(c1, tp["w2"], (1, 1), ((1, 1), (1, 1)),
                                     dimension_numbers=dn, precision=hi)
    y = jnp.maximum(y + tp["b2"][None, :, None, None], 0.0)
    c2 = y.reshape(y.shape[0], 32, 7, 2, 7, 2).max(axis=(3, 5))

    flat = c2.reshape(c2.shape[0], -1)
    logits = jnp.dot(flat, tp["wf"].T, precision=hi) + tp["bf"]
    return logits, c1, c2


if __name__ == "__main__":
    key = jax.random.PRNGKey(0)
    kx, kp = jax.random.split(key)
    # MNIST-shaped input is required by the fc layer (7*7*32); small batch=2.
    x = jax.random.normal(kx, (2, 1, 28, 28), jnp.float32)
    torch_params = init_torch_params(kp)
    params = prepare_params(torch_params)

    logits, c1, c2 = jax.jit(cnn_forward)(x, params)
    jax.block_until_ready((logits, c1, c2))

    assert logits.shape == (2, 10)
    assert c1.shape == (2, 16, 14, 14)
    assert c2.shape == (2, 32, 7, 7)

    ref_logits, ref_c1, ref_c2 = cnn_reference(x, torch_params)
    assert jnp.allclose(c1, ref_c1, atol=1e-3, rtol=1e-3)
    assert jnp.allclose(c2, ref_c2, atol=1e-3, rtol=1e-3)
    assert jnp.allclose(logits, ref_logits, atol=1e-3, rtol=1e-3)

    print("KERNEL_OK")
</pallas_src>

<mosaic_0001>
module attributes {stable_mosaic.version = 11 : i64} {
  func.func @fused_cnn_kernel(%arg0: i32, %arg1: memref<2x256x4xf32, #tpu.memory_space<vmem>>, %arg2: memref<16x64xf32, #tpu.memory_space<vmem>>, %arg3: memref<1x64xf32, #tpu.memory_space<vmem>>, %arg4: memref<144x32xf32, #tpu.memory_space<vmem>>, %arg5: memref<1x32xf32, #tpu.memory_space<vmem>>, %arg6: memref<2x224x16xf32, #tpu.memory_space<vmem>>, %arg7: memref<2x7x15x32xf32, #tpu.memory_space<vmem>>, %arg8: memref<2x272x16xf32, #tpu.memory_space<vmem>>, %arg9: memref<448x16xf32, #tpu.memory_space<vmem>>, %arg10: memref<448x144xf32, #tpu.memory_space<vmem>>) attributes {dimension_semantics = [#tpu.dimension_semantics<parallel>], iteration_bounds = array<i64: 1>, scalar_prefetch = 0 : i64, scratch_operands = 3 : i64, tpu.core_type = #tpu.core_type<tc>, window_params = [{transform_indices = @transform_0, window_bounds = array<i64: 2, 256, 4>}, {pipeline_mode = #tpu.pipeline_mode<synchronous>, transform_indices = @transform_1, window_bounds = array<i64: 16, 64>}, {pipeline_mode = #tpu.pipeline_mode<synchronous>, transform_indices = @transform_2, window_bounds = array<i64: 1, 64>}, {pipeline_mode = #tpu.pipeline_mode<synchronous>, transform_indices = @transform_3, window_bounds = array<i64: 144, 32>}, {pipeline_mode = #tpu.pipeline_mode<synchronous>, transform_indices = @transform_4, window_bounds = array<i64: 1, 32>}, {transform_indices = @transform_5, window_bounds = array<i64: 2, 224, 16>}, {transform_indices = @transform_6, window_bounds = array<i64: 2, 7, 15, 32>}]} {
    %c0 = arith.constant 0 : index
    %c0_0 = arith.constant 0 : index
    %c0_1 = arith.constant 0 : index
    %0 = vector.load %arg1[%c0, %c0_0, %c0_1] : memref<2x256x4xf32, #tpu.memory_space<vmem>>, vector<2x224x4xf32>
    %1 = vector.shape_cast %0 : vector<2x224x4xf32> to vector<448x4xf32>
    %c0_2 = arith.constant 0 : index
    %c0_3 = arith.constant 0 : index
    %2 = vector.load %arg9[%c0_2, %c0_3] : memref<448x16xf32, #tpu.memory_space<vmem>>, vector<448x4xf32>
    tpu.vector_store %arg9[%c0_2, %c0_3], %1 {strides = array<i32>} : memref<448x16xf32, #tpu.memory_space<vmem>>, vector<448x4xf32>,
    %c0_4 = arith.constant 0 : index
    %c1 = arith.constant 1 : index
    %c0_5 = arith.constant 0 : index
    %3 = vector.load %arg1[%c0_4, %c1, %c0_5] : memref<2x256x4xf32, #tpu.memory_space<vmem>>, vector<2x224x4xf32>
    %4 = vector.shape_cast %3 : vector<2x224x4xf32> to vector<448x4xf32>
    %c0_6 = arith.constant 0 : index
    %c4 = arith.constant 4 : index
    %5 = vector.load %arg9[%c0_6, %c4] : memref<448x16xf32, #tpu.memory_space<vmem>>, vector<448x4xf32>
    tpu.vector_store %arg9[%c0_6, %c4], %4 {strides = array<i32>} : memref<448x16xf32, #tpu.memory_space<vmem>>, vector<448x4xf32>,
    %c0_7 = arith.constant 0 : index
    %c16 = arith.constant 16 : index
    %c0_8 = arith.constant 0 : index
    %6 = vector.load %arg1[%c0_7, %c16, %c0_8] : memref<2x256x4xf32, #tpu.memory_space<vmem>>, vector<2x224x4xf32>
    %7 = vector.shape_cast %6 : vector<2x224x4xf32> to vector<448x4xf32>
    %c0_9 = arith.constant 0 : index
    %c8 = arith.constant 8 : index
    %8 = vector.load %arg9[%c0_9, %c8] : memref<448x16xf32, #tpu.memory_space<vmem>>, vector<448x4xf32>
    tpu.vector_store %arg9[%c0_9, %c8], %7 {strides = array<i32>} : memref<448x16xf32, #tpu.memory_space<vmem>>, vector<448x4xf32>,
    %c0_10 = arith.constant 0 : index
    %c17 = arith.constant 17 : index
    %c0_11 = arith.constant 0 : index
    %9 = vector.load %arg1[%c0_10, %c17, %c0_11] : memref<2x256x4xf32, #tpu.memory_space<vmem>>, vector<2x224x4xf32>
    %10 = vector.shape_cast %9 : vector<2x224x4xf32> to vector<448x4xf32>
    %c0_12 = arith.constant 0 : index
    %c12 = arith.constant 12 : index
    %11 = vector.load %arg9[%c0_12, %c12] : memref<448x16xf32, #tpu.memory_space<vmem>>, vector<448x4xf32>
    tpu.vector_store %arg9[%c0_12, %c12], %10 {strides = array<i32>} : memref<448x16xf32, #tpu.memory_space<vmem>>, vector<448x4xf32>,
    %c0_13 = arith.constant 0 : index
    %c0_14 = arith.constant 0 : index
    %12 = vector.load %arg9[%c0_13, %c0_14] : memref<448x16xf32, #tpu.memory_space<vmem>>, vector<448x16xf32>
    %c0_15 = arith.constant 0 : index
    %c0_16 = arith.constant 0 : index
    %13 = vector.load %arg2[%c0_15, %c0_16] : memref<16x64xf32, #tpu.memory_space<vmem>>, vector<16x64xf32>
    %cst = arith.constant dense<0.000000e+00> : vector<448x64xf32>
    %14 = tpu.matmul %12, %13, %cst {dimension_numbers = #tpu.dot_dimension_numbers<[1], [0], [0], [1], [0, 0, 1, 1], [], []>} : vector<448x16xf32>, vector<16x64xf32>, vector<448x64xf32> -> vector<448x64xf32>
    %c0_17 = arith.constant 0 : index
    %c0_18 = arith.constant 0 : index
    %15 = vector.load %arg3[%c0_17, %c0_18] : memref<1x64xf32, #tpu.memory_space<vmem>>, vector<1x64xf32>
    %16 = vector.broadcast %15 : vector<1x64xf32> to vector<448x64xf32>
    %17 = arith.addf %14, %16 : vector<448x64xf32>
    %cst_19 = arith.constant 0.000000e+00 : f32
    %18 = vector.broadcast %cst_19 : f32 to vector<448x64xf32>
    %19 = arith.maximumf %17, %18 : vector<448x64xf32>
    %20 = vector.extract_strided_slice %19 {offsets = [0, 0], sizes = [448, 16], strides = [1, 1]} : vector<448x64xf32> to vector<448x16xf32>
    %21 = vector.extract_strided_slice %19 {offsets = [0, 16], sizes = [448, 16], strides = [1, 1]} : vector<448x64xf32> to vector<448x16xf32>
    %22 = arith.maximumf %20, %21 : vector<448x16xf32>
    %23 = vector.extract_strided_slice %19 {offsets = [0, 32], sizes = [448, 16], strides = [1, 1]} : vector<448x64xf32> to vector<448x16xf32>
    %24 = vector.extract_strided_slice %19 {offsets = [0, 48], sizes = [448, 16], strides = [1, 1]} : vector<448x64xf32> to vector<448x16xf32>
    %25 = arith.maximumf %23, %24 : vector<448x16xf32>
    %26 = arith.maximumf %22, %25 : vector<448x16xf32>
    %27 = vector.shape_cast %26 : vector<448x16xf32> to vector<2x224x16xf32>
    %c0_20 = arith.constant 0 : index
    %c0_21 = arith.constant 0 : index
    %c0_22 = arith.constant 0 : index
    %28 = vector.load %arg6[%c0_20, %c0_21, %c0_22] : memref<2x224x16xf32, #tpu.memory_space<vmem>>, vector<2x224x16xf32>
    tpu.vector_store %arg6[%c0_20, %c0_21, %c0_22], %27 {strides = array<i32>} : memref<2x224x16xf32, #tpu.memory_space<vmem>>, vector<2x224x16xf32>,
    %29 = tpu.iota {dimensions = array<i32: 1>} : vector<2x224x16xi32>
    %c16_i32 = arith.constant 16 : i32
    %c0_i32 = arith.constant 0 : i32
    %30 = arith.cmpi eq, %c16_i32, %c0_i32 : i32
    %c1_i32 = arith.constant 1 : i32
    %31 = arith.select %30, %c1_i32, %c16_i32 : i32
    %32 = vector.broadcast %31 : i32 to vector<2x224x16xi32>
    %33 = arith.remsi %29, %32 : vector<2x224x16xi32>
    %c0_i32_23 = arith.constant 0 : i32
    %34 = vector.broadcast %c0_i32_23 : i32 to vector<2x224x16xi32>
    %35 = arith.cmpi ne, %33, %34 : vector<2x224x16xi32>
    %c0_i32_24 = arith.constant 0 : i32
    %36 = vector.broadcast %c0_i32_24 : i32 to vector<2x224x16xi32>
    %37 = arith.cmpi slt, %33, %36 : vector<2x224x16xi32>
    %c0_i32_25 = arith.constant 0 : i32
    %38 = arith.cmpi slt, %31, %c0_i32_25 : i32
    %39 = vector.broadcast %38 : i1 to vector<2x224x16xi1>
    %40 = vector.broadcast %39 : vector<2x224x16xi1> to vector<2x224x16xi1>
    %41 = arith.xori %37, %40 : vector<2x224x16xi1>
    %42 = arith.andi %41, %35 : vector<2x224x16xi1>
    %43 = vector.broadcast %31 : i32 to vector<2x224x16xi32>
    %44 = arith.addi %33, %43 : vector<2x224x16xi32>
    %45 = arith.select %42, %44, %33 : vector<2x224x16xi1>, vector<2x224x16xi32>
    %c1_i32_26 = arith.constant 1 : i32
    %46 = vector.broadcast %c1_i32_26 : i32 to vector<2x224x16xi32>
    %47 = arith.cmpi sge, %45, %46 : vector<2x224x16xi32>
    %c14_i32 = arith.constant 14 : i32
    %48 = vector.broadcast %c14_i32 : i32 to vector<2x224x16xi32>
    %49 = arith.cmpi sle, %45, %48 : vector<2x224x16xi32>
    %50 = arith.andi %47, %49 : vector<2x224x16xi1>
    %cst_27 = arith.constant 0.000000e+00 : f32
    %51 = vector.broadcast %cst_27 : f32 to vector<2x224x16xf32>
    %52 = arith.select %50, %27, %51 : vector<2x224x16xi1>, vector<2x224x16xf32>
    %cst_28 = arith.constant 0.000000e+00 : f32
    %53 = vector.broadcast %cst_28 : f32 to vector<2x16x16xf32>
    %c0_29 = arith.constant 0 : index
    %c0_30 = arith.constant 0 : index
    %c0_31 = arith.constant 0 : index
    %54 = vector.load %arg8[%c0_29, %c0_30, %c0_31] : memref<2x272x16xf32, #tpu.memory_space<vmem>>, vector<2x16x16xf32>
    tpu.vector_store %arg8[%c0_29, %c0_30, %c0_31], %53 {strides = array<i32>} : memref<2x272x16xf32, #tpu.memory_space<vmem>>, vector<2x16x16xf32>,
    %cst_32 = arith.constant 0.000000e+00 : f32
    %55 = vector.broadcast %cst_32 : f32 to vector<2x32x16xf32>
    %c0_33 = arith.constant 0 : index
    %c240 = arith.constant 240 : index
    %c0_34 = arith.constant 0 : index
    %56 = vector.load %arg8[%c0_33, %c240, %c0_34] : memref<2x272x16xf32, #tpu.memory_space<vmem>>, vector<2x32x16xf32>
    tpu.vector_store %arg8[%c0_33, %c240, %c0_34], %55 {strides = array<i32>} : memref<2x272x16xf32, #tpu.memory_space<vmem>>, vector<2x32x16xf32>,
    %c0_35 = arith.constant 0 : index
    %c16_36 = arith.constant 16 : index
    %c0_37 = arith.constant 0 : index
    %57 = vector.load %arg8[%c0_35, %c16_36, %c0_37] : memref<2x272x16xf32, #tpu.memory_space<vmem>>, vector<2x224x16xf32>
    tpu.vector_store %arg8[%c0_35, %c16_36, %c0_37], %52 {strides = array<i32>} : memref<2x272x16xf32, #tpu.memory_space<vmem>>, vector<2x224x16xf32>,
    %c0_38 = arith.constant 0 : index
    %c0_39 = arith.constant 0 : index
    %c0_40 = arith.constant 0 : index
    %58 = vector.load %arg8[%c0_38, %c0_39, %c0_40] : memref<2x272x16xf32, #tpu.memory_space<vmem>>, vector<2x224x16xf32>
    %59 = vector.shape_cast %58 : vector<2x224x16xf32> to vector<448x16xf32>
    %c0_41 = arith.constant 0 : index
    %c0_42 = arith.constant 0 : index
    %60 = vector.load %arg10[%c0_41, %c0_42] : memref<448x144xf32, #tpu.memory_space<vmem>>, vector<448x16xf32>
    tpu.vector_store %arg10[%c0_41, %c0_42], %59 {strides = array<i32>} : memref<448x144xf32, #tpu.memory_space<vmem>>, vector<448x16xf32>,
    %c0_43 = arith.constant 0 : index
    %c1_44 = arith.constant 1 : index
    %c0_45 = arith.constant 0 : index
    %61 = vector.load %arg8[%c0_43, %c1_44, %c0_45] : memref<2x272x16xf32, #tpu.memory_space<vmem>>, vector<2x224x16xf32>
    %62 = vector.shape_cast %61 : vector<2x224x16xf32> to vector<448x16xf32>
    %c0_46 = arith.constant 0 : index
    %c16_47 = arith.constant 16 : index
    %63 = vector.load %arg10[%c0_46, %c16_47] : memref<448x144xf32, #tpu.memory_space<vmem>>, vector<448x16xf32>
    tpu.vector_store %arg10[%c0_46, %c16_47], %62 {strides = array<i32>} : memref<448x144xf32, #tpu.memory_space<vmem>>, vector<448x16xf32>,
    %c0_48 = arith.constant 0 : index
    %c2 = arith.constant 2 : index
    %c0_49 = arith.constant 0 : index
    %64 = vector.load %arg8[%c0_48, %c2, %c0_49] : memref<2x272x16xf32, #tpu.memory_space<vmem>>, vector<2x224x16xf32>
    %65 = vector.shape_cast %64 : vector<2x224x16xf32> to vector<448x16xf32>
    %c0_50 = arith.constant 0 : index
    %c32 = arith.constant 32 : index
    %66 = vector.load %arg10[%c0_50, %c32] : memref<448x144xf32, #tpu.memory_space<vmem>>, vector<448x16xf32>
    tpu.vector_store %arg10[%c0_50, %c32], %65 {strides = array<i32>} : memref<448x144xf32, #tpu.memory_space<vmem>>, vector<448x16xf32>,
    %c0_51 = arith.constant 0 : index
    %c16_52 = arith.constant 16 : index
    %c0_53 = arith.constant 0 : index
    %67 = vector.load %arg8[%c0_51, %c16_52, %c0_53] : memref<2x272x16xf32, #tpu.memory_space<vmem>>, vector<2x224x16xf32>
    %68 = vector.shape_cast %67 : vector<2x224x16xf32> to vector<448x16xf32>
    %c0_54 = arith.constant 0 : index
    %c48 = arith.constant 48 : index
    %69 = vector.load %arg10[%c0_54, %c48] : memref<448x144xf32, #tpu.memory_space<vmem>>, vector<448x16xf32>
    tpu.vector_store %arg10[%c0_54, %c48], %68 {strides = array<i32>} : memref<448x144xf32, #tpu.memory_space<vmem>>, vector<448x16xf32>,
    %c0_55 = arith.constant 0 : index
    %c17_56 = arith.constant 17 : index
    %c0_57 = arith.constant 0 : index
    %70 = vector.load %arg8[%c0_55, %c17_56, %c0_57] : memref<2x272x16xf32, #tpu.memory_space<vmem>>, vector<2x224x16xf32>
    %71 = vector.shape_cast %70 : vector<2x224x16xf32> to vector<448x16xf32>
    %c0_58 = arith.constant 0 : index
    %c64 = arith.constant 64 : index
    %72 = vector.load %arg10[%c0_58, %c64] : memref<448x144xf32, #tpu.memory_space<vmem>>, vector<448x16xf32>
    tpu.vector_store %arg10[%c0_58, %c64], %71 {strides = array<i32>} : memref<448x144xf32, #tpu.memory_space<vmem>>, vector<448x16xf32>,
    %c0_59 = arith.constant 0 : index
    %c18 = arith.constant 18 : index
    %c0_60 = arith.constant 0 : index
    %73 = vector.load %arg8[%c0_59, %c18, %c0_60] : memref<2x272x16xf32, #tpu.memory_space<vmem>>, vector<2x224x16xf32>
    %74 = vector.shape_cast %73 : vector<2x224x16xf32> to vector<448x16xf32>
    %c0_61 = arith.constant 0 : index
    %c80 = arith.constant 80 : index
    %75 = vector.load %arg10[%c0_61, %c80] : memref<448x144xf32, #tpu.memory_space<vmem>>, vector<448x16xf32>
    tpu.vector_store %arg10[%c0_61, %c80], %74 {strides = array<i32>} : memref<448x144xf32, #tpu.memory_space<vmem>>, vector<448x16xf32>,
    %c0_62 = arith.constant 0 : index
    %c32_63 = arith.constant 32 : index
    %c0_64 = arith.constant 0 : index
    %76 = vector.load %arg8[%c0_62, %c32_63, %c0_64] : memref<2x272x16xf32, #tpu.memory_space<vmem>>, vector<2x224x16xf32>
    %77 = vector.shape_cast %76 : vector<2x224x16xf32> to vector<448x16xf32>
    %c0_65 = arith.constant 0 : index
    %c96 = arith.constant 96 : index
    %78 = vector.load %arg10[%c0_65, %c96] : memref<448x144xf32, #tpu.memory_space<vmem>>, vector<448x16xf32>
    tpu.vector_store %arg10[%c0_65, %c96], %77 {strides = array<i32>} : memref<448x144xf32, #tpu.memory_space<vmem>>, vector<448x16xf32>,
    %c0_66 = arith.constant 0 : index
    %c33 = arith.constant 33 : index
    %c0_67 = arith.constant 0 : index
    %79 = vector.load %arg8[%c0_66, %c33, %c0_67] : memref<2x272x16xf32, #tpu.memory_space<vmem>>, vector<2x224x16xf32>
    %80 = vector.shape_cast %79 : vector<2x224x16xf32> to vector<448x16xf32>
    %c0_68 = arith.constant 0 : index
    %c112 = arith.constant 112 : index
    %81 = vector.load %arg10[%c0_68, %c112] : memref<448x144xf32, #tpu.memory_space<vmem>>, vector<448x16xf32>
    tpu.vector_store %arg10[%c0_68, %c112], %80 {strides = array<i32>} : memref<448x144xf32, #tpu.memory_space<vmem>>, vector<448x16xf32>,
    %c0_69 = arith.constant 0 : index
    %c34 = arith.constant 34 : index
    %c0_70 = arith.constant 0 : index
    %82 = vector.load %arg8[%c0_69, %c34, %c0_70] : memref<2x272x16xf32, #tpu.memory_space<vmem>>, vector<2x224x16xf32>
    %83 = vector.shape_cast %82 : vector<2x224x16xf32> to vector<448x16xf32>
    %c0_71 = arith.constant 0 : index
    %c128 = arith.constant 128 : index
    %84 = vector.load %arg10[%c0_71, %c128] : memref<448x144xf32, #tpu.memory_space<vmem>>, vector<448x16xf32>
    tpu.vector_store %arg10[%c0_71, %c128], %83 {strides = array<i32>} : memref<448x144xf32, #tpu.memory_space<vmem>>, vector<448x16xf32>,
    %c0_72 = arith.constant 0 : index
    %c0_73 = arith.constant 0 : index
    %85 = vector.load %arg10[%c0_72, %c0_73] : memref<448x144xf32, #tpu.memory_space<vmem>>, vector<448x144xf32>
    %c0_74 = arith.constant 0 : index
    %c0_75 = arith.constant 0 : index
    %86 = vector.load %arg4[%c0_74, %c0_75] : memref<144x32xf32, #tpu.memory_space<vmem>>, vector<144x32xf32>
    %cst_76 = arith.constant dense<0.000000e+00> : vector<448x32xf32>
    %87 = tpu.matmul %85, %86, %cst_76 {dimension_numbers = #tpu.dot_dimension_numbers<[1], [0], [0], [1], [0, 0, 1, 1], [], []>} : vector<448x144xf32>, vector<144x32xf32>, vector<448x32xf32> -> vector<448x32xf32>
    %c0_77 = arith.constant 0 : index
    %c0_78 = arith.constant 0 : index
    %88 = vector.load %arg5[%c0_77, %c0_78] : memref<1x32xf32, #tpu.memory_space<vmem>>, vector<1x32xf32>
    %89 = vector.broadcast %88 : vector<1x32xf32> to vector<448x32xf32>
    %90 = arith.addf %87, %89 : vector<448x32xf32>
    %cst_79 = arith.constant 0.000000e+00 : f32
    %91 = vector.broadcast %cst_79 : f32 to vector<448x32xf32>
    %92 = arith.maximumf %90, %91 : vector<448x32xf32>
    %93 = vector.shape_cast %92 : vector<448x32xf32> to vector<2x7x32x32xf32>
    %94 = vector.extract_strided_slice %93 {offsets = [0, 0, 0, 0], sizes = [2, 7, 16, 32], strides = [1, 1, 1, 1]} : vector<2x7x32x32xf32> to vector<2x7x16x32xf32>
    %95 = vector.extract_strided_slice %93 {offsets = [0, 0, 16, 0], sizes = [2, 7, 16, 32], strides = [1, 1, 1, 1]} : vector<2x7x32x32xf32> to vector<2x7x16x32xf32>
    %96 = arith.maximumf %94, %95 : vector<2x7x16x32xf32>
    %97 = vector.extract_strided_slice %96 {offsets = [0, 0, 0, 0], sizes = [2, 7, 15, 32], strides = [1, 1, 1, 1]} : vector<2x7x16x32xf32> to vector<2x7x15x32xf32>
    %98 = vector.extract_strided_slice %96 {offsets = [0, 0, 1, 0], sizes = [2, 7, 15, 32], strides = [1, 1, 1, 1]} : vector<2x7x16x32xf32> to vector<2x7x15x32xf32>
    %99 = arith.maximumf %97, %98 : vector<2x7x15x32xf32>
    %c0_80 = arith.constant 0 : index
    %c0_81 = arith.constant 0 : index
    %c0_82 = arith.constant 0 : index
    %c0_83 = arith.constant 0 : index
    %100 = vector.load %arg7[%c0_80, %c0_81, %c0_82, %c0_83] : memref<2x7x15x32xf32, #tpu.memory_space<vmem>>, vector<2x7x15x32xf32>
    tpu.vector_store %arg7[%c0_80, %c0_81, %c0_82, %c0_83], %99 {strides = array<i32>} : memref<2x7x15x32xf32, #tpu.memory_space<vmem>>, vector<2x7x15x32xf32>,
    return
  }
  func.func @transform_0(%arg0: i32) -> (i32, i32, i32) {
    %c0_i32 = arith.constant 0 : i32
    %c0_i32_0 = arith.constant 0 : i32
    %c0_i32_1 = arith.constant 0 : i32
    return %arg0, %c0_i32, %c0_i32_0 : i32, i32, i32
  }
  func.func @transform_1(%arg0: i32) -> (i32, i32) {
    %c0_i32 = arith.constant 0 : i32
    %c0_i32_0 = arith.constant 0 : i32
    %c0_i32_1 = arith.constant 0 : i32
    return %c0_i32, %c0_i32_0 : i32, i32
  }
  func.func @transform_2(%arg0: i32) -> (i32, i32) {
    %c0_i32 = arith.constant 0 : i32
    %c0_i32_0 = arith.constant 0 : i32
    %c0_i32_1 = arith.constant 0 : i32
    return %c0_i32, %c0_i32_0 : i32, i32
  }
  func.func @transform_3(%arg0: i32) -> (i32, i32) {
    %c0_i32 = arith.constant 0 : i32
    %c0_i32_0 = arith.constant 0 : i32
    %c0_i32_1 = arith.constant 0 : i32
    return %c0_i32, %c0_i32_0 : i32, i32
  }
  func.func @transform_4(%arg0: i32) -> (i32, i32) {
    %c0_i32 = arith.constant 0 : i32
    %c0_i32_0 = arith.constant 0 : i32
    %c0_i32_1 = arith.constant 0 : i32
    return %c0_i32, %c0_i32_0 : i32, i32
  }
  func.func @transform_5(%arg0: i32) -> (i32, i32, i32) {
    %c0_i32 = arith.constant 0 : i32
    %c0_i32_0 = arith.constant 0 : i32
    %c0_i32_1 = arith.constant 0 : i32
    return %arg0, %c0_i32, %c0_i32_0 : i32, i32, i32
  }
  func.func @transform_6(%arg0: i32) -> (i32, i32, i32, i32) {
    %c0_i32 = arith.constant 0 : i32
    %c0_i32_0 = arith.constant 0 : i32
    %c0_i32_1 = arith.constant 0 : i32
    %c0_i32_2 = arith.constant 0 : i32
    return %arg0, %c0_i32, %c0_i32_0, %c0_i32_1 : i32, i32, i32, i32
  }
}

module attributes {stable_mosaic.version = 11 : i64} {
  func.func @linear_kernel(%arg0: i32, %arg1: memref<2x1568xf32, #tpu.memory_space<vmem>>, %arg2: memref<1568x10xf32, #tpu.memory_space<vmem>>, %arg3: memref<1x10xf32, #tpu.memory_space<vmem>>, %arg4: memref<2x10xf32, #tpu.memory_space<vmem>>) attributes {dimension_semantics = [#tpu.dimension_semantics<parallel>], iteration_bounds = array<i64: 1>, scalar_prefetch = 0 : i64, scratch_operands = 0 : i64, tpu.core_type = #tpu.core_type<tc>, window_params = [{transform_indices = @transform_0, window_bounds = array<i64: 2, 1568>}, {pipeline_mode = #tpu.pipeline_mode<synchronous>, transform_indices = @transform_1, window_bounds = array<i64: 1568, 10>}, {pipeline_mode = #tpu.pipeline_mode<synchronous>, transform_indices = @transform_2, window_bounds = array<i64: 1, 10>}, {transform_indices = @transform_3, window_bounds = array<i64: 2, 10>}]} {
    %c0 = arith.constant 0 : index
    %c0_0 = arith.constant 0 : index
    %0 = vector.load %arg1[%c0, %c0_0] : memref<2x1568xf32, #tpu.memory_space<vmem>>, vector<2x1568xf32>
    %c0_1 = arith.constant 0 : index
    %c0_2 = arith.constant 0 : index
    %1 = vector.load %arg2[%c0_1, %c0_2] : memref<1568x10xf32, #tpu.memory_space<vmem>>, vector<1568x10xf32>
    %cst = arith.constant dense<0.000000e+00> : vector<2x10xf32>
    %2 = tpu.matmul %0, %1, %cst {dimension_numbers = #tpu.dot_dimension_numbers<[1], [0], [0], [1], [0, 0, 1, 1], [], []>} : vector<2x1568xf32>, vector<1568x10xf32>, vector<2x10xf32> -> vector<2x10xf32>
    %c0_3 = arith.constant 0 : index
    %c0_4 = arith.constant 0 : index
    %3 = vector.load %arg3[%c0_3, %c0_4] : memref<1x10xf32, #tpu.memory_space<vmem>>, vector<1x10xf32>
    %4 = vector.broadcast %3 : vector<1x10xf32> to vector<2x10xf32>
    %5 = arith.addf %2, %4 : vector<2x10xf32>
    %c0_5 = arith.constant 0 : index
    %c0_6 = arith.constant 0 : index
    %6 = vector.load %arg4[%c0_5, %c0_6] : memref<2x10xf32, #tpu.memory_space<vmem>>, vector<2x10xf32>
    tpu.vector_store %arg4[%c0_5, %c0_6], %5 {strides = array<i32>} : memref<2x10xf32, #tpu.memory_space<vmem>>, vector<2x10xf32>,
    return
  }
  func.func @transform_0(%arg0: i32) -> (i32, i32) {
    %c0_i32 = arith.constant 0 : i32
    %c0_i32_0 = arith.constant 0 : i32
    return %arg0, %c0_i32 : i32, i32
  }
  func.func @transform_1(%arg0: i32) -> (i32, i32) {
    %c0_i32 = arith.constant 0 : i32
    %c0_i32_0 = arith.constant 0 : i32
    %c0_i32_1 = arith.constant 0 : i32
    return %c0_i32, %c0_i32_0 : i32, i32
  }
  func.func @transform_2(%arg0: i32) -> (i32, i32) {
    %c0_i32 = arith.constant 0 : i32
    %c0_i32_0 = arith.constant 0 : i32
    %c0_i32_1 = arith.constant 0 : i32
    return %c0_i32, %c0_i32_0 : i32, i32
  }
  func.func @transform_3(%arg0: i32) -> (i32, i32) {
    %c0_i32 = arith.constant 0 : i32
    %c0_i32_0 = arith.constant 0 : i32
    return %arg0, %c0_i32 : i32, i32
  }
}

</mosaic_0001>

<llo_original>
// kernel: cnn_forward.3
$region0: #{cnn_forward.3}
  #allocation0 [shape = 'u32[]', space=smem, size = 0x4, offset = 0x4, fixed_abs, tag = 'smem constant byte address 0x4 - core index']
  #allocation1 [shape = 'u32[144,128]{1,0:T(1,128)}', space=vmem, size = 0x12000, scoped, tag = 'internal scratch']
  %s0 = inlined_call_operand.vmem [shape: f32[2,1568], index: 0, kind: input, shape index: {}]
  %s1 = inlined_call_operand.vmem [shape: f32[1568,10], index: 1, kind: input, shape index: {}]
  %s2 = inlined_call_operand.vmem [shape: f32[1,10], index: 2, kind: input, shape index: {}]
  %s3 = inlined_call_operand.hbm [shape: f32[2,10], index: 3, kind: output, shape index: {}]
  %s4 = sld [smem:[#allocation0]]
  $region22: #{cnn_forward.3} parent=0
    _
  %s6 = ssub.s32 1, %s4
  %s7 = scalar_select 0, %s6, %s4
  $region1: #{cnn_forward.3} parent=0
    #allocation2 [shape = 'u8[1024]{0}', space=vmem, size = 0x400, scoped, tag = 'output window, operand 0, single buffered']
    #allocation3 [shape = 's32[1]{0}', space=sflag, size = 0x4, scoped, tag = 'scoped memory for cnn_forward.3']
    %8 = vsyncpa [#allocation3], 0
    // Predicated region
    $region2: #{cnn_forward.3} parent=1 // pred_check
      _
    $region3: #{cnn_forward.3} parent=1 // pred_check_branch
      %10 = sbr.rel (0) target = $region5
    $region4: #{cnn_forward.3} parent=1 // pred_region
      _
    $region5: #{cnn_forward.3} parent=1 // pred_fallthru
      _
    // Predicated region
    $region6: #{cnn_forward.3} parent=1 // pred_check
      _
    $region7: #{cnn_forward.3} parent=1 // pred_check_branch
      %12 = sbr.rel (0) target = $region9
    $region8: #{cnn_forward.3} parent=1 // pred_region
      _
    $region9: #{cnn_forward.3} parent=1 // pred_fallthru
      _
    // Predicated region
    $region10: #{cnn_forward.3} parent=1 // pred_check
      _
    $region11: #{cnn_forward.3} parent=1 // pred_check_branch
      %14 = sbr.rel (0) target = $region13
    $region12: #{cnn_forward.3} parent=1 // pred_region
      _
    $region13: #{cnn_forward.3} parent=1 // pred_fallthru
      _
    %v15 = vld [vmem:[%s0] sm:$0xff]
    %v16 = vld [vmem:[%s0 + $0x8] sm:$0xff]
    %v17 = vld [vmem:[%s0 + $0x10] sm:$0xff]
    %v18 = vld [vmem:[%s0 + $0x18] sm:$0x3]
    %v19 = vld [vmem:[%s1] sm:$0xff]
    %v20 = vld [vmem:[%s1 + $0x8] sm:$0xff]
    %v21 = vld [vmem:[%s1 + $0x10] sm:$0xff]
    %v22 = vld [vmem:[%s1 + $0x18] sm:$0xff]
    %v23 = vld [vmem:[%s1 + $0x20] sm:$0xff]
    %v24 = vld [vmem:[%s1 + $0x28] sm:$0xff]
    %v25 = vld [vmem:[%s1 + $0x30] sm:$0xff]
    %v26 = vld [vmem:[%s1 + $0x38] sm:$0xff]
    %v27 = vld [vmem:[%s1 + $0x40] sm:$0xff]
    %v28 = vld [vmem:[%s1 + $0x48] sm:$0xff]
    %v29 = vld [vmem:[%s1 + $0x50] sm:$0xff]
    %v30 = vld [vmem:[%s1 + $0x58] sm:$0xff]
    %v31 = vld [vmem:[%s1 + $0x60] sm:$0xff]
    %v32 = vld [vmem:[%s1 + $0x68] sm:$0xff]
    %v33 = vld [vmem:[%s1 + $0x70] sm:$0xff]
    %v34 = vld [vmem:[%s1 + $0x78] sm:$0xff]
    %v35 = vld [vmem:[%s1 + $0x80] sm:$0xff]
    %v36 = vld [vmem:[%s1 + $0x88] sm:$0xff]
    %v37 = vld [vmem:[%s1 + $0x90] sm:$0xff]
    %v38 = vld [vmem:[%s1 + $0x98] sm:$0xff]
    %v39 = vld [vmem:[%s1 + $0xa0] sm:$0xff]
    %v40 = vld [vmem:[%s1 + $0xa8] sm:$0xff]
    %v41 = vld [vmem:[%s1 + $0xb0] sm:$0xff]
    %v42 = vld [vmem:[%s1 + $0xb8] sm:$0xff]
    %v43 = vld [vmem:[%s1 + $0xc0] sm:$0xff]
    %v44 = vld [vmem:[%s1 + $0xc8] sm:$0xff]
    %v45 = vld [vmem:[%s1 + $0xd0] sm:$0xff]
    %v46 = vld [vmem:[%s1 + $0xd8] sm:$0xff]
    %v47 = vld [vmem:[%s1 + $0xe0] sm:$0xff]
    %v48 = vld [vmem:[%s1 + $0xe8] sm:$0xff]
    %v49 = vld [vmem:[%s1 + $0xf0] sm:$0xff]
    %v50 = vld [vmem:[%s1 + $0xf8] sm:$0xff]
    %v51 = vld [vmem:[%s1 + $0x100] sm:$0xff]
    %v52 = vld [vmem:[%s1 + $0x108] sm:$0xff]
    %v53 = vld [vmem:[%s1 + $0x110] sm:$0xff]
    %v54 = vld [vmem:[%s1 + $0x118] sm:$0xff]
    %v55 = vld [vmem:[%s1 + $0x120] sm:$0xff]
    %v56 = vld [vmem:[%s1 + $0x128] sm:$0xff]
    %v57 = vld [vmem:[%s1 + $0x130] sm:$0xff]
    %v58 = vld [vmem:[%s1 + $0x138] sm:$0xff]
    %v59 = vld [vmem:[%s1 + $0x140] sm:$0xff]
    %v60 = vld [vmem:[%s1 + $0x148] sm:$0xff]
    %v61 = vld [vmem:[%s1 + $0x150] sm:$0xff]
    %v62 = vld [vmem:[%s1 + $0x158] sm:$0xff]
    %v63 = vld [vmem:[%s1 + $0x160] sm:$0xff]
    %v64 = vld [vmem:[%s1 + $0x168] sm:$0xff]
    %v65 = vld [vmem:[%s1 + $0x170] sm:$0xff]
    %v66 = vld [vmem:[%s1 + $0x178] sm:$0xff]
    %v67 = vld [vmem:[%s1 + $0x180] sm:$0xff]
    %v68 = vld [vmem:[%s1 + $0x188] sm:$0xff]
    %v69 = vld [vmem:[%s1 + $0x190] sm:$0xff]
    %v70 = vld [vmem:[%s1 + $0x198] sm:$0xff]
    %v71 = vld [vmem:[%s1 + $0x1a0] sm:$0xff]
    %v72 = vld [vmem:[%s1 + $0x1a8] sm:$0xff]
    %v73 = vld [vmem:[%s1 + $0x1b0] sm:$0xff]
    %v74 = vld [vmem:[%s1 + $0x1b8] sm:$0xff]
    %v75 = vld [vmem:[%s1 + $0x1c0] sm:$0xff]
    %v76 = vld [vmem:[%s1 + $0x1c8] sm:$0xff]
    %v77 = vld [vmem:[%s1 + $0x1d0] sm:$0xff]
    %v78 = vld [vmem:[%s1 + $0x1d8] sm:$0xff]
    %v79 = vld [vmem:[%s1 + $0x1e0] sm:$0xff]
    %v80 = vld [vmem:[%s1 + $0x1e8] sm:$0xff]
    %v81 = vld [vmem:[%s1 + $0x1f0] sm:$0xff]
    %v82 = vld [vmem:[%s1 + $0x1f8] sm:$0xff]
    %v83 = vld [vmem:[%s1 + $0x200] sm:$0xff]
    %v84 = vld [vmem:[%s1 + $0x208] sm:$0xff]
    %v85 = vld [vmem:[%s1 + $0x210] sm:$0xff]
    %v86 = vld [vmem:[%s1 + $0x218] sm:$0xff]
    %v87 = vld [vmem:[%s1 + $0x220] sm:$0xff]
    %v88 = vld [vmem:[%s1 + $0x228] sm:$0xff]
    %v89 = vld [vmem:[%s1 + $0x230] sm:$0xff]
    %v90 = vld [vmem:[%s1 + $0x238] sm:$0xff]
    %v91 = vld [vmem:[%s1 + $0x240] sm:$0xff]
    %v92 = vld [vmem:[%s1 + $0x248] sm:$0xff]
    %v93 = vld [vmem:[%s1 + $0x250] sm:$0xff]
    %v94 = vld [vmem:[%s1 + $0x258] sm:$0xff]
    %v95 = vld [vmem:[%s1 + $0x260] sm:$0xff]
    %v96 = vld [vmem:[%s1 + $0x268] sm:$0xff]
    %v97 = vld [vmem:[%s1 + $0x270] sm:$0xff]
    %v98 = vld [vmem:[%s1 + $0x278] sm:$0xff]
    %v99 = vld [vmem:[%s1 + $0x280] sm:$0xff]
    %v100 = vld [vmem:[%s1 + $0x288] sm:$0xff]
    %v101 = vld [vmem:[%s1 + $0x290] sm:$0xff]
    %v102 = vld [vmem:[%s1 + $0x298] sm:$0xff]
    %v103 = vld [vmem:[%s1 + $0x2a0] sm:$0xff]
    %v104 = vld [vmem:[%s1 + $0x2a8] sm:$0xff]
    %v105 = vld [vmem:[%s1 + $0x2b0] sm:$0xff]
    %v106 = vld [vmem:[%s1 + $0x2b8] sm:$0xff]
    %v107 = vld [vmem:[%s1 + $0x2c0] sm:$0xff]
    %v108 = vld [vmem:[%s1 + $0x2c8] sm:$0xff]
    %v109 = vld [vmem:[%s1 + $0x2d0] sm:$0xff]
    %v110 = vld [vmem:[%s1 + $0x2d8] sm:$0xff]
    %v111 = vld [vmem:[%s1 + $0x2e0] sm:$0xff]
    %v112 = vld [vmem:[%s1 + $0x2e8] sm:$0xff]
    %v113 = vld [vmem:[%s1 + $0x2f0] sm:$0xff]
    %v114 = vld [vmem:[%s1 + $0x2f8] sm:$0xff]
    %v115 = vld [vmem:[%s1 + $0x300] sm:$0xff]
    %v116 = vld [vmem:[%s1 + $0x308] sm:$0xff]
    %v117 = vld [vmem:[%s1 + $0x310] sm:$0xff]
    %v118 = vld [vmem:[%s1 + $0x318] sm:$0xff]
    %v119 = vld [vmem:[%s1 + $0x320] sm:$0xff]
    %v120 = vld [vmem:[%s1 + $0x328] sm:$0xff]
    %v121 = vld [vmem:[%s1 + $0x330] sm:$0xff]
    %v122 = vld [vmem:[%s1 + $0x338] sm:$0xff]
    %v123 = vld [vmem:[%s1 + $0x340] sm:$0xff]
    %v124 = vld [vmem:[%s1 + $0x348] sm:$0xff]
    %v125 = vld [vmem:[%s1 + $0x350] sm:$0xff]
    %v126 = vld [vmem:[%s1 + $0x358] sm:$0xff]
    %v127 = vld [vmem:[%s1 + $0x360] sm:$0xff]
    %v128 = vld [vmem:[%s1 + $0x368] sm:$0xff]
    %v129 = vld [vmem:[%s1 + $0x370] sm:$0xff]
    %v130 = vld [vmem:[%s1 + $0x378] sm:$0xff]
    %v131 = vld [vmem:[%s1 + $0x380] sm:$0xff]
    %v132 = vld [vmem:[%s1 + $0x388] sm:$0xff]
    %v133 = vld [vmem:[%s1 + $0x390] sm:$0xff]
    %v134 = vld [vmem:[%s1 + $0x398] sm:$0xff]
    %v135 = vld [vmem:[%s1 + $0x3a0] sm:$0xff]
    %v136 = vld [vmem:[%s1 + $0x3a8] sm:$0xff]
    %v137 = vld [vmem:[%s1 + $0x3b0] sm:$0xff]
    %v138 = vld [vmem:[%s1 + $0x3b8] sm:$0xff]
    %v139 = vld [vmem:[%s1 + $0x3c0] sm:$0xff]
    %v140 = vld [vmem:[%s1 + $0x3c8] sm:$0xff]
    %v141 = vld [vmem:[%s1 + $0x3d0] sm:$0xff]
    %v142 = vld [vmem:[%s1 + $0x3d8] sm:$0xff]
    %v143 = vld [vmem:[%s1 + $0x3e0] sm:$0xff]
    %v144 = vld [vmem:[%s1 + $0x3e8] sm:$0xff]
    %v145 = vld [vmem:[%s1 + $0x3f0] sm:$0xff]
    %v146 = vld [vmem:[%s1 + $0x3f8] sm:$0xff]
    %v147 = vld [vmem:[%s1 + $0x400] sm:$0xff]
    %v148 = vld [vmem:[%s1 + $0x408] sm:$0xff]
    %v149 = vld [vmem:[%s1 + $0x410] sm:$0xff]
    %v150 = vld [vmem:[%s1 + $0x418] sm:$0xff]
    %v151 = vld [vmem:[%s1 + $0x420] sm:$0xff]
    %v152 = vld [vmem:[%s1 + $0x428] sm:$0xff]
    %v153 = vld [vmem:[%s1 + $0x430] sm:$0xff]
    %v154 = vld [vmem:[%s1 + $0x438] sm:$0xff]
    %v155 = vld [vmem:[%s1 + $0x440] sm:$0xff]
    %v156 = vld [vmem:[%s1 + $0x448] sm:$0xff]
    %v157 = vld [vmem:[%s1 + $0x450] sm:$0xff]
    %v158 = vld [vmem:[%s1 + $0x458] sm:$0xff]
    %v159 = vld [vmem:[%s1 + $0x460] sm:$0xff]
    %v160 = vld [vmem:[%s1 + $0x468] sm:$0xff]
    %v161 = vld [vmem:[%s1 + $0x470] sm:$0xff]
    %v162 = vld [vmem:[%s1 + $0x478] sm:$0xff]
    %v163 = vld [vmem:[%s1 + $0x480] sm:$0xff]
    %v164 = vld [vmem:[%s1 + $0x488] sm:$0xff]
    %v165 = vld [vmem:[%s1 + $0x490] sm:$0xff]
    %v166 = vld [vmem:[%s1 + $0x498] sm:$0xff]
    %v167 = vld [vmem:[%s1 + $0x4a0] sm:$0xff]
    %v168 = vld [vmem:[%s1 + $0x4a8] sm:$0xff]
    %v169 = vld [vmem:[%s1 + $0x4b0] sm:$0xff]
    %v170 = vld [vmem:[%s1 + $0x4b8] sm:$0xff]
    %v171 = vld [vmem:[%s1 + $0x4c0] sm:$0xff]
    %v172 = vld [vmem:[%s1 + $0x4c8] sm:$0xff]
    %v173 = vld [vmem:[%s1 + $0x4d0] sm:$0xff]
    %v174 = vld [vmem:[%s1 + $0x4d8] sm:$0xff]
    %v175 = vld [vmem:[%s1 + $0x4e0] sm:$0xff]
    %v176 = vld [vmem:[%s1 + $0x4e8] sm:$0xff]
    %v177 = vld [vmem:[%s1 + $0x4f0] sm:$0xff]
    %v178 = vld [vmem:[%s1 + $0x4f8] sm:$0xff]
    %v179 = vld [vmem:[%s1 + $0x500] sm:$0xff]
    %v180 = vld [vmem:[%s1 + $0x508] sm:$0xff]
    %v181 = vld [vmem:[%s1 + $0x510] sm:$0xff]
    %v182 = vld [vmem:[%s1 + $0x518] sm:$0xff]
    %v183 = vld [vmem:[%s1 + $0x520] sm:$0xff]
    %v184 = vld [vmem:[%s1 + $0x528] sm:$0xff]
    %v185 = vld [vmem:[%s1 + $0x530] sm:$0xff]
    %v186 = vld [vmem:[%s1 + $0x538] sm:$0xff]
    %v187 = vld [vmem:[%s1 + $0x540] sm:$0xff]
    %v188 = vld [vmem:[%s1 + $0x548] sm:$0xff]
    %v189 = vld [vmem:[%s1 + $0x550] sm:$0xff]
    %v190 = vld [vmem:[%s1 + $0x558] sm:$0xff]
    %v191 = vld [vmem:[%s1 + $0x560] sm:$0xff]
    %v192 = vld [vmem:[%s1 + $0x568] sm:$0xff]
    %v193 = vld [vmem:[%s1 + $0x570] sm:$0xff]
    %v194 = vld [vmem:[%s1 + $0x578] sm:$0xff]
    %v195 = vld [vmem:[%s1 + $0x580] sm:$0xff]
    %v196 = vld [vmem:[%s1 + $0x588] sm:$0xff]
    %v197 = vld [vmem:[%s1 + $0x590] sm:$0xff]
    %v198 = vld [vmem:[%s1 + $0x598] sm:$0xff]
    %v199 = vld [vmem:[%s1 + $0x5a0] sm:$0xff]
    %v200 = vld [vmem:[%s1 + $0x5a8] sm:$0xff]
    %v201 = vld [vmem:[%s1 + $0x5b0] sm:$0xff]
    %v202 = vld [vmem:[%s1 + $0x5b8] sm:$0xff]
    %v203 = vld [vmem:[%s1 + $0x5c0] sm:$0xff]
    %v204 = vld [vmem:[%s1 + $0x5c8] sm:$0xff]
    %v205 = vld [vmem:[%s1 + $0x5d0] sm:$0xff]
    %v206 = vld [vmem:[%s1 + $0x5d8] sm:$0xff]
    %v207 = vld [vmem:[%s1 + $0x5e0] sm:$0xff]
    %v208 = vld [vmem:[%s1 + $0x5e8] sm:$0xff]
    %v209 = vld [vmem:[%s1 + $0x5f0] sm:$0xff]
    %v210 = vld [vmem:[%s1 + $0x5f8] sm:$0xff]
    %v211 = vld [vmem:[%s1 + $0x600] sm:$0xff]
    %v212 = vld [vmem:[%s1 + $0x608] sm:$0xff]
    %v213 = vld [vmem:[%s1 + $0x610] sm:$0xff]
    %v214 = vld [vmem:[%s1 + $0x618] sm:$0xff]
    %v215 = vld [vmem:[%s2] sm:$0x1]
    %v217 = vlaneseq
    %v218 = vshrl.u32 %v217, 7
    %v219 = vsub.s32 0, %v218
    %v220 = vrot.slane %v215, %v219
    %v226 = vcombine.high %v15, %v15
    %v228 = vunpack.c.l.s4 1983009808
    %v229 = vunpack.c.0.s8 %v228
    %v230 = vlaneseq
    %v231 = vshrl.u32 %v230, 7
    %v232 = vsub.s32 %v229, %v231
    %v233 = vrot.slane %v15, %v232
    %v235 = vunpack.c.l.s4 1983009808
    %v236 = vunpack.c.0.s8 %v235
    %v237 = vlaneseq
    %v238 = vshrl.u32 %v237, 7
    %v239 = vsub.s32 %v236, %v238
    %v240 = vrot.slane %v226, %v239
    %v241 = vcombine.high %v233, %v233
    %v242 = vcombine.high %v240, %v240
    %v243 = vcombine.high %v16, %v16
    %v245 = vunpack.c.l.s4 1983009808
    %v246 = vunpack.c.0.s8 %v245
    %v247 = vlaneseq
    %v248 = vshrl.u32 %v247, 7
    %v249 = vsub.s32 %v246, %v248
    %v250 = vrot.slane %v16, %v249
    %v252 = vunpack.c.l.s4 1983009808
    %v253 = vunpack.c.0.s8 %v252
    %v254 = vlaneseq
    %v255 = vshrl.u32 %v254, 7
    %v256 = vsub.s32 %v253, %v255
    %v257 = vrot.slane %v243, %v256
    %v258 = vcombine.high %v250, %v250
    %v259 = vcombine.high %v257, %v257
    %v260 = vcombine.high %v17, %v17
    %v262 = vunpack.c.l.s4 1983009808
    %v263 = vunpack.c.0.s8 %v262
    %v264 = vlaneseq
    %v265 = vshrl.u32 %v264, 7
    %v266 = vsub.s32 %v263, %v265
    %v267 = vrot.slane %v17, %v266
    %v269 = vunpack.c.l.s4 1983009808
    %v270 = vunpack.c.0.s8 %v269
    %v271 = vlaneseq
    %v272 = vshrl.u32 %v271, 7
    %v273 = vsub.s32 %v270, %v272
    %v274 = vrot.slane %v260, %v273
    %v275 = vcombine.high %v267, %v267
    %v276 = vcombine.high %v274, %v274
    %v278 = vunpack.c.l.s4 1983009808
    %v279 = vunpack.c.0.s8 %v278
    %v280 = vlaneseq
    %v281 = vshrl.u32 %v280, 7
    %v282 = vsub.s32 %v279, %v281
    %v283 = vrot.slane %v18, %v282
    %vm296 = vcmask 261120
    %v297 = vsel %vm296, %v283, 0
    %299 = vmatprep.subr.mxu0 0.0
    %300 = vmatpush1.msra.mxu0 %v34
    %301 = vmatprep.subr.mxu0 0.0
    %302 = vmatpush1.msra.mxu0 %v33
    %303 = vmatprep.subr.mxu0 0.0
    %304 = vmatpush1.msra.mxu0 %v32
    %305 = vmatprep.subr.mxu0 0.0
    %306 = vmatpush1.msra.mxu0 %v31
    %307 = vmatprep.subr.mxu0 0.0
    %308 = vmatpush1.msra.mxu0 %v30
    %309 = vmatprep.subr.mxu0 0.0
    %310 = vmatpush1.msra.mxu0 %v29
    %311 = vmatprep.subr.mxu0 0.0
    %312 = vmatpush1.msra.mxu0 %v28
    %313 = vmatprep.subr.mxu0 0.0
    %314 = vmatpush1.msra.mxu0 %v27
    %315 = vmatprep.subr.mxu0 0.0
    %316 = vmatpush1.msra.mxu0 %v26
    %317 = vmatprep.subr.mxu0 0.0
    %318 = vmatpush1.msra.mxu0 %v25
    %319 = vmatprep.subr.mxu0 0.0
    %320 = vmatpush1.msra.mxu0 %v24
    %321 = vmatprep.subr.mxu0 0.0
    %322 = vmatpush1.msra.mxu0 %v23
    %323 = vmatprep.subr.mxu0 0.0
    %324 = vmatpush1.msra.mxu0 %v22
    %325 = vmatprep.subr.mxu0 0.0
    %326 = vmatpush1.msra.mxu0 %v21
    %327 = vmatprep.subr.mxu0 0.0
    %328 = vmatpush1.msra.mxu0 %v20
    %329 = vmatprep.subr.mxu0 0.0
    %330 = vmatpush1.msra.mxu0 %v19
    %331 = vmatprep.subr.mxu0 0.0
    %332 = vmatpush2.msra.mxu0 %v50
    %333 = vmatprep.subr.mxu0 0.0
    %334 = vmatpush2.msra.mxu0 %v49
    %335 = vmatprep.subr.mxu0 0.0
    %336 = vmatpush2.msra.mxu0 %v48
    %337 = vmatprep.subr.mxu0 0.0
    %338 = vmatpush2.msra.mxu0 %v47
    %339 = vmatprep.subr.mxu0 0.0
    %340 = vmatpush2.msra.mxu0 %v46
    %341 = vmatprep.subr.mxu0 0.0
    %342 = vmatpush2.msra.mxu0 %v45
    %343 = vmatprep.subr.mxu0 0.0
    %344 = vmatpush2.msra.mxu0 %v44
    %345 = vmatprep.subr.mxu0 0.0
    %346 = vmatpush2.msra.mxu0 %v43
    %347 = vmatprep.subr.mxu0 0.0
    %348 = vmatpush2.msra.mxu0 %v42
    %349 = vmatprep.subr.mxu0 0.0
    %350 = vmatpush2.msra.mxu0 %v41
    %351 = vmatprep.subr.mxu0 0.0
    %352 = vmatpush2.msra.mxu0 %v40
    %353 = vmatprep.subr.mxu0 0.0
    %354 = vmatpush2.msra.mxu0 %v39
    %355 = vmatprep.subr.mxu0 0.0
    %356 = vmatpush2.msra.mxu0 %v38
    %357 = vmatprep.subr.mxu0 0.0
    %358 = vmatpush2.msra.mxu0 %v37
    %359 = vmatprep.subr.mxu0 0.0
    %360 = vmatpush2.msra.mxu0 %v36
    %361 = vmatprep.subr.mxu0 0.0
    %362 = vmatpush2.msra.mxu0 %v35
    %363 = vmatprep.mubr.f32.mxu0 %v241
    %364 = vmatmul.mubr.f32.gmra.mxu0 %v233
    %v365 = vpop.f32.mrf.mxu0
    %v366 = vadd.f32 %v220, %v365
    %v367 = vpop.f32.mrf.mxu0
    %368 = vdwg.mxu0
    %369 = vmatprep.subr.mxu0 0.0
    %370 = vmatpush1.msra.mxu0 %v66
    %371 = vmatprep.subr.mxu0 0.0
    %372 = vmatpush1.msra.mxu0 %v65
    %373 = vmatprep.subr.mxu0 0.0
    %374 = vmatpush1.msra.mxu0 %v64
    %375 = vmatprep.subr.mxu0 0.0
    %376 = vmatpush1.msra.mxu0 %v63
    %377 = vmatprep.subr.mxu0 0.0
    %378 = vmatpush1.msra.mxu0 %v62
    %379 = vmatprep.subr.mxu0 0.0
    %380 = vmatpush1.msra.mxu0 %v61
    %381 = vmatprep.subr.mxu0 0.0
    %382 = vmatpush1.msra.mxu0 %v60
    %383 = vmatprep.subr.mxu0 0.0
    %384 = vmatpush1.msra.mxu0 %v59
    %385 = vmatprep.subr.mxu0 0.0
    %386 = vmatpush1.msra.mxu0 %v58
    %387 = vmatprep.subr.mxu0 0.0
    %388 = vmatpush1.msra.mxu0 %v57
    %389 = vmatprep.subr.mxu0 0.0
    %390 = vmatpush1.msra.mxu0 %v56
    %391 = vmatprep.subr.mxu0 0.0
    %392 = vmatpush1.msra.mxu0 %v55
    %393 = vmatprep.subr.mxu0 0.0
    %394 = vmatpush1.msra.mxu0 %v54
    %395 = vmatprep.subr.mxu0 0.0
    %396 = vmatpush1.msra.mxu0 %v53
    %397 = vmatprep.subr.mxu0 0.0
    %398 = vmatpush1.msra.mxu0 %v52
    %399 = vmatprep.subr.mxu0 0.0
    %400 = vmatpush1.msra.mxu0 %v51
    %401 = vmatprep.subr.mxu0 0.0
    %402 = vmatpush2.msra.mxu0 %v82
    %403 = vmatprep.subr.mxu0 0.0
    %404 = vmatpush2.msra.mxu0 %v81
    %405 = vmatprep.subr.mxu0 0.0
    %406 = vmatpush2.msra.mxu0 %v80
    %407 = vmatprep.subr.mxu0 0.0
    %408 = vmatpush2.msra.mxu0 %v79
    %409 = vmatprep.subr.mxu0 0.0
    %410 = vmatpush2.msra.mxu0 %v78
    %411 = vmatprep.subr.mxu0 0.0
    %412 = vmatpush2.msra.mxu0 %v77
    %413 = vmatprep.subr.mxu0 0.0
    %414 = vmatpush2.msra.mxu0 %v76
    %415 = vmatprep.subr.mxu0 0.0
    %416 = vmatpush2.msra.mxu0 %v75
    %417 = vmatprep.subr.mxu0 0.0
    %418 = vmatpush2.msra.mxu0 %v74
    %419 = vmatprep.subr.mxu0 0.0
    %420 = vmatpush2.msra.mxu0 %v73
    %421 = vmatprep.subr.mxu0 0.0
    %422 = vmatpush2.msra.mxu0 %v72
    %423 = vmatprep.subr.mxu0 0.0
    %424 = vmatpush2.msra.mxu0 %v71
    %425 = vmatprep.subr.mxu0 0.0
    %426 = vmatpush2.msra.mxu0 %v70
    %427 = vmatprep.subr.mxu0 0.0
    %428 = vmatpush2.msra.mxu0 %v69
    %429 = vmatprep.subr.mxu0 0.0
    %430 = vmatpush2.msra.mxu0 %v68
    %431 = vmatprep.subr.mxu0 0.0
    %432 = vmatpush2.msra.mxu0 %v67
    %433 = vmatprep.mubr.f32.mxu0 %v242
    %434 = vmatmul.mubr.f32.gmra.mxu0 %v240
    %v435 = vpop.f32.mrf.mxu0
    %v436 = vadd.f32 %v366, %v435
    %v437 = vpop.f32.mrf.mxu0
    %438 = vdwg.mxu0
    %439 = vmatprep.subr.mxu0 0.0
    %440 = vmatpush1.msra.mxu0 %v98
    %441 = vmatprep.subr.mxu0 0.0
    %442 = vmatpush1.msra.mxu0 %v97
    %443 = vmatprep.subr.mxu0 0.0
    %444 = vmatpush1.msra.mxu0 %v96
    %445 = vmatprep.subr.mxu0 0.0
    %446 = vmatpush1.msra.mxu0 %v95
    %447 = vmatprep.subr.mxu0 0.0
    %448 = vmatpush1.msra.mxu0 %v94
    %449 = vmatprep.subr.mxu0 0.0
    %450 = vmatpush1.msra.mxu0 %v93
    %451 = vmatprep.subr.mxu0 0.0
    %452 = vmatpush1.msra.mxu0 %v92
    %453 = vmatprep.subr.mxu0 0.0
    %454 = vmatpush1.msra.mxu0 %v91
    %455 = vmatprep.subr.mxu0 0.0
    %456 = vmatpush1.msra.mxu0 %v90
    %457 = vmatprep.subr.mxu0 0.0
    %458 = vmatpush1.msra.mxu0 %v89
    %459 = vmatprep.subr.mxu0 0.0
    %460 = vmatpush1.msra.mxu0 %v88
    %461 = vmatprep.subr.mxu0 0.0
    %462 = vmatpush1.msra.mxu0 %v87
    %463 = vmatprep.subr.mxu0 0.0
    %464 = vmatpush1.msra.mxu0 %v86
    %465 = vmatprep.subr.mxu0 0.0
    %466 = vmatpush1.msra.mxu0 %v85
    %467 = vmatprep.subr.mxu0 0.0
    %468 = vmatpush1.msra.mxu0 %v84
    %469 = vmatprep.subr.mxu0 0.0
    %470 = vmatpush1.msra.mxu0 %v83
    %471 = vmatprep.subr.mxu0 0.0
    %472 = vmatpush2.msra.mxu0 %v114
    %473 = vmatprep.subr.mxu0 0.0
    %474 = vmatpush2.msra.mxu0 %v113
    %475 = vmatprep.subr.mxu0 0.0
    %476 = vmatpush2.msra.mxu0 %v112
    %477 = vmatprep.subr.mxu0 0.0
    %478 = vmatpush2.msra.mxu0 %v111
    %479 = vmatprep.subr.mxu0 0.0
    %480 = vmatpush2.msra.mxu0 %v110
    %481 = vmatprep.subr.mxu0 0.0
    %482 = vmatpush2.msra.mxu0 %v109
    %483 = vmatprep.subr.mxu0 0.0
    %484 = vmatpush2.msra.mxu0 %v108
    %485 = vmatprep.subr.mxu0 0.0
    %486 = vmatpush2.msra.mxu0 %v107
    %487 = vmatprep.subr.mxu0 0.0
    %488 = vmatpush2.msra.mxu0 %v106
    %489 = vmatprep.subr.mxu0 0.0
    %490 = vmatpush2.msra.mxu0 %v105
    %491 = vmatprep.subr.mxu0 0.0
    %492 = vmatpush2.msra.mxu0 %v104
    %493 = vmatprep.subr.mxu0 0.0
    %494 = vmatpush2.msra.mxu0 %v103
    %495 = vmatprep.subr.mxu0 0.0
    %496 = vmatpush2.msra.mxu0 %v102
    %497 = vmatprep.subr.mxu0 0.0
    %498 = vmatpush2.msra.mxu0 %v101
    %499 = vmatprep.subr.mxu0 0.0
    %500 = vmatpush2.msra.mxu0 %v100
    %501 = vmatprep.subr.mxu0 0.0
    %502 = vmatpush2.msra.mxu0 %v99
    %503 = vmatprep.mubr.f32.mxu0 %v258
    %504 = vmatmul.mubr.f32.gmra.mxu0 %v250
    %v505 = vpop.f32.mrf.mxu0
    %v506 = vadd.f32 %v436, %v505
    %v507 = vpop.f32.mrf.mxu0
    %508 = vdwg.mxu0
    %509 = vmatprep.subr.mxu0 0.0
    %510 = vmatpush1.msra.mxu0 %v130
    %511 = vmatprep.subr.mxu0 0.0
    %512 = vmatpush1.msra.mxu0 %v129
    %513 = vmatprep.subr.mxu0 0.0
    %514 = vmatpush1.msra.mxu0 %v128
    %515 = vmatprep.subr.mxu0 0.0
    %516 = vmatpush1.msra.mxu0 %v127
    %517 = vmatprep.subr.mxu0 0.0
    %518 = vmatpush1.msra.mxu0 %v126
    %519 = vmatprep.subr.mxu0 0.0
    %520 = vmatpush1.msra.mxu0 %v125
    %521 = vmatprep.subr.mxu0 0.0
    %522 = vmatpush1.msra.mxu0 %v124
    %523 = vmatprep.subr.mxu0 0.0
    %524 = vmatpush1.msra.mxu0 %v123
    %525 = vmatprep.subr.mxu0 0.0
    %526 = vmatpush1.msra.mxu0 %v122
    %527 = vmatprep.subr.mxu0 0.0
    %528 = vmatpush1.msra.mxu0 %v121
    %529 = vmatprep.subr.mxu0 0.0
    %530 = vmatpush1.msra.mxu0 %v120
    %531 = vmatprep.subr.mxu0 0.0
    %532 = vmatpush1.msra.mxu0 %v119
    %533 = vmatprep.subr.mxu0 0.0
    %534 = vmatpush1.msra.mxu0 %v118
    %535 = vmatprep.subr.mxu0 0.0
    %536 = vmatpush1.msra.mxu0 %v117
    %537 = vmatprep.subr.mxu0 0.0
    %538 = vmatpush1.msra.mxu0 %v116
    %539 = vmatprep.subr.mxu0 0.0
    %540 = vmatpush1.msra.mxu0 %v115
    %541 = vmatprep.subr.mxu0 0.0
    %542 = vmatpush2.msra.mxu0 %v146
    %543 = vmatprep.subr.mxu0 0.0
    %544 = vmatpush2.msra.mxu0 %v145
    %545 = vmatprep.subr.mxu0 0.0
    %546 = vmatpush2.msra.mxu0 %v144
    %547 = vmatprep.subr.mxu0 0.0
    %548 = vmatpush2.msra.mxu0 %v143
    %549 = vmatprep.subr.mxu0 0.0
    %550 = vmatpush2.msra.mxu0 %v142
    %551 = vmatprep.subr.mxu0 0.0
    %552 = vmatpush2.msra.mxu0 %v141
    %553 = vmatprep.subr.mxu0 0.0
    %554 = vmatpush2.msra.mxu0 %v140
    %555 = vmatprep.subr.mxu0 0.0
    %556 = vmatpush2.msra.mxu0 %v139
    %557 = vmatprep.subr.mxu0 0.0
    %558 = vmatpush2.msra.mxu0 %v138
    %559 = vmatprep.subr.mxu0 0.0
    %560 = vmatpush2.msra.mxu0 %v137
    %561 = vmatprep.subr.mxu0 0.0
    %562 = vmatpush2.msra.mxu0 %v136
    %563 = vmatprep.subr.mxu0 0.0
    %564 = vmatpush2.msra.mxu0 %v135
    %565 = vmatprep.subr.mxu0 0.0
    %566 = vmatpush2.msra.mxu0 %v134
    %567 = vmatprep.subr.mxu0 0.0
    %568 = vmatpush2.msra.mxu0 %v133
    %569 = vmatprep.subr.mxu0 0.0
    %570 = vmatpush2.msra.mxu0 %v132
    %571 = vmatprep.subr.mxu0 0.0
    %572 = vmatpush2.msra.mxu0 %v131
    %573 = vmatprep.mubr.f32.mxu0 %v259
    %574 = vmatmul.mubr.f32.gmra.mxu0 %v257
    %v575 = vpop.f32.mrf.mxu0
    %v576 = vadd.f32 %v506, %v575
    %v577 = vpop.f32.mrf.mxu0
    %578 = vdwg.mxu0
    %579 = vmatprep.subr.mxu0 0.0
    %580 = vmatpush1.msra.mxu0 %v162
    %581 = vmatprep.subr.mxu0 0.0
    %582 = vmatpush1.msra.mxu0 %v161
    %583 = vmatprep.subr.mxu0 0.0
    %584 = vmatpush1.msra.mxu0 %v160
    %585 = vmatprep.subr.mxu0 0.0
    %586 = vmatpush1.msra.mxu0 %v159
    %587 = vmatprep.subr.mxu0 0.0
    %588 = vmatpush1.msra.mxu0 %v158
    %589 = vmatprep.subr.mxu0 0.0
    %590 = vmatpush1.msra.mxu0 %v157
    %591 = vmatprep.subr.mxu0 0.0
    %592 = vmatpush1.msra.mxu0 %v156
    %593 = vmatprep.subr.mxu0 0.0
    %594 = vmatpush1.msra.mxu0 %v155
    %595 = vmatprep.subr.mxu0 0.0
    %596 = vmatpush1.msra.mxu0 %v154
    %597 = vmatprep.subr.mxu0 0.0
    %598 = vmatpush1.msra.mxu0 %v153
    %599 = vmatprep.subr.mxu0 0.0
    %600 = vmatpush1.msra.mxu0 %v152
    %601 = vmatprep.subr.mxu0 0.0
    %602 = vmatpush1.msra.mxu0 %v151
    %603 = vmatprep.subr.mxu0 0.0
    %604 = vmatpush1.msra.mxu0 %v150
    %605 = vmatprep.subr.mxu0 0.0
    %606 = vmatpush1.msra.mxu0 %v149
    %607 = vmatprep.subr.mxu0 0.0
    %608 = vmatpush1.msra.mxu0 %v148
    %609 = vmatprep.subr.mxu0 0.0
    %610 = vmatpush1.msra.mxu0 %v147
    %611 = vmatprep.subr.mxu0 0.0
    %612 = vmatpush2.msra.mxu0 %v178
    %613 = vmatprep.subr.mxu0 0.0
    %614 = vmatpush2.msra.mxu0 %v177
    %615 = vmatprep.subr.mxu0 0.0
    %616 = vmatpush2.msra.mxu0 %v176
    %617 = vmatprep.subr.mxu0 0.0
    %618 = vmatpush2.msra.mxu0 %v175
    %619 = vmatprep.subr.mxu0 0.0
    %620 = vmatpush2.msra.mxu0 %v174
    %621 = vmatprep.subr.mxu0 0.0
    %622 = vmatpush2.msra.mxu0 %v173
    %623 = vmatprep.subr.mxu0 0.0
    %624 = vmatpush2.msra.mxu0 %v172
    %625 = vmatprep.subr.mxu0 0.0
    %626 = vmatpush2.msra.mxu0 %v171
    %627 = vmatprep.subr.mxu0 0.0
    %628 = vmatpush2.msra.mxu0 %v170
    %629 = vmatprep.subr.mxu0 0.0
    %630 = vmatpush2.msra.mxu0 %v169
    %631 = vmatprep.subr.mxu0 0.0
    %632 = vmatpush2.msra.mxu0 %v168
    %633 = vmatprep.subr.mxu0 0.0
    %634 = vmatpush2.msra.mxu0 %v167
    %635 = vmatprep.subr.mxu0 0.0
    %636 = vmatpush2.msra.mxu0 %v166
    %637 = vmatprep.subr.mxu0 0.0
    %638 = vmatpush2.msra.mxu0 %v165
    %639 = vmatprep.subr.mxu0 0.0
    %640 = vmatpush2.msra.mxu0 %v164
    %641 = vmatprep.subr.mxu0 0.0
    %642 = vmatpush2.msra.mxu0 %v163
    %643 = vmatprep.mubr.f32.mxu0 %v275
    %644 = vmatmul.mubr.f32.gmra.mxu0 %v267
    %v645 = vpop.f32.mrf.mxu0
    %v646 = vadd.f32 %v576, %v645
    %v647 = vpop.f32.mrf.mxu0
    %648 = vdwg.mxu0
    %649 = vmatprep.subr.mxu0 0.0
    %650 = vmatpush1.msra.mxu0 %v194
    %651 = vmatprep.subr.mxu0 0.0
    %652 = vmatpush1.msra.mxu0 %v193
    %653 = vmatprep.subr.mxu0 0.0
    %654 = vmatpush1.msra.mxu0 %v192
    %655 = vmatprep.subr.mxu0 0.0
    %656 = vmatpush1.msra.mxu0 %v191
    %657 = vmatprep.subr.mxu0 0.0
    %658 = vmatpush1.msra.mxu0 %v190
    %659 = vmatprep.subr.mxu0 0.0
    %660 = vmatpush1.msra.mxu0 %v189
    %661 = vmatprep.subr.mxu0 0.0
    %662 = vmatpush1.msra.mxu0 %v188
    %663 = vmatprep.subr.mxu0 0.0
    %664 = vmatpush1.msra.mxu0 %v187
    %665 = vmatprep.subr.mxu0 0.0
    %666 = vmatpush1.msra.mxu0 %v186
    %667 = vmatprep.subr.mxu0 0.0
    %668 = vmatpush1.msra.mxu0 %v185
    %669 = vmatprep.subr.mxu0 0.0
    %670 = vmatpush1.msra.mxu0 %v184
    %671 = vmatprep.subr.mxu0 0.0
    %672 = vmatpush1.msra.mxu0 %v183
    %673 = vmatprep.subr.mxu0 0.0
    %674 = vmatpush1.msra.mxu0 %v182
    %675 = vmatprep.subr.mxu0 0.0
    %676 = vmatpush1.msra.mxu0 %v181
    %677 = vmatprep.subr.mxu0 0.0
    %678 = vmatpush1.msra.mxu0 %v180
    %679 = vmatprep.subr.mxu0 0.0
    %680 = vmatpush1.msra.mxu0 %v179
    %681 = vmatprep.subr.mxu0 0.0
    %682 = vmatpush2.msra.mxu0 %v210
    %683 = vmatprep.subr.mxu0 0.0
    %684 = vmatpush2.msra.mxu0 %v209
    %685 = vmatprep.subr.mxu0 0.0
    %686 = vmatpush2.msra.mxu0 %v208
    %687 = vmatprep.subr.mxu0 0.0
    %688 = vmatpush2.msra.mxu0 %v207
    %689 = vmatprep.subr.mxu0 0.0
    %690 = vmatpush2.msra.mxu0 %v206
    %691 = vmatprep.subr.mxu0 0.0
    %692 = vmatpush2.msra.mxu0 %v205
    %693 = vmatprep.subr.mxu0 0.0
    %694 = vmatpush2.msra.mxu0 %v204
    %695 = vmatprep.subr.mxu0 0.0
    %696 = vmatpush2.msra.mxu0 %v203
    %697 = vmatprep.subr.mxu0 0.0
    %698 = vmatpush2.msra.mxu0 %v202
    %699 = vmatprep.subr.mxu0 0.0
    %700 = vmatpush2.msra.mxu0 %v201
    %701 = vmatprep.subr.mxu0 0.0
    %702 = vmatpush2.msra.mxu0 %v200
    %703 = vmatprep.subr.mxu0 0.0
    %704 = vmatpush2.msra.mxu0 %v199
    %705 = vmatprep.subr.mxu0 0.0
    %706 = vmatpush2.msra.mxu0 %v198
    %707 = vmatprep.subr.mxu0 0.0
    %708 = vmatpush2.msra.mxu0 %v197
    %709 = vmatprep.subr.mxu0 0.0
    %710 = vmatpush2.msra.mxu0 %v196
    %711 = vmatprep.subr.mxu0 0.0
    %712 = vmatpush2.msra.mxu0 %v195
    %713 = vmatprep.mubr.f32.mxu0 %v276
    %714 = vmatmul.mubr.f32.gmra.mxu0 %v274
    %v715 = vpop.f32.mrf.mxu0
    %v716 = vadd.f32 %v646, %v715
    %v717 = vpop.f32.mrf.mxu0
    %718 = vdwg.mxu0
    %719 = vmatprep.subr.mxu0 0.0
    %720 = vmatpush1.msra.mxu0 0.0
    %721 = vmatprep.subr.mxu0 0.0
    %722 = vmatpush1.msra.mxu0 0.0
    %723 = vmatprep.subr.mxu0 0.0
    %724 = vmatpush1.msra.mxu0 0.0
    %725 = vmatprep.subr.mxu0 0.0
    %726 = vmatpush1.msra.mxu0 0.0
    %727 = vmatprep.subr.mxu0 0.0
    %728 = vmatpush1.msra.mxu0 0.0
    %729 = vmatprep.subr.mxu0 0.0
    %730 = vmatpush1.msra.mxu0 0.0
    %731 = vmatprep.subr.mxu0 0.0
    %732 = vmatpush1.msra.mxu0 0.0
    %733 = vmatprep.subr.mxu0 0.0
    %734 = vmatpush1.msra.mxu0 0.0
    %735 = vmatprep.subr.mxu0 0.0
    %736 = vmatpush1.msra.mxu0 0.0
    %737 = vmatprep.subr.mxu0 0.0
    %738 = vmatpush1.msra.mxu0 0.0
    %739 = vmatprep.subr.mxu0 0.0
    %740 = vmatpush1.msra.mxu0 0.0
    %741 = vmatprep.subr.mxu0 0.0
    %742 = vmatpush1.msra.mxu0 0.0
    %743 = vmatprep.subr.mxu0 0.0
    %744 = vmatpush1.msra.mxu0 %v214
    %745 = vmatprep.subr.mxu0 0.0
    %746 = vmatpush1.msra.mxu0 %v213
    %747 = vmatprep.subr.mxu0 0.0
    %748 = vmatpush1.msra.mxu0 %v212
    %749 = vmatprep.subr.mxu0 0.0
    %750 = vmatpush1.msra.mxu0 %v211
    %751 = vmatprep.subr.mxu0 0.0
    %752 = vmatpush2.msra.mxu0 0.0
    %753 = vmatprep.subr.mxu0 0.0
    %754 = vmatpush2.msra.mxu0 0.0
    %755 = vmatprep.subr.mxu0 0.0
    %756 = vmatpush2.msra.mxu0 0.0
    %757 = vmatprep.subr.mxu0 0.0
    %758 = vmatpush2.msra.mxu0 0.0
    %759 = vmatprep.subr.mxu0 0.0
    %760 = vmatpush2.msra.mxu0 0.0
    %761 = vmatprep.subr.mxu0 0.0
    %762 = vmatpush2.msra.mxu0 0.0
    %763 = vmatprep.subr.mxu0 0.0
    %764 = vmatpush2.msra.mxu0 0.0
    %765 = vmatprep.subr.mxu0 0.0
    %766 = vmatpush2.msra.mxu0 0.0
    %767 = vmatprep.subr.mxu0 0.0
    %768 = vmatpush2.msra.mxu0 0.0
    %769 = vmatprep.subr.mxu0 0.0
    %770 = vmatpush2.msra.mxu0 0.0
    %771 = vmatprep.subr.mxu0 0.0
    %772 = vmatpush2.msra.mxu0 0.0
    %773 = vmatprep.subr.mxu0 0.0
    %774 = vmatpush2.msra.mxu0 0.0
    %775 = vmatprep.subr.mxu0 0.0
    %776 = vmatpush2.msra.mxu0 0.0
    %777 = vmatprep.subr.mxu0 0.0
    %778 = vmatpush2.msra.mxu0 0.0
    %779 = vmatprep.subr.mxu0 0.0
    %780 = vmatpush2.msra.mxu0 0.0
    %781 = vmatprep.subr.mxu0 0.0
    %782 = vmatpush2.msra.mxu0 0.0
    %783 = vmatprep.mubr.f32.mxu0 0.0
    %784 = vmatmul.mubr.f32.gmra.mxu0 %v297
    %v785 = vpop.f32.mrf.mxu0
    %v786 = vadd.f32 %v716, %v785
    %v787 = vpop.f32.mrf.mxu0
    %788 = vdwg.mxu0
    %vm789 = vcmask 74752
    %790 = vst.msk [vmem:[#allocation2] sm:$0x3] %vm789, %v786
    // Predicated region
    $region14: #{cnn_forward.3} parent=1 // pred_check
      _
    $region15: #{cnn_forward.3} parent=1 // pred_check_branch
      %792 = sbr.rel (0) target = $region17
    $region16: #{cnn_forward.3} parent=1 // pred_region
      %s794 = ssub.s32 32, 32
      %795 = vsyncadd [#allocation3], %s794
      %s797 = sshll.u32 [#allocation2], 4
      %s798 = int_to_ptr.vmem [resolvable:$true] %s797
      %800 = dma.vmem_to_hbm [thread:$0]  %s798, 32, %s3, [#allocation3]
    $region17: #{cnn_forward.3} parent=1 // pred_fallthru
      _
    // Predicated region
    $region18: #{cnn_forward.3} parent=1 // pred_check
      _
    $region19: #{cnn_forward.3} parent=1 // pred_check_branch
      %802 = sbr.rel (0) target = $region21
    $region20: #{cnn_forward.3} parent=1 // pred_region
      %803 = dma.done [#allocation3], 32
    $region21: #{cnn_forward.3} parent=1 // pred_fallthru
      _
    %804 = vsyncpa [#allocation3], 1

// kernel: cnn_forward.2
$region0: #{cnn_forward.2}
  #allocation0 [shape = 'u32[]', space=smem, size = 0x4, offset = 0x4, fixed_abs, tag = 'smem constant byte address 0x4 - core index']
  #allocation1 [shape = 'u32[144,128]{1,0:T(1,128)}', space=vmem, size = 0x12000, scoped, tag = 'internal scratch']
  #allocation2 [shape = 'f32[2,272,16]{2,1,0:T(8,128)}', space=vmem, size = 0x44000, scoped, tag = 'scratch operand']
  #allocation3 [shape = 'f32[448,16]{1,0:T(8,128)}', space=vmem, size = 0x38000, scoped, tag = 'scratch operand']
  #allocation4 [shape = 'f32[448,144]{1,0:T(8,128)}', space=vmem, size = 0x70000, scoped, tag = 'scratch operand']
  %s0 = inlined_call_operand.vmem [shape: f32[2,256,4], index: 0, kind: input, shape index: {}]
  %s1 = inlined_call_operand.vmem [shape: f32[16,64], index: 1, kind: input, shape index: {}]
  %s2 = inlined_call_operand.vmem [shape: f32[1,64], index: 2, kind: input, shape index: {}]
  %s3 = inlined_call_operand.vmem [shape: f32[144,32], index: 3, kind: input, shape index: {}]
  %s4 = inlined_call_operand.vmem [shape: f32[1,32], index: 4, kind: input, shape index: {}]
  %s5 = inlined_call_operand.vmem [shape: f32[2,224,16], index: 5, kind: output, shape index: {0}]
  %s6 = inlined_call_operand.vmem [shape: f32[2,7,15,32], index: 6, kind: output, shape index: {1}]
  %7 = xla_tuple %s5, %s6
  %s8 = sld [smem:[#allocation0]]
  $region38: #{cnn_forward.2} parent=0
    _
  %s10 = ssub.s32 1, %s8
  %s11 = scalar_select 0, %s10, %s8
  // Predicated region
  $region2: #{cnn_forward.2} parent=0 // pred_check
    _
  $region3: #{cnn_forward.2} parent=0 // pred_check_branch
    %13 = sbr.rel (0) target = $region5
  $region4: #{cnn_forward.2} parent=0 // pred_region
    _
  $region5: #{cnn_forward.2} parent=0 // pred_fallthru
    _
  // Predicated region
  $region6: #{cnn_forward.2} parent=0 // pred_check
    _
  $region7: #{cnn_forward.2} parent=0 // pred_check_branch
    %15 = sbr.rel (0) target = $region9
  $region8: #{cnn_forward.2} parent=0 // pred_region
    _
  $region9: #{cnn_forward.2} parent=0 // pred_fallthru
    _
  // Predicated region
  $region10: #{cnn_forward.2} parent=0 // pred_check
    _
  $region11: #{cnn_forward.2} parent=0 // pred_check_branch
    %17 = sbr.rel (0) target = $region13
  $region12: #{cnn_forward.2} parent=0 // pred_region
    _
  $region13: #{cnn_forward.2} parent=0 // pred_fallthru
    _
  // Predicated region
  $region14: #{cnn_forward.2} parent=0 // pred_check
    _
  $region15: #{cnn_forward.2} parent=0 // pred_check_branch
    %19 = sbr.rel (0) target = $region17
  $region16: #{cnn_forward.2} parent=0 // pred_region
    _
  $region17: #{cnn_forward.2} parent=0 // pred_fallthru
    _
  // Predicated region
  $region18: #{cnn_forward.2} parent=0 // pred_check
    _
  $region19: #{cnn_forward.2} parent=0 // pred_check_branch
    %21 = sbr.rel (0) target = $region21
  $region20: #{cnn_forward.2} parent=0 // pred_region
    _
  $region21: #{cnn_forward.2} parent=0 // pred_fallthru
    _
  %v22 = vld [vmem:[%s0] sm:$0xff]
  %v23 = vld [vmem:[%s0 + $0x8] sm:$0xff]
  %v24 = vld [vmem:[%s0 + $0x10] sm:$0xff]
  %v25 = vld [vmem:[%s0 + $0x18] sm:$0xff]
  %v26 = vld [vmem:[%s0 + $0x20] sm:$0xff]
  %v27 = vld [vmem:[%s0 + $0x28] sm:$0xff]
  %v28 = vld [vmem:[%s0 + $0x30] sm:$0xff]
  %v29 = vld [vmem:[%s0 + $0x38] sm:$0xff]
  %v30 = vld [vmem:[%s0 + $0x40] sm:$0xff]
  %v31 = vld [vmem:[%s0 + $0x48] sm:$0xff]
  %v32 = vld [vmem:[%s0 + $0x50] sm:$0xff]
  %v33 = vld [vmem:[%s0 + $0x58] sm:$0xff]
  %v34 = vld [vmem:[%s0 + $0x60] sm:$0xff]
  %v35 = vld [vmem:[%s0 + $0x68] sm:$0xff]
  %v36 = vld [vmem:[%s0 + $0x70] sm:$0xff]
  %v37 = vld [vmem:[%s0 + $0x78] sm:$0xff]
  %v38 = vld [vmem:[%s0 + $0x80] sm:$0xff]
  %v39 = vld [vmem:[%s0 + $0x88] sm:$0xff]
  %v40 = vld [vmem:[%s0 + $0x90] sm:$0xff]
  %v41 = vld [vmem:[%s0 + $0x98] sm:$0xff]
  %v42 = vld [vmem:[%s0 + $0xa0] sm:$0xff]
  %v43 = vld [vmem:[%s0 + $0xa8] sm:$0xff]
  %v44 = vld [vmem:[%s0 + $0xb0] sm:$0xff]
  %v45 = vld [vmem:[%s0 + $0xb8] sm:$0xff]
  %v46 = vld [vmem:[%s0 + $0xc0] sm:$0xff]
  %v47 = vld [vmem:[%s0 + $0xc8] sm:$0xff]
  %v48 = vld [vmem:[%s0 + $0xd0] sm:$0xff]
  %v49 = vld [vmem:[%s0 + $0xd8] sm:$0xff]
  %v50 = vld [vmem:[%s0 + $0x100] sm:$0xff]
  %v51 = vld [vmem:[%s0 + $0x108] sm:$0xff]
  %v52 = vld [vmem:[%s0 + $0x110] sm:$0xff]
  %v53 = vld [vmem:[%s0 + $0x118] sm:$0xff]
  %v54 = vld [vmem:[%s0 + $0x120] sm:$0xff]
  %v55 = vld [vmem:[%s0 + $0x128] sm:$0xff]
  %v56 = vld [vmem:[%s0 + $0x130] sm:$0xff]
  %v57 = vld [vmem:[%s0 + $0x138] sm:$0xff]
  %v58 = vld [vmem:[%s0 + $0x140] sm:$0xff]
  %v59 = vld [vmem:[%s0 + $0x148] sm:$0xff]
  %v60 = vld [vmem:[%s0 + $0x150] sm:$0xff]
  %v61 = vld [vmem:[%s0 + $0x158] sm:$0xff]
  %v62 = vld [vmem:[%s0 + $0x160] sm:$0xff]
  %v63 = vld [vmem:[%s0 + $0x168] sm:$0xff]
  %v64 = vld [vmem:[%s0 + $0x170] sm:$0xff]
  %v65 = vld [vmem:[%s0 + $0x178] sm:$0xff]
  %v66 = vld [vmem:[%s0 + $0x180] sm:$0xff]
  %v67 = vld [vmem:[%s0 + $0x188] sm:$0xff]
  %v68 = vld [vmem:[%s0 + $0x190] sm:$0xff]
  %v69 = vld [vmem:[%s0 + $0x198] sm:$0xff]
  %v70 = vld [vmem:[%s0 + $0x1a0] sm:$0xff]
  %v71 = vld [vmem:[%s0 + $0x1a8] sm:$0xff]
  %v72 = vld [vmem:[%s0 + $0x1b0] sm:$0xff]
  %v73 = vld [vmem:[%s0 + $0x1b8] sm:$0xff]
  %v74 = vld [vmem:[%s0 + $0x1c0] sm:$0xff]
  %v75 = vld [vmem:[%s0 + $0x1c8] sm:$0xff]
  %v76 = vld [vmem:[%s0 + $0x1d0] sm:$0xff]
  %v77 = vld [vmem:[%s0 + $0x1d8] sm:$0xff]
  %vm78 = vcmask 31744
  %79 = vst.msk [vmem:[#allocation3] sm:$0xff] %vm78, %v22
  %80 = vst.msk [vmem:[#allocation3 + $0x8] sm:$0xff] %vm78, %v23
  %81 = vst.msk [vmem:[#allocation3 + $0x10] sm:$0xff] %vm78, %v24
  %82 = vst.msk [vmem:[#allocation3 + $0x18] sm:$0xff] %vm78, %v25
  %83 = vst.msk [vmem:[#allocation3 + $0x20] sm:$0xff] %vm78, %v26
  %84 = vst.msk [vmem:[#allocation3 + $0x28] sm:$0xff] %vm78, %v27
  %85 = vst.msk [vmem:[#allocation3 + $0x30] sm:$0xff] %vm78, %v28
  %86 = vst.msk [vmem:[#allocation3 + $0x38] sm:$0xff] %vm78, %v29
  %87 = vst.msk [vmem:[#allocation3 + $0x40] sm:$0xff] %vm78, %v30
  %88 = vst.msk [vmem:[#allocation3 + $0x48] sm:$0xff] %vm78, %v31
  %89 = vst.msk [vmem:[#allocation3 + $0x50] sm:$0xff] %vm78, %v32
  %90 = vst.msk [vmem:[#allocation3 + $0x58] sm:$0xff] %vm78, %v33
  %91 = vst.msk [vmem:[#allocation3 + $0x60] sm:$0xff] %vm78, %v34
  %92 = vst.msk [vmem:[#allocation3 + $0x68] sm:$0xff] %vm78, %v35
  %93 = vst.msk [vmem:[#allocation3 + $0x70] sm:$0xff] %vm78, %v36
  %94 = vst.msk [vmem:[#allocation3 + $0x78] sm:$0xff] %vm78, %v37
  %95 = vst.msk [vmem:[#allocation3 + $0x80] sm:$0xff] %vm78, %v38
  %96 = vst.msk [vmem:[#allocation3 + $0x88] sm:$0xff] %vm78, %v39
  %97 = vst.msk [vmem:[#allocation3 + $0x90] sm:$0xff] %vm78, %v40
  %98 = vst.msk [vmem:[#allocation3 + $0x98] sm:$0xff] %vm78, %v41
  %99 = vst.msk [vmem:[#allocation3 + $0xa0] sm:$0xff] %vm78, %v42
  %100 = vst.msk [vmem:[#allocation3 + $0xa8] sm:$0xff] %vm78, %v43
  %101 = vst.msk [vmem:[#allocation3 + $0xb0] sm:$0xff] %vm78, %v44
  %102 = vst.msk [vmem:[#allocation3 + $0xb8] sm:$0xff] %vm78, %v45
  %103 = vst.msk [vmem:[#allocation3 + $0xc0] sm:$0xff] %vm78, %v46
  %104 = vst.msk [vmem:[#allocation3 + $0xc8] sm:$0xff] %vm78, %v47
  %105 = vst.msk [vmem:[#allocation3 + $0xd0] sm:$0xff] %vm78, %v48
  %106 = vst.msk [vmem:[#allocation3 + $0xd8] sm:$0xff] %vm78, %v49
  %107 = vst.msk [vmem:[#allocation3 + $0xe0] sm:$0xff] %vm78, %v50
  %108 = vst.msk [vmem:[#allocation3 + $0xe8] sm:$0xff] %vm78, %v51
  %109 = vst.msk [vmem:[#allocation3 + $0xf0] sm:$0xff] %vm78, %v52
  %110 = vst.msk [vmem:[#allocation3 + $0xf8] sm:$0xff] %vm78, %v53
  %111 = vst.msk [vmem:[#allocation3 + $0x100] sm:$0xff] %vm78, %v54
  %112 = vst.msk [vmem:[#allocation3 + $0x108] sm:$0xff] %vm78, %v55
  %113 = vst.msk [vmem:[#allocation3 + $0x110] sm:$0xff] %vm78, %v56
  %114 = vst.msk [vmem:[#allocation3 + $0x118] sm:$0xff] %vm78, %v57
  %115 = vst.msk [vmem:[#allocation3 + $0x120] sm:$0xff] %vm78, %v58
  %116 = vst.msk [vmem:[#allocation3 + $0x128] sm:$0xff] %vm78, %v59
  %117 = vst.msk [vmem:[#allocation3 + $0x130] sm:$0xff] %vm78, %v60
  %118 = vst.msk [vmem:[#allocation3 + $0x138] sm:$0xff] %vm78, %v61
  %119 = vst.msk [vmem:[#allocation3 + $0x140] sm:$0xff] %vm78, %v62
  %120 = vst.msk [vmem:[#allocation3 + $0x148] sm:$0xff] %vm78, %v63
  %121 = vst.msk [vmem:[#allocation3 + $0x150] sm:$0xff] %vm78, %v64
  %122 = vst.msk [vmem:[#allocation3 + $0x158] sm:$0xff] %vm78, %v65
  %123 = vst.msk [vmem:[#allocation3 + $0x160] sm:$0xff] %vm78, %v66
  %124 = vst.msk [vmem:[#allocation3 + $0x168] sm:$0xff] %vm78, %v67
  %125 = vst.msk [vmem:[#allocation3 + $0x170] sm:$0xff] %vm78, %v68
  %126 = vst.msk [vmem:[#allocation3 + $0x178] sm:$0xff] %vm78, %v69
  %127 = vst.msk [vmem:[#allocation3 + $0x180] sm:$0xff] %vm78, %v70
  %128 = vst.msk [vmem:[#allocation3 + $0x188] sm:$0xff] %vm78, %v71
  %129 = vst.msk [vmem:[#allocation3 + $0x190] sm:$0xff] %vm78, %v72
  %130 = vst.msk [vmem:[#allocation3 + $0x198] sm:$0xff] %vm78, %v73
  %131 = vst.msk [vmem:[#allocation3 + $0x1a0] sm:$0xff] %vm78, %v74
  %132 = vst.msk [vmem:[#allocation3 + $0x1a8] sm:$0xff] %vm78, %v75
  %133 = vst.msk [vmem:[#allocation3 + $0x1b0] sm:$0xff] %vm78, %v76
  %134 = vst.msk [vmem:[#allocation3 + $0x1b8] sm:$0xff] %vm78, %v77
  %v135 = vld [vmem:[%s0 + $0x1] sm:$0xff]
  %v136 = vld [vmem:[%s0 + $0x9] sm:$0xff]
  %v137 = vld [vmem:[%s0 + $0x11] sm:$0xff]
  %v138 = vld [vmem:[%s0 + $0x19] sm:$0xff]
  %v139 = vld [vmem:[%s0 + $0x21] sm:$0xff]
  %v140 = vld [vmem:[%s0 + $0x29] sm:$0xff]
  %v141 = vld [vmem:[%s0 + $0x31] sm:$0xff]
  %v142 = vld [vmem:[%s0 + $0x39] sm:$0xff]
  %v143 = vld [vmem:[%s0 + $0x41] sm:$0xff]
  %v144 = vld [vmem:[%s0 + $0x49] sm:$0xff]
  %v145 = vld [vmem:[%s0 + $0x51] sm:$0xff]
  %v146 = vld [vmem:[%s0 + $0x59] sm:$0xff]
  %v147 = vld [vmem:[%s0 + $0x61] sm:$0xff]
  %v148 = vld [vmem:[%s0 + $0x69] sm:$0xff]
  %v149 = vld [vmem:[%s0 + $0x71] sm:$0xff]
  %v150 = vld [vmem:[%s0 + $0x79] sm:$0xff]
  %v151 = vld [vmem:[%s0 + $0x81] sm:$0xff]
  %v152 = vld [vmem:[%s0 + $0x89] sm:$0xff]
  %v153 = vld [vmem:[%s0 + $0x91] sm:$0xff]
  %v154 = vld [vmem:[%s0 + $0x99] sm:$0xff]
  %v155 = vld [vmem:[%s0 + $0xa1] sm:$0xff]
  %v156 = vld [vmem:[%s0 + $0xa9] sm:$0xff]
  %v157 = vld [vmem:[%s0 + $0xb1] sm:$0xff]
  %v158 = vld [vmem:[%s0 + $0xb9] sm:$0xff]
  %v159 = vld [vmem:[%s0 + $0xc1] sm:$0xff]
  %v160 = vld [vmem:[%s0 + $0xc9] sm:$0xff]
  %v161 = vld [vmem:[%s0 + $0xd1] sm:$0xff]
  %v162 = vld [vmem:[%s0 + $0xd9] sm:$0xff]
  %v163 = vld [vmem:[%s0 + $0x101] sm:$0xff]
  %v164 = vld [vmem:[%s0 + $0x109] sm:$0xff]
  %v165 = vld [vmem:[%s0 + $0x111] sm:$0xff]
  %v166 = vld [vmem:[%s0 + $0x119] sm:$0xff]
  %v167 = vld [vmem:[%s0 + $0x121] sm:$0xff]
  %v168 = vld [vmem:[%s0 + $0x129] sm:$0xff]
  %v169 = vld [vmem:[%s0 + $0x131] sm:$0xff]
  %v170 = vld [vmem:[%s0 + $0x139] sm:$0xff]
  %v171 = vld [vmem:[%s0 + $0x141] sm:$0xff]
  %v172 = vld [vmem:[%s0 + $0x149] sm:$0xff]
  %v173 = vld [vmem:[%s0 + $0x151] sm:$0xff]
  %v174 = vld [vmem:[%s0 + $0x159] sm:$0xff]
  %v175 = vld [vmem:[%s0 + $0x161] sm:$0xff]
  %v176 = vld [vmem:[%s0 + $0x169] sm:$0xff]
  %v177 = vld [vmem:[%s0 + $0x171] sm:$0xff]
  %v178 = vld [vmem:[%s0 + $0x179] sm:$0xff]
  %v179 = vld [vmem:[%s0 + $0x181] sm:$0xff]
  %v180 = vld [vmem:[%s0 + $0x189] sm:$0xff]
  %v181 = vld [vmem:[%s0 + $0x191] sm:$0xff]
  %v182 = vld [vmem:[%s0 + $0x199] sm:$0xff]
  %v183 = vld [vmem:[%s0 + $0x1a1] sm:$0xff]
  %v184 = vld [vmem:[%s0 + $0x1a9] sm:$0xff]
  %v185 = vld [vmem:[%s0 + $0x1b1] sm:$0xff]
  %v186 = vld [vmem:[%s0 + $0x1b9] sm:$0xff]
  %v187 = vld [vmem:[%s0 + $0x1c1] sm:$0xff]
  %v188 = vld [vmem:[%s0 + $0x1c9] sm:$0xff]
  %v189 = vld [vmem:[%s0 + $0x1d1] sm:$0xff]
  %v190 = vld [vmem:[%s0 + $0x1d9] sm:$0xff]
  %247 = vrot.lane.b32.xlu0 %v135, 4
  %v248 = vpop.permute.xlu0 %247
  %249 = vrot.lane.b32.xlu0 %v136, 4
  %v250 = vpop.permute.xlu0 %249
  %251 = vrot.lane.b32.xlu0 %v137, 4
  %v252 = vpop.permute.xlu0 %251
  %253 = vrot.lane.b32.xlu0 %v138, 4
  %v254 = vpop.permute.xlu0 %253
  %255 = vrot.lane.b32.xlu0 %v139, 4
  %v256 = vpop.permute.xlu0 %255
  %257 = vrot.lane.b32.xlu0 %v140, 4
  %v258 = vpop.permute.xlu0 %257
  %259 = vrot.lane.b32.xlu0 %v141, 4
  %v260 = vpop.permute.xlu0 %259
  %261 = vrot.lane.b32.xlu0 %v142, 4
  %v262 = vpop.permute.xlu0 %261
  %263 = vrot.lane.b32.xlu0 %v143, 4
  %v264 = vpop.permute.xlu0 %263
  %265 = vrot.lane.b32.xlu0 %v144, 4
  %v266 = vpop.permute.xlu0 %265
  %267 = vrot.lane.b32.xlu0 %v145, 4
  %v268 = vpop.permute.xlu0 %267
  %269 = vrot.lane.b32.xlu0 %v146, 4
  %v270 = vpop.permute.xlu0 %269
  %271 = vrot.lane.b32.xlu0 %v147, 4
  %v272 = vpop.permute.xlu0 %271
  %273 = vrot.lane.b32.xlu0 %v148, 4
  %v274 = vpop.permute.xlu0 %273
  %275 = vrot.lane.b32.xlu0 %v149, 4
  %v276 = vpop.permute.xlu0 %275
  %277 = vrot.lane.b32.xlu0 %v150, 4
  %v278 = vpop.permute.xlu0 %277
  %279 = vrot.lane.b32.xlu0 %v151, 4
  %v280 = vpop.permute.xlu0 %279
  %281 = vrot.lane.b32.xlu0 %v152, 4
  %v282 = vpop.permute.xlu0 %281
  %283 = vrot.lane.b32.xlu0 %v153, 4
  %v284 = vpop.permute.xlu0 %283
  %285 = vrot.lane.b32.xlu0 %v154, 4
  %v286 = vpop.permute.xlu0 %285
  %287 = vrot.lane.b32.xlu0 %v155, 4
  %v288 = vpop.permute.xlu0 %287
  %289 = vrot.lane.b32.xlu0 %v156, 4
  %v290 = vpop.permute.xlu0 %289
  %291 = vrot.lane.b32.xlu0 %v157, 4
  %v292 = vpop.permute.xlu0 %291
  %293 = vrot.lane.b32.xlu0 %v158, 4
  %v294 = vpop.permute.xlu0 %293
  %295 = vrot.lane.b32.xlu0 %v159, 4
  %v296 = vpop.permute.xlu0 %295
  %297 = vrot.lane.b32.xlu0 %v160, 4
  %v298 = vpop.permute.xlu0 %297
  %299 = vrot.lane.b32.xlu0 %v161, 4
  %v300 = vpop.permute.xlu0 %299
  %301 = vrot.lane.b32.xlu0 %v162, 4
  %v302 = vpop.permute.xlu0 %301
  %303 = vrot.lane.b32.xlu0 %v163, 4
  %v304 = vpop.permute.xlu0 %303
  %305 = vrot.lane.b32.xlu0 %v164, 4
  %v306 = vpop.permute.xlu0 %305
  %307 = vrot.lane.b32.xlu0 %v165, 4
  %v308 = vpop.permute.xlu0 %307
  %309 = vrot.lane.b32.xlu0 %v166, 4
  %v310 = vpop.permute.xlu0 %309
  %311 = vrot.lane.b32.xlu0 %v167, 4
  %v312 = vpop.permute.xlu0 %311
  %313 = vrot.lane.b32.xlu0 %v168, 4
  %v314 = vpop.permute.xlu0 %313
  %315 = vrot.lane.b32.xlu0 %v169, 4
  %v316 = vpop.permute.xlu0 %315
  %317 = vrot.lane.b32.xlu0 %v170, 4
  %v318 = vpop.permute.xlu0 %317
  %319 = vrot.lane.b32.xlu0 %v171, 4
  %v320 = vpop.permute.xlu0 %319
  %321 = vrot.lane.b32.xlu0 %v172, 4
  %v322 = vpop.permute.xlu0 %321
  %323 = vrot.lane.b32.xlu0 %v173, 4
  %v324 = vpop.permute.xlu0 %323
  %325 = vrot.lane.b32.xlu0 %v174, 4
  %v326 = vpop.permute.xlu0 %325
  %327 = vrot.lane.b32.xlu0 %v175, 4
  %v328 = vpop.permute.xlu0 %327
  %329 = vrot.lane.b32.xlu0 %v176, 4
  %v330 = vpop.permute.xlu0 %329
  %331 = vrot.lane.b32.xlu0 %v177, 4
  %v332 = vpop.permute.xlu0 %331
  %333 = vrot.lane.b32.xlu0 %v178, 4
  %v334 = vpop.permute.xlu0 %333
  %335 = vrot.lane.b32.xlu0 %v179, 4
  %v336 = vpop.permute.xlu0 %335
  %337 = vrot.lane.b32.xlu0 %v180, 4
  %v338 = vpop.permute.xlu0 %337
  %339 = vrot.lane.b32.xlu0 %v181, 4
  %v340 = vpop.permute.xlu0 %339
  %341 = vrot.lane.b32.xlu0 %v182, 4
  %v342 = vpop.permute.xlu0 %341
  %343 = vrot.lane.b32.xlu0 %v183, 4
  %v344 = vpop.permute.xlu0 %343
  %345 = vrot.lane.b32.xlu0 %v184, 4
  %v346 = vpop.permute.xlu0 %345
  %347 = vrot.lane.b32.xlu0 %v185, 4
  %v348 = vpop.permute.xlu0 %347
  %349 = vrot.lane.b32.xlu0 %v186, 4
  %v350 = vpop.permute.xlu0 %349
  %351 = vrot.lane.b32.xlu0 %v187, 4
  %v352 = vpop.permute.xlu0 %351
  %353 = vrot.lane.b32.xlu0 %v188, 4
  %v354 = vpop.permute.xlu0 %353
  %355 = vrot.lane.b32.xlu0 %v189, 4
  %v356 = vpop.permute.xlu0 %355
  %357 = vrot.lane.b32.xlu0 %v190, 4
  %v358 = vpop.permute.xlu0 %357
  %vm415 = vcmask 64544
  %416 = vst.msk [vmem:[#allocation3] sm:$0xff] %vm415, %v248
  %417 = vst.msk [vmem:[#allocation3 + $0x8] sm:$0xff] %vm415, %v250
  %418 = vst.msk [vmem:[#allocation3 + $0x10] sm:$0xff] %vm415, %v252
  %419 = vst.msk [vmem:[#allocation3 + $0x18] sm:$0xff] %vm415, %v254
  %420 = vst.msk [vmem:[#allocation3 + $0x20] sm:$0xff] %vm415, %v256
  %421 = vst.msk [vmem:[#allocation3 + $0x28] sm:$0xff] %vm415, %v258
  %422 = vst.msk [vmem:[#allocation3 + $0x30] sm:$0xff] %vm415, %v260
  %423 = vst.msk [vmem:[#allocation3 + $0x38] sm:$0xff] %vm415, %v262
  %424 = vst.msk [vmem:[#allocation3 + $0x40] sm:$0xff] %vm415, %v264
  %425 = vst.msk [vmem:[#allocation3 + $0x48] sm:$0xff] %vm415, %v266
  %426 = vst.msk [vmem:[#allocation3 + $0x50] sm:$0xff] %vm415, %v268
  %427 = vst.msk [vmem:[#allocation3 + $0x58] sm:$0xff] %vm415, %v270
  %428 = vst.msk [vmem:[#allocation3 + $0x60] sm:$0xff] %vm415, %v272
  %429 = vst.msk [vmem:[#allocation3 + $0x68] sm:$0xff] %vm415, %v274
  %430 = vst.msk [vmem:[#allocation3 + $0x70] sm:$0xff] %vm415, %v276
  %431 = vst.msk [vmem:[#allocation3 + $0x78] sm:$0xff] %vm415, %v278
  %432 = vst.msk [vmem:[#allocation3 + $0x80] sm:$0xff] %vm415, %v280
  %433 = vst.msk [vmem:[#allocation3 + $0x88] sm:$0xff] %vm415, %v282
  %434 = vst.msk [vmem:[#allocation3 + $0x90] sm:$0xff] %vm415, %v284
  %435 = vst.msk [vmem:[#allocation3 + $0x98] sm:$0xff] %vm415, %v286
  %436 = vst.msk [vmem:[#allocation3 + $0xa0] sm:$0xff] %vm415, %v288
  %437 = vst.msk [vmem:[#allocation3 + $0xa8] sm:$0xff] %vm415, %v290
  %438 = vst.msk [vmem:[#allocation3 + $0xb0] sm:$0xff] %vm415, %v292
  %439 = vst.msk [vmem:[#allocation3 + $0xb8] sm:$0xff] %vm415, %v294
  %440 = vst.msk [vmem:[#allocation3 + $0xc0] sm:$0xff] %vm415, %v296
  %441 = vst.msk [vmem:[#allocation3 + $0xc8] sm:$0xff] %vm415, %v298
  %442 = vst.msk [vmem:[#allocation3 + $0xd0] sm:$0xff] %vm415, %v300
  %443 = vst.msk [vmem:[#allocation3 + $0xd8] sm:$0xff] %vm415, %v302
  %444 = vst.msk [vmem:[#allocation3 + $0xe0] sm:$0xff] %vm415, %v304
  %445 = vst.msk [vmem:[#allocation3 + $0xe8] sm:$0xff] %vm415, %v306
  %446 = vst.msk [vmem:[#allocation3 + $0xf0] sm:$0xff] %vm415, %v308
  %447 = vst.msk [vmem:[#allocation3 + $0xf8] sm:$0xff] %vm415, %v310
  %448 = vst.msk [vmem:[#allocation3 + $0x100] sm:$0xff] %vm415, %v312
  %449 = vst.msk [vmem:[#allocation3 + $0x108] sm:$0xff] %vm415, %v314
  %450 = vst.msk [vmem:[#allocation3 + $0x110] sm:$0xff] %vm415, %v316
  %451 = vst.msk [vmem:[#allocation3 + $0x118] sm:$0xff] %vm415, %v318
  %452 = vst.msk [vmem:[#allocation3 + $0x120] sm:$0xff] %vm415, %v320
  %453 = vst.msk [vmem:[#allocation3 + $0x128] sm:$0xff] %vm415, %v322
  %454 = vst.msk [vmem:[#allocation3 + $0x130] sm:$0xff] %vm415, %v324
  %455 = vst.msk [vmem:[#allocation3 + $0x138] sm:$0xff] %vm415, %v326
  %456 = vst.msk [vmem:[#allocation3 + $0x140] sm:$0xff] %vm415, %v328
  %457 = vst.msk [vmem:[#allocation3 + $0x148] sm:$0xff] %vm415, %v330
  %458 = vst.msk [vmem:[#allocation3 + $0x150] sm:$0xff] %vm415, %v332
  %459 = vst.msk [vmem:[#allocation3 + $0x158] sm:$0xff] %vm415, %v334
  %460 = vst.msk [vmem:[#allocation3 + $0x160] sm:$0xff] %vm415, %v336
  %461 = vst.msk [vmem:[#allocation3 + $0x168] sm:$0xff] %vm415, %v338
  %462 = vst.msk [vmem:[#allocation3 + $0x170] sm:$0xff] %vm415, %v340
  %463 = vst.msk [vmem:[#allocation3 + $0x178] sm:$0xff] %vm415, %v342
  %464 = vst.msk [vmem:[#allocation3 + $0x180] sm:$0xff] %vm415, %v344
  %465 = vst.msk [vmem:[#allocation3 + $0x188] sm:$0xff] %vm415, %v346
  %466 = vst.msk [vmem:[#allocation3 + $0x190] sm:$0xff] %vm415, %v348
  %467 = vst.msk [vmem:[#allocation3 + $0x198] sm:$0xff] %vm415, %v350
  %468 = vst.msk [vmem:[#allocation3 + $0x1a0] sm:$0xff] %vm415, %v352
  %469 = vst.msk [vmem:[#allocation3 + $0x1a8] sm:$0xff] %vm415, %v354
  %470 = vst.msk [vmem:[#allocation3 + $0x1b0] sm:$0xff] %vm415, %v356
  %471 = vst.msk [vmem:[#allocation3 + $0x1b8] sm:$0xff] %vm415, %v358
  %v472 = vld [vmem:[%s0 + $0x10] sm:$0xff]
  %v473 = vld [vmem:[%s0 + $0x18] sm:$0xff]
  %v474 = vld [vmem:[%s0 + $0x20] sm:$0xff]
  %v475 = vld [vmem:[%s0 + $0x28] sm:$0xff]
  %v476 = vld [vmem:[%s0 + $0x30] sm:$0xff]
  %v477 = vld [vmem:[%s0 + $0x38] sm:$0xff]
  %v478 = vld [vmem:[%s0 + $0x40] sm:$0xff]
  %v479 = vld [vmem:[%s0 + $0x48] sm:$0xff]
  %v480 = vld [vmem:[%s0 + $0x50] sm:$0xff]
  %v481 = vld [vmem:[%s0 + $0x58] sm:$0xff]
  %v482 = vld [vmem:[%s0 + $0x60] sm:$0xff]
  %v483 = vld [vmem:[%s0 + $0x68] sm:$0xff]
  %v484 = vld [vmem:[%s0 + $0x70] sm:$0xff]
  %v485 = vld [vmem:[%s0 + $0x78] sm:$0xff]
  %v486 = vld [vmem:[%s0 + $0x80] sm:$0xff]
  %v487 = vld [vmem:[%s0 + $0x88] sm:$0xff]
  %v488 = vld [vmem:[%s0 + $0x90] sm:$0xff]
  %v489 = vld [vmem:[%s0 + $0x98] sm:$0xff]
  %v490 = vld [vmem:[%s0 + $0xa0] sm:$0xff]
  %v491 = vld [vmem:[%s0 + $0xa8] sm:$0xff]
  %v492 = vld [vmem:[%s0 + $0xb0] sm:$0xff]
  %v493 = vld [vmem:[%s0 + $0xb8] sm:$0xff]
  %v494 = vld [vmem:[%s0 + $0xc0] sm:$0xff]
  %v495 = vld [vmem:[%s0 + $0xc8] sm:$0xff]
  %v496 = vld [vmem:[%s0 + $0xd0] sm:$0xff]
  %v497 = vld [vmem:[%s0 + $0xd8] sm:$0xff]
  %v498 = vld [vmem:[%s0 + $0xe0] sm:$0xff]
  %v499 = vld [vmem:[%s0 + $0xe8] sm:$0xff]
  %v500 = vld [vmem:[%s0 + $0x110] sm:$0xff]
  %v501 = vld [vmem:[%s0 + $0x118] sm:$0xff]
  %v502 = vld [vmem:[%s0 + $0x120] sm:$0xff]
  %v503 = vld [vmem:[%s0 + $0x128] sm:$0xff]
  %v504 = vld [vmem:[%s0 + $0x130] sm:$0xff]
  %v505 = vld [vmem:[%s0 + $0x138] sm:$0xff]
  %v506 = vld [vmem:[%s0 + $0x140] sm:$0xff]
  %v507 = vld [vmem:[%s0 + $0x148] sm:$0xff]
  %v508 = vld [vmem:[%s0 + $0x150] sm:$0xff]
  %v509 = vld [vmem:[%s0 + $0x158] sm:$0xff]
  %v510 = vld [vmem:[%s0 + $0x160] sm:$0xff]
  %v511 = vld [vmem:[%s0 + $0x168] sm:$0xff]
  %v512 = vld [vmem:[%s0 + $0x170] sm:$0xff]
  %v513 = vld [vmem:[%s0 + $0x178] sm:$0xff]
  %v514 = vld [vmem:[%s0 + $0x180] sm:$0xff]
  %v515 = vld [vmem:[%s0 + $0x188] sm:$0xff]
  %v516 = vld [vmem:[%s0 + $0x190] sm:$0xff]
  %v517 = vld [vmem:[%s0 + $0x198] sm:$0xff]
  %v518 = vld [vmem:[%s0 + $0x1a0] sm:$0xff]
  %v519 = vld [vmem:[%s0 + $0x1a8] sm:$0xff]
  %v520 = vld [vmem:[%s0 + $0x1b0] sm:$0xff]
  %v521 = vld [vmem:[%s0 + $0x1b8] sm:$0xff]
  %v522 = vld [vmem:[%s0 + $0x1c0] sm:$0xff]
  %v523 = vld [vmem:[%s0 + $0x1c8] sm:$0xff]
  %v524 = vld [vmem:[%s0 + $0x1d0] sm:$0xff]
  %v525 = vld [vmem:[%s0 + $0x1d8] sm:$0xff]
  %v526 = vld [vmem:[%s0 + $0x1e0] sm:$0xff]
  %v527 = vld [vmem:[%s0 + $0x1e8] sm:$0xff]
  %584 = vrot.lane.b32.xlu0 %v472, 8
  %v585 = vpop.permute.xlu0 %584
  %586 = vrot.lane.b32.xlu0 %v473, 8
  %v587 = vpop.permute.xlu0 %586
  %588 = vrot.lane.b32.xlu0 %v474, 8
  %v589 = vpop.permute.xlu0 %588
  %590 = vrot.lane.b32.xlu0 %v475, 8
  %v591 = vpop.permute.xlu0 %590
  %592 = vrot.lane.b32.xlu0 %v476, 8
  %v593 = vpop.permute.xlu0 %592
  %594 = vrot.lane.b32.xlu0 %v477, 8
  %v595 = vpop.permute.xlu0 %594
  %596 = vrot.lane.b32.xlu0 %v478, 8
  %v597 = vpop.permute.xlu0 %596
  %598 = vrot.lane.b32.xlu0 %v479, 8
  %v599 = vpop.permute.xlu0 %598
  %600 = vrot.lane.b32.xlu0 %v480, 8
  %v601 = vpop.permute.xlu0 %600
  %602 = vrot.lane.b32.xlu0 %v481, 8
  %v603 = vpop.permute.xlu0 %602
  %604 = vrot.lane.b32.xlu0 %v482, 8
  %v605 = vpop.permute.xlu0 %604
  %606 = vrot.lane.b32.xlu0 %v483, 8
  %v607 = vpop.permute.xlu0 %606
  %608 = vrot.lane.b32.xlu0 %v484, 8
  %v609 = vpop.permute.xlu0 %608
  %610 = vrot.lane.b32.xlu0 %v485, 8
  %v611 = vpop.permute.xlu0 %610
  %612 = vrot.lane.b32.xlu0 %v486, 8
  %v613 = vpop.permute.xlu0 %612
  %614 = vrot.lane.b32.xlu0 %v487, 8
  %v615 = vpop.permute.xlu0 %614
  %616 = vrot.lane.b32.xlu0 %v488, 8
  %v617 = vpop.permute.xlu0 %616
  %618 = vrot.lane.b32.xlu0 %v489, 8
  %v619 = vpop.permute.xlu0 %618
  %620 = vrot.lane.b32.xlu0 %v490, 8
  %v621 = vpop.permute.xlu0 %620
  %622 = vrot.lane.b32.xlu0 %v491, 8
  %v623 = vpop.permute.xlu0 %622
  %624 = vrot.lane.b32.xlu0 %v492, 8
  %v625 = vpop.permute.xlu0 %624
  %626 = vrot.lane.b32.xlu0 %v493, 8
  %v627 = vpop.permute.xlu0 %626
  %628 = vrot.lane.b32.xlu0 %v494, 8
  %v629 = vpop.permute.xlu0 %628
  %630 = vrot.lane.b32.xlu0 %v495, 8
  %v631 = vpop.permute.xlu0 %630
  %632 = vrot.lane.b32.xlu0 %v496, 8
  %v633 = vpop.permute.xlu0 %632
  %634 = vrot.lane.b32.xlu0 %v497, 8
  %v635 = vpop.permute.xlu0 %634
  %636 = vrot.lane.b32.xlu0 %v498, 8
  %v637 = vpop.permute.xlu0 %636
  %638 = vrot.lane.b32.xlu0 %v499, 8
  %v639 = vpop.permute.xlu0 %638
  %640 = vrot.lane.b32.xlu0 %v500, 8
  %v641 = vpop.permute.xlu0 %640
  %642 = vrot.lane.b32.xlu0 %v501, 8
  %v643 = vpop.permute.xlu0 %642
  %644 = vrot.lane.b32.xlu0 %v502, 8
  %v645 = vpop.permute.xlu0 %644
  %646 = vrot.lane.b32.xlu0 %v503, 8
  %v647 = vpop.permute.xlu0 %646
  %648 = vrot.lane.b32.xlu0 %v504, 8
  %v649 = vpop.permute.xlu0 %648
  %650 = vrot.lane.b32.xlu0 %v505, 8
  %v651 = vpop.permute.xlu0 %650
  %652 = vrot.lane.b32.xlu0 %v506, 8
  %v653 = vpop.permute.xlu0 %652
  %654 = vrot.lane.b32.xlu0 %v507, 8
  %v655 = vpop.permute.xlu0 %654
  %656 = vrot.lane.b32.xlu0 %v508, 8
  %v657 = vpop.permute.xlu0 %656
  %658 = vrot.lane.b32.xlu0 %v509, 8
  %v659 = vpop.permute.xlu0 %658
  %660 = vrot.lane.b32.xlu0 %v510, 8
  %v661 = vpop.permute.xlu0 %660
  %662 = vrot.lane.b32.xlu0 %v511, 8
  %v663 = vpop.permute.xlu0 %662
  %664 = vrot.lane.b32.xlu0 %v512, 8
  %v665 = vpop.permute.xlu0 %664
  %666 = vrot.lane.b32.xlu0 %v513, 8
  %v667 = vpop.permute.xlu0 %666
  %668 = vrot.lane.b32.xlu0 %v514, 8
  %v669 = vpop.permute.xlu0 %668
  %670 = vrot.lane.b32.xlu0 %v515, 8
  %v671 = vpop.permute.xlu0 %670
  %672 = vrot.lane.b32.xlu0 %v516, 8
  %v673 = vpop.permute.xlu0 %672
  %674 = vrot.lane.b32.xlu0 %v517, 8
  %v675 = vpop.permute.xlu0 %674
  %676 = vrot.lane.b32.xlu0 %v518, 8
  %v677 = vpop.permute.xlu0 %676
  %678 = vrot.lane.b32.xlu0 %v519, 8
  %v679 = vpop.permute.xlu0 %678
  %680 = vrot.lane.b32.xlu0 %v520, 8
  %v681 = vpop.permute.xlu0 %680
  %682 = vrot.lane.b32.xlu0 %v521, 8
  %v683 = vpop.permute.xlu0 %682
  %684 = vrot.lane.b32.xlu0 %v522, 8
  %v685 = vpop.permute.xlu0 %684
  %686 = vrot.lane.b32.xlu0 %v523, 8
  %v687 = vpop.permute.xlu0 %686
  %688 = vrot.lane.b32.xlu0 %v524, 8
  %v689 = vpop.permute.xlu0 %688
  %690 = vrot.lane.b32.xlu0 %v525, 8
  %v691 = vpop.permute.xlu0 %690
  %692 = vrot.lane.b32.xlu0 %v526, 8
  %v693 = vpop.permute.xlu0 %692
  %694 = vrot.lane.b32.xlu0 %v527, 8
  %v695 = vpop.permute.xlu0 %694
  %vm752 = vcmask 97344
  %753 = vst.msk [vmem:[#allocation3] sm:$0xff] %vm752, %v585
  %754 = vst.msk [vmem:[#allocation3 + $0x8] sm:$0xff] %vm752, %v587
  %755 = vst.msk [vmem:[#allocation3 + $0x10] sm:$0xff] %vm752, %v589
  %756 = vst.msk [vmem:[#allocation3 + $0x18] sm:$0xff] %vm752, %v591
  %757 = vst.msk [vmem:[#allocation3 + $0x20] sm:$0xff] %vm752, %v593
  %758 = vst.msk [vmem:[#allocation3 + $0x28] sm:$0xff] %vm752, %v595
  %759 = vst.msk [vmem:[#allocation3 + $0x30] sm:$0xff] %vm752, %v597
  %760 = vst.msk [vmem:[#allocation3 + $0x38] sm:$0xff] %vm752, %v599
  %761 = vst.msk [vmem:[#allocation3 + $0x40] sm:$0xff] %vm752, %v601
  %762 = vst.msk [vmem:[#allocation3 + $0x48] sm:$0xff] %vm752, %v603
  %763 = vst.msk [vmem:[#allocation3 + $0x50] sm:$0xff] %vm752, %v605
  %764 = vst.msk [vmem:[#allocation3 + $0x58] sm:$0xff] %vm752, %v607
  %765 = vst.msk [vmem:[#allocation3 + $0x60] sm:$0xff] %vm752, %v609
  %766 = vst.msk [vmem:[#allocation3 + $0x68] sm:$0xff] %vm752, %v611
  %767 = vst.msk [vmem:[#allocation3 + $0x70] sm:$0xff] %vm752, %v613
  %768 = vst.msk [vmem:[#allocation3 + $0x78] sm:$0xff] %vm752, %v615
  %769 = vst.msk [vmem:[#allocation3 + $0x80] sm:$0xff] %vm752, %v617
  %770 = vst.msk [vmem:[#allocation3 + $0x88] sm:$0xff] %vm752, %v619
  %771 = vst.msk [vmem:[#allocation3 + $0x90] sm:$0xff] %vm752, %v621
  %772 = vst.msk [vmem:[#allocation3 + $0x98] sm:$0xff] %vm752, %v623
  %773 = vst.msk [vmem:[#allocation3 + $0xa0] sm:$0xff] %vm752, %v625
  %774 = vst.msk [vmem:[#allocation3 + $0xa8] sm:$0xff] %vm752, %v627
  %775 = vst.msk [vmem:[#allocation3 + $0xb0] sm:$0xff] %vm752, %v629
  %776 = vst.msk [vmem:[#allocation3 + $0xb8] sm:$0xff] %vm752, %v631
  %777 = vst.msk [vmem:[#allocation3 + $0xc0] sm:$0xff] %vm752, %v633
  %778 = vst.msk [vmem:[#allocation3 + $0xc8] sm:$0xff] %vm752, %v635
  %779 = vst.msk [vmem:[#allocation3 + $0xd0] sm:$0xff] %vm752, %v637
  %780 = vst.msk [vmem:[#allocation3 + $0xd8] sm:$0xff] %vm752, %v639
  %781 = vst.msk [vmem:[#allocation3 + $0xe0] sm:$0xff] %vm752, %v641
  %782 = vst.msk [vmem:[#allocation3 + $0xe8] sm:$0xff] %vm752, %v643
  %783 = vst.msk [vmem:[#allocation3 + $0xf0] sm:$0xff] %vm752, %v645
  %784 = vst.msk [vmem:[#allocation3 + $0xf8] sm:$0xff] %vm752, %v647
  %785 = vst.msk [vmem:[#allocation3 + $0x100] sm:$0xff] %vm752, %v649
  %786 = vst.msk [vmem:[#allocation3 + $0x108] sm:$0xff] %vm752, %v651
  %787 = vst.msk [vmem:[#allocation3 + $0x110] sm:$0xff] %vm752, %v653
  %788 = vst.msk [vmem:[#allocation3 + $0x118] sm:$0xff] %vm752, %v655
  %789 = vst.msk [vmem:[#allocation3 + $0x120] sm:$0xff] %vm752, %v657
  %790 = vst.msk [vmem:[#allocation3 + $0x128] sm:$0xff] %vm752, %v659
  %791 = vst.msk [vmem:[#allocation3 + $0x130] sm:$0xff] %vm752, %v661
  %792 = vst.msk [vmem:[#allocation3 + $0x138] sm:$0xff] %vm752, %v663
  %793 = vst.msk [vmem:[#allocation3 + $0x140] sm:$0xff] %vm752, %v665
  %794 = vst.msk [vmem:[#allocation3 + $0x148] sm:$0xff] %vm752, %v667
  %795 = vst.msk [vmem:[#allocation3 + $0x150] sm:$0xff] %vm752, %v669
  %796 = vst.msk [vmem:[#allocation3 + $0x158] sm:$0xff] %vm752, %v671
  %797 = vst.msk [vmem:[#allocation3 + $0x160] sm:$0xff] %vm752, %v673
  %798 = vst.msk [vmem:[#allocation3 + $0x168] sm:$0xff] %vm752, %v675
  %799 = vst.msk [vmem:[#allocation3 + $0x170] sm:$0xff] %vm752, %v677
  %800 = vst.msk [vmem:[#allocation3 + $0x178] sm:$0xff] %vm752, %v679
  %801 = vst.msk [vmem:[#allocation3 + $0x180] sm:$0xff] %vm752, %v681
  %802 = vst.msk [vmem:[#allocation3 + $0x188] sm:$0xff] %vm752, %v683
  %803 = vst.msk [vmem:[#allocation3 + $0x190] sm:$0xff] %vm752, %v685
  %804 = vst.msk [vmem:[#allocation3 + $0x198] sm:$0xff] %vm752, %v687
  %805 = vst.msk [vmem:[#allocation3 + $0x1a0] sm:$0xff] %vm752, %v689
  %806 = vst.msk [vmem:[#allocation3 + $0x1a8] sm:$0xff] %vm752, %v691
  %807 = vst.msk [vmem:[#allocation3 + $0x1b0] sm:$0xff] %vm752, %v693
  %808 = vst.msk [vmem:[#allocation3 + $0x1b8] sm:$0xff] %vm752, %v695
  %v809 = vld [vmem:[%s0 + $0x11] sm:$0xff]
  %v810 = vld [vmem:[%s0 + $0x19] sm:$0xff]
  %v811 = vld [vmem:[%s0 + $0x21] sm:$0xff]
  %v812 = vld [vmem:[%s0 + $0x29] sm:$0xff]
  %v813 = vld [vmem:[%s0 + $0x31] sm:$0xff]
  %v814 = vld [vmem:[%s0 + $0x39] sm:$0xff]
  %v815 = vld [vmem:[%s0 + $0x41] sm:$0xff]
  %v816 = vld [vmem:[%s0 + $0x49] sm:$0xff]
  %v817 = vld [vmem:[%s0 + $0x51] sm:$0xff]
  %v818 = vld [vmem:[%s0 + $0x59] sm:$0xff]
  %v819 = vld [vmem:[%s0 + $0x61] sm:$0xff]
  %v820 = vld [vmem:[%s0 + $0x69] sm:$0xff]
  %v821 = vld [vmem:[%s0 + $0x71] sm:$0xff]
  %v822 = vld [vmem:[%s0 + $0x79] sm:$0xff]
  %v823 = vld [vmem:[%s0 + $0x81] sm:$0xff]
  %v824 = vld [vmem:[%s0 + $0x89] sm:$0xff]
  %v825 = vld [vmem:[%s0 + $0x91] sm:$0xff]
  %v826 = vld [vmem:[%s0 + $0x99] sm:$0xff]
  %v827 = vld [vmem:[%s0 + $0xa1] sm:$0xff]
  %v828 = vld [vmem:[%s0 + $0xa9] sm:$0xff]
  %v829 = vld [vmem:[%s0 + $0xb1] sm:$0xff]
  %v830 = vld [vmem:[%s0 + $0xb9] sm:$0xff]
  %v831 = vld [vmem:[%s0 + $0xc1] sm:$0xff]
  %v832 = vld [vmem:[%s0 + $0xc9] sm:$0xff]
  %v833 = vld [vmem:[%s0 + $0xd1] sm:$0xff]
  %v834 = vld [vmem:[%s0 + $0xd9] sm:$0xff]
  %v835 = vld [vmem:[%s0 + $0xe1] sm:$0xff]
  %v836 = vld [vmem:[%s0 + $0xe9] sm:$0xff]
  %v837 = vld [vmem:[%s0 + $0x111] sm:$0xff]
  %v838 = vld [vmem:[%s0 + $0x119] sm:$0xff]
  %v839 = vld [vmem:[%s0 + $0x121] sm:$0xff]
  %v840 = vld [vmem:[%s0 + $0x129] sm:$0xff]
  %v841 = vld [vmem:[%s0 + $0x131] sm:$0xff]
  %v842 = vld [vmem:[%s0 + $0x139] sm:$0xff]
  %v843 = vld [vmem:[%s0 + $0x141] sm:$0xff]
  %v844 = vld [vmem:[%s0 + $0x149] sm:$0xff]
  %v845 = vld [vmem:[%s0 + $0x151] sm:$0xff]
  %v846 = vld [vmem:[%s0 + $0x159] sm:$0xff]
  %v847 = vld [vmem:[%s0 + $0x161] sm:$0xff]
  %v848 = vld [vmem:[%s0 + $0x169] sm:$0xff]
  %v849 = vld [vmem:[%s0 + $0x171] sm:$0xff]
  %v850 = vld [vmem:[%s0 + $0x179] sm:$0xff]
  %v851 = vld [vmem:[%s0 + $0x181] sm:$0xff]
  %v852 = vld [vmem:[%s0 + $0x189] sm:$0xff]
  %v853 = vld [vmem:[%s0 + $0x191] sm:$0xff]
  %v854 = vld [vmem:[%s0 + $0x199] sm:$0xff]
  %v855 = vld [vmem:[%s0 + $0x1a1] sm:$0xff]
  %v856 = vld [vmem:[%s0 + $0x1a9] sm:$0xff]
  %v857 = vld [vmem:[%s0 + $0x1b1] sm:$0xff]
  %v858 = vld [vmem:[%s0 + $0x1b9] sm:$0xff]
  %v859 = vld [vmem:[%s0 + $0x1c1] sm:$0xff]
  %v860 = vld [vmem:[%s0 + $0x1c9] sm:$0xff]
  %v861 = vld [vmem:[%s0 + $0x1d1] sm:$0xff]
  %v862 = vld [vmem:[%s0 + $0x1d9] sm:$0xff]
  %v863 = vld [vmem:[%s0 + $0x1e1] sm:$0xff]
  %v864 = vld [vmem:[%s0 + $0x1e9] sm:$0xff]
  %921 = vrot.lane.b32.xlu0 %v809, 12
  %v922 = vpop.permute.xlu0 %921
  %923 = vrot.lane.b32.xlu0 %v810, 12
  %v924 = vpop.permute.xlu0 %923
  %925 = vrot.lane.b32.xlu0 %v811, 12
  %v926 = vpop.permute.xlu0 %925
  %927 = vrot.lane.b32.xlu0 %v812, 12
  %v928 = vpop.permute.xlu0 %927
  %929 = vrot.lane.b32.xlu0 %v813, 12
  %v930 = vpop.permute.xlu0 %929
  %931 = vrot.lane.b32.xlu0 %v814, 12
  %v932 = vpop.permute.xlu0 %931
  %933 = vrot.lane.b32.xlu0 %v815, 12
  %v934 = vpop.permute.xlu0 %933
  %935 = vrot.lane.b32.xlu0 %v816, 12
  %v936 = vpop.permute.xlu0 %935
  %937 = vrot.lane.b32.xlu0 %v817, 12
  %v938 = vpop.permute.xlu0 %937
  %939 = vrot.lane.b32.xlu0 %v818, 12
  %v940 = vpop.permute.xlu0 %939
  %941 = vrot.lane.b32.xlu0 %v819, 12
  %v942 = vpop.permute.xlu0 %941
  %943 = vrot.lane.b32.xlu0 %v820, 12
  %v944 = vpop.permute.xlu0 %943
  %945 = vrot.lane.b32.xlu0 %v821, 12
  %v946 = vpop.permute.xlu0 %945
  %947 = vrot.lane.b32.xlu0 %v822, 12
  %v948 = vpop.permute.xlu0 %947
  %949 = vrot.lane.b32.xlu0 %v823, 12
  %v950 = vpop.permute.xlu0 %949
  %951 = vrot.lane.b32.xlu0 %v824, 12
  %v952 = vpop.permute.xlu0 %951
  %953 = vrot.lane.b32.xlu0 %v825, 12
  %v954 = vpop.permute.xlu0 %953
  %955 = vrot.lane.b32.xlu0 %v826, 12
  %v956 = vpop.permute.xlu0 %955
  %957 = vrot.lane.b32.xlu0 %v827, 12
  %v958 = vpop.permute.xlu0 %957
  %959 = vrot.lane.b32.xlu0 %v828, 12
  %v960 = vpop.permute.xlu0 %959
  %961 = vrot.lane.b32.xlu0 %v829, 12
  %v962 = vpop.permute.xlu0 %961
  %963 = vrot.lane.b32.xlu0 %v830, 12
  %v964 = vpop.permute.xlu0 %963
  %965 = vrot.lane.b32.xlu0 %v831, 12
  %v966 = vpop.permute.xlu0 %965
  %967 = vrot.lane.b32.xlu0 %v832, 12
  %v968 = vpop.permute.xlu0 %967
  %969 = vrot.lane.b32.xlu0 %v833, 12
  %v970 = vpop.permute.xlu0 %969
  %971 = vrot.lane.b32.xlu0 %v834, 12
  %v972 = vpop.permute.xlu0 %971
  %973 = vrot.lane.b32.xlu0 %v835, 12
  %v974 = vpop.permute.xlu0 %973
  %975 = vrot.lane.b32.xlu0 %v836, 12
  %v976 = vpop.permute.xlu0 %975
  %977 = vrot.lane.b32.xlu0 %v837, 12
  %v978 = vpop.permute.xlu0 %977
  %979 = vrot.lane.b32.xlu0 %v838, 12
  %v980 = vpop.permute.xlu0 %979
  %981 = vrot.lane.b32.xlu0 %v839, 12
  %v982 = vpop.permute.xlu0 %981
  %983 = vrot.lane.b32.xlu0 %v840, 12
  %v984 = vpop.permute.xlu0 %983
  %985 = vrot.lane.b32.xlu0 %v841, 12
  %v986 = vpop.permute.xlu0 %985
  %987 = vrot.lane.b32.xlu0 %v842, 12
  %v988 = vpop.permute.xlu0 %987
  %989 = vrot.lane.b32.xlu0 %v843, 12
  %v990 = vpop.permute.xlu0 %989
  %991 = vrot.lane.b32.xlu0 %v844, 12
  %v992 = vpop.permute.xlu0 %991
  %993 = vrot.lane.b32.xlu0 %v845, 12
  %v994 = vpop.permute.xlu0 %993
  %995 = vrot.lane.b32.xlu0 %v846, 12
  %v996 = vpop.permute.xlu0 %995
  %997 = vrot.lane.b32.xlu0 %v847, 12
  %v998 = vpop.permute.xlu0 %997
  %999 = vrot.lane.b32.xlu0 %v848, 12
  %v1000 = vpop.permute.xlu0 %999
  %1001 = vrot.lane.b32.xlu0 %v849, 12
  %v1002 = vpop.permute.xlu0 %1001
  %1003 = vrot.lane.b32.xlu0 %v850, 12
  %v1004 = vpop.permute.xlu0 %1003
  %1005 = vrot.lane.b32.xlu0 %v851, 12
  %v1006 = vpop.permute.xlu0 %1005
  %1007 = vrot.lane.b32.xlu0 %v852, 12
  %v1008 = vpop.permute.xlu0 %1007
  %1009 = vrot.lane.b32.xlu0 %v853, 12
  %v1010 = vpop.permute.xlu0 %1009
  %1011 = vrot.lane.b32.xlu0 %v854, 12
  %v1012 = vpop.permute.xlu0 %1011
  %1013 = vrot.lane.b32.xlu0 %v855, 12
  %v1014 = vpop.permute.xlu0 %1013
  %1015 = vrot.lane.b32.xlu0 %v856, 12
  %v1016 = vpop.permute.xlu0 %1015
  %1017 = vrot.lane.b32.xlu0 %v857, 12
  %v1018 = vpop.permute.xlu0 %1017
  %1019 = vrot.lane.b32.xlu0 %v858, 12
  %v1020 = vpop.permute.xlu0 %1019
  %1021 = vrot.lane.b32.xlu0 %v859, 12
  %v1022 = vpop.permute.xlu0 %1021
  %1023 = vrot.lane.b32.xlu0 %v860, 12
  %v1024 = vpop.permute.xlu0 %1023
  %1025 = vrot.lane.b32.xlu0 %v861, 12
  %v1026 = vpop.permute.xlu0 %1025
  %1027 = vrot.lane.b32.xlu0 %v862, 12
  %v1028 = vpop.permute.xlu0 %1027
  %1029 = vrot.lane.b32.xlu0 %v863, 12
  %v1030 = vpop.permute.xlu0 %1029
  %1031 = vrot.lane.b32.xlu0 %v864, 12
  %v1032 = vpop.permute.xlu0 %1031
  %vm1089 = vcmask 130144
  %1090 = vst.msk [vmem:[#allocation3] sm:$0xff] %vm1089, %v922
  %1091 = vst.msk [vmem:[#allocation3 + $0x8] sm:$0xff] %vm1089, %v924
  %1092 = vst.msk [vmem:[#allocation3 + $0x10] sm:$0xff] %vm1089, %v926
  %1093 = vst.msk [vmem:[#allocation3 + $0x18] sm:$0xff] %vm1089, %v928
  %1094 = vst.msk [vmem:[#allocation3 + $0x20] sm:$0xff] %vm1089, %v930
  %1095 = vst.msk [vmem:[#allocation3 + $0x28] sm:$0xff] %vm1089, %v932
  %1096 = vst.msk [vmem:[#allocation3 + $0x30] sm:$0xff] %vm1089, %v934
  %1097 = vst.msk [vmem:[#allocation3 + $0x38] sm:$0xff] %vm1089, %v936
  %1098 = vst.msk [vmem:[#allocation3 + $0x40] sm:$0xff] %vm1089, %v938
  %1099 = vst.msk [vmem:[#allocation3 + $0x48] sm:$0xff] %vm1089, %v940
  %1100 = vst.msk [vmem:[#allocation3 + $0x50] sm:$0xff] %vm1089, %v942
  %1101 = vst.msk [vmem:[#allocation3 + $0x58] sm:$0xff] %vm1089, %v944
  %1102 = vst.msk [vmem:[#allocation3 + $0x60] sm:$0xff] %vm1089, %v946
  %1103 = vst.msk [vmem:[#allocation3 + $0x68] sm:$0xff] %vm1089, %v948
  %1104 = vst.msk [vmem:[#allocation3 + $0x70] sm:$0xff] %vm1089, %v950
  %1105 = vst.msk [vmem:[#allocation3 + $0x78] sm:$0xff] %vm1089, %v952
  %1106 = vst.msk [vmem:[#allocation3 + $0x80] sm:$0xff] %vm1089, %v954
  %1107 = vst.msk [vmem:[#allocation3 + $0x88] sm:$0xff] %vm1089, %v956
  %1108 = vst.msk [vmem:[#allocation3 + $0x90] sm:$0xff] %vm1089, %v958
  %1109 = vst.msk [vmem:[#allocation3 + $0x98] sm:$0xff] %vm1089, %v960
  %1110 = vst.msk [vmem:[#allocation3 + $0xa0] sm:$0xff] %vm1089, %v962
  %1111 = vst.msk [vmem:[#allocation3 + $0xa8] sm:$0xff] %vm1089, %v964
  %1112 = vst.msk [vmem:[#allocation3 + $0xb0] sm:$0xff] %vm1089, %v966
  %1113 = vst.msk [vmem:[#allocation3 + $0xb8] sm:$0xff] %vm1089, %v968
  %1114 = vst.msk [vmem:[#allocation3 + $0xc0] sm:$0xff] %vm1089, %v970
  %1115 = vst.msk [vmem:[#allocation3 + $0xc8] sm:$0xff] %vm1089, %v972
  %1116 = vst.msk [vmem:[#allocation3 + $0xd0] sm:$0xff] %vm1089, %v974
  %1117 = vst.msk [vmem:[#allocation3 + $0xd8] sm:$0xff] %vm1089, %v976
  %1118 = vst.msk [vmem:[#allocation3 + $0xe0] sm:$0xff] %vm1089, %v978
  %1119 = vst.msk [vmem:[#allocation3 + $0xe8] sm:$0xff] %vm1089, %v980
  %1120 = vst.msk [vmem:[#allocation3 + $0xf0] sm:$0xff] %vm1089, %v982
  %1121 = vst.msk [vmem:[#allocation3 + $0xf8] sm:$0xff] %vm1089, %v984
  %1122 = vst.msk [vmem:[#allocation3 + $0x100] sm:$0xff] %vm1089, %v986
  %1123 = vst.msk [vmem:[#allocation3 + $0x108] sm:$0xff] %vm1089, %v988
  %1124 = vst.msk [vmem:[#allocation3 + $0x110] sm:$0xff] %vm1089, %v990
  %1125 = vst.msk [vmem:[#allocation3 + $0x118] sm:$0xff] %vm1089, %v992
  %1126 = vst.msk [vmem:[#allocation3 + $0x120] sm:$0xff] %vm1089, %v994
  %1127 = vst.msk [vmem:[#allocation3 + $0x128] sm:$0xff] %vm1089, %v996
  %1128 = vst.msk [vmem:[#allocation3 + $0x130] sm:$0xff] %vm1089, %v998
  %1129 = vst.msk [vmem:[#allocation3 + $0x138] sm:$0xff] %vm1089, %v1000
  %1130 = vst.msk [vmem:[#allocation3 + $0x140] sm:$0xff] %vm1089, %v1002
  %1131 = vst.msk [vmem:[#allocation3 + $0x148] sm:$0xff] %vm1089, %v1004
  %1132 = vst.msk [vmem:[#allocation3 + $0x150] sm:$0xff] %vm1089, %v1006
  %1133 = vst.msk [vmem:[#allocation3 + $0x158] sm:$0xff] %vm1089, %v1008
  %1134 = vst.msk [vmem:[#allocation3 + $0x160] sm:$0xff] %vm1089, %v1010
  %1135 = vst.msk [vmem:[#allocation3 + $0x168] sm:$0xff] %vm1089, %v1012
  %1136 = vst.msk [vmem:[#allocation3 + $0x170] sm:$0xff] %vm1089, %v1014
  %1137 = vst.msk [vmem:[#allocation3 + $0x178] sm:$0xff] %vm1089, %v1016
  %1138 = vst.msk [vmem:[#allocation3 + $0x180] sm:$0xff] %vm1089, %v1018
  %1139 = vst.msk [vmem:[#allocation3 + $0x188] sm:$0xff] %vm1089, %v1020
  %1140 = vst.msk [vmem:[#allocation3 + $0x190] sm:$0xff] %vm1089, %v1022
  %1141 = vst.msk [vmem:[#allocation3 + $0x198] sm:$0xff] %vm1089, %v1024
  %1142 = vst.msk [vmem:[#allocation3 + $0x1a0] sm:$0xff] %vm1089, %v1026
  %1143 = vst.msk [vmem:[#allocation3 + $0x1a8] sm:$0xff] %vm1089, %v1028
  %1144 = vst.msk [vmem:[#allocation3 + $0x1b0] sm:$0xff] %vm1089, %v1030
  %1145 = vst.msk [vmem:[#allocation3 + $0x1b8] sm:$0xff] %vm1089, %v1032
  %v1146 = vld [vmem:[#allocation3] sm:$0xff]
  %v1147 = vld [vmem:[#allocation3 + $0x8] sm:$0xff]
  %v1148 = vld [vmem:[#allocation3 + $0x10] sm:$0xff]
  %v1149 = vld [vmem:[#allocation3 + $0x18] sm:$0xff]
  %v1150 = vld [vmem:[#allocation3 + $0x20] sm:$0xff]
  %v1151 = vld [vmem:[#allocation3 + $0x28] sm:$0xff]
  %v1152 = vld [vmem:[#allocation3 + $0x30] sm:$0xff]
  %v1153 = vld [vmem:[#allocation3 + $0x38] sm:$0xff]
  %v1154 = vld [vmem:[#allocation3 + $0x40] sm:$0xff]
  %v1155 = vld [vmem:[#allocation3 + $0x48] sm:$0xff]
  %v1156 = vld [vmem:[#allocation3 + $0x50] sm:$0xff]
  %v1157 = vld [vmem:[#allocation3 + $0x58] sm:$0xff]
  %v1158 = vld [vmem:[#allocation3 + $0x60] sm:$0xff]
  %v1159 = vld [vmem:[#allocation3 + $0x68] sm:$0xff]
  %v1160 = vld [vmem:[#allocation3 + $0x70] sm:$0xff]
  %v1161 = vld [vmem:[#allocation3 + $0x78] sm:$0xff]
  %v1162 = vld [vmem:[#allocation3 + $0x80] sm:$0xff]
  %v1163 = vld [vmem:[#allocation3 + $0x88] sm:$0xff]
  %v1164 = vld [vmem:[#allocation3 + $0x90] sm:$0xff]
  %v1165 = vld [vmem:[#allocation3 + $0x98] sm:$0xff]
  %v1166 = vld [vmem:[#allocation3 + $0xa0] sm:$0xff]
  %v1167 = vld [vmem:[#allocation3 + $0xa8] sm:$0xff]
  %v1168 = vld [vmem:[#allocation3 + $0xb0] sm:$0xff]
  %v1169 = vld [vmem:[#allocation3 + $0xb8] sm:$0xff]
  %v1170 = vld [vmem:[#allocation3 + $0xc0] sm:$0xff]
  %v1171 = vld [vmem:[#allocation3 + $0xc8] sm:$0xff]
  %v1172 = vld [vmem:[#allocation3 + $0xd0] sm:$0xff]
  %v1173 = vld [vmem:[#allocation3 + $0xd8] sm:$0xff]
  %v1174 = vld [vmem:[#allocation3 + $0xe0] sm:$0xff]
  %v1175 = vld [vmem:[#allocation3 + $0xe8] sm:$0xff]
  %v1176 = vld [vmem:[#allocation3 + $0xf0] sm:$0xff]
  %v1177 = vld [vmem:[#allocation3 + $0xf8] sm:$0xff]
  %v1178 = vld [vmem:[#allocation3 + $0x100] sm:$0xff]
  %v1179 = vld [vmem:[#allocation3 + $0x108] sm:$0xff]
  %v1180 = vld [vmem:[#allocation3 + $0x110] sm:$0xff]
  %v1181 = vld [vmem:[#allocation3 + $0x118] sm:$0xff]
  %v1182 = vld [vmem:[#allocation3 + $0x120] sm:$0xff]
  %v1183 = vld [vmem:[#allocation3 + $0x128] sm:$0xff]
  %v1184 = vld [vmem:[#allocation3 + $0x130] sm:$0xff]
  %v1185 = vld [vmem:[#allocation3 + $0x138] sm:$0xff]
  %v1186 = vld [vmem:[#allocation3 + $0x140] sm:$0xff]
  %v1187 = vld [vmem:[#allocation3 + $0x148] sm:$0xff]
  %v1188 = vld [vmem:[#allocation3 + $0x150] sm:$0xff]
  %v1189 = vld [vmem:[#allocation3 + $0x158] sm:$0xff]
  %v1190 = vld [vmem:[#allocation3 + $0x160] sm:$0xff]
  %v1191 = vld [vmem:[#allocation3 + $0x168] sm:$0xff]
  %v1192 = vld [vmem:[#allocation3 + $0x170] sm:$0xff]
  %v1193 = vld [vmem:[#allocation3 + $0x178] sm:$0xff]
  %v1194 = vld [vmem:[#allocation3 + $0x180] sm:$0xff]
  %v1195 = vld [vmem:[#allocation3 + $0x188] sm:$0xff]
  %v1196 = vld [vmem:[#allocation3 + $0x190] sm:$0xff]
  %v1197 = vld [vmem:[#allocation3 + $0x198] sm:$0xff]
  %v1198 = vld [vmem:[#allocation3 + $0x1a0] sm:$0xff]
  %v1199 = vld [vmem:[#allocation3 + $0x1a8] sm:$0xff]
  %v1200 = vld [vmem:[#allocation3 + $0x1b0] sm:$0xff]
  %v1201 = vld [vmem:[#allocation3 + $0x1b8] sm:$0xff]
  %v1202 = vld [vmem:[%s1] sm:$0xff]
  %v1203 = vld [vmem:[%s1 + $0x8] sm:$0xff]
  %v1204 = vld [vmem:[%s2] sm:$0x1]
  %v1206 = vlaneseq
  %v1207 = vshrl.u32 %v1206, 7
  %v1208 = vsub.s32 0, %v1207
  %v1209 = vrot.slane %v1204, %v1208
  %vm1211 = vcmask 130048
  %v1213 = vsel %vm1211, %v1146, 0
  %v1216 = vsel %vm1211, %v1147, 0
  %v1219 = vsel %vm1211, %v1148, 0
  %v1222 = vsel %vm1211, %v1149, 0
  %v1225 = vsel %vm1211, %v1150, 0
  %v1228 = vsel %vm1211, %v1151, 0
  %v1231 = vsel %vm1211, %v1152, 0
  %v1234 = vsel %vm1211, %v1153, 0
  %v1237 = vsel %vm1211, %v1154, 0
  %v1240 = vsel %vm1211, %v1155, 0
  %v1243 = vsel %vm1211, %v1156, 0
  %v1246 = vsel %vm1211, %v1157, 0
  %v1249 = vsel %vm1211, %v1158, 0
  %v1252 = vsel %vm1211, %v1159, 0
  %v1255 = vsel %vm1211, %v1160, 0
  %v1258 = vsel %vm1211, %v1161, 0
  %v1261 = vsel %vm1211, %v1162, 0
  %v1264 = vsel %vm1211, %v1163, 0
  %v1267 = vsel %vm1211, %v1164, 0
  %v1270 = vsel %vm1211, %v1165, 0
  %v1273 = vsel %vm1211, %v1166, 0
  %v1276 = vsel %vm1211, %v1167, 0
  %v1279 = vsel %vm1211, %v1168, 0
  %v1282 = vsel %vm1211, %v1169, 0
  %v1285 = vsel %vm1211, %v1170, 0
  %v1288 = vsel %vm1211, %v1171, 0
  %v1291 = vsel %vm1211, %v1172, 0
  %v1294 = vsel %vm1211, %v1173, 0
  %v1297 = vsel %vm1211, %v1174, 0
  %v1300 = vsel %vm1211, %v1175, 0
  %v1303 = vsel %vm1211, %v1176, 0
  %v1306 = vsel %vm1211, %v1177, 0
  %v1309 = vsel %vm1211, %v1178, 0
  %v1312 = vsel %vm1211, %v1179, 0
  %v1315 = vsel %vm1211, %v1180, 0
  %v1318 = vsel %vm1211, %v1181, 0
  %v1321 = vsel %vm1211, %v1182, 0
  %v1324 = vsel %vm1211, %v1183, 0
  %v1327 = vsel %vm1211, %v1184, 0
  %v1330 = vsel %vm1211, %v1185, 0
  %v1333 = vsel %vm1211, %v1186, 0
  %v1336 = vsel %vm1211, %v1187, 0
  %v1339 = vsel %vm1211, %v1188, 0
  %v1342 = vsel %vm1211, %v1189, 0
  %v1345 = vsel %vm1211, %v1190, 0
  %v1348 = vsel %vm1211, %v1191, 0
  %v1351 = vsel %vm1211, %v1192, 0
  %v1354 = vsel %vm1211, %v1193, 0
  %v1357 = vsel %vm1211, %v1194, 0
  %v1360 = vsel %vm1211, %v1195, 0
  %v1363 = vsel %vm1211, %v1196, 0
  %v1366 = vsel %vm1211, %v1197, 0
  %v1369 = vsel %vm1211, %v1198, 0
  %v1372 = vsel %vm1211, %v1199, 0
  %v1375 = vsel %vm1211, %v1200, 0
  %v1378 = vsel %vm1211, %v1201, 0
  %1380 = vmatprep.subr.mxu0 0.0
  %1381 = vmatpush1.msra.mxu0 0.0
  %1382 = vmatprep.subr.mxu0 0.0
  %1383 = vmatpush1.msra.mxu0 0.0
  %1384 = vmatprep.subr.mxu0 0.0
  %1385 = vmatpush1.msra.mxu0 0.0
  %1386 = vmatprep.subr.mxu0 0.0
  %1387 = vmatpush1.msra.mxu0 0.0
  %1388 = vmatprep.subr.mxu0 0.0
  %1389 = vmatpush1.msra.mxu0 0.0
  %1390 = vmatprep.subr.mxu0 0.0
  %1391 = vmatpush1.msra.mxu0 0.0
  %1392 = vmatprep.subr.mxu0 0.0
  %1393 = vmatpush1.msra.mxu0 0.0
  %1394 = vmatprep.subr.mxu0 0.0
  %1395 = vmatpush1.msra.mxu0 0.0
  %1396 = vmatprep.subr.mxu0 0.0
  %1397 = vmatpush1.msra.mxu0 0.0
  %1398 = vmatprep.subr.mxu0 0.0
  %1399 = vmatpush1.msra.mxu0 0.0
  %1400 = vmatprep.subr.mxu0 0.0
  %1401 = vmatpush1.msra.mxu0 0.0
  %1402 = vmatprep.subr.mxu0 0.0
  %1403 = vmatpush1.msra.mxu0 0.0
  %1404 = vmatprep.subr.mxu0 0.0
  %1405 = vmatpush1.msra.mxu0 0.0
  %1406 = vmatprep.subr.mxu0 0.0
  %1407 = vmatpush1.msra.mxu0 0.0
  %1408 = vmatprep.subr.mxu0 0.0
  %1409 = vmatpush1.msra.mxu0 %v1203
  %1410 = vmatprep.subr.mxu0 0.0
  %1411 = vmatpush1.msra.mxu0 %v1202
  %1412 = vmatprep.subr.mxu0 0.0
  %1413 = vmatpush2.msra.mxu0 0.0
  %1414 = vmatprep.subr.mxu0 0.0
  %1415 = vmatpush2.msra.mxu0 0.0
  %1416 = vmatprep.subr.mxu0 0.0
  %1417 = vmatpush2.msra.mxu0 0.0
  %1418 = vmatprep.subr.mxu0 0.0
  %1419 = vmatpush2.msra.mxu0 0.0
  %1420 = vmatprep.subr.mxu0 0.0
  %1421 = vmatpush2.msra.mxu0 0.0
  %1422 = vmatprep.subr.mxu0 0.0
  %1423 = vmatpush2.msra.mxu0 0.0
  %1424 = vmatprep.subr.mxu0 0.0
  %1425 = vmatpush2.msra.mxu0 0.0
  %1426 = vmatprep.subr.mxu0 0.0
  %1427 = vmatpush2.msra.mxu0 0.0
  %1428 = vmatprep.subr.mxu0 0.0
  %1429 = vmatpush2.msra.mxu0 0.0
  %1430 = vmatprep.subr.mxu0 0.0
  %1431 = vmatpush2.msra.mxu0 0.0
  %1432 = vmatprep.subr.mxu0 0.0
  %1433 = vmatpush2.msra.mxu0 0.0
  %1434 = vmatprep.subr.mxu0 0.0
  %1435 = vmatpush2.msra.mxu0 0.0
  %1436 = vmatprep.subr.mxu0 0.0
  %1437 = vmatpush2.msra.mxu0 0.0
  %1438 = vmatprep.subr.mxu0 0.0
  %1439 = vmatpush2.msra.mxu0 0.0
  %1440 = vmatprep.subr.mxu0 0.0
  %1441 = vmatpush2.msra.mxu0 0.0
  %1442 = vmatprep.subr.mxu0 0.0
  %1443 = vmatpush2.msra.mxu0 0.0
  %1444 = vmatprep.mubr.f32.mxu0 0.0
  %1445 = vmatmul.mubr.f32.gmra.mxu0 %v1213
  %v1446 = vpop.f32.mrf.mxu0
  %v1447 = vadd.f32 %v1209, %v1446
  %v1448 = vpop.f32.mrf.mxu0
  %1449 = vmatprep.mubr.f32.mxu0 0.0
  %1450 = vmatmul.mubr.f32.gmra.mxu0 %v1216
  %v1451 = vpop.f32.mrf.mxu0
  %v1452 = vadd.f32 %v1209, %v1451
  %v1453 = vpop.f32.mrf.mxu0
  %1454 = vmatprep.mubr.f32.mxu0 0.0
  %1455 = vmatmul.mubr.f32.gmra.mxu0 %v1219
  %v1456 = vpop.f32.mrf.mxu0
  %v1457 = vadd.f32 %v1209, %v1456
  %v1458 = vpop.f32.mrf.mxu0
  %1459 = vmatprep.mubr.f32.mxu0 0.0
  %1460 = vmatmul.mubr.f32.gmra.mxu0 %v1222
  %v1461 = vpop.f32.mrf.mxu0
  %v1462 = vadd.f32 %v1209, %v1461
  %v1463 = vpop.f32.mrf.mxu0
  %1464 = vmatprep.mubr.f32.mxu0 0.0
  %1465 = vmatmul.mubr.f32.gmra.mxu0 %v1225
  %v1466 = vpop.f32.mrf.mxu0
  %v1467 = vadd.f32 %v1209, %v1466
  %v1468 = vpop.f32.mrf.mxu0
  %1469 = vmatprep.mubr.f32.mxu0 0.0
  %1470 = vmatmul.mubr.f32.gmra.mxu0 %v1228
  %v1471 = vpop.f32.mrf.mxu0
  %v1472 = vadd.f32 %v1209, %v1471
  %v1473 = vpop.f32.mrf.mxu0
  %1474 = vmatprep.mubr.f32.mxu0 0.0
  %1475 = vmatmul.mubr.f32.gmra.mxu0 %v1231
  %v1476 = vpop.f32.mrf.mxu0
  %v1477 = vadd.f32 %v1209, %v1476
  %v1478 = vpop.f32.mrf.mxu0
  %1479 = vmatprep.mubr.f32.mxu0 0.0
  %1480 = vmatmul.mubr.f32.gmra.mxu0 %v1234
  %v1481 = vpop.f32.mrf.mxu0
  %v1482 = vadd.f32 %v1209, %v1481
  %v1483 = vpop.f32.mrf.mxu0
  %1484 = vmatprep.mubr.f32.mxu0 0.0
  %1485 = vmatmul.mubr.f32.gmra.mxu0 %v1237
  %v1486 = vpop.f32.mrf.mxu0
  %v1487 = vadd.f32 %v1209, %v1486
  %v1488 = vpop.f32.mrf.mxu0
  %1489 = vmatprep.mubr.f32.mxu0 0.0
  %1490 = vmatmul.mubr.f32.gmra.mxu0 %v1240
  %v1491 = vpop.f32.mrf.mxu0
  %v1492 = vadd.f32 %v1209, %v1491
  %v1493 = vpop.f32.mrf.mxu0
  %1494 = vmatprep.mubr.f32.mxu0 0.0
  %1495 = vmatmul.mubr.f32.gmra.mxu0 %v1243
  %v1496 = vpop.f32.mrf.mxu0
  %v1497 = vadd.f32 %v1209, %v1496
  %v1498 = vpop.f32.mrf.mxu0
  %1499 = vmatprep.mubr.f32.mxu0 0.0
  %1500 = vmatmul.mubr.f32.gmra.mxu0 %v1246
  %v1501 = vpop.f32.mrf.mxu0
  %v1502 = vadd.f32 %v1209, %v1501
  %v1503 = vpop.f32.mrf.mxu0
  %1504 = vmatprep.mubr.f32.mxu0 0.0
  %1505 = vmatmul.mubr.f32.gmra.mxu0 %v1249
  %v1506 = vpop.f32.mrf.mxu0
  %v1507 = vadd.f32 %v1209, %v1506
  %v1508 = vpop.f32.mrf.mxu0
  %1509 = vmatprep.mubr.f32.mxu0 0.0
  %1510 = vmatmul.mubr.f32.gmra.mxu0 %v1252
  %v1511 = vpop.f32.mrf.mxu0
  %v1512 = vadd.f32 %v1209, %v1511
  %v1513 = vpop.f32.mrf.mxu0
  %1514 = vmatprep.mubr.f32.mxu0 0.0
  %1515 = vmatmul.mubr.f32.gmra.mxu0 %v1255
  %v1516 = vpop.f32.mrf.mxu0
  %v1517 = vadd.f32 %v1209, %v1516
  %v1518 = vpop.f32.mrf.mxu0
  %1519 = vmatprep.mubr.f32.mxu0 0.0
  %1520 = vmatmul.mubr.f32.gmra.mxu0 %v1258
  %v1521 = vpop.f32.mrf.mxu0
  %v1522 = vadd.f32 %v1209, %v1521
  %v1523 = vpop.f32.mrf.mxu0
  %1524 = vmatprep.mubr.f32.mxu0 0.0
  %1525 = vmatmul.mubr.f32.gmra.mxu0 %v1261
  %v1526 = vpop.f32.mrf.mxu0
  %v1527 = vadd.f32 %v1209, %v1526
  %v1528 = vpop.f32.mrf.mxu0
  %1529 = vmatprep.mubr.f32.mxu0 0.0
  %1530 = vmatmul.mubr.f32.gmra.mxu0 %v1264
  %v1531 = vpop.f32.mrf.mxu0
  %v1532 = vadd.f32 %v1209, %v1531
  %v1533 = vpop.f32.mrf.mxu0
  %1534 = vmatprep.mubr.f32.mxu0 0.0
  %1535 = vmatmul.mubr.f32.gmra.mxu0 %v1267
  %v1536 = vpop.f32.mrf.mxu0
  %v1537 = vadd.f32 %v1209, %v1536
  %v1538 = vpop.f32.mrf.mxu0
  %1539 = vmatprep.mubr.f32.mxu0 0.0
  %1540 = vmatmul.mubr.f32.gmra.mxu0 %v1270
  %v1541 = vpop.f32.mrf.mxu0
  %v1542 = vadd.f32 %v1209, %v1541
  %v1543 = vpop.f32.mrf.mxu0
  %1544 = vmatprep.mubr.f32.mxu0 0.0
  %1545 = vmatmul.mubr.f32.gmra.mxu0 %v1273
  %v1546 = vpop.f32.mrf.mxu0
  %v1547 = vadd.f32 %v1209, %v1546
  %v1548 = vpop.f32.mrf.mxu0
  %1549 = vmatprep.mubr.f32.mxu0 0.0
  %1550 = vmatmul.mubr.f32.gmra.mxu0 %v1276
  %v1551 = vpop.f32.mrf.mxu0
  %v1552 = vadd.f32 %v1209, %v1551
  %v1553 = vpop.f32.mrf.mxu0
  %1554 = vmatprep.mubr.f32.mxu0 0.0
  %1555 = vmatmul.mubr.f32.gmra.mxu0 %v1279
  %v1556 = vpop.f32.mrf.mxu0
  %v1557 = vadd.f32 %v1209, %v1556
  %v1558 = vpop.f32.mrf.mxu0
  %1559 = vmatprep.mubr.f32.mxu0 0.0
  %1560 = vmatmul.mubr.f32.gmra.mxu0 %v1282
  %v1561 = vpop.f32.mrf.mxu0
  %v1562 = vadd.f32 %v1209, %v1561
  %v1563 = vpop.f32.mrf.mxu0
  %1564 = vmatprep.mubr.f32.mxu0 0.0
  %1565 = vmatmul.mubr.f32.gmra.mxu0 %v1285
  %v1566 = vpop.f32.mrf.mxu0
  %v1567 = vadd.f32 %v1209, %v1566
  %v1568 = vpop.f32.mrf.mxu0
  %1569 = vmatprep.mubr.f32.mxu0 0.0
  %1570 = vmatmul.mubr.f32.gmra.mxu0 %v1288
  %v1571 = vpop.f32.mrf.mxu0
  %v1572 = vadd.f32 %v1209, %v1571
  %v1573 = vpop.f32.mrf.mxu0
  %1574 = vmatprep.mubr.f32.mxu0 0.0
  %1575 = vmatmul.mubr.f32.gmra.mxu0 %v1291
  %v1576 = vpop.f32.mrf.mxu0
  %v1577 = vadd.f32 %v1209, %v1576
  %v1578 = vpop.f32.mrf.mxu0
  %1579 = vmatprep.mubr.f32.mxu0 0.0
  %1580 = vmatmul.mubr.f32.gmra.mxu0 %v1294
  %v1581 = vpop.f32.mrf.mxu0
  %v1582 = vadd.f32 %v1209, %v1581
  %v1583 = vpop.f32.mrf.mxu0
  %1584 = vmatprep.mubr.f32.mxu0 0.0
  %1585 = vmatmul.mubr.f32.gmra.mxu0 %v1297
  %v1586 = vpop.f32.mrf.mxu0
  %v1587 = vadd.f32 %v1209, %v1586
  %v1588 = vpop.f32.mrf.mxu0
  %1589 = vmatprep.mubr.f32.mxu0 0.0
  %1590 = vmatmul.mubr.f32.gmra.mxu0 %v1300
  %v1591 = vpop.f32.mrf.mxu0
  %v1592 = vadd.f32 %v1209, %v1591
  %v1593 = vpop.f32.mrf.mxu0
  %1594 = vmatprep.mubr.f32.mxu0 0.0
  %1595 = vmatmul.mubr.f32.gmra.mxu0 %v1303
  %v1596 = vpop.f32.mrf.mxu0
  %v1597 = vadd.f32 %v1209, %v1596
  %v1598 = vpop.f32.mrf.mxu0
  %1599 = vmatprep.mubr.f32.mxu0 0.0
  %1600 = vmatmul.mubr.f32.gmra.mxu0 %v1306
  %v1601 = vpop.f32.mrf.mxu0
  %v1602 = vadd.f32 %v1209, %v1601
  %v1603 = vpop.f32.mrf.mxu0
  %1604 = vmatprep.mubr.f32.mxu0 0.0
  %1605 = vmatmul.mubr.f32.gmra.mxu0 %v1309
  %v1606 = vpop.f32.mrf.mxu0
  %v1607 = vadd.f32 %v1209, %v1606
  %v1608 = vpop.f32.mrf.mxu0
  %1609 = vmatprep.mubr.f32.mxu0 0.0
  %1610 = vmatmul.mubr.f32.gmra.mxu0 %v1312
  %v1611 = vpop.f32.mrf.mxu0
  %v1612 = vadd.f32 %v1209, %v1611
  %v1613 = vpop.f32.mrf.mxu0
  %1614 = vmatprep.mubr.f32.mxu0 0.0
  %1615 = vmatmul.mubr.f32.gmra.mxu0 %v1315
  %v1616 = vpop.f32.mrf.mxu0
  %v1617 = vadd.f32 %v1209, %v1616
  %v1618 = vpop.f32.mrf.mxu0
  %1619 = vmatprep.mubr.f32.mxu0 0.0
  %1620 = vmatmul.mubr.f32.gmra.mxu0 %v1318
  %v1621 = vpop.f32.mrf.mxu0
  %v1622 = vadd.f32 %v1209, %v1621
  %v1623 = vpop.f32.mrf.mxu0
  %1624 = vmatprep.mubr.f32.mxu0 0.0
  %1625 = vmatmul.mubr.f32.gmra.mxu0 %v1321
  %v1626 = vpop.f32.mrf.mxu0
  %v1627 = vadd.f32 %v1209, %v1626
  %v1628 = vpop.f32.mrf.mxu0
  %1629 = vmatprep.mubr.f32.mxu0 0.0
  %1630 = vmatmul.mubr.f32.gmra.mxu0 %v1324
  %v1631 = vpop.f32.mrf.mxu0
  %v1632 = vadd.f32 %v1209, %v1631
  %v1633 = vpop.f32.mrf.mxu0
  %1634 = vmatprep.mubr.f32.mxu0 0.0
  %1635 = vmatmul.mubr.f32.gmra.mxu0 %v1327
  %v1636 = vpop.f32.mrf.mxu0
  %v1637 = vadd.f32 %v1209, %v1636
  %v1638 = vpop.f32.mrf.mxu0
  %1639 = vmatprep.mubr.f32.mxu0 0.0
  %1640 = vmatmul.mubr.f32.gmra.mxu0 %v1330
  %v1641 = vpop.f32.mrf.mxu0
  %v1642 = vadd.f32 %v1209, %v1641
  %v1643 = vpop.f32.mrf.mxu0
  %1644 = vmatprep.mubr.f32.mxu0 0.0
  %1645 = vmatmul.mubr.f32.gmra.mxu0 %v1333
  %v1646 = vpop.f32.mrf.mxu0
  %v1647 = vadd.f32 %v1209, %v1646
  %v1648 = vpop.f32.mrf.mxu0
  %1649 = vmatprep.mubr.f32.mxu0 0.0
  %1650 = vmatmul.mubr.f32.gmra.mxu0 %v1336
  %v1651 = vpop.f32.mrf.mxu0
  %v1652 = vadd.f32 %v1209, %v1651
  %v1653 = vpop.f32.mrf.mxu0
  %1654 = vmatprep.mubr.f32.mxu0 0.0
  %1655 = vmatmul.mubr.f32.gmra.mxu0 %v1339
  %v1656 = vpop.f32.mrf.mxu0
  %v1657 = vadd.f32 %v1209, %v1656
  %v1658 = vpop.f32.mrf.mxu0
  %1659 = vmatprep.mubr.f32.mxu0 0.0
  %1660 = vmatmul.mubr.f32.gmra.mxu0 %v1342
  %v1661 = vpop.f32.mrf.mxu0
  %v1662 = vadd.f32 %v1209, %v1661
  %v1663 = vpop.f32.mrf.mxu0
  %1664 = vmatprep.mubr.f32.mxu0 0.0
  %1665 = vmatmul.mubr.f32.gmra.mxu0 %v1345
  %v1666 = vpop.f32.mrf.mxu0
  %v1667 = vadd.f32 %v1209, %v1666
  %v1668 = vpop.f32.mrf.mxu0
  %1669 = vmatprep.mubr.f32.mxu0 0.0
  %1670 = vmatmul.mubr.f32.gmra.mxu0 %v1348
  %v1671 = vpop.f32.mrf.mxu0
  %v1672 = vadd.f32 %v1209, %v1671
  %v1673 = vpop.f32.mrf.mxu0
  %1674 = vmatprep.mubr.f32.mxu0 0.0
  %1675 = vmatmul.mubr.f32.gmra.mxu0 %v1351
  %v1676 = vpop.f32.mrf.mxu0
  %v1677 = vadd.f32 %v1209, %v1676
  %v1678 = vpop.f32.mrf.mxu0
  %1679 = vmatprep.mubr.f32.mxu0 0.0
  %1680 = vmatmul.mubr.f32.gmra.mxu0 %v1354
  %v1681 = vpop.f32.mrf.mxu0
  %v1682 = vadd.f32 %v1209, %v1681
  %v1683 = vpop.f32.mrf.mxu0
  %1684 = vmatprep.mubr.f32.mxu0 0.0
  %1685 = vmatmul.mubr.f32.gmra.mxu0 %v1357
  %v1686 = vpop.f32.mrf.mxu0
  %v1687 = vadd.f32 %v1209, %v1686
  %v1688 = vpop.f32.mrf.mxu0
  %1689 = vmatprep.mubr.f32.mxu0 0.0
  %1690 = vmatmul.mubr.f32.gmra.mxu0 %v1360
  %v1691 = vpop.f32.mrf.mxu0
  %v1692 = vadd.f32 %v1209, %v1691
  %v1693 = vpop.f32.mrf.mxu0
  %1694 = vmatprep.mubr.f32.mxu0 0.0
  %1695 = vmatmul.mubr.f32.gmra.mxu0 %v1363
  %v1696 = vpop.f32.mrf.mxu0
  %v1697 = vadd.f32 %v1209, %v1696
  %v1698 = vpop.f32.mrf.mxu0
  %1699 = vmatprep.mubr.f32.mxu0 0.0
  %1700 = vmatmul.mubr.f32.gmra.mxu0 %v1366
  %v1701 = vpop.f32.mrf.mxu0
  %v1702 = vadd.f32 %v1209, %v1701
  %v1703 = vpop.f32.mrf.mxu0
  %1704 = vmatprep.mubr.f32.mxu0 0.0
  %1705 = vmatmul.mubr.f32.gmra.mxu0 %v1369
  %v1706 = vpop.f32.mrf.mxu0
  %v1707 = vadd.f32 %v1209, %v1706
  %v1708 = vpop.f32.mrf.mxu0
  %1709 = vmatprep.mubr.f32.mxu0 0.0
  %1710 = vmatmul.mubr.f32.gmra.mxu0 %v1372
  %v1711 = vpop.f32.mrf.mxu0
  %v1712 = vadd.f32 %v1209, %v1711
  %v1713 = vpop.f32.mrf.mxu0
  %1714 = vmatprep.mubr.f32.mxu0 0.0
  %1715 = vmatmul.mubr.f32.gmra.mxu0 %v1375
  %v1716 = vpop.f32.mrf.mxu0
  %v1717 = vadd.f32 %v1209, %v1716
  %v1718 = vpop.f32.mrf.mxu0
  %1719 = vmatprep.mubr.f32.mxu0 0.0
  %1720 = vmatmul.mubr.f32.gmra.mxu0 %v1378
  %v1721 = vpop.f32.mrf.mxu0
  %v1722 = vadd.f32 %v1209, %v1721
  %v1723 = vpop.f32.mrf.mxu0
  %1724 = vdwg.mxu0
  %v1725 = vmax.f32 %v1447, 0.0
  %v1726 = vmax.f32 %v1452, 0.0
  %v1727 = vmax.f32 %v1457, 0.0
  %v1728 = vmax.f32 %v1462, 0.0
  %v1729 = vmax.f32 %v1467, 0.0
  %v1730 = vmax.f32 %v1472, 0.0
  %v1731 = vmax.f32 %v1477, 0.0
  %v1732 = vmax.f32 %v1482, 0.0
  %v1733 = vmax.f32 %v1487, 0.0
  %v1734 = vmax.f32 %v1492, 0.0
  %v1735 = vmax.f32 %v1497, 0.0
  %v1736 = vmax.f32 %v1502, 0.0
  %v1737 = vmax.f32 %v1507, 0.0
  %v1738 = vmax.f32 %v1512, 0.0
  %v1739 = vmax.f32 %v1517, 0.0
  %v1740 = vmax.f32 %v1522, 0.0
  %v1741 = vmax.f32 %v1527, 0.0
  %v1742 = vmax.f32 %v1532, 0.0
  %v1743 = vmax.f32 %v1537, 0.0
  %v1744 = vmax.f32 %v1542, 0.0
  %v1745 = vmax.f32 %v1547, 0.0
  %v1746 = vmax.f32 %v1552, 0.0
  %v1747 = vmax.f32 %v1557, 0.0
  %v1748 = vmax.f32 %v1562, 0.0
  %v1749 = vmax.f32 %v1567, 0.0
  %v1750 = vmax.f32 %v1572, 0.0
  %v1751 = vmax.f32 %v1577, 0.0
  %v1752 = vmax.f32 %v1582, 0.0
  %v1753 = vmax.f32 %v1587, 0.0
  %v1754 = vmax.f32 %v1592, 0.0
  %v1755 = vmax.f32 %v1597, 0.0
  %v1756 = vmax.f32 %v1602, 0.0
  %v1757 = vmax.f32 %v1607, 0.0
  %v1758 = vmax.f32 %v1612, 0.0
  %v1759 = vmax.f32 %v1617, 0.0
  %v1760 = vmax.f32 %v1622, 0.0
  %v1761 = vmax.f32 %v1627, 0.0
  %v1762 = vmax.f32 %v1632, 0.0
  %v1763 = vmax.f32 %v1637, 0.0
  %v1764 = vmax.f32 %v1642, 0.0
  %v1765 = vmax.f32 %v1647, 0.0
  %v1766 = vmax.f32 %v1652, 0.0
  %v1767 = vmax.f32 %v1657, 0.0
  %v1768 = vmax.f32 %v1662, 0.0
  %v1769 = vmax.f32 %v1667, 0.0
  %v1770 = vmax.f32 %v1672, 0.0
  %v1771 = vmax.f32 %v1677, 0.0
  %v1772 = vmax.f32 %v1682, 0.0
  %v1773 = vmax.f32 %v1687, 0.0
  %v1774 = vmax.f32 %v1692, 0.0
  %v1775 = vmax.f32 %v1697, 0.0
  %v1776 = vmax.f32 %v1702, 0.0
  %v1777 = vmax.f32 %v1707, 0.0
  %v1778 = vmax.f32 %v1712, 0.0
  %v1779 = vmax.f32 %v1717, 0.0
  %v1780 = vmax.f32 %v1722, 0.0
  %1837 = vrot.lane.b32.xlu0 %v1725, 112
  %v1838 = vpop.permute.xlu0 %1837
  %1839 = vrot.lane.b32.xlu0 %v1726, 112
  %v1840 = vpop.permute.xlu0 %1839
  %1841 = vrot.lane.b32.xlu0 %v1727, 112
  %v1842 = vpop.permute.xlu0 %1841
  %1843 = vrot.lane.b32.xlu0 %v1728, 112
  %v1844 = vpop.permute.xlu0 %1843
  %1845 = vrot.lane.b32.xlu0 %v1729, 112
  %v1846 = vpop.permute.xlu0 %1845
  %1847 = vrot.lane.b32.xlu0 %v1730, 112
  %v1848 = vpop.permute.xlu0 %1847
  %1849 = vrot.lane.b32.xlu0 %v1731, 112
  %v1850 = vpop.permute.xlu0 %1849
  %1851 = vrot.lane.b32.xlu0 %v1732, 112
  %v1852 = vpop.permute.xlu0 %1851
  %1853 = vrot.lane.b32.xlu0 %v1733, 112
  %v1854 = vpop.permute.xlu0 %1853
  %1855 = vrot.lane.b32.xlu0 %v1734, 112
  %v1856 = vpop.permute.xlu0 %1855
  %1857 = vrot.lane.b32.xlu0 %v1735, 112
  %v1858 = vpop.permute.xlu0 %1857
  %1859 = vrot.lane.b32.xlu0 %v1736, 112
  %v1860 = vpop.permute.xlu0 %1859
  %1861 = vrot.lane.b32.xlu0 %v1737, 112
  %v1862 = vpop.permute.xlu0 %1861
  %1863 = vrot.lane.b32.xlu0 %v1738, 112
  %v1864 = vpop.permute.xlu0 %1863
  %1865 = vrot.lane.b32.xlu0 %v1739, 112
  %v1866 = vpop.permute.xlu0 %1865
  %1867 = vrot.lane.b32.xlu0 %v1740, 112
  %v1868 = vpop.permute.xlu0 %1867
  %1869 = vrot.lane.b32.xlu0 %v1741, 112
  %v1870 = vpop.permute.xlu0 %1869
  %1871 = vrot.lane.b32.xlu0 %v1742, 112
  %v1872 = vpop.permute.xlu0 %1871
  %1873 = vrot.lane.b32.xlu0 %v1743, 112
  %v1874 = vpop.permute.xlu0 %1873
  %1875 = vrot.lane.b32.xlu0 %v1744, 112
  %v1876 = vpop.permute.xlu0 %1875
  %1877 = vrot.lane.b32.xlu0 %v1745, 112
  %v1878 = vpop.permute.xlu0 %1877
  %1879 = vrot.lane.b32.xlu0 %v1746, 112
  %v1880 = vpop.permute.xlu0 %1879
  %1881 = vrot.lane.b32.xlu0 %v1747, 112
  %v1882 = vpop.permute.xlu0 %1881
  %1883 = vrot.lane.b32.xlu0 %v1748, 112
  %v1884 = vpop.permute.xlu0 %1883
  %1885 = vrot.lane.b32.xlu0 %v1749, 112
  %v1886 = vpop.permute.xlu0 %1885
  %1887 = vrot.lane.b32.xlu0 %v1750, 112
  %v1888 = vpop.permute.xlu0 %1887
  %1889 = vrot.lane.b32.xlu0 %v1751, 112
  %v1890 = vpop.permute.xlu0 %1889
  %1891 = vrot.lane.b32.xlu0 %v1752, 112
  %v1892 = vpop.permute.xlu0 %1891
  %1893 = vrot.lane.b32.xlu0 %v1753, 112
  %v1894 = vpop.permute.xlu0 %1893
  %1895 = vrot.lane.b32.xlu0 %v1754, 112
  %v1896 = vpop.permute.xlu0 %1895
  %1897 = vrot.lane.b32.xlu0 %v1755, 112
  %v1898 = vpop.permute.xlu0 %1897
  %1899 = vrot.lane.b32.xlu0 %v1756, 112
  %v1900 = vpop.permute.xlu0 %1899
  %1901 = vrot.lane.b32.xlu0 %v1757, 112
  %v1902 = vpop.permute.xlu0 %1901
  %1903 = vrot.lane.b32.xlu0 %v1758, 112
  %v1904 = vpop.permute.xlu0 %1903
  %1905 = vrot.lane.b32.xlu0 %v1759, 112
  %v1906 = vpop.permute.xlu0 %1905
  %1907 = vrot.lane.b32.xlu0 %v1760, 112
  %v1908 = vpop.permute.xlu0 %1907
  %1909 = vrot.lane.b32.xlu0 %v1761, 112
  %v1910 = vpop.permute.xlu0 %1909
  %1911 = vrot.lane.b32.xlu0 %v1762, 112
  %v1912 = vpop.permute.xlu0 %1911
  %1913 = vrot.lane.b32.xlu0 %v1763, 112
  %v1914 = vpop.permute.xlu0 %1913
  %1915 = vrot.lane.b32.xlu0 %v1764, 112
  %v1916 = vpop.permute.xlu0 %1915
  %1917 = vrot.lane.b32.xlu0 %v1765, 112
  %v1918 = vpop.permute.xlu0 %1917
  %1919 = vrot.lane.b32.xlu0 %v1766, 112
  %v1920 = vpop.permute.xlu0 %1919
  %1921 = vrot.lane.b32.xlu0 %v1767, 112
  %v1922 = vpop.permute.xlu0 %1921
  %1923 = vrot.lane.b32.xlu0 %v1768, 112
  %v1924 = vpop.permute.xlu0 %1923
  %1925 = vrot.lane.b32.xlu0 %v1769, 112
  %v1926 = vpop.permute.xlu0 %1925
  %1927 = vrot.lane.b32.xlu0 %v1770, 112
  %v1928 = vpop.permute.xlu0 %1927
  %1929 = vrot.lane.b32.xlu0 %v1771, 112
  %v1930 = vpop.permute.xlu0 %1929
  %1931 = vrot.lane.b32.xlu0 %v1772, 112
  %v1932 = vpop.permute.xlu0 %1931
  %1933 = vrot.lane.b32.xlu0 %v1773, 112
  %v1934 = vpop.permute.xlu0 %1933
  %1935 = vrot.lane.b32.xlu0 %v1774, 112
  %v1936 = vpop.permute.xlu0 %1935
  %1937 = vrot.lane.b32.xlu0 %v1775, 112
  %v1938 = vpop.permute.xlu0 %1937
  %1939 = vrot.lane.b32.xlu0 %v1776, 112
  %v1940 = vpop.permute.xlu0 %1939
  %1941 = vrot.lane.b32.xlu0 %v1777, 112
  %v1942 = vpop.permute.xlu0 %1941
  %1943 = vrot.lane.b32.xlu0 %v1778, 112
  %v1944 = vpop.permute.xlu0 %1943
  %1945 = vrot.lane.b32.xlu0 %v1779, 112
  %v1946 = vpop.permute.xlu0 %1945
  %1947 = vrot.lane.b32.xlu0 %v1780, 112
  %v1948 = vpop.permute.xlu0 %1947
  %v2005 = vmax.f32 %v1725, %v1838
  %v2006 = vmax.f32 %v1726, %v1840
  %v2007 = vmax.f32 %v1727, %v1842
  %v2008 = vmax.f32 %v1728, %v1844
  %v2009 = vmax.f32 %v1729, %v1846
  %v2010 = vmax.f32 %v1730, %v1848
  %v2011 = vmax.f32 %v1731, %v1850
  %v2012 = vmax.f32 %v1732, %v1852
  %v2013 = vmax.f32 %v1733, %v1854
  %v2014 = vmax.f32 %v1734, %v1856
  %v2015 = vmax.f32 %v1735, %v1858
  %v2016 = vmax.f32 %v1736, %v1860
  %v2017 = vmax.f32 %v1737, %v1862
  %v2018 = vmax.f32 %v1738, %v1864
  %v2019 = vmax.f32 %v1739, %v1866
  %v2020 = vmax.f32 %v1740, %v1868
  %v2021 = vmax.f32 %v1741, %v1870
  %v2022 = vmax.f32 %v1742, %v1872
  %v2023 = vmax.f32 %v1743, %v1874
  %v2024 = vmax.f32 %v1744, %v1876
  %v2025 = vmax.f32 %v1745, %v1878
  %v2026 = vmax.f32 %v1746, %v1880
  %v2027 = vmax.f32 %v1747, %v1882
  %v2028 = vmax.f32 %v1748, %v1884
  %v2029 = vmax.f32 %v1749, %v1886
  %v2030 = vmax.f32 %v1750, %v1888
  %v2031 = vmax.f32 %v1751, %v1890
  %v2032 = vmax.f32 %v1752, %v1892
  %v2033 = vmax.f32 %v1753, %v1894
  %v2034 = vmax.f32 %v1754, %v1896
  %v2035 = vmax.f32 %v1755, %v1898
  %v2036 = vmax.f32 %v1756, %v1900
  %v2037 = vmax.f32 %v1757, %v1902
  %v2038 = vmax.f32 %v1758, %v1904
  %v2039 = vmax.f32 %v1759, %v1906
  %v2040 = vmax.f32 %v1760, %v1908
  %v2041 = vmax.f32 %v1761, %v1910
  %v2042 = vmax.f32 %v1762, %v1912
  %v2043 = vmax.f32 %v1763, %v1914
  %v2044 = vmax.f32 %v1764, %v1916
  %v2045 = vmax.f32 %v1765, %v1918
  %v2046 = vmax.f32 %v1766, %v1920
  %v2047 = vmax.f32 %v1767, %v1922
  %v2048 = vmax.f32 %v1768, %v1924
  %v2049 = vmax.f32 %v1769, %v1926
  %v2050 = vmax.f32 %v1770, %v1928
  %v2051 = vmax.f32 %v1771, %v1930
  %v2052 = vmax.f32 %v1772, %v1932
  %v2053 = vmax.f32 %v1773, %v1934
  %v2054 = vmax.f32 %v1774, %v1936
  %v2055 = vmax.f32 %v1775, %v1938
  %v2056 = vmax.f32 %v1776, %v1940
  %v2057 = vmax.f32 %v1777, %v1942
  %v2058 = vmax.f32 %v1778, %v1944
  %v2059 = vmax.f32 %v1779, %v1946
  %v2060 = vmax.f32 %v1780, %v1948
  %2117 = vrot.lane.b32.xlu0 %v2005, 96
  %v2118 = vpop.permute.xlu0 %2117
  %2119 = vrot.lane.b32.xlu0 %v2006, 96
  %v2120 = vpop.permute.xlu0 %2119
  %2121 = vrot.lane.b32.xlu0 %v2007, 96
  %v2122 = vpop.permute.xlu0 %2121
  %2123 = vrot.lane.b32.xlu0 %v2008, 96
  %v2124 = vpop.permute.xlu0 %2123
  %2125 = vrot.lane.b32.xlu0 %v2009, 96
  %v2126 = vpop.permute.xlu0 %2125
  %2127 = vrot.lane.b32.xlu0 %v2010, 96
  %v2128 = vpop.permute.xlu0 %2127
  %2129 = vrot.lane.b32.xlu0 %v2011, 96
  %v2130 = vpop.permute.xlu0 %2129
  %2131 = vrot.lane.b32.xlu0 %v2012, 96
  %v2132 = vpop.permute.xlu0 %2131
  %2133 = vrot.lane.b32.xlu0 %v2013, 96
  %v2134 = vpop.permute.xlu0 %2133
  %2135 = vrot.lane.b32.xlu0 %v2014, 96
  %v2136 = vpop.permute.xlu0 %2135
  %2137 = vrot.lane.b32.xlu0 %v2015, 96
  %v2138 = vpop.permute.xlu0 %2137
  %2139 = vrot.lane.b32.xlu0 %v2016, 96
  %v2140 = vpop.permute.xlu0 %2139
  %2141 = vrot.lane.b32.xlu0 %v2017, 96
  %v2142 = vpop.permute.xlu0 %2141
  %2143 = vrot.lane.b32.xlu0 %v2018, 96
  %v2144 = vpop.permute.xlu0 %2143
  %2145 = vrot.lane.b32.xlu0 %v2019, 96
  %v2146 = vpop.permute.xlu0 %2145
  %2147 = vrot.lane.b32.xlu0 %v2020, 96
  %v2148 = vpop.permute.xlu0 %2147
  %2149 = vrot.lane.b32.xlu0 %v2021, 96
  %v2150 = vpop.permute.xlu0 %2149
  %2151 = vrot.lane.b32.xlu0 %v2022, 96
  %v2152 = vpop.permute.xlu0 %2151
  %2153 = vrot.lane.b32.xlu0 %v2023, 96
  %v2154 = vpop.permute.xlu0 %2153
  %2155 = vrot.lane.b32.xlu0 %v2024, 96
  %v2156 = vpop.permute.xlu0 %2155
  %2157 = vrot.lane.b32.xlu0 %v2025, 96
  %v2158 = vpop.permute.xlu0 %2157
  %2159 = vrot.lane.b32.xlu0 %v2026, 96
  %v2160 = vpop.permute.xlu0 %2159
  %2161 = vrot.lane.b32.xlu0 %v2027, 96
  %v2162 = vpop.permute.xlu0 %2161
  %2163 = vrot.lane.b32.xlu0 %v2028, 96
  %v2164 = vpop.permute.xlu0 %2163
  %2165 = vrot.lane.b32.xlu0 %v2029, 96
  %v2166 = vpop.permute.xlu0 %2165
  %2167 = vrot.lane.b32.xlu0 %v2030, 96
  %v2168 = vpop.permute.xlu0 %2167
  %2169 = vrot.lane.b32.xlu0 %v2031, 96
  %v2170 = vpop.permute.xlu0 %2169
  %2171 = vrot.lane.b32.xlu0 %v2032, 96
  %v2172 = vpop.permute.xlu0 %2171
  %2173 = vrot.lane.b32.xlu0 %v2033, 96
  %v2174 = vpop.permute.xlu0 %2173
  %2175 = vrot.lane.b32.xlu0 %v2034, 96
  %v2176 = vpop.permute.xlu0 %2175
  %2177 = vrot.lane.b32.xlu0 %v2035, 96
  %v2178 = vpop.permute.xlu0 %2177
  %2179 = vrot.lane.b32.xlu0 %v2036, 96
  %v2180 = vpop.permute.xlu0 %2179
  %2181 = vrot.lane.b32.xlu0 %v2037, 96
  %v2182 = vpop.permute.xlu0 %2181
  %2183 = vrot.lane.b32.xlu0 %v2038, 96
  %v2184 = vpop.permute.xlu0 %2183
  %2185 = vrot.lane.b32.xlu0 %v2039, 96
  %v2186 = vpop.permute.xlu0 %2185
  %2187 = vrot.lane.b32.xlu0 %v2040, 96
  %v2188 = vpop.permute.xlu0 %2187
  %2189 = vrot.lane.b32.xlu0 %v2041, 96
  %v2190 = vpop.permute.xlu0 %2189
  %2191 = vrot.lane.b32.xlu0 %v2042, 96
  %v2192 = vpop.permute.xlu0 %2191
  %2193 = vrot.lane.b32.xlu0 %v2043, 96
  %v2194 = vpop.permute.xlu0 %2193
  %2195 = vrot.lane.b32.xlu0 %v2044, 96
  %v2196 = vpop.permute.xlu0 %2195
  %2197 = vrot.lane.b32.xlu0 %v2045, 96
  %v2198 = vpop.permute.xlu0 %2197
  %2199 = vrot.lane.b32.xlu0 %v2046, 96
  %v2200 = vpop.permute.xlu0 %2199
  %2201 = vrot.lane.b32.xlu0 %v2047, 96
  %v2202 = vpop.permute.xlu0 %2201
  %2203 = vrot.lane.b32.xlu0 %v2048, 96
  %v2204 = vpop.permute.xlu0 %2203
  %2205 = vrot.lane.b32.xlu0 %v2049, 96
  %v2206 = vpop.permute.xlu0 %2205
  %2207 = vrot.lane.b32.xlu0 %v2050, 96
  %v2208 = vpop.permute.xlu0 %2207
  %2209 = vrot.lane.b32.xlu0 %v2051, 96
  %v2210 = vpop.permute.xlu0 %2209
  %2211 = vrot.lane.b32.xlu0 %v2052, 96
  %v2212 = vpop.permute.xlu0 %2211
  %2213 = vrot.lane.b32.xlu0 %v2053, 96
  %v2214 = vpop.permute.xlu0 %2213
  %2215 = vrot.lane.b32.xlu0 %v2054, 96
  %v2216 = vpop.permute.xlu0 %2215
  %2217 = vrot.lane.b32.xlu0 %v2055, 96
  %v2218 = vpop.permute.xlu0 %2217
  %2219 = vrot.lane.b32.xlu0 %v2056, 96
  %v2220 = vpop.permute.xlu0 %2219
  %2221 = vrot.lane.b32.xlu0 %v2057, 96
  %v2222 = vpop.permute.xlu0 %2221
  %2223 = vrot.lane.b32.xlu0 %v2058, 96
  %v2224 = vpop.permute.xlu0 %2223
  %2225 = vrot.lane.b32.xlu0 %v2059, 96
  %v2226 = vpop.permute.xlu0 %2225
  %2227 = vrot.lane.b32.xlu0 %v2060, 96
  %v2228 = vpop.permute.xlu0 %2227
  %v2285 = vmax.f32 %v2005, %v2118
  %v2286 = vmax.f32 %v2006, %v2120
  %v2287 = vmax.f32 %v2007, %v2122
  %v2288 = vmax.f32 %v2008, %v2124
  %v2289 = vmax.f32 %v2009, %v2126
  %v2290 = vmax.f32 %v2010, %v2128
  %v2291 = vmax.f32 %v2011, %v2130
  %v2292 = vmax.f32 %v2012, %v2132
  %v2293 = vmax.f32 %v2013, %v2134
  %v2294 = vmax.f32 %v2014, %v2136
  %v2295 = vmax.f32 %v2015, %v2138
  %v2296 = vmax.f32 %v2016, %v2140
  %v2297 = vmax.f32 %v2017, %v2142
  %v2298 = vmax.f32 %v2018, %v2144
  %v2299 = vmax.f32 %v2019, %v2146
  %v2300 = vmax.f32 %v2020, %v2148
  %v2301 = vmax.f32 %v2021, %v2150
  %v2302 = vmax.f32 %v2022, %v2152
  %v2303 = vmax.f32 %v2023, %v2154
  %v2304 = vmax.f32 %v2024, %v2156
  %v2305 = vmax.f32 %v2025, %v2158
  %v2306 = vmax.f32 %v2026, %v2160
  %v2307 = vmax.f32 %v2027, %v2162
  %v2308 = vmax.f32 %v2028, %v2164
  %v2309 = vmax.f32 %v2029, %v2166
  %v2310 = vmax.f32 %v2030, %v2168
  %v2311 = vmax.f32 %v2031, %v2170
  %v2312 = vmax.f32 %v2032, %v2172
  %v2313 = vmax.f32 %v2033, %v2174
  %v2314 = vmax.f32 %v2034, %v2176
  %v2315 = vmax.f32 %v2035, %v2178
  %v2316 = vmax.f32 %v2036, %v2180
  %v2317 = vmax.f32 %v2037, %v2182
  %v2318 = vmax.f32 %v2038, %v2184
  %v2319 = vmax.f32 %v2039, %v2186
  %v2320 = vmax.f32 %v2040, %v2188
  %v2321 = vmax.f32 %v2041, %v2190
  %v2322 = vmax.f32 %v2042, %v2192
  %v2323 = vmax.f32 %v2043, %v2194
  %v2324 = vmax.f32 %v2044, %v2196
  %v2325 = vmax.f32 %v2045, %v2198
  %v2326 = vmax.f32 %v2046, %v2200
  %v2327 = vmax.f32 %v2047, %v2202
  %v2328 = vmax.f32 %v2048, %v2204
  %v2329 = vmax.f32 %v2049, %v2206
  %v2330 = vmax.f32 %v2050, %v2208
  %v2331 = vmax.f32 %v2051, %v2210
  %v2332 = vmax.f32 %v2052, %v2212
  %v2333 = vmax.f32 %v2053, %v2214
  %v2334 = vmax.f32 %v2054, %v2216
  %v2335 = vmax.f32 %v2055, %v2218
  %v2336 = vmax.f32 %v2056, %v2220
  %v2337 = vmax.f32 %v2057, %v2222
  %v2338 = vmax.f32 %v2058, %v2224
  %v2339 = vmax.f32 %v2059, %v2226
  %v2340 = vmax.f32 %v2060, %v2228
  %2341 = vst.msk [vmem:[%s5] sm:$0xff] %vm1211, %v2285
  %2342 = vst.msk [vmem:[%s5 + $0x8] sm:$0xff] %vm1211, %v2286
  %2343 = vst.msk [vmem:[%s5 + $0x10] sm:$0xff] %vm1211, %v2287
  %2344 = vst.msk [vmem:[%s5 + $0x18] sm:$0xff] %vm1211, %v2288
  %2345 = vst.msk [vmem:[%s5 + $0x20] sm:$0xff] %vm1211, %v2289
  %2346 = vst.msk [vmem:[%s5 + $0x28] sm:$0xff] %vm1211, %v2290
  %2347 = vst.msk [vmem:[%s5 + $0x30] sm:$0xff] %vm1211, %v2291
  %2348 = vst.msk [vmem:[%s5 + $0x38] sm:$0xff] %vm1211, %v2292
  %2349 = vst.msk [vmem:[%s5 + $0x40] sm:$0xff] %vm1211, %v2293
  %2350 = vst.msk [vmem:[%s5 + $0x48] sm:$0xff] %vm1211, %v2294
  %2351 = vst.msk [vmem:[%s5 + $0x50] sm:$0xff] %vm1211, %v2295
  %2352 = vst.msk [vmem:[%s5 + $0x58] sm:$0xff] %vm1211, %v2296
  %2353 = vst.msk [vmem:[%s5 + $0x60] sm:$0xff] %vm1211, %v2297
  %2354 = vst.msk [vmem:[%s5 + $0x68] sm:$0xff] %vm1211, %v2298
  %2355 = vst.msk [vmem:[%s5 + $0x70] sm:$0xff] %vm1211, %v2299
  %2356 = vst.msk [vmem:[%s5 + $0x78] sm:$0xff] %vm1211, %v2300
  %2357 = vst.msk [vmem:[%s5 + $0x80] sm:$0xff] %vm1211, %v2301
  %2358 = vst.msk [vmem:[%s5 + $0x88] sm:$0xff] %vm1211, %v2302
  %2359 = vst.msk [vmem:[%s5 + $0x90] sm:$0xff] %vm1211, %v2303
  %2360 = vst.msk [vmem:[%s5 + $0x98] sm:$0xff] %vm1211, %v2304
  %2361 = vst.msk [vmem:[%s5 + $0xa0] sm:$0xff] %vm1211, %v2305
  %2362 = vst.msk [vmem:[%s5 + $0xa8] sm:$0xff] %vm1211, %v2306
  %2363 = vst.msk [vmem:[%s5 + $0xb0] sm:$0xff] %vm1211, %v2307
  %2364 = vst.msk [vmem:[%s5 + $0xb8] sm:$0xff] %vm1211, %v2308
  %2365 = vst.msk [vmem:[%s5 + $0xc0] sm:$0xff] %vm1211, %v2309
  %2366 = vst.msk [vmem:[%s5 + $0xc8] sm:$0xff] %vm1211, %v2310
  %2367 = vst.msk [vmem:[%s5 + $0xd0] sm:$0xff] %vm1211, %v2311
  %2368 = vst.msk [vmem:[%s5 + $0xd8] sm:$0xff] %vm1211, %v2312
  %2369 = vst.msk [vmem:[%s5 + $0xe0] sm:$0xff] %vm1211, %v2313
  %2370 = vst.msk [vmem:[%s5 + $0xe8] sm:$0xff] %vm1211, %v2314
  %2371 = vst.msk [vmem:[%s5 + $0xf0] sm:$0xff] %vm1211, %v2315
  %2372 = vst.msk [vmem:[%s5 + $0xf8] sm:$0xff] %vm1211, %v2316
  %2373 = vst.msk [vmem:[%s5 + $0x100] sm:$0xff] %vm1211, %v2317
  %2374 = vst.msk [vmem:[%s5 + $0x108] sm:$0xff] %vm1211, %v2318
  %2375 = vst.msk [vmem:[%s5 + $0x110] sm:$0xff] %vm1211, %v2319
  %2376 = vst.msk [vmem:[%s5 + $0x118] sm:$0xff] %vm1211, %v2320
  %2377 = vst.msk [vmem:[%s5 + $0x120] sm:$0xff] %vm1211, %v2321
  %2378 = vst.msk [vmem:[%s5 + $0x128] sm:$0xff] %vm1211, %v2322
  %2379 = vst.msk [vmem:[%s5 + $0x130] sm:$0xff] %vm1211, %v2323
  %2380 = vst.msk [vmem:[%s5 + $0x138] sm:$0xff] %vm1211, %v2324
  %2381 = vst.msk [vmem:[%s5 + $0x140] sm:$0xff] %vm1211, %v2325
  %2382 = vst.msk [vmem:[%s5 + $0x148] sm:$0xff] %vm1211, %v2326
  %2383 = vst.msk [vmem:[%s5 + $0x150] sm:$0xff] %vm1211, %v2327
  %2384 = vst.msk [vmem:[%s5 + $0x158] sm:$0xff] %vm1211, %v2328
  %2385 = vst.msk [vmem:[%s5 + $0x160] sm:$0xff] %vm1211, %v2329
  %2386 = vst.msk [vmem:[%s5 + $0x168] sm:$0xff] %vm1211, %v2330
  %2387 = vst.msk [vmem:[%s5 + $0x170] sm:$0xff] %vm1211, %v2331
  %2388 = vst.msk [vmem:[%s5 + $0x178] sm:$0xff] %vm1211, %v2332
  %2389 = vst.msk [vmem:[%s5 + $0x180] sm:$0xff] %vm1211, %v2333
  %2390 = vst.msk [vmem:[%s5 + $0x188] sm:$0xff] %vm1211, %v2334
  %2391 = vst.msk [vmem:[%s5 + $0x190] sm:$0xff] %vm1211, %v2335
  %2392 = vst.msk [vmem:[%s5 + $0x198] sm:$0xff] %vm1211, %v2336
  %2393 = vst.msk [vmem:[%s5 + $0x1a0] sm:$0xff] %vm1211, %v2337
  %2394 = vst.msk [vmem:[%s5 + $0x1a8] sm:$0xff] %vm1211, %v2338
  %2395 = vst.msk [vmem:[%s5 + $0x1b0] sm:$0xff] %vm1211, %v2339
  %2396 = vst.msk [vmem:[%s5 + $0x1b8] sm:$0xff] %vm1211, %v2340
  %v2397 = vlaneseq
  %v2398 = vshrl.u32 %v2397, 7
  %v2399 = vadd.s32 %v2398, 8
  %v2400 = vadd.s32 %v2398, 16
  %v2401 = vadd.s32 %v2398, 24
  %v2402 = vadd.s32 %v2398, 32
  %v2403 = vadd.s32 %v2398, 40
  %v2404 = vadd.s32 %v2398, 48
  %v2405 = vadd.s32 %v2398, 56
  %v2406 = vadd.s32 %v2398, 64
  %v2407 = vadd.s32 %v2398, 72
  %v2408 = vadd.s32 %v2398, 80
  %v2409 = vadd.s32 %v2398, 88
  %v2410 = vadd.s32 %v2398, 96
  %v2411 = vadd.s32 %v2398, 104
  %v2412 = vadd.s32 %v2398, 112
  %v2413 = vadd.s32 %v2398, 120
  %v2414 = vadd.s32 %v2398, 128
  %v2415 = vadd.s32 %v2398, 136
  %v2416 = vadd.s32 %v2398, 144
  %v2417 = vadd.s32 %v2398, 152
  %v2418 = vadd.s32 %v2398, 160
  %v2419 = vadd.s32 %v2398, 168
  %v2420 = vadd.s32 %v2398, 176
  %v2421 = vadd.s32 %v2398, 184
  %v2422 = vadd.s32 %v2398, 192
  %v2423 = vadd.s32 %v2398, 200
  %v2424 = vadd.s32 %v2398, 208
  %v2425 = vadd.s32 %v2398, 216
  %vm2426 = vcmp.lt.s32.totalorder %v2398, 0
  %v2427 = vsub.s32 0, %v2398
  %v2428 = vsel %vm2426, %v2427, %v2398
  %v2429 = vshrl.u32 %v2428, 4
  %v2430 = vand.u32 %v2428, 15
  %v2431 = vsub.s32 0, %v2430
  %v2432 = vsel %vm2426, %v2431, %v2430
  %vm2433 = vcmp.lt.s32.totalorder %v2399, 0
  %v2434 = vsub.s32 0, %v2399
  %v2435 = vsel %vm2433, %v2434, %v2399
  %v2436 = vshrl.u32 %v2435, 4
  %v2437 = vand.u32 %v2435, 15
  %v2438 = vsub.s32 0, %v2437
  %v2439 = vsel %vm2433, %v2438, %v2437
  %vm2440 = vcmp.lt.s32.totalorder %v2400, 0
  %v2441 = vsub.s32 0, %v2400
  %v2442 = vsel %vm2440, %v2441, %v2400
  %v2443 = vshrl.u32 %v2442, 4
  %v2444 = vand.u32 %v2442, 15
  %v2445 = vsub.s32 0, %v2444
  %v2446 = vsel %vm2440, %v2445, %v2444
  %vm2447 = vcmp.lt.s32.totalorder %v2401, 0
  %v2448 = vsub.s32 0, %v2401
  %v2449 = vsel %vm2447, %v2448, %v2401
  %v2450 = vshrl.u32 %v2449, 4
  %v2451 = vand.u32 %v2449, 15
  %v2452 = vsub.s32 0, %v2451
  %v2453 = vsel %vm2447, %v2452, %v2451
  %vm2454 = vcmp.lt.s32.totalorder %v2402, 0
  %v2455 = vsub.s32 0, %v2402
  %v2456 = vsel %vm2454, %v2455, %v2402
  %v2457 = vshrl.u32 %v2456, 4
  %v2458 = vand.u32 %v2456, 15
  %v2459 = vsub.s32 0, %v2458
  %v2460 = vsel %vm2454, %v2459, %v2458
  %vm2461 = vcmp.lt.s32.totalorder %v2403, 0
  %v2462 = vsub.s32 0, %v2403
  %v2463 = vsel %vm2461, %v2462, %v2403
  %v2464 = vshrl.u32 %v2463, 4
  %v2465 = vand.u32 %v2463, 15
  %v2466 = vsub.s32 0, %v2465
  %v2467 = vsel %vm2461, %v2466, %v2465
  %vm2468 = vcmp.lt.s32.totalorder %v2404, 0
  %v2469 = vsub.s32 0, %v2404
  %v2470 = vsel %vm2468, %v2469, %v2404
  %v2471 = vshrl.u32 %v2470, 4
  %v2472 = vand.u32 %v2470, 15
  %v2473 = vsub.s32 0, %v2472
  %v2474 = vsel %vm2468, %v2473, %v2472
  %vm2475 = vcmp.lt.s32.totalorder %v2405, 0
  %v2476 = vsub.s32 0, %v2405
  %v2477 = vsel %vm2475, %v2476, %v2405
  %v2478 = vshrl.u32 %v2477, 4
  %v2479 = vand.u32 %v2477, 15
  %v2480 = vsub.s32 0, %v2479
  %v2481 = vsel %vm2475, %v2480, %v2479
  %vm2482 = vcmp.lt.s32.totalorder %v2406, 0
  %v2483 = vsub.s32 0, %v2406
  %v2484 = vsel %vm2482, %v2483, %v2406
  %v2485 = vshrl.u32 %v2484, 4
  %v2486 = vand.u32 %v2484, 15
  %v2487 = vsub.s32 0, %v2486
  %v2488 = vsel %vm2482, %v2487, %v2486
  %vm2489 = vcmp.lt.s32.totalorder %v2407, 0
  %v2490 = vsub.s32 0, %v2407
  %v2491 = vsel %vm2489, %v2490, %v2407
  %v2492 = vshrl.u32 %v2491, 4
  %v2493 = vand.u32 %v2491, 15
  %v2494 = vsub.s32 0, %v2493
  %v2495 = vsel %vm2489, %v2494, %v2493
  %vm2496 = vcmp.lt.s32.totalorder %v2408, 0
  %v2497 = vsub.s32 0, %v2408
  %v2498 = vsel %vm2496, %v2497, %v2408
  %v2499 = vshrl.u32 %v2498, 4
  %v2500 = vand.u32 %v2498, 15
  %v2501 = vsub.s32 0, %v2500
  %v2502 = vsel %vm2496, %v2501, %v2500
  %vm2503 = vcmp.lt.s32.totalorder %v2409, 0
  %v2504 = vsub.s32 0, %v2409
  %v2505 = vsel %vm2503, %v2504, %v2409
  %v2506 = vshrl.u32 %v2505, 4
  %v2507 = vand.u32 %v2505, 15
  %v2508 = vsub.s32 0, %v2507
  %v2509 = vsel %vm2503, %v2508, %v2507
  %vm2510 = vcmp.lt.s32.totalorder %v2410, 0
  %v2511 = vsub.s32 0, %v2410
  %v2512 = vsel %vm2510, %v2511, %v2410
  %v2513 = vshrl.u32 %v2512, 4
  %v2514 = vand.u32 %v2512, 15
  %v2515 = vsub.s32 0, %v2514
  %v2516 = vsel %vm2510, %v2515, %v2514
  %vm2517 = vcmp.lt.s32.totalorder %v2411, 0
  %v2518 = vsub.s32 0, %v2411
  %v2519 = vsel %vm2517, %v2518, %v2411
  %v2520 = vshrl.u32 %v2519, 4
  %v2521 = vand.u32 %v2519, 15
  %v2522 = vsub.s32 0, %v2521
  %v2523 = vsel %vm2517, %v2522, %v2521
  %vm2524 = vcmp.lt.s32.totalorder %v2412, 0
  %v2525 = vsub.s32 0, %v2412
  %v2526 = vsel %vm2524, %v2525, %v2412
  %v2527 = vshrl.u32 %v2526, 4
  %v2528 = vand.u32 %v2526, 15
  %v2529 = vsub.s32 0, %v2528
  %v2530 = vsel %vm2524, %v2529, %v2528
  %vm2531 = vcmp.lt.s32.totalorder %v2413, 0
  %v2532 = vsub.s32 0, %v2413
  %v2533 = vsel %vm2531, %v2532, %v2413
  %v2534 = vshrl.u32 %v2533, 4
  %v2535 = vand.u32 %v2533, 15
  %v2536 = vsub.s32 0, %v2535
  %v2537 = vsel %vm2531, %v2536, %v2535
  %vm2538 = vcmp.lt.s32.totalorder %v2414, 0
  %v2539 = vsub.s32 0, %v2414
  %v2540 = vsel %vm2538, %v2539, %v2414
  %v2541 = vshrl.u32 %v2540, 4
  %v2542 = vand.u32 %v2540, 15
  %v2543 = vsub.s32 0, %v2542
  %v2544 = vsel %vm2538, %v2543, %v2542
  %vm2545 = vcmp.lt.s32.totalorder %v2415, 0
  %v2546 = vsub.s32 0, %v2415
  %v2547 = vsel %vm2545, %v2546, %v2415
  %v2548 = vshrl.u32 %v2547, 4
  %v2549 = vand.u32 %v2547, 15
  %v2550 = vsub.s32 0, %v2549
  %v2551 = vsel %vm2545, %v2550, %v2549
  %vm2552 = vcmp.lt.s32.totalorder %v2416, 0
  %v2553 = vsub.s32 0, %v2416
  %v2554 = vsel %vm2552, %v2553, %v2416
  %v2555 = vshrl.u32 %v2554, 4
  %v2556 = vand.u32 %v2554, 15
  %v2557 = vsub.s32 0, %v2556
  %v2558 = vsel %vm2552, %v2557, %v2556
  %vm2559 = vcmp.lt.s32.totalorder %v2417, 0
  %v2560 = vsub.s32 0, %v2417
  %v2561 = vsel %vm2559, %v2560, %v2417
  %v2562 = vshrl.u32 %v2561, 4
  %v2563 = vand.u32 %v2561, 15
  %v2564 = vsub.s32 0, %v2563
  %v2565 = vsel %vm2559, %v2564, %v2563
  %vm2566 = vcmp.lt.s32.totalorder %v2418, 0
  %v2567 = vsub.s32 0, %v2418
  %v2568 = vsel %vm2566, %v2567, %v2418
  %v2569 = vshrl.u32 %v2568, 4
  %v2570 = vand.u32 %v2568, 15
  %v2571 = vsub.s32 0, %v2570
  %v2572 = vsel %vm2566, %v2571, %v2570
  %vm2573 = vcmp.lt.s32.totalorder %v2419, 0
  %v2574 = vsub.s32 0, %v2419
  %v2575 = vsel %vm2573, %v2574, %v2419
  %v2576 = vshrl.u32 %v2575, 4
  %v2577 = vand.u32 %v2575, 15
  %v2578 = vsub.s32 0, %v2577
  %v2579 = vsel %vm2573, %v2578, %v2577
  %vm2580 = vcmp.lt.s32.totalorder %v2420, 0
  %v2581 = vsub.s32 0, %v2420
  %v2582 = vsel %vm2580, %v2581, %v2420
  %v2583 = vshrl.u32 %v2582, 4
  %v2584 = vand.u32 %v2582, 15
  %v2585 = vsub.s32 0, %v2584
  %v2586 = vsel %vm2580, %v2585, %v2584
  %vm2587 = vcmp.lt.s32.totalorder %v2421, 0
  %v2588 = vsub.s32 0, %v2421
  %v2589 = vsel %vm2587, %v2588, %v2421
  %v2590 = vshrl.u32 %v2589, 4
  %v2591 = vand.u32 %v2589, 15
  %v2592 = vsub.s32 0, %v2591
  %v2593 = vsel %vm2587, %v2592, %v2591
  %vm2594 = vcmp.lt.s32.totalorder %v2422, 0
  %v2595 = vsub.s32 0, %v2422
  %v2596 = vsel %vm2594, %v2595, %v2422
  %v2597 = vshrl.u32 %v2596, 4
  %v2598 = vand.u32 %v2596, 15
  %v2599 = vsub.s32 0, %v2598
  %v2600 = vsel %vm2594, %v2599, %v2598
  %vm2601 = vcmp.lt.s32.totalorder %v2423, 0
  %v2602 = vsub.s32 0, %v2423
  %v2603 = vsel %vm2601, %v2602, %v2423
  %v2604 = vshrl.u32 %v2603, 4
  %v2605 = vand.u32 %v2603, 15
  %v2606 = vsub.s32 0, %v2605
  %v2607 = vsel %vm2601, %v2606, %v2605
  %vm2608 = vcmp.lt.s32.totalorder %v2424, 0
  %v2609 = vsub.s32 0, %v2424
  %v2610 = vsel %vm2608, %v2609, %v2424
  %v2611 = vshrl.u32 %v2610, 4
  %v2612 = vand.u32 %v2610, 15
  %v2613 = vsub.s32 0, %v2612
  %v2614 = vsel %vm2608, %v2613, %v2612
  %vm2615 = vcmp.lt.s32.totalorder %v2425, 0
  %v2616 = vsub.s32 0, %v2425
  %v2617 = vsel %vm2615, %v2616, %v2425
  %v2618 = vshrl.u32 %v2617, 4
  %v2619 = vand.u32 %v2617, 15
  %v2620 = vsub.s32 0, %v2619
  %v2621 = vsel %vm2615, %v2620, %v2619
  %vm2622 = vcmp.ne.s32.totalorder %v2432, 0
  %vm2623 = vcmp.ne.s32.totalorder %v2439, 0
  %vm2624 = vcmp.ne.s32.totalorder %v2446, 0
  %vm2625 = vcmp.ne.s32.totalorder %v2453, 0
  %vm2626 = vcmp.ne.s32.totalorder %v2460, 0
  %vm2627 = vcmp.ne.s32.totalorder %v2467, 0
  %vm2628 = vcmp.ne.s32.totalorder %v2474, 0
  %vm2629 = vcmp.ne.s32.totalorder %v2481, 0
  %vm2630 = vcmp.ne.s32.totalorder %v2488, 0
  %vm2631 = vcmp.ne.s32.totalorder %v2495, 0
  %vm2632 = vcmp.ne.s32.totalorder %v2502, 0
  %vm2633 = vcmp.ne.s32.totalorder %v2509, 0
  %vm2634 = vcmp.ne.s32.totalorder %v2516, 0
  %vm2635 = vcmp.ne.s32.totalorder %v2523, 0
  %vm2636 = vcmp.ne.s32.totalorder %v2530, 0
  %vm2637 = vcmp.ne.s32.totalorder %v2537, 0
  %vm2638 = vcmp.ne.s32.totalorder %v2544, 0
  %vm2639 = vcmp.ne.s32.totalorder %v2551, 0
  %vm2640 = vcmp.ne.s32.totalorder %v2558, 0
  %vm2641 = vcmp.ne.s32.totalorder %v2565, 0
  %vm2642 = vcmp.ne.s32.totalorder %v2572, 0
  %vm2643 = vcmp.ne.s32.totalorder %v2579, 0
  %vm2644 = vcmp.ne.s32.totalorder %v2586, 0
  %vm2645 = vcmp.ne.s32.totalorder %v2593, 0
  %vm2646 = vcmp.ne.s32.totalorder %v2600, 0
  %vm2647 = vcmp.ne.s32.totalorder %v2607, 0
  %vm2648 = vcmp.ne.s32.totalorder %v2614, 0
  %vm2649 = vcmp.ne.s32.totalorder %v2621, 0
  %vm2650 = vcmp.lt.s32.totalorder %v2432, 0
  %vm2651 = vcmp.lt.s32.totalorder %v2439, 0
  %vm2652 = vcmp.lt.s32.totalorder %v2446, 0
  %vm2653 = vcmp.lt.s32.totalorder %v2453, 0
  %vm2654 = vcmp.lt.s32.totalorder %v2460, 0
  %vm2655 = vcmp.lt.s32.totalorder %v2467, 0
  %vm2656 = vcmp.lt.s32.totalorder %v2474, 0
  %vm2657 = vcmp.lt.s32.totalorder %v2481, 0
  %vm2658 = vcmp.lt.s32.totalorder %v2488, 0
  %vm2659 = vcmp.lt.s32.totalorder %v2495, 0
  %vm2660 = vcmp.lt.s32.totalorder %v2502, 0
  %vm2661 = vcmp.lt.s32.totalorder %v2509, 0
  %vm2662 = vcmp.lt.s32.totalorder %v2516, 0
  %vm2663 = vcmp.lt.s32.totalorder %v2523, 0
  %vm2664 = vcmp.lt.s32.totalorder %v2530, 0
  %vm2665 = vcmp.lt.s32.totalorder %v2537, 0
  %vm2666 = vcmp.lt.s32.totalorder %v2544, 0
  %vm2667 = vcmp.lt.s32.totalorder %v2551, 0
  %vm2668 = vcmp.lt.s32.totalorder %v2558, 0
  %vm2669 = vcmp.lt.s32.totalorder %v2565, 0
  %vm2670 = vcmp.lt.s32.totalorder %v2572, 0
  %vm2671 = vcmp.lt.s32.totalorder %v2579, 0
  %vm2672 = vcmp.lt.s32.totalorder %v2586, 0
  %vm2673 = vcmp.lt.s32.totalorder %v2593, 0
  %vm2674 = vcmp.lt.s32.totalorder %v2600, 0
  %vm2675 = vcmp.lt.s32.totalorder %v2607, 0
  %vm2676 = vcmp.lt.s32.totalorder %v2614, 0
  %vm2677 = vcmp.lt.s32.totalorder %v2621, 0
  %vm2678 = vmand %vm2650, %vm2622
  %vm2679 = vmand %vm2651, %vm2623
  %vm2680 = vmand %vm2652, %vm2624
  %vm2681 = vmand %vm2653, %vm2625
  %vm2682 = vmand %vm2654, %vm2626
  %vm2683 = vmand %vm2655, %vm2627
  %vm2684 = vmand %vm2656, %vm2628
  %vm2685 = vmand %vm2657, %vm2629
  %vm2686 = vmand %vm2658, %vm2630
  %vm2687 = vmand %vm2659, %vm2631
  %vm2688 = vmand %vm2660, %vm2632
  %vm2689 = vmand %vm2661, %vm2633
  %vm2690 = vmand %vm2662, %vm2634
  %vm2691 = vmand %vm2663, %vm2635
  %vm2692 = vmand %vm2664, %vm2636
  %vm2693 = vmand %vm2665, %vm2637
  %vm2694 = vmand %vm2666, %vm2638
  %vm2695 = vmand %vm2667, %vm2639
  %vm2696 = vmand %vm2668, %vm2640
  %vm2697 = vmand %vm2669, %vm2641
  %vm2698 = vmand %vm2670, %vm2642
  %vm2699 = vmand %vm2671, %vm2643
  %vm2700 = vmand %vm2672, %vm2644
  %vm2701 = vmand %vm2673, %vm2645
  %vm2702 = vmand %vm2674, %vm2646
  %vm2703 = vmand %vm2675, %vm2647
  %vm2704 = vmand %vm2676, %vm2648
  %vm2705 = vmand %vm2677, %vm2649
  %v2706 = vadd.s32 %v2432, 16
  %v2707 = vadd.s32 %v2439, 16
  %v2708 = vadd.s32 %v2446, 16
  %v2709 = vadd.s32 %v2453, 16
  %v2710 = vadd.s32 %v2460, 16
  %v2711 = vadd.s32 %v2467, 16
  %v2712 = vadd.s32 %v2474, 16
  %v2713 = vadd.s32 %v2481, 16
  %v2714 = vadd.s32 %v2488, 16
  %v2715 = vadd.s32 %v2495, 16
  %v2716 = vadd.s32 %v2502, 16
  %v2717 = vadd.s32 %v2509, 16
  %v2718 = vadd.s32 %v2516, 16
  %v2719 = vadd.s32 %v2523, 16
  %v2720 = vadd.s32 %v2530, 16
  %v2721 = vadd.s32 %v2537, 16
  %v2722 = vadd.s32 %v2544, 16
  %v2723 = vadd.s32 %v2551, 16
  %v2724 = vadd.s32 %v2558, 16
  %v2725 = vadd.s32 %v2565, 16
  %v2726 = vadd.s32 %v2572, 16
  %v2727 = vadd.s32 %v2579, 16
  %v2728 = vadd.s32 %v2586, 16
  %v2729 = vadd.s32 %v2593, 16
  %v2730 = vadd.s32 %v2600, 16
  %v2731 = vadd.s32 %v2607, 16
  %v2732 = vadd.s32 %v2614, 16
  %v2733 = vadd.s32 %v2621, 16
  %v2734 = vsel %vm2678, %v2706, %v2432
  %v2735 = vsel %vm2679, %v2707, %v2439
  %v2736 = vsel %vm2680, %v2708, %v2446
  %v2737 = vsel %vm2681, %v2709, %v2453
  %v2738 = vsel %vm2682, %v2710, %v2460
  %v2739 = vsel %vm2683, %v2711, %v2467
  %v2740 = vsel %vm2684, %v2712, %v2474
  %v2741 = vsel %vm2685, %v2713, %v2481
  %v2742 = vsel %vm2686, %v2714, %v2488
  %v2743 = vsel %vm2687, %v2715, %v2495
  %v2744 = vsel %vm2688, %v2716, %v2502
  %v2745 = vsel %vm2689, %v2717, %v2509
  %v2746 = vsel %vm2690, %v2718, %v2516
  %v2747 = vsel %vm2691, %v2719, %v2523
  %v2748 = vsel %vm2692, %v2720, %v2530
  %v2749 = vsel %vm2693, %v2721, %v2537
  %v2750 = vsel %vm2694, %v2722, %v2544
  %v2751 = vsel %vm2695, %v2723, %v2551
  %v2752 = vsel %vm2696, %v2724, %v2558
  %v2753 = vsel %vm2697, %v2725, %v2565
  %v2754 = vsel %vm2698, %v2726, %v2572
  %v2755 = vsel %vm2699, %v2727, %v2579
  %v2756 = vsel %vm2700, %v2728, %v2586
  %v2757 = vsel %vm2701, %v2729, %v2593
  %v2758 = vsel %vm2702, %v2730, %v2600
  %v2759 = vsel %vm2703, %v2731, %v2607
  %v2760 = vsel %vm2704, %v2732, %v2614
  %v2761 = vsel %vm2705, %v2733, %v2621
  %vm2762 = vcmp.ge.s32.totalorder %v2734, 1
  %vm2763 = vcmp.ge.s32.totalorder %v2735, 1
  %vm2764 = vcmp.ge.s32.totalorder %v2736, 1
  %vm2765 = vcmp.ge.s32.totalorder %v2737, 1
  %vm2766 = vcmp.ge.s32.totalorder %v2738, 1
  %vm2767 = vcmp.ge.s32.totalorder %v2739, 1
  %vm2768 = vcmp.ge.s32.totalorder %v2740, 1
  %vm2769 = vcmp.ge.s32.totalorder %v2741, 1
  %vm2770 = vcmp.ge.s32.totalorder %v2742, 1
  %vm2771 = vcmp.ge.s32.totalorder %v2743, 1
  %vm2772 = vcmp.ge.s32.totalorder %v2744, 1
  %vm2773 = vcmp.ge.s32.totalorder %v2745, 1
  %vm2774 = vcmp.ge.s32.totalorder %v2746, 1
  %vm2775 = vcmp.ge.s32.totalorder %v2747, 1
  %vm2776 = vcmp.ge.s32.totalorder %v2748, 1
  %vm2777 = vcmp.ge.s32.totalorder %v2749, 1
  %vm2778 = vcmp.ge.s32.totalorder %v2750, 1
  %vm2779 = vcmp.ge.s32.totalorder %v2751, 1
  %vm2780 = vcmp.ge.s32.totalorder %v2752, 1
  %vm2781 = vcmp.ge.s32.totalorder %v2753, 1
  %vm2782 = vcmp.ge.s32.totalorder %v2754, 1
  %vm2783 = vcmp.ge.s32.totalorder %v2755, 1
  %vm2784 = vcmp.ge.s32.totalorder %v2756, 1
  %vm2785 = vcmp.ge.s32.totalorder %v2757, 1
  %vm2786 = vcmp.ge.s32.totalorder %v2758, 1
  %vm2787 = vcmp.ge.s32.totalorder %v2759, 1
  %vm2788 = vcmp.ge.s32.totalorder %v2760, 1
  %vm2789 = vcmp.ge.s32.totalorder %v2761, 1
  %vm2790 = vcmp.le.s32.totalorder %v2734, 14
  %vm2791 = vcmp.le.s32.totalorder %v2735, 14
  %vm2792 = vcmp.le.s32.totalorder %v2736, 14
  %vm2793 = vcmp.le.s32.totalorder %v2737, 14
  %vm2794 = vcmp.le.s32.totalorder %v2738, 14
  %vm2795 = vcmp.le.s32.totalorder %v2739, 14
  %vm2796 = vcmp.le.s32.totalorder %v2740, 14
  %vm2797 = vcmp.le.s32.totalorder %v2741, 14
  %vm2798 = vcmp.le.s32.totalorder %v2742, 14
  %vm2799 = vcmp.le.s32.totalorder %v2743, 14
  %vm2800 = vcmp.le.s32.totalorder %v2744, 14
  %vm2801 = vcmp.le.s32.totalorder %v2745, 14
  %vm2802 = vcmp.le.s32.totalorder %v2746, 14
  %vm2803 = vcmp.le.s32.totalorder %v2747, 14
  %vm2804 = vcmp.le.s32.totalorder %v2748, 14
  %vm2805 = vcmp.le.s32.totalorder %v2749, 14
  %vm2806 = vcmp.le.s32.totalorder %v2750, 14
  %vm2807 = vcmp.le.s32.totalorder %v2751, 14
  %vm2808 = vcmp.le.s32.totalorder %v2752, 14
  %vm2809 = vcmp.le.s32.totalorder %v2753, 14
  %vm2810 = vcmp.le.s32.totalorder %v2754, 14
  %vm2811 = vcmp.le.s32.totalorder %v2755, 14
  %vm2812 = vcmp.le.s32.totalorder %v2756, 14
  %vm2813 = vcmp.le.s32.totalorder %v2757, 14
  %vm2814 = vcmp.le.s32.totalorder %v2758, 14
  %vm2815 = vcmp.le.s32.totalorder %v2759, 14
  %vm2816 = vcmp.le.s32.totalorder %v2760, 14
  %vm2817 = vcmp.le.s32.totalorder %v2761, 14
  %vm2818 = vmand %vm2762, %vm2790
  %vm2819 = vmand %vm2763, %vm2791
  %vm2820 = vmand %vm2764, %vm2792
  %vm2821 = vmand %vm2765, %vm2793
  %vm2822 = vmand %vm2766, %vm2794
  %vm2823 = vmand %vm2767, %vm2795
  %vm2824 = vmand %vm2768, %vm2796
  %vm2825 = vmand %vm2769, %vm2797
  %vm2826 = vmand %vm2770, %vm2798
  %vm2827 = vmand %vm2771, %vm2799
  %vm2828 = vmand %vm2772, %vm2800
  %vm2829 = vmand %vm2773, %vm2801
  %vm2830 = vmand %vm2774, %vm2802
  %vm2831 = vmand %vm2775, %vm2803
  %vm2832 = vmand %vm2776, %vm2804
  %vm2833 = vmand %vm2777, %vm2805
  %vm2834 = vmand %vm2778, %vm2806
  %vm2835 = vmand %vm2779, %vm2807
  %vm2836 = vmand %vm2780, %vm2808
  %vm2837 = vmand %vm2781, %vm2809
  %vm2838 = vmand %vm2782, %vm2810
  %vm2839 = vmand %vm2783, %vm2811
  %vm2840 = vmand %vm2784, %vm2812
  %vm2841 = vmand %vm2785, %vm2813
  %vm2842 = vmand %vm2786, %vm2814
  %vm2843 = vmand %vm2787, %vm2815
  %vm2844 = vmand %vm2788, %vm2816
  %vm2845 = vmand %vm2789, %vm2817
  %v2846 = vsel %vm2818, %v2285, 0.0
  %v2847 = vsel %vm2819, %v2286, 0.0
  %v2848 = vsel %vm2820, %v2287, 0.0
  %v2849 = vsel %vm2821, %v2288, 0.0
  %v2850 = vsel %vm2822, %v2289, 0.0
  %v2851 = vsel %vm2823, %v2290, 0.0
  %v2852 = vsel %vm2824, %v2291, 0.0
  %v2853 = vsel %vm2825, %v2292, 0.0
  %v2854 = vsel %vm2826, %v2293, 0.0
  %v2855 = vsel %vm2827, %v2294, 0.0
  %v2856 = vsel %vm2828, %v2295, 0.0
  %v2857 = vsel %vm2829, %v2296, 0.0
  %v2858 = vsel %vm2830, %v2297, 0.0
  %v2859 = vsel %vm2831, %v2298, 0.0
  %v2860 = vsel %vm2832, %v2299, 0.0
  %v2861 = vsel %vm2833, %v2300, 0.0
  %v2862 = vsel %vm2834, %v2301, 0.0
  %v2863 = vsel %vm2835, %v2302, 0.0
  %v2864 = vsel %vm2836, %v2303, 0.0
  %v2865 = vsel %vm2837, %v2304, 0.0
  %v2866 = vsel %vm2838, %v2305, 0.0
  %v2867 = vsel %vm2839, %v2306, 0.0
  %v2868 = vsel %vm2840, %v2307, 0.0
  %v2869 = vsel %vm2841, %v2308, 0.0
  %v2870 = vsel %vm2842, %v2309, 0.0
  %v2871 = vsel %vm2843, %v2310, 0.0
  %v2872 = vsel %vm2844, %v2311, 0.0
  %v2873 = vsel %vm2845, %v2312, 0.0
  %v2874 = vsel %vm2818, %v2313, 0.0
  %v2875 = vsel %vm2819, %v2314, 0.0
  %v2876 = vsel %vm2820, %v2315, 0.0
  %v2877 = vsel %vm2821, %v2316, 0.0
  %v2878 = vsel %vm2822, %v2317, 0.0
  %v2879 = vsel %vm2823, %v2318, 0.0
  %v2880 = vsel %vm2824, %v2319, 0.0
  %v2881 = vsel %vm2825, %v2320, 0.0
  %v2882 = vsel %vm2826, %v2321, 0.0
  %v2883 = vsel %vm2827, %v2322, 0.0
  %v2884 = vsel %vm2828, %v2323, 0.0
  %v2885 = vsel %vm2829, %v2324, 0.0
  %v2886 = vsel %vm2830, %v2325, 0.0
  %v2887 = vsel %vm2831, %v2326, 0.0
  %v2888 = vsel %vm2832, %v2327, 0.0
  %v2889 = vsel %vm2833, %v2328, 0.0
  %v2890 = vsel %vm2834, %v2329, 0.0
  %v2891 = vsel %vm2835, %v2330, 0.0
  %v2892 = vsel %vm2836, %v2331, 0.0
  %v2893 = vsel %vm2837, %v2332, 0.0
  %v2894 = vsel %vm2838, %v2333, 0.0
  %v2895 = vsel %vm2839, %v2334, 0.0
  %v2896 = vsel %vm2840, %v2335, 0.0
  %v2897 = vsel %vm2841, %v2336, 0.0
  %v2898 = vsel %vm2842, %v2337, 0.0
  %v2899 = vsel %vm2843, %v2338, 0.0
  %v2900 = vsel %vm2844, %v2339, 0.0
  %v2901 = vsel %vm2845, %v2340, 0.0
  %2902 = vst.msk [vmem:[#allocation2] sm:$0xff] %vm1211, 0.0
  %2903 = vst.msk [vmem:[#allocation2 + $0x8] sm:$0xff] %vm1211, 0.0
  %2904 = vst.msk [vmem:[#allocation2 + $0x110] sm:$0xff] %vm1211, 0.0
  %2905 = vst.msk [vmem:[#allocation2 + $0x118] sm:$0xff] %vm1211, 0.0
  %2906 = vst.msk [vmem:[#allocation2 + $0xf0] sm:$0xff] %vm1211, 0.0
  %2907 = vst.msk [vmem:[#allocation2 + $0xf8] sm:$0xff] %vm1211, 0.0
  %2908 = vst.msk [vmem:[#allocation2 + $0x100] sm:$0xff] %vm1211, 0.0
  %2909 = vst.msk [vmem:[#allocation2 + $0x108] sm:$0xff] %vm1211, 0.0
  %2910 = vst.msk [vmem:[#allocation2 + $0x200] sm:$0xff] %vm1211, 0.0
  %2911 = vst.msk [vmem:[#allocation2 + $0x208] sm:$0xff] %vm1211, 0.0
  %2912 = vst.msk [vmem:[#allocation2 + $0x210] sm:$0xff] %vm1211, 0.0
  %2913 = vst.msk [vmem:[#allocation2 + $0x218] sm:$0xff] %vm1211, 0.0
  %2914 = vst.msk [vmem:[#allocation2 + $0x10] sm:$0xff] %vm1211, %v2846
  %2915 = vst.msk [vmem:[#allocation2 + $0x18] sm:$0xff] %vm1211, %v2847
  %2916 = vst.msk [vmem:[#allocation2 + $0x20] sm:$0xff] %vm1211, %v2848
  %2917 = vst.msk [vmem:[#allocation2 + $0x28] sm:$0xff] %vm1211, %v2849
  %2918 = vst.msk [vmem:[#allocation2 + $0x30] sm:$0xff] %vm1211, %v2850
  %2919 = vst.msk [vmem:[#allocation2 + $0x38] sm:$0xff] %vm1211, %v2851
  %2920 = vst.msk [vmem:[#allocation2 + $0x40] sm:$0xff] %vm1211, %v2852
  %2921 = vst.msk [vmem:[#allocation2 + $0x48] sm:$0xff] %vm1211, %v2853
  %2922 = vst.msk [vmem:[#allocation2 + $0x50] sm:$0xff] %vm1211, %v2854
  %2923 = vst.msk [vmem:[#allocation2 + $0x58] sm:$0xff] %vm1211, %v2855
  %2924 = vst.msk [vmem:[#allocation2 + $0x60] sm:$0xff] %vm1211, %v2856
  %2925 = vst.msk [vmem:[#allocation2 + $0x68] sm:$0xff] %vm1211, %v2857
  %2926 = vst.msk [vmem:[#allocation2 + $0x70] sm:$0xff] %vm1211, %v2858
  %2927 = vst.msk [vmem:[#allocation2 + $0x78] sm:$0xff] %vm1211, %v2859
  %2928 = vst.msk [vmem:[#allocation2 + $0x80] sm:$0xff] %vm1211, %v2860
  %2929 = vst.msk [vmem:[#allocation2 + $0x88] sm:$0xff] %vm1211, %v2861
  %2930 = vst.msk [vmem:[#allocation2 + $0x90] sm:$0xff] %vm1211, %v2862
  %2931 = vst.msk [vmem:[#allocation2 + $0x98] sm:$0xff] %vm1211, %v2863
  %2932 = vst.msk [vmem:[#allocation2 + $0xa0] sm:$0xff] %vm1211, %v2864
  %2933 = vst.msk [vmem:[#allocation2 + $0xa8] sm:$0xff] %vm1211, %v2865
  %2934 = vst.msk [vmem:[#allocation2 + $0xb0] sm:$0xff] %vm1211, %v2866
  %2935 = vst.msk [vmem:[#allocation2 + $0xb8] sm:$0xff] %vm1211, %v2867
  %2936 = vst.msk [vmem:[#allocation2 + $0xc0] sm:$0xff] %vm1211, %v2868
  %2937 = vst.msk [vmem:[#allocation2 + $0xc8] sm:$0xff] %vm1211, %v2869
  %2938 = vst.msk [vmem:[#allocation2 + $0xd0] sm:$0xff] %vm1211, %v2870
  %2939 = vst.msk [vmem:[#allocation2 + $0xd8] sm:$0xff] %vm1211, %v2871
  %2940 = vst.msk [vmem:[#allocation2 + $0xe0] sm:$0xff] %vm1211, %v2872
  %2941 = vst.msk [vmem:[#allocation2 + $0xe8] sm:$0xff] %vm1211, %v2873
  %2942 = vst.msk [vmem:[#allocation2 + $0x120] sm:$0xff] %vm1211, %v2874
  %2943 = vst.msk [vmem:[#allocation2 + $0x128] sm:$0xff] %vm1211, %v2875
  %2944 = vst.msk [vmem:[#allocation2 + $0x130] sm:$0xff] %vm1211, %v2876
  %2945 = vst.msk [vmem:[#allocation2 + $0x138] sm:$0xff] %vm1211, %v2877
  %2946 = vst.msk [vmem:[#allocation2 + $0x140] sm:$0xff] %vm1211, %v2878
  %2947 = vst.msk [vmem:[#allocation2 + $0x148] sm:$0xff] %vm1211, %v2879
  %2948 = vst.msk [vmem:[#allocation2 + $0x150] sm:$0xff] %vm1211, %v2880
  %2949 = vst.msk [vmem:[#allocation2 + $0x158] sm:$0xff] %vm1211, %v2881
  %2950 = vst.msk [vmem:[#allocation2 + $0x160] sm:$0xff] %vm1211, %v2882
  %2951 = vst.msk [vmem:[#allocation2 + $0x168] sm:$0xff] %vm1211, %v2883
  %2952 = vst.msk [vmem:[#allocation2 + $0x170] sm:$0xff] %vm1211, %v2884
  %2953 = vst.msk [vmem:[#allocation2 + $0x178] sm:$0xff] %vm1211, %v2885
  %2954 = vst.msk [vmem:[#allocation2 + $0x180] sm:$0xff] %vm1211, %v2886
  %2955 = vst.msk [vmem:[#allocation2 + $0x188] sm:$0xff] %vm1211, %v2887
  %2956 = vst.msk [vmem:[#allocation2 + $0x190] sm:$0xff] %vm1211, %v2888
  %2957 = vst.msk [vmem:[#allocation2 + $0x198] sm:$0xff] %vm1211, %v2889
  %2958 = vst.msk [vmem:[#allocation2 + $0x1a0] sm:$0xff] %vm1211, %v2890
  %2959 = vst.msk [vmem:[#allocation2 + $0x1a8] sm:$0xff] %vm1211, %v2891
  %2960 = vst.msk [vmem:[#allocation2 + $0x1b0] sm:$0xff] %vm1211, %v2892
  %2961 = vst.msk [vmem:[#allocation2 + $0x1b8] sm:$0xff] %vm1211, %v2893
  %2962 = vst.msk [vmem:[#allocation2 + $0x1c0] sm:$0xff] %vm1211, %v2894
  %2963 = vst.msk [vmem:[#allocation2 + $0x1c8] sm:$0xff] %vm1211, %v2895
  %2964 = vst.msk [vmem:[#allocation2 + $0x1d0] sm:$0xff] %vm1211, %v2896
  %2965 = vst.msk [vmem:[#allocation2 + $0x1d8] sm:$0xff] %vm1211, %v2897
  %2966 = vst.msk [vmem:[#allocation2 + $0x1e0] sm:$0xff] %vm1211, %v2898
  %2967 = vst.msk [vmem:[#allocation2 + $0x1e8] sm:$0xff] %vm1211, %v2899
  %2968 = vst.msk [vmem:[#allocation2 + $0x1f0] sm:$0xff] %vm1211, %v2900
  %2969 = vst.msk [vmem:[#allocation2 + $0x1f8] sm:$0xff] %vm1211, %v2901
  %v2970 = vld [vmem:[#allocation2] sm:$0xff]
  %v2971 = vld [vmem:[#allocation2 + $0x8] sm:$0xff]
  %v2972 = vld [vmem:[#allocation2 + $0x10] sm:$0xff]
  %v2973 = vld [vmem:[#allocation2 + $0x18] sm:$0xff]
  %v2974 = vld [vmem:[#allocation2 + $0x20] sm:$0xff]
  %v2975 = vld [vmem:[#allocation2 + $0x28] sm:$0xff]
  %v2976 = vld [vmem:[#allocation2 + $0x30] sm:$0xff]
  %v2977 = vld [vmem:[#allocation2 + $0x38] sm:$0xff]
  %v2978 = vld [vmem:[#allocation2 + $0x40] sm:$0xff]
  %v2979 = vld [vmem:[#allocation2 + $0x48] sm:$0xff]
  %v2980 = vld [vmem:[#allocation2 + $0x50] sm:$0xff]
  %v2981 = vld [vmem:[#allocation2 + $0x58] sm:$0xff]
  %v2982 = vld [vmem:[#allocation2 + $0x60] sm:$0xff]
  %v2983 = vld [vmem:[#allocation2 + $0x68] sm:$0xff]
  %v2984 = vld [vmem:[#allocation2 + $0x70] sm:$0xff]
  %v2985 = vld [vmem:[#allocation2 + $0x78] sm:$0xff]
  %v2986 = vld [vmem:[#allocation2 + $0x80] sm:$0xff]
  %v2987 = vld [vmem:[#allocation2 + $0x88] sm:$0xff]
  %v2988 = vld [vmem:[#allocation2 + $0x90] sm:$0xff]
  %v2989 = vld [vmem:[#allocation2 + $0x98] sm:$0xff]
  %v2990 = vld [vmem:[#allocation2 + $0xa0] sm:$0xff]
  %v2991 = vld [vmem:[#allocation2 + $0xa8] sm:$0xff]
  %v2992 = vld [vmem:[#allocation2 + $0xb0] sm:$0xff]
  %v2993 = vld [vmem:[#allocation2 + $0xb8] sm:$0xff]
  %v2994 = vld [vmem:[#allocation2 + $0xc0] sm:$0xff]
  %v2995 = vld [vmem:[#allocation2 + $0xc8] sm:$0xff]
  %v2996 = vld [vmem:[#allocation2 + $0xd0] sm:$0xff]
  %v2997 = vld [vmem:[#allocation2 + $0xd8] sm:$0xff]
  %v2998 = vld [vmem:[#allocation2 + $0x110] sm:$0xff]
  %v2999 = vld [vmem:[#allocation2 + $0x118] sm:$0xff]
  %v3000 = vld [vmem:[#allocation2 + $0x120] sm:$0xff]
  %v3001 = vld [vmem:[#allocation2 + $0x128] sm:$0xff]
  %v3002 = vld [vmem:[#allocation2 + $0x130] sm:$0xff]
  %v3003 = vld [vmem:[#allocation2 + $0x138] sm:$0xff]
  %v3004 = vld [vmem:[#allocation2 + $0x140] sm:$0xff]
  %v3005 = vld [vmem:[#allocation2 + $0x148] sm:$0xff]
  %v3006 = vld [vmem:[#allocation2 + $0x150] sm:$0xff]
  %v3007 = vld [vmem:[#allocation2 + $0x158] sm:$0xff]
  %v3008 = vld [vmem:[#allocation2 + $0x160] sm:$0xff]
  %v3009 = vld [vmem:[#allocation2 + $0x168] sm:$0xff]
  %v3010 = vld [vmem:[#allocation2 + $0x170] sm:$0xff]
  %v3011 = vld [vmem:[#allocation2 + $0x178] sm:$0xff]
  %v3012 = vld [vmem:[#allocation2 + $0x180] sm:$0xff]
  %v3013 = vld [vmem:[#allocation2 + $0x188] sm:$0xff]
  %v3014 = vld [vmem:[#allocation2 + $0x190] sm:$0xff]
  %v3015 = vld [vmem:[#allocation2 + $0x198] sm:$0xff]
  %v3016 = vld [vmem:[#allocation2 + $0x1a0] sm:$0xff]
  %v3017 = vld [vmem:[#allocation2 + $0x1a8] sm:$0xff]
  %v3018 = vld [vmem:[#allocation2 + $0x1b0] sm:$0xff]
  %v3019 = vld [vmem:[#allocation2 + $0x1b8] sm:$0xff]
  %v3020 = vld [vmem:[#allocation2 + $0x1c0] sm:$0xff]
  %v3021 = vld [vmem:[#allocation2 + $0x1c8] sm:$0xff]
  %v3022 = vld [vmem:[#allocation2 + $0x1d0] sm:$0xff]
  %v3023 = vld [vmem:[#allocation2 + $0x1d8] sm:$0xff]
  %v3024 = vld [vmem:[#allocation2 + $0x1e0] sm:$0xff]
  %v3025 = vld [vmem:[#allocation2 + $0x1e8] sm:$0xff]
  %3026 = vst.msk [vmem:[#allocation4] sm:$0xff] %vm1211, %v2970
  %3027 = vst.msk [vmem:[#allocation4 + $0x10] sm:$0xff] %vm1211, %v2971
  %3028 = vst.msk [vmem:[#allocation4 + $0x20] sm:$0xff] %vm1211, %v2972
  %3029 = vst.msk [vmem:[#allocation4 + $0x30] sm:$0xff] %vm1211, %v2973
  %3030 = vst.msk [vmem:[#allocation4 + $0x40] sm:$0xff] %vm1211, %v2974
  %3031 = vst.msk [vmem:[#allocation4 + $0x50] sm:$0xff] %vm1211, %v2975
  %3032 = vst.msk [vmem:[#allocation4 + $0x60] sm:$0xff] %vm1211, %v2976
  %3033 = vst.msk [vmem:[#allocation4 + $0x70] sm:$0xff] %vm1211, %v2977
  %3034 = vst.msk [vmem:[#allocation4 + $0x80] sm:$0xff] %vm1211, %v2978
  %3035 = vst.msk [vmem:[#allocation4 + $0x90] sm:$0xff] %vm1211, %v2979
  %3036 = vst.msk [vmem:[#allocation4 + $0xa0] sm:$0xff] %vm1211, %v2980
  %3037 = vst.msk [vmem:[#allocation4 + $0xb0] sm:$0xff] %vm1211, %v2981
  %3038 = vst.msk [vmem:[#allocation4 + $0xc0] sm:$0xff] %vm1211, %v2982
  %3039 = vst.msk [vmem:[#allocation4 + $0xd0] sm:$0xff] %vm1211, %v2983
  %3040 = vst.msk [vmem:[#allocation4 + $0xe0] sm:$0xff] %vm1211, %v2984
  %3041 = vst.msk [vmem:[#allocation4 + $0xf0] sm:$0xff] %vm1211, %v2985
  %3042 = vst.msk [vmem:[#allocation4 + $0x100] sm:$0xff] %vm1211, %v2986
  %3043 = vst.msk [vmem:[#allocation4 + $0x110] sm:$0xff] %vm1211, %v2987
  %3044 = vst.msk [vmem:[#allocation4 + $0x120] sm:$0xff] %vm1211, %v2988
  %3045 = vst.msk [vmem:[#allocation4 + $0x130] sm:$0xff] %vm1211, %v2989
  %3046 = vst.msk [vmem:[#allocation4 + $0x140] sm:$0xff] %vm1211, %v2990
  %3047 = vst.msk [vmem:[#allocation4 + $0x150] sm:$0xff] %vm1211, %v2991
  %3048 = vst.msk [vmem:[#allocation4 + $0x160] sm:$0xff] %vm1211, %v2992
  %3049 = vst.msk [vmem:[#allocation4 + $0x170] sm:$0xff] %vm1211, %v2993
  %3050 = vst.msk [vmem:[#allocation4 + $0x180] sm:$0xff] %vm1211, %v2994
  %3051 = vst.msk [vmem:[#allocation4 + $0x190] sm:$0xff] %vm1211, %v2995
  %3052 = vst.msk [vmem:[#allocation4 + $0x1a0] sm:$0xff] %vm1211, %v2996
  %3053 = vst.msk [vmem:[#allocation4 + $0x1b0] sm:$0xff] %vm1211, %v2997
  %3054 = vst.msk [vmem:[#allocation4 + $0x1c0] sm:$0xff] %vm1211, %v2998
  %3055 = vst.msk [vmem:[#allocation4 + $0x1d0] sm:$0xff] %vm1211, %v2999
  %3056 = vst.msk [vmem:[#allocation4 + $0x1e0] sm:$0xff] %vm1211, %v3000
  %3057 = vst.msk [vmem:[#allocation4 + $0x1f0] sm:$0xff] %vm1211, %v3001
  %3058 = vst.msk [vmem:[#allocation4 + $0x200] sm:$0xff] %vm1211, %v3002
  %3059 = vst.msk [vmem:[#allocation4 + $0x210] sm:$0xff] %vm1211, %v3003
  %3060 = vst.msk [vmem:[#allocation4 + $0x220] sm:$0xff] %vm1211, %v3004
  %3061 = vst.msk [vmem:[#allocation4 + $0x230] sm:$0xff] %vm1211, %v3005
  %3062 = vst.msk [vmem:[#allocation4 + $0x240] sm:$0xff] %vm1211, %v3006
  %3063 = vst.msk [vmem:[#allocation4 + $0x250] sm:$0xff] %vm1211, %v3007
  %3064 = vst.msk [vmem:[#allocation4 + $0x260] sm:$0xff] %vm1211, %v3008
  %3065 = vst.msk [vmem:[#allocation4 + $0x270] sm:$0xff] %vm1211, %v3009
  %3066 = vst.msk [vmem:[#allocation4 + $0x280] sm:$0xff] %vm1211, %v3010
  %3067 = vst.msk [vmem:[#allocation4 + $0x290] sm:$0xff] %vm1211, %v3011
  %3068 = vst.msk [vmem:[#allocation4 + $0x2a0] sm:$0xff] %vm1211, %v3012
  %3069 = vst.msk [vmem:[#allocation4 + $0x2b0] sm:$0xff] %vm1211, %v3013
  %3070 = vst.msk [vmem:[#allocation4 + $0x2c0] sm:$0xff] %vm1211, %v3014
  %3071 = vst.msk [vmem:[#allocation4 + $0x2d0] sm:$0xff] %vm1211, %v3015
  %3072 = vst.msk [vmem:[#allocation4 + $0x2e0] sm:$0xff] %vm1211, %v3016
  %3073 = vst.msk [vmem:[#allocation4 + $0x2f0] sm:$0xff] %vm1211, %v3017
  %3074 = vst.msk [vmem:[#allocation4 + $0x300] sm:$0xff] %vm1211, %v3018
  %3075 = vst.msk [vmem:[#allocation4 + $0x310] sm:$0xff] %vm1211, %v3019
  %3076 = vst.msk [vmem:[#allocation4 + $0x320] sm:$0xff] %vm1211, %v3020
  %3077 = vst.msk [vmem:[#allocation4 + $0x330] sm:$0xff] %vm1211, %v3021
  %3078 = vst.msk [vmem:[#allocation4 + $0x340] sm:$0xff] %vm1211, %v3022
  %3079 = vst.msk [vmem:[#allocation4 + $0x350] sm:$0xff] %vm1211, %v3023
  %3080 = vst.msk [vmem:[#allocation4 + $0x360] sm:$0xff] %vm1211, %v3024
  %3081 = vst.msk [vmem:[#allocation4 + $0x370] sm:$0xff] %vm1211, %v3025
  %v3082 = vld [vmem:[#allocation2 + $0x1] sm:$0xff]
  %v3083 = vld [vmem:[#allocation2 + $0x9] sm:$0xff]
  %v3084 = vld [vmem:[#allocation2 + $0x11] sm:$0xff]
  %v3085 = vld [vmem:[#allocation2 + $0x19] sm:$0xff]
  %v3086 = vld [vmem:[#allocation2 + $0x21] sm:$0xff]
  %v3087 = vld [vmem:[#allocation2 + $0x29] sm:$0xff]
  %v3088 = vld [vmem:[#allocation2 + $0x31] sm:$0xff]
  %v3089 = vld [vmem:[#allocation2 + $0x39] sm:$0xff]
  %v3090 = vld [vmem:[#allocation2 + $0x41] sm:$0xff]
  %v3091 = vld [vmem:[#allocation2 + $0x49] sm:$0xff]
  %v3092 = vld [vmem:[#allocation2 + $0x51] sm:$0xff]
  %v3093 = vld [vmem:[#allocation2 + $0x59] sm:$0xff]
  %v3094 = vld [vmem:[#allocation2 + $0x61] sm:$0xff]
  %v3095 = vld [vmem:[#allocation2 + $0x69] sm:$0xff]
  %v3096 = vld [vmem:[#allocation2 + $0x71] sm:$0xff]
  %v3097 = vld [vmem:[#allocation2 + $0x79] sm:$0xff]
  %v3098 = vld [vmem:[#allocation2 + $0x81] sm:$0xff]
  %v3099 = vld [vmem:[#allocation2 + $0x89] sm:$0xff]
  %v3100 = vld [vmem:[#allocation2 + $0x91] sm:$0xff]
  %v3101 = vld [vmem:[#allocation2 + $0x99] sm:$0xff]
  %v3102 = vld [vmem:[#allocation2 + $0xa1] sm:$0xff]
  %v3103 = vld [vmem:[#allocation2 + $0xa9] sm:$0xff]
  %v3104 = vld [vmem:[#allocation2 + $0xb1] sm:$0xff]
  %v3105 = vld [vmem:[#allocation2 + $0xb9] sm:$0xff]
  %v3106 = vld [vmem:[#allocation2 + $0xc1] sm:$0xff]
  %v3107 = vld [vmem:[#allocation2 + $0xc9] sm:$0xff]
  %v3108 = vld [vmem:[#allocation2 + $0xd1] sm:$0xff]
  %v3109 = vld [vmem:[#allocation2 + $0xd9] sm:$0xff]
  %v3110 = vld [vmem:[#allocation2 + $0x111] sm:$0xff]
  %v3111 = vld [vmem:[#allocation2 + $0x119] sm:$0xff]
  %v3112 = vld [vmem:[#allocation2 + $0x121] sm:$0xff]
  %v3113 = vld [vmem:[#allocation2 + $0x129] sm:$0xff]
  %v3114 = vld [vmem:[#allocation2 + $0x131] sm:$0xff]
  %v3115 = vld [vmem:[#allocation2 + $0x139] sm:$0xff]
  %v3116 = vld [vmem:[#allocation2 + $0x141] sm:$0xff]
  %v3117 = vld [vmem:[#allocation2 + $0x149] sm:$0xff]
  %v3118 = vld [vmem:[#allocation2 + $0x151] sm:$0xff]
  %v3119 = vld [vmem:[#allocation2 + $0x159] sm:$0xff]
  %v3120 = vld [vmem:[#allocation2 + $0x161] sm:$0xff]
  %v3121 = vld [vmem:[#allocation2 + $0x169] sm:$0xff]
  %v3122 = vld [vmem:[#allocation2 + $0x171] sm:$0xff]
  %v3123 = vld [vmem:[#allocation2 + $0x179] sm:$0xff]
  %v3124 = vld [vmem:[#allocation2 + $0x181] sm:$0xff]
  %v3125 = vld [vmem:[#allocation2 + $0x189] sm:$0xff]
  %v3126 = vld [vmem:[#allocation2 + $0x191] sm:$0xff]
  %v3127 = vld [vmem:[#allocation2 + $0x199] sm:$0xff]
  %v3128 = vld [vmem:[#allocation2 + $0x1a1] sm:$0xff]
  %v3129 = vld [vmem:[#allocation2 + $0x1a9] sm:$0xff]
  %v3130 = vld [vmem:[#allocation2 + $0x1b1] sm:$0xff]
  %v3131 = vld [vmem:[#allocation2 + $0x1b9] sm:$0xff]
  %v3132 = vld [vmem:[#allocation2 + $0x1c1] sm:$0xff]
  %v3133 = vld [vmem:[#allocation2 + $0x1c9] sm:$0xff]
  %v3134 = vld [vmem:[#allocation2 + $0x1d1] sm:$0xff]
  %v3135 = vld [vmem:[#allocation2 + $0x1d9] sm:$0xff]
  %v3136 = vld [vmem:[#allocation2 + $0x1e1] sm:$0xff]
  %v3137 = vld [vmem:[#allocation2 + $0x1e9] sm:$0xff]
  %3194 = vrot.lane.b32.xlu0 %v3082, 16
  %v3195 = vpop.permute.xlu0 %3194
  %3196 = vrot.lane.b32.xlu0 %v3083, 16
  %v3197 = vpop.permute.xlu0 %3196
  %3198 = vrot.lane.b32.xlu0 %v3084, 16
  %v3199 = vpop.permute.xlu0 %3198
  %3200 = vrot.lane.b32.xlu0 %v3085, 16
  %v3201 = vpop.permute.xlu0 %3200
  %3202 = vrot.lane.b32.xlu0 %v3086, 16
  %v3203 = vpop.permute.xlu0 %3202
  %3204 = vrot.lane.b32.xlu0 %v3087, 16
  %v3205 = vpop.permute.xlu0 %3204
  %3206 = vrot.lane.b32.xlu0 %v3088, 16
  %v3207 = vpop.permute.xlu0 %3206
  %3208 = vrot.lane.b32.xlu0 %v3089, 16
  %v3209 = vpop.permute.xlu0 %3208
  %3210 = vrot.lane.b32.xlu0 %v3090, 16
  %v3211 = vpop.permute.xlu0 %3210
  %3212 = vrot.lane.b32.xlu0 %v3091, 16
  %v3213 = vpop.permute.xlu0 %3212
  %3214 = vrot.lane.b32.xlu0 %v3092, 16
  %v3215 = vpop.permute.xlu0 %3214
  %3216 = vrot.lane.b32.xlu0 %v3093, 16
  %v3217 = vpop.permute.xlu0 %3216
  %3218 = vrot.lane.b32.xlu0 %v3094, 16
  %v3219 = vpop.permute.xlu0 %3218
  %3220 = vrot.lane.b32.xlu0 %v3095, 16
  %v3221 = vpop.permute.xlu0 %3220
  %3222 = vrot.lane.b32.xlu0 %v3096, 16
  %v3223 = vpop.permute.xlu0 %3222
  %3224 = vrot.lane.b32.xlu0 %v3097, 16
  %v3225 = vpop.permute.xlu0 %3224
  %3226 = vrot.lane.b32.xlu0 %v3098, 16
  %v3227 = vpop.permute.xlu0 %3226
  %3228 = vrot.lane.b32.xlu0 %v3099, 16
  %v3229 = vpop.permute.xlu0 %3228
  %3230 = vrot.lane.b32.xlu0 %v3100, 16
  %v3231 = vpop.permute.xlu0 %3230
  %3232 = vrot.lane.b32.xlu0 %v3101, 16
  %v3233 = vpop.permute.xlu0 %3232
  %3234 = vrot.lane.b32.xlu0 %v3102, 16
  %v3235 = vpop.permute.xlu0 %3234
  %3236 = vrot.lane.b32.xlu0 %v3103, 16
  %v3237 = vpop.permute.xlu0 %3236
  %3238 = vrot.lane.b32.xlu0 %v3104, 16
  %v3239 = vpop.permute.xlu0 %3238
  %3240 = vrot.lane.b32.xlu0 %v3105, 16
  %v3241 = vpop.permute.xlu0 %3240
  %3242 = vrot.lane.b32.xlu0 %v3106, 16
  %v3243 = vpop.permute.xlu0 %3242
  %3244 = vrot.lane.b32.xlu0 %v3107, 16
  %v3245 = vpop.permute.xlu0 %3244
  %3246 = vrot.lane.b32.xlu0 %v3108, 16
  %v3247 = vpop.permute.xlu0 %3246
  %3248 = vrot.lane.b32.xlu0 %v3109, 16
  %v3249 = vpop.permute.xlu0 %3248
  %3250 = vrot.lane.b32.xlu0 %v3110, 16
  %v3251 = vpop.permute.xlu0 %3250
  %3252 = vrot.lane.b32.xlu0 %v3111, 16
  %v3253 = vpop.permute.xlu0 %3252
  %3254 = vrot.lane.b32.xlu0 %v3112, 16
  %v3255 = vpop.permute.xlu0 %3254
  %3256 = vrot.lane.b32.xlu0 %v3113, 16
  %v3257 = vpop.permute.xlu0 %3256
  %3258 = vrot.lane.b32.xlu0 %v3114, 16
  %v3259 = vpop.permute.xlu0 %3258
  %3260 = vrot.lane.b32.xlu0 %v3115, 16
  %v3261 = vpop.permute.xlu0 %3260
  %3262 = vrot.lane.b32.xlu0 %v3116, 16
  %v3263 = vpop.permute.xlu0 %3262
  %3264 = vrot.lane.b32.xlu0 %v3117, 16
  %v3265 = vpop.permute.xlu0 %3264
  %3266 = vrot.lane.b32.xlu0 %v3118, 16
  %v3267 = vpop.permute.xlu0 %3266
  %3268 = vrot.lane.b32.xlu0 %v3119, 16
  %v3269 = vpop.permute.xlu0 %3268
  %3270 = vrot.lane.b32.xlu0 %v3120, 16
  %v3271 = vpop.permute.xlu0 %3270
  %3272 = vrot.lane.b32.xlu0 %v3121, 16
  %v3273 = vpop.permute.xlu0 %3272
  %3274 = vrot.lane.b32.xlu0 %v3122, 16
  %v3275 = vpop.permute.xlu0 %3274
  %3276 = vrot.lane.b32.xlu0 %v3123, 16
  %v3277 = vpop.permute.xlu0 %3276
  %3278 = vrot.lane.b32.xlu0 %v3124, 16
  %v3279 = vpop.permute.xlu0 %3278
  %3280 = vrot.lane.b32.xlu0 %v3125, 16
  %v3281 = vpop.permute.xlu0 %3280
  %3282 = vrot.lane.b32.xlu0 %v3126, 16
  %v3283 = vpop.permute.xlu0 %3282
  %3284 = vrot.lane.b32.xlu0 %v3127, 16
  %v3285 = vpop.permute.xlu0 %3284
  %3286 = vrot.lane.b32.xlu0 %v3128, 16
  %v3287 = vpop.permute.xlu0 %3286
  %3288 = vrot.lane.b32.xlu0 %v3129, 16
  %v3289 = vpop.permute.xlu0 %3288
  %3290 = vrot.lane.b32.xlu0 %v3130, 16
  %v3291 = vpop.permute.xlu0 %3290
  %3292 = vrot.lane.b32.xlu0 %v3131, 16
  %v3293 = vpop.permute.xlu0 %3292
  %3294 = vrot.lane.b32.xlu0 %v3132, 16
  %v3295 = vpop.permute.xlu0 %3294
  %3296 = vrot.lane.b32.xlu0 %v3133, 16
  %v3297 = vpop.permute.xlu0 %3296
  %3298 = vrot.lane.b32.xlu0 %v3134, 16
  %v3299 = vpop.permute.xlu0 %3298
  %3300 = vrot.lane.b32.xlu0 %v3135, 16
  %v3301 = vpop.permute.xlu0 %3300
  %3302 = vrot.lane.b32.xlu0 %v3136, 16
  %v3303 = vpop.permute.xlu0 %3302
  %3304 = vrot.lane.b32.xlu0 %v3137, 16
  %v3305 = vpop.permute.xlu0 %3304
  %vm3362 = vcmask 261248
  %3363 = vst.msk [vmem:[#allocation4] sm:$0xff] %vm3362, %v3195
  %3364 = vst.msk [vmem:[#allocation4 + $0x10] sm:$0xff] %vm3362, %v3197
  %3365 = vst.msk [vmem:[#allocation4 + $0x20] sm:$0xff] %vm3362, %v3199
  %3366 = vst.msk [vmem:[#allocation4 + $0x30] sm:$0xff] %vm3362, %v3201
  %3367 = vst.msk [vmem:[#allocation4 + $0x40] sm:$0xff] %vm3362, %v3203
  %3368 = vst.msk [vmem:[#allocation4 + $0x50] sm:$0xff] %vm3362, %v3205
  %3369 = vst.msk [vmem:[#allocation4 + $0x60] sm:$0xff] %vm3362, %v3207
  %3370 = vst.msk [vmem:[#allocation4 + $0x70] sm:$0xff] %vm3362, %v3209
  %3371 = vst.msk [vmem:[#allocation4 + $0x80] sm:$0xff] %vm3362, %v3211
  %3372 = vst.msk [vmem:[#allocation4 + $0x90] sm:$0xff] %vm3362, %v3213
  %3373 = vst.msk [vmem:[#allocation4 + $0xa0] sm:$0xff] %vm3362, %v3215
  %3374 = vst.msk [vmem:[#allocation4 + $0xb0] sm:$0xff] %vm3362, %v3217
  %3375 = vst.msk [vmem:[#allocation4 + $0xc0] sm:$0xff] %vm3362, %v3219
  %3376 = vst.msk [vmem:[#allocation4 + $0xd0] sm:$0xff] %vm3362, %v3221
  %3377 = vst.msk [vmem:[#allocation4 + $0xe0] sm:$0xff] %vm3362, %v3223
  %3378 = vst.msk [vmem:[#allocation4 + $0xf0] sm:$0xff] %vm3362, %v3225
  %3379 = vst.msk [vmem:[#allocation4 + $0x100] sm:$0xff] %vm3362, %v3227
  %3380 = vst.msk [vmem:[#allocation4 + $0x110] sm:$0xff] %vm3362, %v3229
  %3381 = vst.msk [vmem:[#allocation4 + $0x120] sm:$0xff] %vm3362, %v3231
  %3382 = vst.msk [vmem:[#allocation4 + $0x130] sm:$0xff] %vm3362, %v3233
  %3383 = vst.msk [vmem:[#allocation4 + $0x140] sm:$0xff] %vm3362, %v3235
  %3384 = vst.msk [vmem:[#allocation4 + $0x150] sm:$0xff] %vm3362, %v3237
  %3385 = vst.msk [vmem:[#allocation4 + $0x160] sm:$0xff] %vm3362, %v3239
  %3386 = vst.msk [vmem:[#allocation4 + $0x170] sm:$0xff] %vm3362, %v3241
  %3387 = vst.msk [vmem:[#allocation4 + $0x180] sm:$0xff] %vm3362, %v3243
  %3388 = vst.msk [vmem:[#allocation4 + $0x190] sm:$0xff] %vm3362, %v3245
  %3389 = vst.msk [vmem:[#allocation4 + $0x1a0] sm:$0xff] %vm3362, %v3247
  %3390 = vst.msk [vmem:[#allocation4 + $0x1b0] sm:$0xff] %vm3362, %v3249
  %3391 = vst.msk [vmem:[#allocation4 + $0x1c0] sm:$0xff] %vm3362, %v3251
  %3392 = vst.msk [vmem:[#allocation4 + $0x1d0] sm:$0xff] %vm3362, %v3253
  %3393 = vst.msk [vmem:[#allocation4 + $0x1e0] sm:$0xff] %vm3362, %v3255
  %3394 = vst.msk [vmem:[#allocation4 + $0x1f0] sm:$0xff] %vm3362, %v3257
  %3395 = vst.msk [vmem:[#allocation4 + $0x200] sm:$0xff] %vm3362, %v3259
  %3396 = vst.msk [vmem:[#allocation4 + $0x210] sm:$0xff] %vm3362, %v3261
  %3397 = vst.msk [vmem:[#allocation4 + $0x220] sm:$0xff] %vm3362, %v3263
  %3398 = vst.msk [vmem:[#allocation4 + $0x230] sm:$0xff] %vm3362, %v3265
  %3399 = vst.msk [vmem:[#allocation4 + $0x240] sm:$0xff] %vm3362, %v3267
  %3400 = vst.msk [vmem:[#allocation4 + $0x250] sm:$0xff] %vm3362, %v3269
  %3401 = vst.msk [vmem:[#allocation4 + $0x260] sm:$0xff] %vm3362, %v3271
  %3402 = vst.msk [vmem:[#allocation4 + $0x270] sm:$0xff] %vm3362, %v3273
  %3403 = vst.msk [vmem:[#allocation4 + $0x280] sm:$0xff] %vm3362, %v3275
  %3404 = vst.msk [vmem:[#allocation4 + $0x290] sm:$0xff] %vm3362, %v3277
  %3405 = vst.msk [vmem:[#allocation4 + $0x2a0] sm:$0xff] %vm3362, %v3279
  %3406 = vst.msk [vmem:[#allocation4 + $0x2b0] sm:$0xff] %vm3362, %v3281
  %3407 = vst.msk [vmem:[#allocation4 + $0x2c0] sm:$0xff] %vm3362, %v3283
  %3408 = vst.msk [vmem:[#allocation4 + $0x2d0] sm:$0xff] %vm3362, %v3285
  %3409 = vst.msk [vmem:[#allocation4 + $0x2e0] sm:$0xff] %vm3362, %v3287
  %3410 = vst.msk [vmem:[#allocation4 + $0x2f0] sm:$0xff] %vm3362, %v3289
  %3411 = vst.msk [vmem:[#allocation4 + $0x300] sm:$0xff] %vm3362, %v3291
  %3412 = vst.msk [vmem:[#allocation4 + $0x310] sm:$0xff] %vm3362, %v3293
  %3413 = vst.msk [vmem:[#allocation4 + $0x320] sm:$0xff] %vm3362, %v3295
  %3414 = vst.msk [vmem:[#allocation4 + $0x330] sm:$0xff] %vm3362, %v3297
  %3415 = vst.msk [vmem:[#allocation4 + $0x340] sm:$0xff] %vm3362, %v3299
  %3416 = vst.msk [vmem:[#allocation4 + $0x350] sm:$0xff] %vm3362, %v3301
  %3417 = vst.msk [vmem:[#allocation4 + $0x360] sm:$0xff] %vm3362, %v3303
  %3418 = vst.msk [vmem:[#allocation4 + $0x370] sm:$0xff] %vm3362, %v3305
  %v3419 = vld [vmem:[#allocation2 + $0x2] sm:$0xff]
  %v3420 = vld [vmem:[#allocation2 + $0xa] sm:$0xff]
  %v3421 = vld [vmem:[#allocation2 + $0x12] sm:$0xff]
  %v3422 = vld [vmem:[#allocation2 + $0x1a] sm:$0xff]
  %v3423 = vld [vmem:[#allocation2 + $0x22] sm:$0xff]
  %v3424 = vld [vmem:[#allocation2 + $0x2a] sm:$0xff]
  %v3425 = vld [vmem:[#allocation2 + $0x32] sm:$0xff]
  %v3426 = vld [vmem:[#allocation2 + $0x3a] sm:$0xff]
  %v3427 = vld [vmem:[#allocation2 + $0x42] sm:$0xff]
  %v3428 = vld [vmem:[#allocation2 + $0x4a] sm:$0xff]
  %v3429 = vld [vmem:[#allocation2 + $0x52] sm:$0xff]
  %v3430 = vld [vmem:[#allocation2 + $0x5a] sm:$0xff]
  %v3431 = vld [vmem:[#allocation2 + $0x62] sm:$0xff]
  %v3432 = vld [vmem:[#allocation2 + $0x6a] sm:$0xff]
  %v3433 = vld [vmem:[#allocation2 + $0x72] sm:$0xff]
  %v3434 = vld [vmem:[#allocation2 + $0x7a] sm:$0xff]
  %v3435 = vld [vmem:[#allocation2 + $0x82] sm:$0xff]
  %v3436 = vld [vmem:[#allocation2 + $0x8a] sm:$0xff]
  %v3437 = vld [vmem:[#allocation2 + $0x92] sm:$0xff]
  %v3438 = vld [vmem:[#allocation2 + $0x9a] sm:$0xff]
  %v3439 = vld [vmem:[#allocation2 + $0xa2] sm:$0xff]
  %v3440 = vld [vmem:[#allocation2 + $0xaa] sm:$0xff]
  %v3441 = vld [vmem:[#allocation2 + $0xb2] sm:$0xff]
  %v3442 = vld [vmem:[#allocation2 + $0xba] sm:$0xff]
  %v3443 = vld [vmem:[#allocation2 + $0xc2] sm:$0xff]
  %v3444 = vld [vmem:[#allocation2 + $0xca] sm:$0xff]
  %v3445 = vld [vmem:[#allocation2 + $0xd2] sm:$0xff]
  %v3446 = vld [vmem:[#allocation2 + $0xda] sm:$0xff]
  %v3447 = vld [vmem:[#allocation2 + $0x112] sm:$0xff]
  %v3448 = vld [vmem:[#allocation2 + $0x11a] sm:$0xff]
  %v3449 = vld [vmem:[#allocation2 + $0x122] sm:$0xff]
  %v3450 = vld [vmem:[#allocation2 + $0x12a] sm:$0xff]
  %v3451 = vld [vmem:[#allocation2 + $0x132] sm:$0xff]
  %v3452 = vld [vmem:[#allocation2 + $0x13a] sm:$0xff]
  %v3453 = vld [vmem:[#allocation2 + $0x142] sm:$0xff]
  %v3454 = vld [vmem:[#allocation2 + $0x14a] sm:$0xff]
  %v3455 = vld [vmem:[#allocation2 + $0x152] sm:$0xff]
  %v3456 = vld [vmem:[#allocation2 + $0x15a] sm:$0xff]
  %v3457 = vld [vmem:[#allocation2 + $0x162] sm:$0xff]
  %v3458 = vld [vmem:[#allocation2 + $0x16a] sm:$0xff]
  %v3459 = vld [vmem:[#allocation2 + $0x172] sm:$0xff]
  %v3460 = vld [vmem:[#allocation2 + $0x17a] sm:$0xff]
  %v3461 = vld [vmem:[#allocation2 + $0x182] sm:$0xff]
  %v3462 = vld [vmem:[#allocation2 + $0x18a] sm:$0xff]
  %v3463 = vld [vmem:[#allocation2 + $0x192] sm:$0xff]
  %v3464 = vld [vmem:[#allocation2 + $0x19a] sm:$0xff]
  %v3465 = vld [vmem:[#allocation2 + $0x1a2] sm:$0xff]
  %v3466 = vld [vmem:[#allocation2 + $0x1aa] sm:$0xff]
  %v3467 = vld [vmem:[#allocation2 + $0x1b2] sm:$0xff]
  %v3468 = vld [vmem:[#allocation2 + $0x1ba] sm:$0xff]
  %v3469 = vld [vmem:[#allocation2 + $0x1c2] sm:$0xff]
  %v3470 = vld [vmem:[#allocation2 + $0x1ca] sm:$0xff]
  %v3471 = vld [vmem:[#allocation2 + $0x1d2] sm:$0xff]
  %v3472 = vld [vmem:[#allocation2 + $0x1da] sm:$0xff]
  %v3473 = vld [vmem:[#allocation2 + $0x1e2] sm:$0xff]
  %v3474 = vld [vmem:[#allocation2 + $0x1ea] sm:$0xff]
  %3531 = vrot.lane.b32.xlu0 %v3419, 32
  %v3532 = vpop.permute.xlu0 %3531
  %3533 = vrot.lane.b32.xlu0 %v3420, 32
  %v3534 = vpop.permute.xlu0 %3533
  %3535 = vrot.lane.b32.xlu0 %v3421, 32
  %v3536 = vpop.permute.xlu0 %3535
  %3537 = vrot.lane.b32.xlu0 %v3422, 32
  %v3538 = vpop.permute.xlu0 %3537
  %3539 = vrot.lane.b32.xlu0 %v3423, 32
  %v3540 = vpop.permute.xlu0 %3539
  %3541 = vrot.lane.b32.xlu0 %v3424, 32
  %v3542 = vpop.permute.xlu0 %3541
  %3543 = vrot.lane.b32.xlu0 %v3425, 32
  %v3544 = vpop.permute.xlu0 %3543
  %3545 = vrot.lane.b32.xlu0 %v3426, 32
  %v3546 = vpop.permute.xlu0 %3545
  %3547 = vrot.lane.b32.xlu0 %v3427, 32
  %v3548 = vpop.permute.xlu0 %3547
  %3549 = vrot.lane.b32.xlu0 %v3428, 32
  %v3550 = vpop.permute.xlu0 %3549
  %3551 = vrot.lane.b32.xlu0 %v3429, 32
  %v3552 = vpop.permute.xlu0 %3551
  %3553 = vrot.lane.b32.xlu0 %v3430, 32
  %v3554 = vpop.permute.xlu0 %3553
  %3555 = vrot.lane.b32.xlu0 %v3431, 32
  %v3556 = vpop.permute.xlu0 %3555
  %3557 = vrot.lane.b32.xlu0 %v3432, 32
  %v3558 = vpop.permute.xlu0 %3557
  %3559 = vrot.lane.b32.xlu0 %v3433, 32
  %v3560 = vpop.permute.xlu0 %3559
  %3561 = vrot.lane.b32.xlu0 %v3434, 32
  %v3562 = vpop.permute.xlu0 %3561
  %3563 = vrot.lane.b32.xlu0 %v3435, 32
  %v3564 = vpop.permute.xlu0 %3563
  %3565 = vrot.lane.b32.xlu0 %v3436, 32
  %v3566 = vpop.permute.xlu0 %3565
  %3567 = vrot.lane.b32.xlu0 %v3437, 32
  %v3568 = vpop.permute.xlu0 %3567
  %3569 = vrot.lane.b32.xlu0 %v3438, 32
  %v3570 = vpop.permute.xlu0 %3569
  %3571 = vrot.lane.b32.xlu0 %v3439, 32
  %v3572 = vpop.permute.xlu0 %3571
  %3573 = vrot.lane.b32.xlu0 %v3440, 32
  %v3574 = vpop.permute.xlu0 %3573
  %3575 = vrot.lane.b32.xlu0 %v3441, 32
  %v3576 = vpop.permute.xlu0 %3575
  %3577 = vrot.lane.b32.xlu0 %v3442, 32
  %v3578 = vpop.permute.xlu0 %3577
  %3579 = vrot.lane.b32.xlu0 %v3443, 32
  %v3580 = vpop.permute.xlu0 %3579
  %3581 = vrot.lane.b32.xlu0 %v3444, 32
  %v3582 = vpop.permute.xlu0 %3581
  %3583 = vrot.lane.b32.xlu0 %v3445, 32
  %v3584 = vpop.permute.xlu0 %3583
  %3585 = vrot.lane.b32.xlu0 %v3446, 32
  %v3586 = vpop.permute.xlu0 %3585
  %3587 = vrot.lane.b32.xlu0 %v3447, 32
  %v3588 = vpop.permute.xlu0 %3587
  %3589 = vrot.lane.b32.xlu0 %v3448, 32
  %v3590 = vpop.permute.xlu0 %3589
  %3591 = vrot.lane.b32.xlu0 %v3449, 32
  %v3592 = vpop.permute.xlu0 %3591
  %3593 = vrot.lane.b32.xlu0 %v3450, 32
  %v3594 = vpop.permute.xlu0 %3593
  %3595 = vrot.lane.b32.xlu0 %v3451, 32
  %v3596 = vpop.permute.xlu0 %3595
  %3597 = vrot.lane.b32.xlu0 %v3452, 32
  %v3598 = vpop.permute.xlu0 %3597
  %3599 = vrot.lane.b32.xlu0 %v3453, 32
  %v3600 = vpop.permute.xlu0 %3599
  %3601 = vrot.lane.b32.xlu0 %v3454, 32
  %v3602 = vpop.permute.xlu0 %3601
  %3603 = vrot.lane.b32.xlu0 %v3455, 32
  %v3604 = vpop.permute.xlu0 %3603
  %3605 = vrot.lane.b32.xlu0 %v3456, 32
  %v3606 = vpop.permute.xlu0 %3605
  %3607 = vrot.lane.b32.xlu0 %v3457, 32
  %v3608 = vpop.permute.xlu0 %3607
  %3609 = vrot.lane.b32.xlu0 %v3458, 32
  %v3610 = vpop.permute.xlu0 %3609
  %3611 = vrot.lane.b32.xlu0 %v3459, 32
  %v3612 = vpop.permute.xlu0 %3611
  %3613 = vrot.lane.b32.xlu0 %v3460, 32
  %v3614 = vpop.permute.xlu0 %3613
  %3615 = vrot.lane.b32.xlu0 %v3461, 32
  %v3616 = vpop.permute.xlu0 %3615
  %3617 = vrot.lane.b32.xlu0 %v3462, 32
  %v3618 = vpop.permute.xlu0 %3617
  %3619 = vrot.lane.b32.xlu0 %v3463, 32
  %v3620 = vpop.permute.xlu0 %3619
  %3621 = vrot.lane.b32.xlu0 %v3464, 32
  %v3622 = vpop.permute.xlu0 %3621
  %3623 = vrot.lane.b32.xlu0 %v3465, 32
  %v3624 = vpop.permute.xlu0 %3623
  %3625 = vrot.lane.b32.xlu0 %v3466, 32
  %v3626 = vpop.permute.xlu0 %3625
  %3627 = vrot.lane.b32.xlu0 %v3467, 32
  %v3628 = vpop.permute.xlu0 %3627
  %3629 = vrot.lane.b32.xlu0 %v3468, 32
  %v3630 = vpop.permute.xlu0 %3629
  %3631 = vrot.lane.b32.xlu0 %v3469, 32
  %v3632 = vpop.permute.xlu0 %3631
  %3633 = vrot.lane.b32.xlu0 %v3470, 32
  %v3634 = vpop.permute.xlu0 %3633
  %3635 = vrot.lane.b32.xlu0 %v3471, 32
  %v3636 = vpop.permute.xlu0 %3635
  %3637 = vrot.lane.b32.xlu0 %v3472, 32
  %v3638 = vpop.permute.xlu0 %3637
  %3639 = vrot.lane.b32.xlu0 %v3473, 32
  %v3640 = vpop.permute.xlu0 %3639
  %3641 = vrot.lane.b32.xlu0 %v3474, 32
  %v3642 = vpop.permute.xlu0 %3641
  %vm3699 = vcmask 392448
  %3700 = vst.msk [vmem:[#allocation4] sm:$0xff] %vm3699, %v3532
  %3701 = vst.msk [vmem:[#allocation4 + $0x10] sm:$0xff] %vm3699, %v3534
  %3702 = vst.msk [vmem:[#allocation4 + $0x20] sm:$0xff] %vm3699, %v3536
  %3703 = vst.msk [vmem:[#allocation4 + $0x30] sm:$0xff] %vm3699, %v3538
  %3704 = vst.msk [vmem:[#allocation4 + $0x40] sm:$0xff] %vm3699, %v3540
  %3705 = vst.msk [vmem:[#allocation4 + $0x50] sm:$0xff] %vm3699, %v3542
  %3706 = vst.msk [vmem:[#allocation4 + $0x60] sm:$0xff] %vm3699, %v3544
  %3707 = vst.msk [vmem:[#allocation4 + $0x70] sm:$0xff] %vm3699, %v3546
  %3708 = vst.msk [vmem:[#allocation4 + $0x80] sm:$0xff] %vm3699, %v3548
  %3709 = vst.msk [vmem:[#allocation4 + $0x90] sm:$0xff] %vm3699, %v3550
  %3710 = vst.msk [vmem:[#allocation4 + $0xa0] sm:$0xff] %vm3699, %v3552
  %3711 = vst.msk [vmem:[#allocation4 + $0xb0] sm:$0xff] %vm3699, %v3554
  %3712 = vst.msk [vmem:[#allocation4 + $0xc0] sm:$0xff] %vm3699, %v3556
  %3713 = vst.msk [vmem:[#allocation4 + $0xd0] sm:$0xff] %vm3699, %v3558
  %3714 = vst.msk [vmem:[#allocation4 + $0xe0] sm:$0xff] %vm3699, %v3560
  %3715 = vst.msk [vmem:[#allocation4 + $0xf0] sm:$0xff] %vm3699, %v3562
  %3716 = vst.msk [vmem:[#allocation4 + $0x100] sm:$0xff] %vm3699, %v3564
  %3717 = vst.msk [vmem:[#allocation4 + $0x110] sm:$0xff] %vm3699, %v3566
  %3718 = vst.msk [vmem:[#allocation4 + $0x120] sm:$0xff] %vm3699, %v3568
  %3719 = vst.msk [vmem:[#allocation4 + $0x130] sm:$0xff] %vm3699, %v3570
  %3720 = vst.msk [vmem:[#allocation4 + $0x140] sm:$0xff] %vm3699, %v3572
  %3721 = vst.msk [vmem:[#allocation4 + $0x150] sm:$0xff] %vm3699, %v3574
  %3722 = vst.msk [vmem:[#allocation4 + $0x160] sm:$0xff] %vm3699, %v3576
  %3723 = vst.msk [vmem:[#allocation4 + $0x170] sm:$0xff] %vm3699, %v3578
  %3724 = vst.msk [vmem:[#allocation4 + $0x180] sm:$0xff] %vm3699, %v3580
  %3725 = vst.msk [vmem:[#allocation4 + $0x190] sm:$0xff] %vm3699, %v3582
  %3726 = vst.msk [vmem:[#allocation4 + $0x1a0] sm:$0xff] %vm3699, %v3584
  %3727 = vst.msk [vmem:[#allocation4 + $0x1b0] sm:$0xff] %vm3699, %v3586
  %3728 = vst.msk [vmem:[#allocation4 + $0x1c0] sm:$0xff] %vm3699, %v3588
  %3729 = vst.msk [vmem:[#allocation4 + $0x1d0] sm:$0xff] %vm3699, %v3590
  %3730 = vst.msk [vmem:[#allocation4 + $0x1e0] sm:$0xff] %vm3699, %v3592
  %3731 = vst.msk [vmem:[#allocation4 + $0x1f0] sm:$0xff] %vm3699, %v3594
  %3732 = vst.msk [vmem:[#allocation4 + $0x200] sm:$0xff] %vm3699, %v3596
  %3733 = vst.msk [vmem:[#allocation4 + $0x210] sm:$0xff] %vm3699, %v3598
  %3734 = vst.msk [vmem:[#allocation4 + $0x220] sm:$0xff] %vm3699, %v3600
  %3735 = vst.msk [vmem:[#allocation4 + $0x230] sm:$0xff] %vm3699, %v3602
  %3736 = vst.msk [vmem:[#allocation4 + $0x240] sm:$0xff] %vm3699, %v3604
  %3737 = vst.msk [vmem:[#allocation4 + $0x250] sm:$0xff] %vm3699, %v3606
  %3738 = vst.msk [vmem:[#allocation4 + $0x260] sm:$0xff] %vm3699, %v3608
  %3739 = vst.msk [vmem:[#allocation4 + $0x270] sm:$0xff] %vm3699, %v3610
  %3740 = vst.msk [vmem:[#allocation4 + $0x280] sm:$0xff] %vm3699, %v3612
  %3741 = vst.msk [vmem:[#allocation4 + $0x290] sm:$0xff] %vm3699, %v3614
  %3742 = vst.msk [vmem:[#allocation4 + $0x2a0] sm:$0xff] %vm3699, %v3616
  %3743 = vst.msk [vmem:[#allocation4 + $0x2b0] sm:$0xff] %vm3699, %v3618
  %3744 = vst.msk [vmem:[#allocation4 + $0x2c0] sm:$0xff] %vm3699, %v3620
  %3745 = vst.msk [vmem:[#allocation4 + $0x2d0] sm:$0xff] %vm3699, %v3622
  %3746 = vst.msk [vmem:[#allocation4 + $0x2e0] sm:$0xff] %vm3699, %v3624
  %3747 = vst.msk [vmem:[#allocation4 + $0x2f0] sm:$0xff] %vm3699, %v3626
  %3748 = vst.msk [vmem:[#allocation4 + $0x300] sm:$0xff] %vm3699, %v3628
  %3749 = vst.msk [vmem:[#allocation4 + $0x310] sm:$0xff] %vm3699, %v3630
  %3750 = vst.msk [vmem:[#allocation4 + $0x320] sm:$0xff] %vm3699, %v3632
  %3751 = vst.msk [vmem:[#allocation4 + $0x330] sm:$0xff] %vm3699, %v3634
  %3752 = vst.msk [vmem:[#allocation4 + $0x340] sm:$0xff] %vm3699, %v3636
  %3753 = vst.msk [vmem:[#allocation4 + $0x350] sm:$0xff] %vm3699, %v3638
  %3754 = vst.msk [vmem:[#allocation4 + $0x360] sm:$0xff] %vm3699, %v3640
  %3755 = vst.msk [vmem:[#allocation4 + $0x370] sm:$0xff] %vm3699, %v3642
  %v3756 = vld [vmem:[#allocation2 + $0x10] sm:$0xff]
  %v3757 = vld [vmem:[#allocation2 + $0x18] sm:$0xff]
  %v3758 = vld [vmem:[#allocation2 + $0x20] sm:$0xff]
  %v3759 = vld [vmem:[#allocation2 + $0x28] sm:$0xff]
  %v3760 = vld [vmem:[#allocation2 + $0x30] sm:$0xff]
  %v3761 = vld [vmem:[#allocation2 + $0x38] sm:$0xff]
  %v3762 = vld [vmem:[#allocation2 + $0x40] sm:$0xff]
  %v3763 = vld [vmem:[#allocation2 + $0x48] sm:$0xff]
  %v3764 = vld [vmem:[#allocation2 + $0x50] sm:$0xff]
  %v3765 = vld [vmem:[#allocation2 + $0x58] sm:$0xff]
  %v3766 = vld [vmem:[#allocation2 + $0x60] sm:$0xff]
  %v3767 = vld [vmem:[#allocation2 + $0x68] sm:$0xff]
  %v3768 = vld [vmem:[#allocation2 + $0x70] sm:$0xff]
  %v3769 = vld [vmem:[#allocation2 + $0x78] sm:$0xff]
  %v3770 = vld [vmem:[#allocation2 + $0x80] sm:$0xff]
  %v3771 = vld [vmem:[#allocation2 + $0x88] sm:$0xff]
  %v3772 = vld [vmem:[#allocation2 + $0x90] sm:$0xff]
  %v3773 = vld [vmem:[#allocation2 + $0x98] sm:$0xff]
  %v3774 = vld [vmem:[#allocation2 + $0xa0] sm:$0xff]
  %v3775 = vld [vmem:[#allocation2 + $0xa8] sm:$0xff]
  %v3776 = vld [vmem:[#allocation2 + $0xb0] sm:$0xff]
  %v3777 = vld [vmem:[#allocation2 + $0xb8] sm:$0xff]
  %v3778 = vld [vmem:[#allocation2 + $0xc0] sm:$0xff]
  %v3779 = vld [vmem:[#allocation2 + $0xc8] sm:$0xff]
  %v3780 = vld [vmem:[#allocation2 + $0xd0] sm:$0xff]
  %v3781 = vld [vmem:[#allocation2 + $0xd8] sm:$0xff]
  %v3782 = vld [vmem:[#allocation2 + $0xe0] sm:$0xff]
  %v3783 = vld [vmem:[#allocation2 + $0xe8] sm:$0xff]
  %v3784 = vld [vmem:[#allocation2 + $0x120] sm:$0xff]
  %v3785 = vld [vmem:[#allocation2 + $0x128] sm:$0xff]
  %v3786 = vld [vmem:[#allocation2 + $0x130] sm:$0xff]
  %v3787 = vld [vmem:[#allocation2 + $0x138] sm:$0xff]
  %v3788 = vld [vmem:[#allocation2 + $0x140] sm:$0xff]
  %v3789 = vld [vmem:[#allocation2 + $0x148] sm:$0xff]
  %v3790 = vld [vmem:[#allocation2 + $0x150] sm:$0xff]
  %v3791 = vld [vmem:[#allocation2 + $0x158] sm:$0xff]
  %v3792 = vld [vmem:[#allocation2 + $0x160] sm:$0xff]
  %v3793 = vld [vmem:[#allocation2 + $0x168] sm:$0xff]
  %v3794 = vld [vmem:[#allocation2 + $0x170] sm:$0xff]
  %v3795 = vld [vmem:[#allocation2 + $0x178] sm:$0xff]
  %v3796 = vld [vmem:[#allocation2 + $0x180] sm:$0xff]
  %v3797 = vld [vmem:[#allocation2 + $0x188] sm:$0xff]
  %v3798 = vld [vmem:[#allocation2 + $0x190] sm:$0xff]
  %v3799 = vld [vmem:[#allocation2 + $0x198] sm:$0xff]
  %v3800 = vld [vmem:[#allocation2 + $0x1a0] sm:$0xff]
  %v3801 = vld [vmem:[#allocation2 + $0x1a8] sm:$0xff]
  %v3802 = vld [vmem:[#allocation2 + $0x1b0] sm:$0xff]
  %v3803 = vld [vmem:[#allocation2 + $0x1b8] sm:$0xff]
  %v3804 = vld [vmem:[#allocation2 + $0x1c0] sm:$0xff]
  %v3805 = vld [vmem:[#allocation2 + $0x1c8] sm:$0xff]
  %v3806 = vld [vmem:[#allocation2 + $0x1d0] sm:$0xff]
  %v3807 = vld [vmem:[#allocation2 + $0x1d8] sm:$0xff]
  %v3808 = vld [vmem:[#allocation2 + $0x1e0] sm:$0xff]
  %v3809 = vld [vmem:[#allocation2 + $0x1e8] sm:$0xff]
  %v3810 = vld [vmem:[#allocation2 + $0x1f0] sm:$0xff]
  %v3811 = vld [vmem:[#allocation2 + $0x1f8] sm:$0xff]
  %3868 = vrot.lane.b32.xlu0 %v3756, 48
  %v3869 = vpop.permute.xlu0 %3868
  %3870 = vrot.lane.b32.xlu0 %v3757, 48
  %v3871 = vpop.permute.xlu0 %3870
  %3872 = vrot.lane.b32.xlu0 %v3758, 48
  %v3873 = vpop.permute.xlu0 %3872
  %3874 = vrot.lane.b32.xlu0 %v3759, 48
  %v3875 = vpop.permute.xlu0 %3874
  %3876 = vrot.lane.b32.xlu0 %v3760, 48
  %v3877 = vpop.permute.xlu0 %3876
  %3878 = vrot.lane.b32.xlu0 %v3761, 48
  %v3879 = vpop.permute.xlu0 %3878
  %3880 = vrot.lane.b32.xlu0 %v3762, 48
  %v3881 = vpop.permute.xlu0 %3880
  %3882 = vrot.lane.b32.xlu0 %v3763, 48
  %v3883 = vpop.permute.xlu0 %3882
  %3884 = vrot.lane.b32.xlu0 %v3764, 48
  %v3885 = vpop.permute.xlu0 %3884
  %3886 = vrot.lane.b32.xlu0 %v3765, 48
  %v3887 = vpop.permute.xlu0 %3886
  %3888 = vrot.lane.b32.xlu0 %v3766, 48
  %v3889 = vpop.permute.xlu0 %3888
  %3890 = vrot.lane.b32.xlu0 %v3767, 48
  %v3891 = vpop.permute.xlu0 %3890
  %3892 = vrot.lane.b32.xlu0 %v3768, 48
  %v3893 = vpop.permute.xlu0 %3892
  %3894 = vrot.lane.b32.xlu0 %v3769, 48
  %v3895 = vpop.permute.xlu0 %3894
  %3896 = vrot.lane.b32.xlu0 %v3770, 48
  %v3897 = vpop.permute.xlu0 %3896
  %3898 = vrot.lane.b32.xlu0 %v3771, 48
  %v3899 = vpop.permute.xlu0 %3898
  %3900 = vrot.lane.b32.xlu0 %v3772, 48
  %v3901 = vpop.permute.xlu0 %3900
  %3902 = vrot.lane.b32.xlu0 %v3773, 48
  %v3903 = vpop.permute.xlu0 %3902
  %3904 = vrot.lane.b32.xlu0 %v3774, 48
  %v3905 = vpop.permute.xlu0 %3904
  %3906 = vrot.lane.b32.xlu0 %v3775, 48
  %v3907 = vpop.permute.xlu0 %3906
  %3908 = vrot.lane.b32.xlu0 %v3776, 48
  %v3909 = vpop.permute.xlu0 %3908
  %3910 = vrot.lane.b32.xlu0 %v3777, 48
  %v3911 = vpop.permute.xlu0 %3910
  %3912 = vrot.lane.b32.xlu0 %v3778, 48
  %v3913 = vpop.permute.xlu0 %3912
  %3914 = vrot.lane.b32.xlu0 %v3779, 48
  %v3915 = vpop.permute.xlu0 %3914
  %3916 = vrot.lane.b32.xlu0 %v3780, 48
  %v3917 = vpop.permute.xlu0 %3916
  %3918 = vrot.lane.b32.xlu0 %v3781, 48
  %v3919 = vpop.permute.xlu0 %3918
  %3920 = vrot.lane.b32.xlu0 %v3782, 48
  %v3921 = vpop.permute.xlu0 %3920
  %3922 = vrot.lane.b32.xlu0 %v3783, 48
  %v3923 = vpop.permute.xlu0 %3922
  %3924 = vrot.lane.b32.xlu0 %v3784, 48
  %v3925 = vpop.permute.xlu0 %3924
  %3926 = vrot.lane.b32.xlu0 %v3785, 48
  %v3927 = vpop.permute.xlu0 %3926
  %3928 = vrot.lane.b32.xlu0 %v3786, 48
  %v3929 = vpop.permute.xlu0 %3928
  %3930 = vrot.lane.b32.xlu0 %v3787, 48
  %v3931 = vpop.permute.xlu0 %3930
  %3932 = vrot.lane.b32.xlu0 %v3788, 48
  %v3933 = vpop.permute.xlu0 %3932
  %3934 = vrot.lane.b32.xlu0 %v3789, 48
  %v3935 = vpop.permute.xlu0 %3934
  %3936 = vrot.lane.b32.xlu0 %v3790, 48
  %v3937 = vpop.permute.xlu0 %3936
  %3938 = vrot.lane.b32.xlu0 %v3791, 48
  %v3939 = vpop.permute.xlu0 %3938
  %3940 = vrot.lane.b32.xlu0 %v3792, 48
  %v3941 = vpop.permute.xlu0 %3940
  %3942 = vrot.lane.b32.xlu0 %v3793, 48
  %v3943 = vpop.permute.xlu0 %3942
  %3944 = vrot.lane.b32.xlu0 %v3794, 48
  %v3945 = vpop.permute.xlu0 %3944
  %3946 = vrot.lane.b32.xlu0 %v3795, 48
  %v3947 = vpop.permute.xlu0 %3946
  %3948 = vrot.lane.b32.xlu0 %v3796, 48
  %v3949 = vpop.permute.xlu0 %3948
  %3950 = vrot.lane.b32.xlu0 %v3797, 48
  %v3951 = vpop.permute.xlu0 %3950
  %3952 = vrot.lane.b32.xlu0 %v3798, 48
  %v3953 = vpop.permute.xlu0 %3952
  %3954 = vrot.lane.b32.xlu0 %v3799, 48
  %v3955 = vpop.permute.xlu0 %3954
  %3956 = vrot.lane.b32.xlu0 %v3800, 48
  %v3957 = vpop.permute.xlu0 %3956
  %3958 = vrot.lane.b32.xlu0 %v3801, 48
  %v3959 = vpop.permute.xlu0 %3958
  %3960 = vrot.lane.b32.xlu0 %v3802, 48
  %v3961 = vpop.permute.xlu0 %3960
  %3962 = vrot.lane.b32.xlu0 %v3803, 48
  %v3963 = vpop.permute.xlu0 %3962
  %3964 = vrot.lane.b32.xlu0 %v3804, 48
  %v3965 = vpop.permute.xlu0 %3964
  %3966 = vrot.lane.b32.xlu0 %v3805, 48
  %v3967 = vpop.permute.xlu0 %3966
  %3968 = vrot.lane.b32.xlu0 %v3806, 48
  %v3969 = vpop.permute.xlu0 %3968
  %3970 = vrot.lane.b32.xlu0 %v3807, 48
  %v3971 = vpop.permute.xlu0 %3970
  %3972 = vrot.lane.b32.xlu0 %v3808, 48
  %v3973 = vpop.permute.xlu0 %3972
  %3974 = vrot.lane.b32.xlu0 %v3809, 48
  %v3975 = vpop.permute.xlu0 %3974
  %3976 = vrot.lane.b32.xlu0 %v3810, 48
  %v3977 = vpop.permute.xlu0 %3976
  %3978 = vrot.lane.b32.xlu0 %v3811, 48
  %v3979 = vpop.permute.xlu0 %3978
  %vm4036 = vcmask 523648
  %4037 = vst.msk [vmem:[#allocation4] sm:$0xff] %vm4036, %v3869
  %4038 = vst.msk [vmem:[#allocation4 + $0x10] sm:$0xff] %vm4036, %v3871
  %4039 = vst.msk [vmem:[#allocation4 + $0x20] sm:$0xff] %vm4036, %v3873
  %4040 = vst.msk [vmem:[#allocation4 + $0x30] sm:$0xff] %vm4036, %v3875
  %4041 = vst.msk [vmem:[#allocation4 + $0x40] sm:$0xff] %vm4036, %v3877
  %4042 = vst.msk [vmem:[#allocation4 + $0x50] sm:$0xff] %vm4036, %v3879
  %4043 = vst.msk [vmem:[#allocation4 + $0x60] sm:$0xff] %vm4036, %v3881
  %4044 = vst.msk [vmem:[#allocation4 + $0x70] sm:$0xff] %vm4036, %v3883
  %4045 = vst.msk [vmem:[#allocation4 + $0x80] sm:$0xff] %vm4036, %v3885
  %4046 = vst.msk [vmem:[#allocation4 + $0x90] sm:$0xff] %vm4036, %v3887
  %4047 = vst.msk [vmem:[#allocation4 + $0xa0] sm:$0xff] %vm4036, %v3889
  %4048 = vst.msk [vmem:[#allocation4 + $0xb0] sm:$0xff] %vm4036, %v3891
  %4049 = vst.msk [vmem:[#allocation4 + $0xc0] sm:$0xff] %vm4036, %v3893
  %4050 = vst.msk [vmem:[#allocation4 + $0xd0] sm:$0xff] %vm4036, %v3895
  %4051 = vst.msk [vmem:[#allocation4 + $0xe0] sm:$0xff] %vm4036, %v3897
  %4052 = vst.msk [vmem:[#allocation4 + $0xf0] sm:$0xff] %vm4036, %v3899
  %4053 = vst.msk [vmem:[#allocation4 + $0x100] sm:$0xff] %vm4036, %v3901
  %4054 = vst.msk [vmem:[#allocation4 + $0x110] sm:$0xff] %vm4036, %v3903
  %4055 = vst.msk [vmem:[#allocation4 + $0x120] sm:$0xff] %vm4036, %v3905
  %4056 = vst.msk [vmem:[#allocation4 + $0x130] sm:$0xff] %vm4036, %v3907
  %4057 = vst.msk [vmem:[#allocation4 + $0x140] sm:$0xff] %vm4036, %v3909
  %4058 = vst.msk [vmem:[#allocation4 + $0x150] sm:$0xff] %vm4036, %v3911
  %4059 = vst.msk [vmem:[#allocation4 + $0x160] sm:$0xff] %vm4036, %v3913
  %4060 = vst.msk [vmem:[#allocation4 + $0x170] sm:$0xff] %vm4036, %v3915
  %4061 = vst.msk [vmem:[#allocation4 + $0x180] sm:$0xff] %vm4036, %v3917
  %4062 = vst.msk [vmem:[#allocation4 + $0x190] sm:$0xff] %vm4036, %v3919
  %4063 = vst.msk [vmem:[#allocation4 + $0x1a0] sm:$0xff] %vm4036, %v3921
  %4064 = vst.msk [vmem:[#allocation4 + $0x1b0] sm:$0xff] %vm4036, %v3923
  %4065 = vst.msk [vmem:[#allocation4 + $0x1c0] sm:$0xff] %vm4036, %v3925
  %4066 = vst.msk [vmem:[#allocation4 + $0x1d0] sm:$0xff] %vm4036, %v3927
  %4067 = vst.msk [vmem:[#allocation4 + $0x1e0] sm:$0xff] %vm4036, %v3929
  %4068 = vst.msk [vmem:[#allocation4 + $0x1f0] sm:$0xff] %vm4036, %v3931
  %4069 = vst.msk [vmem:[#allocation4 + $0x200] sm:$0xff] %vm4036, %v3933
  %4070 = vst.msk [vmem:[#allocation4 + $0x210] sm:$0xff] %vm4036, %v3935
  %4071 = vst.msk [vmem:[#allocation4 + $0x220] sm:$0xff] %vm4036, %v3937
  %4072 = vst.msk [vmem:[#allocation4 + $0x230] sm:$0xff] %vm4036, %v3939
  %4073 = vst.msk [vmem:[#allocation4 + $0x240] sm:$0xff] %vm4036, %v3941
  %4074 = vst.msk [vmem:[#allocation4 + $0x250] sm:$0xff] %vm4036, %v3943
  %4075 = vst.msk [vmem:[#allocation4 + $0x260] sm:$0xff] %vm4036, %v3945
  %4076 = vst.msk [vmem:[#allocation4 + $0x270] sm:$0xff] %vm4036, %v3947
  %4077 = vst.msk [vmem:[#allocation4 + $0x280] sm:$0xff] %vm4036, %v3949
  %4078 = vst.msk [vmem:[#allocation4 + $0x290] sm:$0xff] %vm4036, %v3951
  %4079 = vst.msk [vmem:[#allocation4 + $0x2a0] sm:$0xff] %vm4036, %v3953
  %4080 = vst.msk [vmem:[#allocation4 + $0x2b0] sm:$0xff] %vm4036, %v3955
  %4081 = vst.msk [vmem:[#allocation4 + $0x2c0] sm:$0xff] %vm4036, %v3957
  %4082 = vst.msk [vmem:[#allocation4 + $0x2d0] sm:$0xff] %vm4036, %v3959
  %4083 = vst.msk [vmem:[#allocation4 + $0x2e0] sm:$0xff] %vm4036, %v3961
  %4084 = vst.msk [vmem:[#allocation4 + $0x2f0] sm:$0xff] %vm4036, %v3963
  %4085 = vst.msk [vmem:[#allocation4 + $0x300] sm:$0xff] %vm4036, %v3965
  %4086 = vst.msk [vmem:[#allocation4 + $0x310] sm:$0xff] %vm4036, %v3967
  %4087 = vst.msk [vmem:[#allocation4 + $0x320] sm:$0xff] %vm4036, %v3969
  %4088 = vst.msk [vmem:[#allocation4 + $0x330] sm:$0xff] %vm4036, %v3971
  %4089 = vst.msk [vmem:[#allocation4 + $0x340] sm:$0xff] %vm4036, %v3973
  %4090 = vst.msk [vmem:[#allocation4 + $0x350] sm:$0xff] %vm4036, %v3975
  %4091 = vst.msk [vmem:[#allocation4 + $0x360] sm:$0xff] %vm4036, %v3977
  %4092 = vst.msk [vmem:[#allocation4 + $0x370] sm:$0xff] %vm4036, %v3979
  %v4093 = vld [vmem:[#allocation2 + $0x11] sm:$0xff]
  %v4094 = vld [vmem:[#allocation2 + $0x19] sm:$0xff]
  %v4095 = vld [vmem:[#allocation2 + $0x21] sm:$0xff]
  %v4096 = vld [vmem:[#allocation2 + $0x29] sm:$0xff]
  %v4097 = vld [vmem:[#allocation2 + $0x31] sm:$0xff]
  %v4098 = vld [vmem:[#allocation2 + $0x39] sm:$0xff]
  %v4099 = vld [vmem:[#allocation2 + $0x41] sm:$0xff]
  %v4100 = vld [vmem:[#allocation2 + $0x49] sm:$0xff]
  %v4101 = vld [vmem:[#allocation2 + $0x51] sm:$0xff]
  %v4102 = vld [vmem:[#allocation2 + $0x59] sm:$0xff]
  %v4103 = vld [vmem:[#allocation2 + $0x61] sm:$0xff]
  %v4104 = vld [vmem:[#allocation2 + $0x69] sm:$0xff]
  %v4105 = vld [vmem:[#allocation2 + $0x71] sm:$0xff]
  %v4106 = vld [vmem:[#allocation2 + $0x79] sm:$0xff]
  %v4107 = vld [vmem:[#allocation2 + $0x81] sm:$0xff]
  %v4108 = vld [vmem:[#allocation2 + $0x89] sm:$0xff]
  %v4109 = vld [vmem:[#allocation2 + $0x91] sm:$0xff]
  %v4110 = vld [vmem:[#allocation2 + $0x99] sm:$0xff]
  %v4111 = vld [vmem:[#allocation2 + $0xa1] sm:$0xff]
  %v4112 = vld [vmem:[#allocation2 + $0xa9] sm:$0xff]
  %v4113 = vld [vmem:[#allocation2 + $0xb1] sm:$0xff]
  %v4114 = vld [vmem:[#allocation2 + $0xb9] sm:$0xff]
  %v4115 = vld [vmem:[#allocation2 + $0xc1] sm:$0xff]
  %v4116 = vld [vmem:[#allocation2 + $0xc9] sm:$0xff]
  %v4117 = vld [vmem:[#allocation2 + $0xd1] sm:$0xff]
  %v4118 = vld [vmem:[#allocation2 + $0xd9] sm:$0xff]
  %v4119 = vld [vmem:[#allocation2 + $0xe1] sm:$0xff]
  %v4120 = vld [vmem:[#allocation2 + $0xe9] sm:$0xff]
  %v4121 = vld [vmem:[#allocation2 + $0x121] sm:$0xff]
  %v4122 = vld [vmem:[#allocation2 + $0x129] sm:$0xff]
  %v4123 = vld [vmem:[#allocation2 + $0x131] sm:$0xff]
  %v4124 = vld [vmem:[#allocation2 + $0x139] sm:$0xff]
  %v4125 = vld [vmem:[#allocation2 + $0x141] sm:$0xff]
  %v4126 = vld [vmem:[#allocation2 + $0x149] sm:$0xff]
  %v4127 = vld [vmem:[#allocation2 + $0x151] sm:$0xff]
  %v4128 = vld [vmem:[#allocation2 + $0x159] sm:$0xff]
  %v4129 = vld [vmem:[#allocation2 + $0x161] sm:$0xff]
  %v4130 = vld [vmem:[#allocation2 + $0x169] sm:$0xff]
  %v4131 = vld [vmem:[#allocation2 + $0x171] sm:$0xff]
  %v4132 = vld [vmem:[#allocation2 + $0x179] sm:$0xff]
  %v4133 = vld [vmem:[#allocation2 + $0x181] sm:$0xff]
  %v4134 = vld [vmem:[#allocation2 + $0x189] sm:$0xff]
  %v4135 = vld [vmem:[#allocation2 + $0x191] sm:$0xff]
  %v4136 = vld [vmem:[#allocation2 + $0x199] sm:$0xff]
  %v4137 = vld [vmem:[#allocation2 + $0x1a1] sm:$0xff]
  %v4138 = vld [vmem:[#allocation2 + $0x1a9] sm:$0xff]
  %v4139 = vld [vmem:[#allocation2 + $0x1b1] sm:$0xff]
  %v4140 = vld [vmem:[#allocation2 + $0x1b9] sm:$0xff]
  %v4141 = vld [vmem:[#allocation2 + $0x1c1] sm:$0xff]
  %v4142 = vld [vmem:[#allocation2 + $0x1c9] sm:$0xff]
  %v4143 = vld [vmem:[#allocation2 + $0x1d1] sm:$0xff]
  %v4144 = vld [vmem:[#allocation2 + $0x1d9] sm:$0xff]
  %v4145 = vld [vmem:[#allocation2 + $0x1e1] sm:$0xff]
  %v4146 = vld [vmem:[#allocation2 + $0x1e9] sm:$0xff]
  %v4147 = vld [vmem:[#allocation2 + $0x1f1] sm:$0xff]
  %v4148 = vld [vmem:[#allocation2 + $0x1f9] sm:$0xff]
  %4205 = vrot.lane.b32.xlu0 %v4093, 64
  %v4206 = vpop.permute.xlu0 %4205
  %4207 = vrot.lane.b32.xlu0 %v4094, 64
  %v4208 = vpop.permute.xlu0 %4207
  %4209 = vrot.lane.b32.xlu0 %v4095, 64
  %v4210 = vpop.permute.xlu0 %4209
  %4211 = vrot.lane.b32.xlu0 %v4096, 64
  %v4212 = vpop.permute.xlu0 %4211
  %4213 = vrot.lane.b32.xlu0 %v4097, 64
  %v4214 = vpop.permute.xlu0 %4213
  %4215 = vrot.lane.b32.xlu0 %v4098, 64
  %v4216 = vpop.permute.xlu0 %4215
  %4217 = vrot.lane.b32.xlu0 %v4099, 64
  %v4218 = vpop.permute.xlu0 %4217
  %4219 = vrot.lane.b32.xlu0 %v4100, 64
  %v4220 = vpop.permute.xlu0 %4219
  %4221 = vrot.lane.b32.xlu0 %v4101, 64
  %v4222 = vpop.permute.xlu0 %4221
  %4223 = vrot.lane.b32.xlu0 %v4102, 64
  %v4224 = vpop.permute.xlu0 %4223
  %4225 = vrot.lane.b32.xlu0 %v4103, 64
  %v4226 = vpop.permute.xlu0 %4225
  %4227 = vrot.lane.b32.xlu0 %v4104, 64
  %v4228 = vpop.permute.xlu0 %4227
  %4229 = vrot.lane.b32.xlu0 %v4105, 64
  %v4230 = vpop.permute.xlu0 %4229
  %4231 = vrot.lane.b32.xlu0 %v4106, 64
  %v4232 = vpop.permute.xlu0 %4231
  %4233 = vrot.lane.b32.xlu0 %v4107, 64
  %v4234 = vpop.permute.xlu0 %4233
  %4235 = vrot.lane.b32.xlu0 %v4108, 64
  %v4236 = vpop.permute.xlu0 %4235
  %4237 = vrot.lane.b32.xlu0 %v4109, 64
  %v4238 = vpop.permute.xlu0 %4237
  %4239 = vrot.lane.b32.xlu0 %v4110, 64
  %v4240 = vpop.permute.xlu0 %4239
  %4241 = vrot.lane.b32.xlu0 %v4111, 64
  %v4242 = vpop.permute.xlu0 %4241
  %4243 = vrot.lane.b32.xlu0 %v4112, 64
  %v4244 = vpop.permute.xlu0 %4243
  %4245 = vrot.lane.b32.xlu0 %v4113, 64
  %v4246 = vpop.permute.xlu0 %4245
  %4247 = vrot.lane.b32.xlu0 %v4114, 64
  %v4248 = vpop.permute.xlu0 %4247
  %4249 = vrot.lane.b32.xlu0 %v4115, 64
  %v4250 = vpop.permute.xlu0 %4249
  %4251 = vrot.lane.b32.xlu0 %v4116, 64
  %v4252 = vpop.permute.xlu0 %4251
  %4253 = vrot.lane.b32.xlu0 %v4117, 64
  %v4254 = vpop.permute.xlu0 %4253
  %4255 = vrot.lane.b32.xlu0 %v4118, 64
  %v4256 = vpop.permute.xlu0 %4255
  %4257 = vrot.lane.b32.xlu0 %v4119, 64
  %v4258 = vpop.permute.xlu0 %4257
  %4259 = vrot.lane.b32.xlu0 %v4120, 64
  %v4260 = vpop.permute.xlu0 %4259
  %4261 = vrot.lane.b32.xlu0 %v4121, 64
  %v4262 = vpop.permute.xlu0 %4261
  %4263 = vrot.lane.b32.xlu0 %v4122, 64
  %v4264 = vpop.permute.xlu0 %4263
  %4265 = vrot.lane.b32.xlu0 %v4123, 64
  %v4266 = vpop.permute.xlu0 %4265
  %4267 = vrot.lane.b32.xlu0 %v4124, 64
  %v4268 = vpop.permute.xlu0 %4267
  %4269 = vrot.lane.b32.xlu0 %v4125, 64
  %v4270 = vpop.permute.xlu0 %4269
  %4271 = vrot.lane.b32.xlu0 %v4126, 64
  %v4272 = vpop.permute.xlu0 %4271
  %4273 = vrot.lane.b32.xlu0 %v4127, 64
  %v4274 = vpop.permute.xlu0 %4273
  %4275 = vrot.lane.b32.xlu0 %v4128, 64
  %v4276 = vpop.permute.xlu0 %4275
  %4277 = vrot.lane.b32.xlu0 %v4129, 64
  %v4278 = vpop.permute.xlu0 %4277
  %4279 = vrot.lane.b32.xlu0 %v4130, 64
  %v4280 = vpop.permute.xlu0 %4279
  %4281 = vrot.lane.b32.xlu0 %v4131, 64
  %v4282 = vpop.permute.xlu0 %4281
  %4283 = vrot.lane.b32.xlu0 %v4132, 64
  %v4284 = vpop.permute.xlu0 %4283
  %4285 = vrot.lane.b32.xlu0 %v4133, 64
  %v4286 = vpop.permute.xlu0 %4285
  %4287 = vrot.lane.b32.xlu0 %v4134, 64
  %v4288 = vpop.permute.xlu0 %4287
  %4289 = vrot.lane.b32.xlu0 %v4135, 64
  %v4290 = vpop.permute.xlu0 %4289
  %4291 = vrot.lane.b32.xlu0 %v4136, 64
  %v4292 = vpop.permute.xlu0 %4291
  %4293 = vrot.lane.b32.xlu0 %v4137, 64
  %v4294 = vpop.permute.xlu0 %4293
  %4295 = vrot.lane.b32.xlu0 %v4138, 64
  %v4296 = vpop.permute.xlu0 %4295
  %4297 = vrot.lane.b32.xlu0 %v4139, 64
  %v4298 = vpop.permute.xlu0 %4297
  %4299 = vrot.lane.b32.xlu0 %v4140, 64
  %v4300 = vpop.permute.xlu0 %4299
  %4301 = vrot.lane.b32.xlu0 %v4141, 64
  %v4302 = vpop.permute.xlu0 %4301
  %4303 = vrot.lane.b32.xlu0 %v4142, 64
  %v4304 = vpop.permute.xlu0 %4303
  %4305 = vrot.lane.b32.xlu0 %v4143, 64
  %v4306 = vpop.permute.xlu0 %4305
  %4307 = vrot.lane.b32.xlu0 %v4144, 64
  %v4308 = vpop.permute.xlu0 %4307
  %4309 = vrot.lane.b32.xlu0 %v4145, 64
  %v4310 = vpop.permute.xlu0 %4309
  %4311 = vrot.lane.b32.xlu0 %v4146, 64
  %v4312 = vpop.permute.xlu0 %4311
  %4313 = vrot.lane.b32.xlu0 %v4147, 64
  %v4314 = vpop.permute.xlu0 %4313
  %4315 = vrot.lane.b32.xlu0 %v4148, 64
  %v4316 = vpop.permute.xlu0 %4315
  %vm4373 = vcmask 654848
  %4374 = vst.msk [vmem:[#allocation4] sm:$0xff] %vm4373, %v4206
  %4375 = vst.msk [vmem:[#allocation4 + $0x10] sm:$0xff] %vm4373, %v4208
  %4376 = vst.msk [vmem:[#allocation4 + $0x20] sm:$0xff] %vm4373, %v4210
  %4377 = vst.msk [vmem:[#allocation4 + $0x30] sm:$0xff] %vm4373, %v4212
  %4378 = vst.msk [vmem:[#allocation4 + $0x40] sm:$0xff] %vm4373, %v4214
  %4379 = vst.msk [vmem:[#allocation4 + $0x50] sm:$0xff] %vm4373, %v4216
  %4380 = vst.msk [vmem:[#allocation4 + $0x60] sm:$0xff] %vm4373, %v4218
  %4381 = vst.msk [vmem:[#allocation4 + $0x70] sm:$0xff] %vm4373, %v4220
  %4382 = vst.msk [vmem:[#allocation4 + $0x80] sm:$0xff] %vm4373, %v4222
  %4383 = vst.msk [vmem:[#allocation4 + $0x90] sm:$0xff] %vm4373, %v4224
  %4384 = vst.msk [vmem:[#allocation4 + $0xa0] sm:$0xff] %vm4373, %v4226
  %4385 = vst.msk [vmem:[#allocation4 + $0xb0] sm:$0xff] %vm4373, %v4228
  %4386 = vst.msk [vmem:[#allocation4 + $0xc0] sm:$0xff] %vm4373, %v4230
  %4387 = vst.msk [vmem:[#allocation4 + $0xd0] sm:$0xff] %vm4373, %v4232
  %4388 = vst.msk [vmem:[#allocation4 + $0xe0] sm:$0xff] %vm4373, %v4234
  %4389 = vst.msk [vmem:[#allocation4 + $0xf0] sm:$0xff] %vm4373, %v4236
  %4390 = vst.msk [vmem:[#allocation4 + $0x100] sm:$0xff] %vm4373, %v4238
  %4391 = vst.msk [vmem:[#allocation4 + $0x110] sm:$0xff] %vm4373, %v4240
  %4392 = vst.msk [vmem:[#allocation4 + $0x120] sm:$0xff] %vm4373, %v4242
  %4393 = vst.msk [vmem:[#allocation4 + $0x130] sm:$0xff] %vm4373, %v4244
  %4394 = vst.msk [vmem:[#allocation4 + $0x140] sm:$0xff] %vm4373, %v4246
  %4395 = vst.msk [vmem:[#allocation4 + $0x150] sm:$0xff] %vm4373, %v4248
  %4396 = vst.msk [vmem:[#allocation4 + $0x160] sm:$0xff] %vm4373, %v4250
  %4397 = vst.msk [vmem:[#allocation4 + $0x170] sm:$0xff] %vm4373, %v4252
  %4398 = vst.msk [vmem:[#allocation4 + $0x180] sm:$0xff] %vm4373, %v4254
  %4399 = vst.msk [vmem:[#allocation4 + $0x190] sm:$0xff] %vm4373, %v4256
  %4400 = vst.msk [vmem:[#allocation4 + $0x1a0] sm:$0xff] %vm4373, %v4258
  %4401 = vst.msk [vmem:[#allocation4 + $0x1b0] sm:$0xff] %vm4373, %v4260
  %4402 = vst.msk [vmem:[#allocation4 + $0x1c0] sm:$0xff] %vm4373, %v4262
  %4403 = vst.msk [vmem:[#allocation4 + $0x1d0] sm:$0xff] %vm4373, %v4264
  %4404 = vst.msk [vmem:[#allocation4 + $0x1e0] sm:$0xff] %vm4373, %v4266
  %4405 = vst.msk [vmem:[#allocation4 + $0x1f0] sm:$0xff] %vm4373, %v4268
  %4406 = vst.msk [vmem:[#allocation4 + $0x200] sm:$0xff] %vm4373, %v4270
  %4407 = vst.msk [vmem:[#allocation4 + $0x210] sm:$0xff] %vm4373, %v4272
  %4408 = vst.msk [vmem:[#allocation4 + $0x220] sm:$0xff] %vm4373, %v4274
  %4409 = vst.msk [vmem:[#allocation4 + $0x230] sm:$0xff] %vm4373, %v4276
  %4410 = vst.msk [vmem:[#allocation4 + $0x240] sm:$0xff] %vm4373, %v4278
  %4411 = vst.msk [vmem:[#allocation4 + $0x250] sm:$0xff] %vm4373, %v4280
  %4412 = vst.msk [vmem:[#allocation4 + $0x260] sm:$0xff] %vm4373, %v4282
  %4413 = vst.msk [vmem:[#allocation4 + $0x270] sm:$0xff] %vm4373, %v4284
  %4414 = vst.msk [vmem:[#allocation4 + $0x280] sm:$0xff] %vm4373, %v4286
  %4415 = vst.msk [vmem:[#allocation4 + $0x290] sm:$0xff] %vm4373, %v4288
  %4416 = vst.msk [vmem:[#allocation4 + $0x2a0] sm:$0xff] %vm4373, %v4290
  %4417 = vst.msk [vmem:[#allocation4 + $0x2b0] sm:$0xff] %vm4373, %v4292
  %4418 = vst.msk [vmem:[#allocation4 + $0x2c0] sm:$0xff] %vm4373, %v4294
  %4419 = vst.msk [vmem:[#allocation4 + $0x2d0] sm:$0xff] %vm4373, %v4296
  %4420 = vst.msk [vmem:[#allocation4 + $0x2e0] sm:$0xff] %vm4373, %v4298
  %4421 = vst.msk [vmem:[#allocation4 + $0x2f0] sm:$0xff] %vm4373, %v4300
  %4422 = vst.msk [vmem:[#allocation4 + $0x300] sm:$0xff] %vm4373, %v4302
  %4423 = vst.msk [vmem:[#allocation4 + $0x310] sm:$0xff] %vm4373, %v4304
  %4424 = vst.msk [vmem:[#allocation4 + $0x320] sm:$0xff] %vm4373, %v4306
  %4425 = vst.msk [vmem:[#allocation4 + $0x330] sm:$0xff] %vm4373, %v4308
  %4426 = vst.msk [vmem:[#allocation4 + $0x340] sm:$0xff] %vm4373, %v4310
  %4427 = vst.msk [vmem:[#allocation4 + $0x350] sm:$0xff] %vm4373, %v4312
  %4428 = vst.msk [vmem:[#allocation4 + $0x360] sm:$0xff] %vm4373, %v4314
  %4429 = vst.msk [vmem:[#allocation4 + $0x370] sm:$0xff] %vm4373, %v4316
  %v4430 = vld [vmem:[#allocation2 + $0x12] sm:$0xff]
  %v4431 = vld [vmem:[#allocation2 + $0x1a] sm:$0xff]
  %v4432 = vld [vmem:[#allocation2 + $0x22] sm:$0xff]
  %v4433 = vld [vmem:[#allocation2 + $0x2a] sm:$0xff]
  %v4434 = vld [vmem:[#allocation2 + $0x32] sm:$0xff]
  %v4435 = vld [vmem:[#allocation2 + $0x3a] sm:$0xff]
  %v4436 = vld [vmem:[#allocation2 + $0x42] sm:$0xff]
  %v4437 = vld [vmem:[#allocation2 + $0x4a] sm:$0xff]
  %v4438 = vld [vmem:[#allocation2 + $0x52] sm:$0xff]
  %v4439 = vld [vmem:[#allocation2 + $0x5a] sm:$0xff]
  %v4440 = vld [vmem:[#allocation2 + $0x62] sm:$0xff]
  %v4441 = vld [vmem:[#allocation2 + $0x6a] sm:$0xff]
  %v4442 = vld [vmem:[#allocation2 + $0x72] sm:$0xff]
  %v4443 = vld [vmem:[#allocation2 + $0x7a] sm:$0xff]
  %v4444 = vld [vmem:[#allocation2 + $0x82] sm:$0xff]
  %v4445 = vld [vmem:[#allocation2 + $0x8a] sm:$0xff]
  %v4446 = vld [vmem:[#allocation2 + $0x92] sm:$0xff]
  %v4447 = vld [vmem:[#allocation2 + $0x9a] sm:$0xff]
  %v4448 = vld [vmem:[#allocation2 + $0xa2] sm:$0xff]
  %v4449 = vld [vmem:[#allocation2 + $0xaa] sm:$0xff]
  %v4450 = vld [vmem:[#allocation2 + $0xb2] sm:$0xff]
  %v4451 = vld [vmem:[#allocation2 + $0xba] sm:$0xff]
  %v4452 = vld [vmem:[#allocation2 + $0xc2] sm:$0xff]
  %v4453 = vld [vmem:[#allocation2 + $0xca] sm:$0xff]
  %v4454 = vld [vmem:[#allocation2 + $0xd2] sm:$0xff]
  %v4455 = vld [vmem:[#allocation2 + $0xda] sm:$0xff]
  %v4456 = vld [vmem:[#allocation2 + $0xe2] sm:$0xff]
  %v4457 = vld [vmem:[#allocation2 + $0xea] sm:$0xff]
  %v4458 = vld [vmem:[#allocation2 + $0x122] sm:$0xff]
  %v4459 = vld [vmem:[#allocation2 + $0x12a] sm:$0xff]
  %v4460 = vld [vmem:[#allocation2 + $0x132] sm:$0xff]
  %v4461 = vld [vmem:[#allocation2 + $0x13a] sm:$0xff]
  %v4462 = vld [vmem:[#allocation2 + $0x142] sm:$0xff]
  %v4463 = vld [vmem:[#allocation2 + $0x14a] sm:$0xff]
  %v4464 = vld [vmem:[#allocation2 + $0x152] sm:$0xff]
  %v4465 = vld [vmem:[#allocation2 + $0x15a] sm:$0xff]
  %v4466 = vld [vmem:[#allocation2 + $0x162] sm:$0xff]
  %v4467 = vld [vmem:[#allocation2 + $0x16a] sm:$0xff]
  %v4468 = vld [vmem:[#allocation2 + $0x172] sm:$0xff]
  %v4469 = vld [vmem:[#allocation2 + $0x17a] sm:$0xff]
  %v4470 = vld [vmem:[#allocation2 + $0x182] sm:$0xff]
  %v4471 = vld [vmem:[#allocation2 + $0x18a] sm:$0xff]
  %v4472 = vld [vmem:[#allocation2 + $0x192] sm:$0xff]
  %v4473 = vld [vmem:[#allocation2 + $0x19a] sm:$0xff]
  %v4474 = vld [vmem:[#allocation2 + $0x1a2] sm:$0xff]
  %v4475 = vld [vmem:[#allocation2 + $0x1aa] sm:$0xff]
  %v4476 = vld [vmem:[#allocation2 + $0x1b2] sm:$0xff]
  %v4477 = vld [vmem:[#allocation2 + $0x1ba] sm:$0xff]
  %v4478 = vld [vmem:[#allocation2 + $0x1c2] sm:$0xff]
  %v4479 = vld [vmem:[#allocation2 + $0x1ca] sm:$0xff]
  %v4480 = vld [vmem:[#allocation2 + $0x1d2] sm:$0xff]
  %v4481 = vld [vmem:[#allocation2 + $0x1da] sm:$0xff]
  %v4482 = vld [vmem:[#allocation2 + $0x1e2] sm:$0xff]
  %v4483 = vld [vmem:[#allocation2 + $0x1ea] sm:$0xff]
  %v4484 = vld [vmem:[#allocation2 + $0x1f2] sm:$0xff]
  %v4485 = vld [vmem:[#allocation2 + $0x1fa] sm:$0xff]
  %4542 = vrot.lane.b32.xlu0 %v4430, 80
  %v4543 = vpop.permute.xlu0 %4542
  %4544 = vrot.lane.b32.xlu0 %v4431, 80
  %v4545 = vpop.permute.xlu0 %4544
  %4546 = vrot.lane.b32.xlu0 %v4432, 80
  %v4547 = vpop.permute.xlu0 %4546
  %4548 = vrot.lane.b32.xlu0 %v4433, 80
  %v4549 = vpop.permute.xlu0 %4548
  %4550 = vrot.lane.b32.xlu0 %v4434, 80
  %v4551 = vpop.permute.xlu0 %4550
  %4552 = vrot.lane.b32.xlu0 %v4435, 80
  %v4553 = vpop.permute.xlu0 %4552
  %4554 = vrot.lane.b32.xlu0 %v4436, 80
  %v4555 = vpop.permute.xlu0 %4554
  %4556 = vrot.lane.b32.xlu0 %v4437, 80
  %v4557 = vpop.permute.xlu0 %4556
  %4558 = vrot.lane.b32.xlu0 %v4438, 80
  %v4559 = vpop.permute.xlu0 %4558
  %4560 = vrot.lane.b32.xlu0 %v4439, 80
  %v4561 = vpop.permute.xlu0 %4560
  %4562 = vrot.lane.b32.xlu0 %v4440, 80
  %v4563 = vpop.permute.xlu0 %4562
  %4564 = vrot.lane.b32.xlu0 %v4441, 80
  %v4565 = vpop.permute.xlu0 %4564
  %4566 = vrot.lane.b32.xlu0 %v4442, 80
  %v4567 = vpop.permute.xlu0 %4566
  %4568 = vrot.lane.b32.xlu0 %v4443, 80
  %v4569 = vpop.permute.xlu0 %4568
  %4570 = vrot.lane.b32.xlu0 %v4444, 80
  %v4571 = vpop.permute.xlu0 %4570
  %4572 = vrot.lane.b32.xlu0 %v4445, 80
  %v4573 = vpop.permute.xlu0 %4572
  %4574 = vrot.lane.b32.xlu0 %v4446, 80
  %v4575 = vpop.permute.xlu0 %4574
  %4576 = vrot.lane.b32.xlu0 %v4447, 80
  %v4577 = vpop.permute.xlu0 %4576
  %4578 = vrot.lane.b32.xlu0 %v4448, 80
  %v4579 = vpop.permute.xlu0 %4578
  %4580 = vrot.lane.b32.xlu0 %v4449, 80
  %v4581 = vpop.permute.xlu0 %4580
  %4582 = vrot.lane.b32.xlu0 %v4450, 80
  %v4583 = vpop.permute.xlu0 %4582
  %4584 = vrot.lane.b32.xlu0 %v4451, 80
  %v4585 = vpop.permute.xlu0 %4584
  %4586 = vrot.lane.b32.xlu0 %v4452, 80
  %v4587 = vpop.permute.xlu0 %4586
  %4588 = vrot.lane.b32.xlu0 %v4453, 80
  %v4589 = vpop.permute.xlu0 %4588
  %4590 = vrot.lane.b32.xlu0 %v4454, 80
  %v4591 = vpop.permute.xlu0 %4590
  %4592 = vrot.lane.b32.xlu0 %v4455, 80
  %v4593 = vpop.permute.xlu0 %4592
  %4594 = vrot.lane.b32.xlu0 %v4456, 80
  %v4595 = vpop.permute.xlu0 %4594
  %4596 = vrot.lane.b32.xlu0 %v4457, 80
  %v4597 = vpop.permute.xlu0 %4596
  %4598 = vrot.lane.b32.xlu0 %v4458, 80
  %v4599 = vpop.permute.xlu0 %4598
  %4600 = vrot.lane.b32.xlu0 %v4459, 80
  %v4601 = vpop.permute.xlu0 %4600
  %4602 = vrot.lane.b32.xlu0 %v4460, 80
  %v4603 = vpop.permute.xlu0 %4602
  %4604 = vrot.lane.b32.xlu0 %v4461, 80
  %v4605 = vpop.permute.xlu0 %4604
  %4606 = vrot.lane.b32.xlu0 %v4462, 80
  %v4607 = vpop.permute.xlu0 %4606
  %4608 = vrot.lane.b32.xlu0 %v4463, 80
  %v4609 = vpop.permute.xlu0 %4608
  %4610 = vrot.lane.b32.xlu0 %v4464, 80
  %v4611 = vpop.permute.xlu0 %4610
  %4612 = vrot.lane.b32.xlu0 %v4465, 80
  %v4613 = vpop.permute.xlu0 %4612
  %4614 = vrot.lane.b32.xlu0 %v4466, 80
  %v4615 = vpop.permute.xlu0 %4614
  %4616 = vrot.lane.b32.xlu0 %v4467, 80
  %v4617 = vpop.permute.xlu0 %4616
  %4618 = vrot.lane.b32.xlu0 %v4468, 80
  %v4619 = vpop.permute.xlu0 %4618
  %4620 = vrot.lane.b32.xlu0 %v4469, 80
  %v4621 = vpop.permute.xlu0 %4620
  %4622 = vrot.lane.b32.xlu0 %v4470, 80
  %v4623 = vpop.permute.xlu0 %4622
  %4624 = vrot.lane.b32.xlu0 %v4471, 80
  %v4625 = vpop.permute.xlu0 %4624
  %4626 = vrot.lane.b32.xlu0 %v4472, 80
  %v4627 = vpop.permute.xlu0 %4626
  %4628 = vrot.lane.b32.xlu0 %v4473, 80
  %v4629 = vpop.permute.xlu0 %4628
  %4630 = vrot.lane.b32.xlu0 %v4474, 80
  %v4631 = vpop.permute.xlu0 %4630
  %4632 = vrot.lane.b32.xlu0 %v4475, 80
  %v4633 = vpop.permute.xlu0 %4632
  %4634 = vrot.lane.b32.xlu0 %v4476, 80
  %v4635 = vpop.permute.xlu0 %4634
  %4636 = vrot.lane.b32.xlu0 %v4477, 80
  %v4637 = vpop.permute.xlu0 %4636
  %4638 = vrot.lane.b32.xlu0 %v4478, 80
  %v4639 = vpop.permute.xlu0 %4638
  %4640 = vrot.lane.b32.xlu0 %v4479, 80
  %v4641 = vpop.permute.xlu0 %4640
  %4642 = vrot.lane.b32.xlu0 %v4480, 80
  %v4643 = vpop.permute.xlu0 %4642
  %4644 = vrot.lane.b32.xlu0 %v4481, 80
  %v4645 = vpop.permute.xlu0 %4644
  %4646 = vrot.lane.b32.xlu0 %v4482, 80
  %v4647 = vpop.permute.xlu0 %4646
  %4648 = vrot.lane.b32.xlu0 %v4483, 80
  %v4649 = vpop.permute.xlu0 %4648
  %4650 = vrot.lane.b32.xlu0 %v4484, 80
  %v4651 = vpop.permute.xlu0 %4650
  %4652 = vrot.lane.b32.xlu0 %v4485, 80
  %v4653 = vpop.permute.xlu0 %4652
  %vm4710 = vcmask 786048
  %4711 = vst.msk [vmem:[#allocation4] sm:$0xff] %vm4710, %v4543
  %4712 = vst.msk [vmem:[#allocation4 + $0x10] sm:$0xff] %vm4710, %v4545
  %4713 = vst.msk [vmem:[#allocation4 + $0x20] sm:$0xff] %vm4710, %v4547
  %4714 = vst.msk [vmem:[#allocation4 + $0x30] sm:$0xff] %vm4710, %v4549
  %4715 = vst.msk [vmem:[#allocation4 + $0x40] sm:$0xff] %vm4710, %v4551
  %4716 = vst.msk [vmem:[#allocation4 + $0x50] sm:$0xff] %vm4710, %v4553
  %4717 = vst.msk [vmem:[#allocation4 + $0x60] sm:$0xff] %vm4710, %v4555
  %4718 = vst.msk [vmem:[#allocation4 + $0x70] sm:$0xff] %vm4710, %v4557
  %4719 = vst.msk [vmem:[#allocation4 + $0x80] sm:$0xff] %vm4710, %v4559
  %4720 = vst.msk [vmem:[#allocation4 + $0x90] sm:$0xff] %vm4710, %v4561
  %4721 = vst.msk [vmem:[#allocation4 + $0xa0] sm:$0xff] %vm4710, %v4563
  %4722 = vst.msk [vmem:[#allocation4 + $0xb0] sm:$0xff] %vm4710, %v4565
  %4723 = vst.msk [vmem:[#allocation4 + $0xc0] sm:$0xff] %vm4710, %v4567
  %4724 = vst.msk [vmem:[#allocation4 + $0xd0] sm:$0xff] %vm4710, %v4569
  %4725 = vst.msk [vmem:[#allocation4 + $0xe0] sm:$0xff] %vm4710, %v4571
  %4726 = vst.msk [vmem:[#allocation4 + $0xf0] sm:$0xff] %vm4710, %v4573
  %4727 = vst.msk [vmem:[#allocation4 + $0x100] sm:$0xff] %vm4710, %v4575
  %4728 = vst.msk [vmem:[#allocation4 + $0x110] sm:$0xff] %vm4710, %v4577
  %4729 = vst.msk [vmem:[#allocation4 + $0x120] sm:$0xff] %vm4710, %v4579
  %4730 = vst.msk [vmem:[#allocation4 + $0x130] sm:$0xff] %vm4710, %v4581
  %4731 = vst.msk [vmem:[#allocation4 + $0x140] sm:$0xff] %vm4710, %v4583
  %4732 = vst.msk [vmem:[#allocation4 + $0x150] sm:$0xff] %vm4710, %v4585
  %4733 = vst.msk [vmem:[#allocation4 + $0x160] sm:$0xff] %vm4710, %v4587
  %4734 = vst.msk [vmem:[#allocation4 + $0x170] sm:$0xff] %vm4710, %v4589
  %4735 = vst.msk [vmem:[#allocation4 + $0x180] sm:$0xff] %vm4710, %v4591
  %4736 = vst.msk [vmem:[#allocation4 + $0x190] sm:$0xff] %vm4710, %v4593
  %4737 = vst.msk [vmem:[#allocation4 + $0x1a0] sm:$0xff] %vm4710, %v4595
  %4738 = vst.msk [vmem:[#allocation4 + $0x1b0] sm:$0xff] %vm4710, %v4597
  %4739 = vst.msk [vmem:[#allocation4 + $0x1c0] sm:$0xff] %vm4710, %v4599
  %4740 = vst.msk [vmem:[#allocation4 + $0x1d0] sm:$0xff] %vm4710, %v4601
  %4741 = vst.msk [vmem:[#allocation4 + $0x1e0] sm:$0xff] %vm4710, %v4603
  %4742 = vst.msk [vmem:[#allocation4 + $0x1f0] sm:$0xff] %vm4710, %v4605
  %4743 = vst.msk [vmem:[#allocation4 + $0x200] sm:$0xff] %vm4710, %v4607
  %4744 = vst.msk [vmem:[#allocation4 + $0x210] sm:$0xff] %vm4710, %v4609
  %4745 = vst.msk [vmem:[#allocation4 + $0x220] sm:$0xff] %vm4710, %v4611
  %4746 = vst.msk [vmem:[#allocation4 + $0x230] sm:$0xff] %vm4710, %v4613
  %4747 = vst.msk [vmem:[#allocation4 + $0x240] sm:$0xff] %vm4710, %v4615
  %4748 = vst.msk [vmem:[#allocation4 + $0x250] sm:$0xff] %vm4710, %v4617
  %4749 = vst.msk [vmem:[#allocation4 + $0x260] sm:$0xff] %vm4710, %v4619
  %4750 = vst.msk [vmem:[#allocation4 + $0x270] sm:$0xff] %vm4710, %v4621
  %4751 = vst.msk [vmem:[#allocation4 + $0x280] sm:$0xff] %vm4710, %v4623
  %4752 = vst.msk [vmem:[#allocation4 + $0x290] sm:$0xff] %vm4710, %v4625
  %4753 = vst.msk [vmem:[#allocation4 + $0x2a0] sm:$0xff] %vm4710, %v4627
  %4754 = vst.msk [vmem:[#allocation4 + $0x2b0] sm:$0xff] %vm4710, %v4629
  %4755 = vst.msk [vmem:[#allocation4 + $0x2c0] sm:$0xff] %vm4710, %v4631
  %4756 = vst.msk [vmem:[#allocation4 + $0x2d0] sm:$0xff] %vm4710, %v4633
  %4757 = vst.msk [vmem:[#allocation4 + $0x2e0] sm:$0xff] %vm4710, %v4635
  %4758 = vst.msk [vmem:[#allocation4 + $0x2f0] sm:$0xff] %vm4710, %v4637
  %4759 = vst.msk [vmem:[#allocation4 + $0x300] sm:$0xff] %vm4710, %v4639
  %4760 = vst.msk [vmem:[#allocation4 + $0x310] sm:$0xff] %vm4710, %v4641
  %4761 = vst.msk [vmem:[#allocation4 + $0x320] sm:$0xff] %vm4710, %v4643
  %4762 = vst.msk [vmem:[#allocation4 + $0x330] sm:$0xff] %vm4710, %v4645
  %4763 = vst.msk [vmem:[#allocation4 + $0x340] sm:$0xff] %vm4710, %v4647
  %4764 = vst.msk [vmem:[#allocation4 + $0x350] sm:$0xff] %vm4710, %v4649
  %4765 = vst.msk [vmem:[#allocation4 + $0x360] sm:$0xff] %vm4710, %v4651
  %4766 = vst.msk [vmem:[#allocation4 + $0x370] sm:$0xff] %vm4710, %v4653
  %v4767 = vld [vmem:[#allocation2 + $0x20] sm:$0xff]
  %v4768 = vld [vmem:[#allocation2 + $0x28] sm:$0xff]
  %v4769 = vld [vmem:[#allocation2 + $0x30] sm:$0xff]
  %v4770 = vld [vmem:[#allocation2 + $0x38] sm:$0xff]
  %v4771 = vld [vmem:[#allocation2 + $0x40] sm:$0xff]
  %v4772 = vld [vmem:[#allocation2 + $0x48] sm:$0xff]
  %v4773 = vld [vmem:[#allocation2 + $0x50] sm:$0xff]
  %v4774 = vld [vmem:[#allocation2 + $0x58] sm:$0xff]
  %v4775 = vld [vmem:[#allocation2 + $0x60] sm:$0xff]
  %v4776 = vld [vmem:[#allocation2 + $0x68] sm:$0xff]
  %v4777 = vld [vmem:[#allocation2 + $0x70] sm:$0xff]
  %v4778 = vld [vmem:[#allocation2 + $0x78] sm:$0xff]
  %v4779 = vld [vmem:[#allocation2 + $0x80] sm:$0xff]
  %v4780 = vld [vmem:[#allocation2 + $0x88] sm:$0xff]
  %v4781 = vld [vmem:[#allocation2 + $0x90] sm:$0xff]
  %v4782 = vld [vmem:[#allocation2 + $0x98] sm:$0xff]
  %v4783 = vld [vmem:[#allocation2 + $0xa0] sm:$0xff]
  %v4784 = vld [vmem:[#allocation2 + $0xa8] sm:$0xff]
  %v4785 = vld [vmem:[#allocation2 + $0xb0] sm:$0xff]
  %v4786 = vld [vmem:[#allocation2 + $0xb8] sm:$0xff]
  %v4787 = vld [vmem:[#allocation2 + $0xc0] sm:$0xff]
  %v4788 = vld [vmem:[#allocation2 + $0xc8] sm:$0xff]
  %v4789 = vld [vmem:[#allocation2 + $0xd0] sm:$0xff]
  %v4790 = vld [vmem:[#allocation2 + $0xd8] sm:$0xff]
  %v4791 = vld [vmem:[#allocation2 + $0xe0] sm:$0xff]
  %v4792 = vld [vmem:[#allocation2 + $0xe8] sm:$0xff]
  %v4793 = vld [vmem:[#allocation2 + $0xf0] sm:$0xff]
  %v4794 = vld [vmem:[#allocation2 + $0xf8] sm:$0xff]
  %v4795 = vld [vmem:[#allocation2 + $0x130] sm:$0xff]
  %v4796 = vld [vmem:[#allocation2 + $0x138] sm:$0xff]
  %v4797 = vld [vmem:[#allocation2 + $0x140] sm:$0xff]
  %v4798 = vld [vmem:[#allocation2 + $0x148] sm:$0xff]
  %v4799 = vld [vmem:[#allocation2 + $0x150] sm:$0xff]
  %v4800 = vld [vmem:[#allocation2 + $0x158] sm:$0xff]
  %v4801 = vld [vmem:[#allocation2 + $0x160] sm:$0xff]
  %v4802 = vld [vmem:[#allocation2 + $0x168] sm:$0xff]
  %v4803 = vld [vmem:[#allocation2 + $0x170] sm:$0xff]
  %v4804 = vld [vmem:[#allocation2 + $0x178] sm:$0xff]
  %v4805 = vld [vmem:[#allocation2 + $0x180] sm:$0xff]
  %v4806 = vld [vmem:[#allocation2 + $0x188] sm:$0xff]
  %v4807 = vld [vmem:[#allocation2 + $0x190] sm:$0xff]
  %v4808 = vld [vmem:[#allocation2 + $0x198] sm:$0xff]
  %v4809 = vld [vmem:[#allocation2 + $0x1a0] sm:$0xff]
  %v4810 = vld [vmem:[#allocation2 + $0x1a8] sm:$0xff]
  %v4811 = vld [vmem:[#allocation2 + $0x1b0] sm:$0xff]
  %v4812 = vld [vmem:[#allocation2 + $0x1b8] sm:$0xff]
  %v4813 = vld [vmem:[#allocation2 + $0x1c0] sm:$0xff]
  %v4814 = vld [vmem:[#allocation2 + $0x1c8] sm:$0xff]
  %v4815 = vld [vmem:[#allocation2 + $0x1d0] sm:$0xff]
  %v4816 = vld [vmem:[#allocation2 + $0x1d8] sm:$0xff]
  %v4817 = vld [vmem:[#allocation2 + $0x1e0] sm:$0xff]
  %v4818 = vld [vmem:[#allocation2 + $0x1e8] sm:$0xff]
  %v4819 = vld [vmem:[#allocation2 + $0x1f0] sm:$0xff]
  %v4820 = vld [vmem:[#allocation2 + $0x1f8] sm:$0xff]
  %v4821 = vld [vmem:[#allocation2 + $0x200] sm:$0xff]
  %v4822 = vld [vmem:[#allocation2 + $0x208] sm:$0xff]
  %4879 = vrot.lane.b32.xlu0 %v4767, 96
  %v4880 = vpop.permute.xlu0 %4879
  %4881 = vrot.lane.b32.xlu0 %v4768, 96
  %v4882 = vpop.permute.xlu0 %4881
  %4883 = vrot.lane.b32.xlu0 %v4769, 96
  %v4884 = vpop.permute.xlu0 %4883
  %4885 = vrot.lane.b32.xlu0 %v4770, 96
  %v4886 = vpop.permute.xlu0 %4885
  %4887 = vrot.lane.b32.xlu0 %v4771, 96
  %v4888 = vpop.permute.xlu0 %4887
  %4889 = vrot.lane.b32.xlu0 %v4772, 96
  %v4890 = vpop.permute.xlu0 %4889
  %4891 = vrot.lane.b32.xlu0 %v4773, 96
  %v4892 = vpop.permute.xlu0 %4891
  %4893 = vrot.lane.b32.xlu0 %v4774, 96
  %v4894 = vpop.permute.xlu0 %4893
  %4895 = vrot.lane.b32.xlu0 %v4775, 96
  %v4896 = vpop.permute.xlu0 %4895
  %4897 = vrot.lane.b32.xlu0 %v4776, 96
  %v4898 = vpop.permute.xlu0 %4897
  %4899 = vrot.lane.b32.xlu0 %v4777, 96
  %v4900 = vpop.permute.xlu0 %4899
  %4901 = vrot.lane.b32.xlu0 %v4778, 96
  %v4902 = vpop.permute.xlu0 %4901
  %4903 = vrot.lane.b32.xlu0 %v4779, 96
  %v4904 = vpop.permute.xlu0 %4903
  %4905 = vrot.lane.b32.xlu0 %v4780, 96
  %v4906 = vpop.permute.xlu0 %4905
  %4907 = vrot.lane.b32.xlu0 %v4781, 96
  %v4908 = vpop.permute.xlu0 %4907
  %4909 = vrot.lane.b32.xlu0 %v4782, 96
  %v4910 = vpop.permute.xlu0 %4909
  %4911 = vrot.lane.b32.xlu0 %v4783, 96
  %v4912 = vpop.permute.xlu0 %4911
  %4913 = vrot.lane.b32.xlu0 %v4784, 96
  %v4914 = vpop.permute.xlu0 %4913
  %4915 = vrot.lane.b32.xlu0 %v4785, 96
  %v4916 = vpop.permute.xlu0 %4915
  %4917 = vrot.lane.b32.xlu0 %v4786, 96
  %v4918 = vpop.permute.xlu0 %4917
  %4919 = vrot.lane.b32.xlu0 %v4787, 96
  %v4920 = vpop.permute.xlu0 %4919
  %4921 = vrot.lane.b32.xlu0 %v4788, 96
  %v4922 = vpop.permute.xlu0 %4921
  %4923 = vrot.lane.b32.xlu0 %v4789, 96
  %v4924 = vpop.permute.xlu0 %4923
  %4925 = vrot.lane.b32.xlu0 %v4790, 96
  %v4926 = vpop.permute.xlu0 %4925
  %4927 = vrot.lane.b32.xlu0 %v4791, 96
  %v4928 = vpop.permute.xlu0 %4927
  %4929 = vrot.lane.b32.xlu0 %v4792, 96
  %v4930 = vpop.permute.xlu0 %4929
  %4931 = vrot.lane.b32.xlu0 %v4793, 96
  %v4932 = vpop.permute.xlu0 %4931
  %4933 = vrot.lane.b32.xlu0 %v4794, 96
  %v4934 = vpop.permute.xlu0 %4933
  %4935 = vrot.lane.b32.xlu0 %v4795, 96
  %v4936 = vpop.permute.xlu0 %4935
  %4937 = vrot.lane.b32.xlu0 %v4796, 96
  %v4938 = vpop.permute.xlu0 %4937
  %4939 = vrot.lane.b32.xlu0 %v4797, 96
  %v4940 = vpop.permute.xlu0 %4939
  %4941 = vrot.lane.b32.xlu0 %v4798, 96
  %v4942 = vpop.permute.xlu0 %4941
  %4943 = vrot.lane.b32.xlu0 %v4799, 96
  %v4944 = vpop.permute.xlu0 %4943
  %4945 = vrot.lane.b32.xlu0 %v4800, 96
  %v4946 = vpop.permute.xlu0 %4945
  %4947 = vrot.lane.b32.xlu0 %v4801, 96
  %v4948 = vpop.permute.xlu0 %4947
  %4949 = vrot.lane.b32.xlu0 %v4802, 96
  %v4950 = vpop.permute.xlu0 %4949
  %4951 = vrot.lane.b32.xlu0 %v4803, 96
  %v4952 = vpop.permute.xlu0 %4951
  %4953 = vrot.lane.b32.xlu0 %v4804, 96
  %v4954 = vpop.permute.xlu0 %4953
  %4955 = vrot.lane.b32.xlu0 %v4805, 96
  %v4956 = vpop.permute.xlu0 %4955
  %4957 = vrot.lane.b32.xlu0 %v4806, 96
  %v4958 = vpop.permute.xlu0 %4957
  %4959 = vrot.lane.b32.xlu0 %v4807, 96
  %v4960 = vpop.permute.xlu0 %4959
  %4961 = vrot.lane.b32.xlu0 %v4808, 96
  %v4962 = vpop.permute.xlu0 %4961
  %4963 = vrot.lane.b32.xlu0 %v4809, 96
  %v4964 = vpop.permute.xlu0 %4963
  %4965 = vrot.lane.b32.xlu0 %v4810, 96
  %v4966 = vpop.permute.xlu0 %4965
  %4967 = vrot.lane.b32.xlu0 %v4811, 96
  %v4968 = vpop.permute.xlu0 %4967
  %4969 = vrot.lane.b32.xlu0 %v4812, 96
  %v4970 = vpop.permute.xlu0 %4969
  %4971 = vrot.lane.b32.xlu0 %v4813, 96
  %v4972 = vpop.permute.xlu0 %4971
  %4973 = vrot.lane.b32.xlu0 %v4814, 96
  %v4974 = vpop.permute.xlu0 %4973
  %4975 = vrot.lane.b32.xlu0 %v4815, 96
  %v4976 = vpop.permute.xlu0 %4975
  %4977 = vrot.lane.b32.xlu0 %v4816, 96
  %v4978 = vpop.permute.xlu0 %4977
  %4979 = vrot.lane.b32.xlu0 %v4817, 96
  %v4980 = vpop.permute.xlu0 %4979
  %4981 = vrot.lane.b32.xlu0 %v4818, 96
  %v4982 = vpop.permute.xlu0 %4981
  %4983 = vrot.lane.b32.xlu0 %v4819, 96
  %v4984 = vpop.permute.xlu0 %4983
  %4985 = vrot.lane.b32.xlu0 %v4820, 96
  %v4986 = vpop.permute.xlu0 %4985
  %4987 = vrot.lane.b32.xlu0 %v4821, 96
  %v4988 = vpop.permute.xlu0 %4987
  %4989 = vrot.lane.b32.xlu0 %v4822, 96
  %v4990 = vpop.permute.xlu0 %4989
  %vm5047 = vcmask 917248
  %5048 = vst.msk [vmem:[#allocation4] sm:$0xff] %vm5047, %v4880
  %5049 = vst.msk [vmem:[#allocation4 + $0x10] sm:$0xff] %vm5047, %v4882
  %5050 = vst.msk [vmem:[#allocation4 + $0x20] sm:$0xff] %vm5047, %v4884
  %5051 = vst.msk [vmem:[#allocation4 + $0x30] sm:$0xff] %vm5047, %v4886
  %5052 = vst.msk [vmem:[#allocation4 + $0x40] sm:$0xff] %vm5047, %v4888
  %5053 = vst.msk [vmem:[#allocation4 + $0x50] sm:$0xff] %vm5047, %v4890
  %5054 = vst.msk [vmem:[#allocation4 + $0x60] sm:$0xff] %vm5047, %v4892
  %5055 = vst.msk [vmem:[#allocation4 + $0x70] sm:$0xff] %vm5047, %v4894
  %5056 = vst.msk [vmem:[#allocation4 + $0x80] sm:$0xff] %vm5047, %v4896
  %5057 = vst.msk [vmem:[#allocation4 + $0x90] sm:$0xff] %vm5047, %v4898
  %5058 = vst.msk [vmem:[#allocation4 + $0xa0] sm:$0xff] %vm5047, %v4900
  %5059 = vst.msk [vmem:[#allocation4 + $0xb0] sm:$0xff] %vm5047, %v4902
  %5060 = vst.msk [vmem:[#allocation4 + $0xc0] sm:$0xff] %vm5047, %v4904
  %5061 = vst.msk [vmem:[#allocation4 + $0xd0] sm:$0xff] %vm5047, %v4906
  %5062 = vst.msk [vmem:[#allocation4 + $0xe0] sm:$0xff] %vm5047, %v4908
  %5063 = vst.msk [vmem:[#allocation4 + $0xf0] sm:$0xff] %vm5047, %v4910
  %5064 = vst.msk [vmem:[#allocation4 + $0x100] sm:$0xff] %vm5047, %v4912
  %5065 = vst.msk [vmem:[#allocation4 + $0x110] sm:$0xff] %vm5047, %v4914
  %5066 = vst.msk [vmem:[#allocation4 + $0x120] sm:$0xff] %vm5047, %v4916
  %5067 = vst.msk [vmem:[#allocation4 + $0x130] sm:$0xff] %vm5047, %v4918
  %5068 = vst.msk [vmem:[#allocation4 + $0x140] sm:$0xff] %vm5047, %v4920
  %5069 = vst.msk [vmem:[#allocation4 + $0x150] sm:$0xff] %vm5047, %v4922
  %5070 = vst.msk [vmem:[#allocation4 + $0x160] sm:$0xff] %vm5047, %v4924
  %5071 = vst.msk [vmem:[#allocation4 + $0x170] sm:$0xff] %vm5047, %v4926
  %5072 = vst.msk [vmem:[#allocation4 + $0x180] sm:$0xff] %vm5047, %v4928
  %5073 = vst.msk [vmem:[#allocation4 + $0x190] sm:$0xff] %vm5047, %v4930
  %5074 = vst.msk [vmem:[#allocation4 + $0x1a0] sm:$0xff] %vm5047, %v4932
  %5075 = vst.msk [vmem:[#allocation4 + $0x1b0] sm:$0xff] %vm5047, %v4934
  %5076 = vst.msk [vmem:[#allocation4 + $0x1c0] sm:$0xff] %vm5047, %v4936
  %5077 = vst.msk [vmem:[#allocation4 + $0x1d0] sm:$0xff] %vm5047, %v4938
  %5078 = vst.msk [vmem:[#allocation4 + $0x1e0] sm:$0xff] %vm5047, %v4940
  %5079 = vst.msk [vmem:[#allocation4 + $0x1f0] sm:$0xff] %vm5047, %v4942
  %5080 = vst.msk [vmem:[#allocation4 + $0x200] sm:$0xff] %vm5047, %v4944
  %5081 = vst.msk [vmem:[#allocation4 + $0x210] sm:$0xff] %vm5047, %v4946
  %5082 = vst.msk [vmem:[#allocation4 + $0x220] sm:$0xff] %vm5047, %v4948
  %5083 = vst.msk [vmem:[#allocation4 + $0x230] sm:$0xff] %vm5047, %v4950
  %5084 = vst.msk [vmem:[#allocation4 + $0x240] sm:$0xff] %vm5047, %v4952
  %5085 = vst.msk [vmem:[#allocation4 + $0x250] sm:$0xff] %vm5047, %v4954
  %5086 = vst.msk [vmem:[#allocation4 + $0x260] sm:$0xff] %vm5047, %v4956
  %5087 = vst.msk [vmem:[#allocation4 + $0x270] sm:$0xff] %vm5047, %v4958
  %5088 = vst.msk [vmem:[#allocation4 + $0x280] sm:$0xff] %vm5047, %v4960
  %5089 = vst.msk [vmem:[#allocation4 + $0x290] sm:$0xff] %vm5047, %v4962
  %5090 = vst.msk [vmem:[#allocation4 + $0x2a0] sm:$0xff] %vm5047, %v4964
  %5091 = vst.msk [vmem:[#allocation4 + $0x2b0] sm:$0xff] %vm5047, %v4966
  %5092 = vst.msk [vmem:[#allocation4 + $0x2c0] sm:$0xff] %vm5047, %v4968
  %5093 = vst.msk [vmem:[#allocation4 + $0x2d0] sm:$0xff] %vm5047, %v4970
  %5094 = vst.msk [vmem:[#allocation4 + $0x2e0] sm:$0xff] %vm5047, %v4972
  %5095 = vst.msk [vmem:[#allocation4 + $0x2f0] sm:$0xff] %vm5047, %v4974
  %5096 = vst.msk [vmem:[#allocation4 + $0x300] sm:$0xff] %vm5047, %v4976
  %5097 = vst.msk [vmem:[#allocation4 + $0x310] sm:$0xff] %vm5047, %v4978
  %5098 = vst.msk [vmem:[#allocation4 + $0x320] sm:$0xff] %vm5047, %v4980
  %5099 = vst.msk [vmem:[#allocation4 + $0x330] sm:$0xff] %vm5047, %v4982
  %5100 = vst.msk [vmem:[#allocation4 + $0x340] sm:$0xff] %vm5047, %v4984
  %5101 = vst.msk [vmem:[#allocation4 + $0x350] sm:$0xff] %vm5047, %v4986
  %5102 = vst.msk [vmem:[#allocation4 + $0x360] sm:$0xff] %vm5047, %v4988
  %5103 = vst.msk [vmem:[#allocation4 + $0x370] sm:$0xff] %vm5047, %v4990
  %v5104 = vld [vmem:[#allocation2 + $0x21] sm:$0xff]
  %v5105 = vld [vmem:[#allocation2 + $0x29] sm:$0xff]
  %v5106 = vld [vmem:[#allocation2 + $0x31] sm:$0xff]
  %v5107 = vld [vmem:[#allocation2 + $0x39] sm:$0xff]
  %v5108 = vld [vmem:[#allocation2 + $0x41] sm:$0xff]
  %v5109 = vld [vmem:[#allocation2 + $0x49] sm:$0xff]
  %v5110 = vld [vmem:[#allocation2 + $0x51] sm:$0xff]
  %v5111 = vld [vmem:[#allocation2 + $0x59] sm:$0xff]
  %v5112 = vld [vmem:[#allocation2 + $0x61] sm:$0xff]
  %v5113 = vld [vmem:[#allocation2 + $0x69] sm:$0xff]
  %v5114 = vld [vmem:[#allocation2 + $0x71] sm:$0xff]
  %v5115 = vld [vmem:[#allocation2 + $0x79] sm:$0xff]
  %v5116 = vld [vmem:[#allocation2 + $0x81] sm:$0xff]
  %v5117 = vld [vmem:[#allocation2 + $0x89] sm:$0xff]
  %v5118 = vld [vmem:[#allocation2 + $0x91] sm:$0xff]
  %v5119 = vld [vmem:[#allocation2 + $0x99] sm:$0xff]
  %v5120 = vld [vmem:[#allocation2 + $0xa1] sm:$0xff]
  %v5121 = vld [vmem:[#allocation2 + $0xa9] sm:$0xff]
  %v5122 = vld [vmem:[#allocation2 + $0xb1] sm:$0xff]
  %v5123 = vld [vmem:[#allocation2 + $0xb9] sm:$0xff]
  %v5124 = vld [vmem:[#allocation2 + $0xc1] sm:$0xff]
  %v5125 = vld [vmem:[#allocation2 + $0xc9] sm:$0xff]
  %v5126 = vld [vmem:[#allocation2 + $0xd1] sm:$0xff]
  %v5127 = vld [vmem:[#allocation2 + $0xd9] sm:$0xff]
  %v5128 = vld [vmem:[#allocation2 + $0xe1] sm:$0xff]
  %v5129 = vld [vmem:[#allocation2 + $0xe9] sm:$0xff]
  %v5130 = vld [vmem:[#allocation2 + $0xf1] sm:$0xff]
  %v5131 = vld [vmem:[#allocation2 + $0xf9] sm:$0xff]
  %v5132 = vld [vmem:[#allocation2 + $0x131] sm:$0xff]
  %v5133 = vld [vmem:[#allocation2 + $0x139] sm:$0xff]
  %v5134 = vld [vmem:[#allocation2 + $0x141] sm:$0xff]
  %v5135 = vld [vmem:[#allocation2 + $0x149] sm:$0xff]
  %v5136 = vld [vmem:[#allocation2 + $0x151] sm:$0xff]
  %v5137 = vld [vmem:[#allocation2 + $0x159] sm:$0xff]
  %v5138 = vld [vmem:[#allocation2 + $0x161] sm:$0xff]
  %v5139 = vld [vmem:[#allocation2 + $0x169] sm:$0xff]
  %v5140 = vld [vmem:[#allocation2 + $0x171] sm:$0xff]
  %v5141 = vld [vmem:[#allocation2 + $0x179] sm:$0xff]
  %v5142 = vld [vmem:[#allocation2 + $0x181] sm:$0xff]
  %v5143 = vld [vmem:[#allocation2 + $0x189] sm:$0xff]
  %v5144 = vld [vmem:[#allocation2 + $0x191] sm:$0xff]
  %v5145 = vld [vmem:[#allocation2 + $0x199] sm:$0xff]
  %v5146 = vld [vmem:[#allocation2 + $0x1a1] sm:$0xff]
  %v5147 = vld [vmem:[#allocation2 + $0x1a9] sm:$0xff]
  %v5148 = vld [vmem:[#allocation2 + $0x1b1] sm:$0xff]
  %v5149 = vld [vmem:[#allocation2 + $0x1b9] sm:$0xff]
  %v5150 = vld [vmem:[#allocation2 + $0x1c1] sm:$0xff]
  %v5151 = vld [vmem:[#allocation2 + $0x1c9] sm:$0xff]
  %v5152 = vld [vmem:[#allocation2 + $0x1d1] sm:$0xff]
  %v5153 = vld [vmem:[#allocation2 + $0x1d9] sm:$0xff]
  %v5154 = vld [vmem:[#allocation2 + $0x1e1] sm:$0xff]
  %v5155 = vld [vmem:[#allocation2 + $0x1e9] sm:$0xff]
  %v5156 = vld [vmem:[#allocation2 + $0x1f1] sm:$0xff]
  %v5157 = vld [vmem:[#allocation2 + $0x1f9] sm:$0xff]
  %v5158 = vld [vmem:[#allocation2 + $0x201] sm:$0xff]
  %v5159 = vld [vmem:[#allocation2 + $0x209] sm:$0xff]
  %5216 = vrot.lane.b32.xlu0 %v5104, 112
  %v5217 = vpop.permute.xlu0 %5216
  %5218 = vrot.lane.b32.xlu0 %v5105, 112
  %v5219 = vpop.permute.xlu0 %5218
  %5220 = vrot.lane.b32.xlu0 %v5106, 112
  %v5221 = vpop.permute.xlu0 %5220
  %5222 = vrot.lane.b32.xlu0 %v5107, 112
  %v5223 = vpop.permute.xlu0 %5222
  %5224 = vrot.lane.b32.xlu0 %v5108, 112
  %v5225 = vpop.permute.xlu0 %5224
  %5226 = vrot.lane.b32.xlu0 %v5109, 112
  %v5227 = vpop.permute.xlu0 %5226
  %5228 = vrot.lane.b32.xlu0 %v5110, 112
  %v5229 = vpop.permute.xlu0 %5228
  %5230 = vrot.lane.b32.xlu0 %v5111, 112
  %v5231 = vpop.permute.xlu0 %5230
  %5232 = vrot.lane.b32.xlu0 %v5112, 112
  %v5233 = vpop.permute.xlu0 %5232
  %5234 = vrot.lane.b32.xlu0 %v5113, 112
  %v5235 = vpop.permute.xlu0 %5234
  %5236 = vrot.lane.b32.xlu0 %v5114, 112
  %v5237 = vpop.permute.xlu0 %5236
  %5238 = vrot.lane.b32.xlu0 %v5115, 112
  %v5239 = vpop.permute.xlu0 %5238
  %5240 = vrot.lane.b32.xlu0 %v5116, 112
  %v5241 = vpop.permute.xlu0 %5240
  %5242 = vrot.lane.b32.xlu0 %v5117, 112
  %v5243 = vpop.permute.xlu0 %5242
  %5244 = vrot.lane.b32.xlu0 %v5118, 112
  %v5245 = vpop.permute.xlu0 %5244
  %5246 = vrot.lane.b32.xlu0 %v5119, 112
  %v5247 = vpop.permute.xlu0 %5246
  %5248 = vrot.lane.b32.xlu0 %v5120, 112
  %v5249 = vpop.permute.xlu0 %5248
  %5250 = vrot.lane.b32.xlu0 %v5121, 112
  %v5251 = vpop.permute.xlu0 %5250
  %5252 = vrot.lane.b32.xlu0 %v5122, 112
  %v5253 = vpop.permute.xlu0 %5252
  %5254 = vrot.lane.b32.xlu0 %v5123, 112
  %v5255 = vpop.permute.xlu0 %5254
  %5256 = vrot.lane.b32.xlu0 %v5124, 112
  %v5257 = vpop.permute.xlu0 %5256
  %5258 = vrot.lane.b32.xlu0 %v5125, 112
  %v5259 = vpop.permute.xlu0 %5258
  %5260 = vrot.lane.b32.xlu0 %v5126, 112
  %v5261 = vpop.permute.xlu0 %5260
  %5262 = vrot.lane.b32.xlu0 %v5127, 112
  %v5263 = vpop.permute.xlu0 %5262
  %5264 = vrot.lane.b32.xlu0 %v5128, 112
  %v5265 = vpop.permute.xlu0 %5264
  %5266 = vrot.lane.b32.xlu0 %v5129, 112
  %v5267 = vpop.permute.xlu0 %5266
  %5268 = vrot.lane.b32.xlu0 %v5130, 112
  %v5269 = vpop.permute.xlu0 %5268
  %5270 = vrot.lane.b32.xlu0 %v5131, 112
  %v5271 = vpop.permute.xlu0 %5270
  %5272 = vrot.lane.b32.xlu0 %v5132, 112
  %v5273 = vpop.permute.xlu0 %5272
  %5274 = vrot.lane.b32.xlu0 %v5133, 112
  %v5275 = vpop.permute.xlu0 %5274
  %5276 = vrot.lane.b32.xlu0 %v5134, 112
  %v5277 = vpop.permute.xlu0 %5276
  %5278 = vrot.lane.b32.xlu0 %v5135, 112
  %v5279 = vpop.permute.xlu0 %5278
  %5280 = vrot.lane.b32.xlu0 %v5136, 112
  %v5281 = vpop.permute.xlu0 %5280
  %5282 = vrot.lane.b32.xlu0 %v5137, 112
  %v5283 = vpop.permute.xlu0 %5282
  %5284 = vrot.lane.b32.xlu0 %v5138, 112
  %v5285 = vpop.permute.xlu0 %5284
  %5286 = vrot.lane.b32.xlu0 %v5139, 112
  %v5287 = vpop.permute.xlu0 %5286
  %5288 = vrot.lane.b32.xlu0 %v5140, 112
  %v5289 = vpop.permute.xlu0 %5288
  %5290 = vrot.lane.b32.xlu0 %v5141, 112
  %v5291 = vpop.permute.xlu0 %5290
  %5292 = vrot.lane.b32.xlu0 %v5142, 112
  %v5293 = vpop.permute.xlu0 %5292
  %5294 = vrot.lane.b32.xlu0 %v5143, 112
  %v5295 = vpop.permute.xlu0 %5294
  %5296 = vrot.lane.b32.xlu0 %v5144, 112
  %v5297 = vpop.permute.xlu0 %5296
  %5298 = vrot.lane.b32.xlu0 %v5145, 112
  %v5299 = vpop.permute.xlu0 %5298
  %5300 = vrot.lane.b32.xlu0 %v5146, 112
  %v5301 = vpop.permute.xlu0 %5300
  %5302 = vrot.lane.b32.xlu0 %v5147, 112
  %v5303 = vpop.permute.xlu0 %5302
  %5304 = vrot.lane.b32.xlu0 %v5148, 112
  %v5305 = vpop.permute.xlu0 %5304
  %5306 = vrot.lane.b32.xlu0 %v5149, 112
  %v5307 = vpop.permute.xlu0 %5306
  %5308 = vrot.lane.b32.xlu0 %v5150, 112
  %v5309 = vpop.permute.xlu0 %5308
  %5310 = vrot.lane.b32.xlu0 %v5151, 112
  %v5311 = vpop.permute.xlu0 %5310
  %5312 = vrot.lane.b32.xlu0 %v5152, 112
  %v5313 = vpop.permute.xlu0 %5312
  %5314 = vrot.lane.b32.xlu0 %v5153, 112
  %v5315 = vpop.permute.xlu0 %5314
  %5316 = vrot.lane.b32.xlu0 %v5154, 112
  %v5317 = vpop.permute.xlu0 %5316
  %5318 = vrot.lane.b32.xlu0 %v5155, 112
  %v5319 = vpop.permute.xlu0 %5318
  %5320 = vrot.lane.b32.xlu0 %v5156, 112
  %v5321 = vpop.permute.xlu0 %5320
  %5322 = vrot.lane.b32.xlu0 %v5157, 112
  %v5323 = vpop.permute.xlu0 %5322
  %5324 = vrot.lane.b32.xlu0 %v5158, 112
  %v5325 = vpop.permute.xlu0 %5324
  %5326 = vrot.lane.b32.xlu0 %v5159, 112
  %v5327 = vpop.permute.xlu0 %5326
  %vm5384 = vcmask 1048448
  %5385 = vst.msk [vmem:[#allocation4] sm:$0xff] %vm5384, %v5217
  %5386 = vst.msk [vmem:[#allocation4 + $0x10] sm:$0xff] %vm5384, %v5219
  %5387 = vst.msk [vmem:[#allocation4 + $0x20] sm:$0xff] %vm5384, %v5221
  %5388 = vst.msk [vmem:[#allocation4 + $0x30] sm:$0xff] %vm5384, %v5223
  %5389 = vst.msk [vmem:[#allocation4 + $0x40] sm:$0xff] %vm5384, %v5225
  %5390 = vst.msk [vmem:[#allocation4 + $0x50] sm:$0xff] %vm5384, %v5227
  %5391 = vst.msk [vmem:[#allocation4 + $0x60] sm:$0xff] %vm5384, %v5229
  %5392 = vst.msk [vmem:[#allocation4 + $0x70] sm:$0xff] %vm5384, %v5231
  %5393 = vst.msk [vmem:[#allocation4 + $0x80] sm:$0xff] %vm5384, %v5233
  %5394 = vst.msk [vmem:[#allocation4 + $0x90] sm:$0xff] %vm5384, %v5235
  %5395 = vst.msk [vmem:[#allocation4 + $0xa0] sm:$0xff] %vm5384, %v5237
  %5396 = vst.msk [vmem:[#allocation4 + $0xb0] sm:$0xff] %vm5384, %v5239
  %5397 = vst.msk [vmem:[#allocation4 + $0xc0] sm:$0xff] %vm5384, %v5241
  %5398 = vst.msk [vmem:[#allocation4 + $0xd0] sm:$0xff] %vm5384, %v5243
  %5399 = vst.msk [vmem:[#allocation4 + $0xe0] sm:$0xff] %vm5384, %v5245
  %5400 = vst.msk [vmem:[#allocation4 + $0xf0] sm:$0xff] %vm5384, %v5247
  %5401 = vst.msk [vmem:[#allocation4 + $0x100] sm:$0xff] %vm5384, %v5249
  %5402 = vst.msk [vmem:[#allocation4 + $0x110] sm:$0xff] %vm5384, %v5251
  %5403 = vst.msk [vmem:[#allocation4 + $0x120] sm:$0xff] %vm5384, %v5253
  %5404 = vst.msk [vmem:[#allocation4 + $0x130] sm:$0xff] %vm5384, %v5255
  %5405 = vst.msk [vmem:[#allocation4 + $0x140] sm:$0xff] %vm5384, %v5257
  %5406 = vst.msk [vmem:[#allocation4 + $0x150] sm:$0xff] %vm5384, %v5259
  %5407 = vst.msk [vmem:[#allocation4 + $0x160] sm:$0xff] %vm5384, %v5261
  %5408 = vst.msk [vmem:[#allocation4 + $0x170] sm:$0xff] %vm5384, %v5263
  %5409 = vst.msk [vmem:[#allocation4 + $0x180] sm:$0xff] %vm5384, %v5265
  %5410 = vst.msk [vmem:[#allocation4 + $0x190] sm:$0xff] %vm5384, %v5267
  %5411 = vst.msk [vmem:[#allocation4 + $0x1a0] sm:$0xff] %vm5384, %v5269
  %5412 = vst.msk [vmem:[#allocation4 + $0x1b0] sm:$0xff] %vm5384, %v5271
  %5413 = vst.msk [vmem:[#allocation4 + $0x1c0] sm:$0xff] %vm5384, %v5273
  %5414 = vst.msk [vmem:[#allocation4 + $0x1d0] sm:$0xff] %vm5384, %v5275
  %5415 = vst.msk [vmem:[#allocation4 + $0x1e0] sm:$0xff] %vm5384, %v5277
  %5416 = vst.msk [vmem:[#allocation4 + $0x1f0] sm:$0xff] %vm5384, %v5279
  %5417 = vst.msk [vmem:[#allocation4 + $0x200] sm:$0xff] %vm5384, %v5281
  %5418 = vst.msk [vmem:[#allocation4 + $0x210] sm:$0xff] %vm5384, %v5283
  %5419 = vst.msk [vmem:[#allocation4 + $0x220] sm:$0xff] %vm5384, %v5285
  %5420 = vst.msk [vmem:[#allocation4 + $0x230] sm:$0xff] %vm5384, %v5287
  %5421 = vst.msk [vmem:[#allocation4 + $0x240] sm:$0xff] %vm5384, %v5289
  %5422 = vst.msk [vmem:[#allocation4 + $0x250] sm:$0xff] %vm5384, %v5291
  %5423 = vst.msk [vmem:[#allocation4 + $0x260] sm:$0xff] %vm5384, %v5293
  %5424 = vst.msk [vmem:[#allocation4 + $0x270] sm:$0xff] %vm5384, %v5295
  %5425 = vst.msk [vmem:[#allocation4 + $0x280] sm:$0xff] %vm5384, %v5297
  %5426 = vst.msk [vmem:[#allocation4 + $0x290] sm:$0xff] %vm5384, %v5299
  %5427 = vst.msk [vmem:[#allocation4 + $0x2a0] sm:$0xff] %vm5384, %v5301
  %5428 = vst.msk [vmem:[#allocation4 + $0x2b0] sm:$0xff] %vm5384, %v5303
  %5429 = vst.msk [vmem:[#allocation4 + $0x2c0] sm:$0xff] %vm5384, %v5305
  %5430 = vst.msk [vmem:[#allocation4 + $0x2d0] sm:$0xff] %vm5384, %v5307
  %5431 = vst.msk [vmem:[#allocation4 + $0x2e0] sm:$0xff] %vm5384, %v5309
  %5432 = vst.msk [vmem:[#allocation4 + $0x2f0] sm:$0xff] %vm5384, %v5311
  %5433 = vst.msk [vmem:[#allocation4 + $0x300] sm:$0xff] %vm5384, %v5313
  %5434 = vst.msk [vmem:[#allocation4 + $0x310] sm:$0xff] %vm5384, %v5315
  %5435 = vst.msk [vmem:[#allocation4 + $0x320] sm:$0xff] %vm5384, %v5317
  %5436 = vst.msk [vmem:[#allocation4 + $0x330] sm:$0xff] %vm5384, %v5319
  %5437 = vst.msk [vmem:[#allocation4 + $0x340] sm:$0xff] %vm5384, %v5321
  %5438 = vst.msk [vmem:[#allocation4 + $0x350] sm:$0xff] %vm5384, %v5323
  %5439 = vst.msk [vmem:[#allocation4 + $0x360] sm:$0xff] %vm5384, %v5325
  %5440 = vst.msk [vmem:[#allocation4 + $0x370] sm:$0xff] %vm5384, %v5327
  %v5441 = vld [vmem:[#allocation2 + $0x22] sm:$0xff]
  %v5442 = vld [vmem:[#allocation2 + $0x2a] sm:$0xff]
  %v5443 = vld [vmem:[#allocation2 + $0x32] sm:$0xff]
  %v5444 = vld [vmem:[#allocation2 + $0x3a] sm:$0xff]
  %v5445 = vld [vmem:[#allocation2 + $0x42] sm:$0xff]
  %v5446 = vld [vmem:[#allocation2 + $0x4a] sm:$0xff]
  %v5447 = vld [vmem:[#allocation2 + $0x52] sm:$0xff]
  %v5448 = vld [vmem:[#allocation2 + $0x5a] sm:$0xff]
  %v5449 = vld [vmem:[#allocation2 + $0x62] sm:$0xff]
  %v5450 = vld [vmem:[#allocation2 + $0x6a] sm:$0xff]
  %v5451 = vld [vmem:[#allocation2 + $0x72] sm:$0xff]
  %v5452 = vld [vmem:[#allocation2 + $0x7a] sm:$0xff]
  %v5453 = vld [vmem:[#allocation2 + $0x82] sm:$0xff]
  %v5454 = vld [vmem:[#allocation2 + $0x8a] sm:$0xff]
  %v5455 = vld [vmem:[#allocation2 + $0x92] sm:$0xff]
  %v5456 = vld [vmem:[#allocation2 + $0x9a] sm:$0xff]
  %v5457 = vld [vmem:[#allocation2 + $0xa2] sm:$0xff]
  %v5458 = vld [vmem:[#allocation2 + $0xaa] sm:$0xff]
  %v5459 = vld [vmem:[#allocation2 + $0xb2] sm:$0xff]
  %v5460 = vld [vmem:[#allocation2 + $0xba] sm:$0xff]
  %v5461 = vld [vmem:[#allocation2 + $0xc2] sm:$0xff]
  %v5462 = vld [vmem:[#allocation2 + $0xca] sm:$0xff]
  %v5463 = vld [vmem:[#allocation2 + $0xd2] sm:$0xff]
  %v5464 = vld [vmem:[#allocation2 + $0xda] sm:$0xff]
  %v5465 = vld [vmem:[#allocation2 + $0xe2] sm:$0xff]
  %v5466 = vld [vmem:[#allocation2 + $0xea] sm:$0xff]
  %v5467 = vld [vmem:[#allocation2 + $0xf2] sm:$0xff]
  %v5468 = vld [vmem:[#allocation2 + $0xfa] sm:$0xff]
  %v5469 = vld [vmem:[#allocation2 + $0x132] sm:$0xff]
  %v5470 = vld [vmem:[#allocation2 + $0x13a] sm:$0xff]
  %v5471 = vld [vmem:[#allocation2 + $0x142] sm:$0xff]
  %v5472 = vld [vmem:[#allocation2 + $0x14a] sm:$0xff]
  %v5473 = vld [vmem:[#allocation2 + $0x152] sm:$0xff]
  %v5474 = vld [vmem:[#allocation2 + $0x15a] sm:$0xff]
  %v5475 = vld [vmem:[#allocation2 + $0x162] sm:$0xff]
  %v5476 = vld [vmem:[#allocation2 + $0x16a] sm:$0xff]
  %v5477 = vld [vmem:[#allocation2 + $0x172] sm:$0xff]
  %v5478 = vld [vmem:[#allocation2 + $0x17a] sm:$0xff]
  %v5479 = vld [vmem:[#allocation2 + $0x182] sm:$0xff]
  %v5480 = vld [vmem:[#allocation2 + $0x18a] sm:$0xff]
  %v5481 = vld [vmem:[#allocation2 + $0x192] sm:$0xff]
  %v5482 = vld [vmem:[#allocation2 + $0x19a] sm:$0xff]
  %v5483 = vld [vmem:[#allocation2 + $0x1a2] sm:$0xff]
  %v5484 = vld [vmem:[#allocation2 + $0x1aa] sm:$0xff]
  %v5485 = vld [vmem:[#allocation2 + $0x1b2] sm:$0xff]
  %v5486 = vld [vmem:[#allocation2 + $0x1ba] sm:$0xff]
  %v5487 = vld [vmem:[#allocation2 + $0x1c2] sm:$0xff]
  %v5488 = vld [vmem:[#allocation2 + $0x1ca] sm:$0xff]
  %v5489 = vld [vmem:[#allocation2 + $0x1d2] sm:$0xff]
  %v5490 = vld [vmem:[#allocation2 + $0x1da] sm:$0xff]
  %v5491 = vld [vmem:[#allocation2 + $0x1e2] sm:$0xff]
  %v5492 = vld [vmem:[#allocation2 + $0x1ea] sm:$0xff]
  %v5493 = vld [vmem:[#allocation2 + $0x1f2] sm:$0xff]
  %v5494 = vld [vmem:[#allocation2 + $0x1fa] sm:$0xff]
  %v5495 = vld [vmem:[#allocation2 + $0x202] sm:$0xff]
  %v5496 = vld [vmem:[#allocation2 + $0x20a] sm:$0xff]
  %5497 = vst.msk [vmem:[#allocation4 + $0x8] sm:$0xff] %vm1211, %v5441
  %5498 = vst.msk [vmem:[#allocation4 + $0x18] sm:$0xff] %vm1211, %v5442
  %5499 = vst.msk [vmem:[#allocation4 + $0x28] sm:$0xff] %vm1211, %v5443
  %5500 = vst.msk [vmem:[#allocation4 + $0x38] sm:$0xff] %vm1211, %v5444
  %5501 = vst.msk [vmem:[#allocation4 + $0x48] sm:$0xff] %vm1211, %v5445
  %5502 = vst.msk [vmem:[#allocation4 + $0x58] sm:$0xff] %vm1211, %v5446
  %5503 = vst.msk [vmem:[#allocation4 + $0x68] sm:$0xff] %vm1211, %v5447
  %5504 = vst.msk [vmem:[#allocation4 + $0x78] sm:$0xff] %vm1211, %v5448
  %5505 = vst.msk [vmem:[#allocation4 + $0x88] sm:$0xff] %vm1211, %v5449
  %5506 = vst.msk [vmem:[#allocation4 + $0x98] sm:$0xff] %vm1211, %v5450
  %5507 = vst.msk [vmem:[#allocation4 + $0xa8] sm:$0xff] %vm1211, %v5451
  %5508 = vst.msk [vmem:[#allocation4 + $0xb8] sm:$0xff] %vm1211, %v5452
  %5509 = vst.msk [vmem:[#allocation4 + $0xc8] sm:$0xff] %vm1211, %v5453
  %5510 = vst.msk [vmem:[#allocation4 + $0xd8] sm:$0xff] %vm1211, %v5454
  %5511 = vst.msk [vmem:[#allocation4 + $0xe8] sm:$0xff] %vm1211, %v5455
  %5512 = vst.msk [vmem:[#allocation4 + $0xf8] sm:$0xff] %vm1211, %v5456
  %5513 = vst.msk [vmem:[#allocation4 + $0x108] sm:$0xff] %vm1211, %v5457
  %5514 = vst.msk [vmem:[#allocation4 + $0x118] sm:$0xff] %vm1211, %v5458
  %5515 = vst.msk [vmem:[#allocation4 + $0x128] sm:$0xff] %vm1211, %v5459
  %5516 = vst.msk [vmem:[#allocation4 + $0x138] sm:$0xff] %vm1211, %v5460
  %5517 = vst.msk [vmem:[#allocation4 + $0x148] sm:$0xff] %vm1211, %v5461
  %5518 = vst.msk [vmem:[#allocation4 + $0x158] sm:$0xff] %vm1211, %v5462
  %5519 = vst.msk [vmem:[#allocation4 + $0x168] sm:$0xff] %vm1211, %v5463
  %5520 = vst.msk [vmem:[#allocation4 + $0x178] sm:$0xff] %vm1211, %v5464
  %5521 = vst.msk [vmem:[#allocation4 + $0x188] sm:$0xff] %vm1211, %v5465
  %5522 = vst.msk [vmem:[#allocation4 + $0x198] sm:$0xff] %vm1211, %v5466
  %5523 = vst.msk [vmem:[#allocation4 + $0x1a8] sm:$0xff] %vm1211, %v5467
  %5524 = vst.msk [vmem:[#allocation4 + $0x1b8] sm:$0xff] %vm1211, %v5468
  %5525 = vst.msk [vmem:[#allocation4 + $0x1c8] sm:$0xff] %vm1211, %v5469
  %5526 = vst.msk [vmem:[#allocation4 + $0x1d8] sm:$0xff] %vm1211, %v5470
  %5527 = vst.msk [vmem:[#allocation4 + $0x1e8] sm:$0xff] %vm1211, %v5471
  %5528 = vst.msk [vmem:[#allocation4 + $0x1f8] sm:$0xff] %vm1211, %v5472
  %5529 = vst.msk [vmem:[#allocation4 + $0x208] sm:$0xff] %vm1211, %v5473
  %5530 = vst.msk [vmem:[#allocation4 + $0x218] sm:$0xff] %vm1211, %v5474
  %5531 = vst.msk [vmem:[#allocation4 + $0x228] sm:$0xff] %vm1211, %v5475
  %5532 = vst.msk [vmem:[#allocation4 + $0x238] sm:$0xff] %vm1211, %v5476
  %5533 = vst.msk [vmem:[#allocation4 + $0x248] sm:$0xff] %vm1211, %v5477
  %5534 = vst.msk [vmem:[#allocation4 + $0x258] sm:$0xff] %vm1211, %v5478
  %5535 = vst.msk [vmem:[#allocation4 + $0x268] sm:$0xff] %vm1211, %v5479
  %5536 = vst.msk [vmem:[#allocation4 + $0x278] sm:$0xff] %vm1211, %v5480
  %5537 = vst.msk [vmem:[#allocation4 + $0x288] sm:$0xff] %vm1211, %v5481
  %5538 = vst.msk [vmem:[#allocation4 + $0x298] sm:$0xff] %vm1211, %v5482
  %5539 = vst.msk [vmem:[#allocation4 + $0x2a8] sm:$0xff] %vm1211, %v5483
  %5540 = vst.msk [vmem:[#allocation4 + $0x2b8] sm:$0xff] %vm1211, %v5484
  %5541 = vst.msk [vmem:[#allocation4 + $0x2c8] sm:$0xff] %vm1211, %v5485
  %5542 = vst.msk [vmem:[#allocation4 + $0x2d8] sm:$0xff] %vm1211, %v5486
  %5543 = vst.msk [vmem:[#allocation4 + $0x2e8] sm:$0xff] %vm1211, %v5487
  %5544 = vst.msk [vmem:[#allocation4 + $0x2f8] sm:$0xff] %vm1211, %v5488
  %5545 = vst.msk [vmem:[#allocation4 + $0x308] sm:$0xff] %vm1211, %v5489
  %5546 = vst.msk [vmem:[#allocation4 + $0x318] sm:$0xff] %vm1211, %v5490
  %5547 = vst.msk [vmem:[#allocation4 + $0x328] sm:$0xff] %vm1211, %v5491
  %5548 = vst.msk [vmem:[#allocation4 + $0x338] sm:$0xff] %vm1211, %v5492
  %5549 = vst.msk [vmem:[#allocation4 + $0x348] sm:$0xff] %vm1211, %v5493
  %5550 = vst.msk [vmem:[#allocation4 + $0x358] sm:$0xff] %vm1211, %v5494
  %5551 = vst.msk [vmem:[#allocation4 + $0x368] sm:$0xff] %vm1211, %v5495
  %5552 = vst.msk [vmem:[#allocation4 + $0x378] sm:$0xff] %vm1211, %v5496
  %v5553 = vld [vmem:[#allocation4] sm:$0xff]
  %v5554 = vld [vmem:[#allocation4 + $0x8] sm:$0xff]
  %v5555 = vld [vmem:[#allocation4 + $0x10] sm:$0xff]
  %v5556 = vld [vmem:[#allocation4 + $0x18] sm:$0xff]
  %v5557 = vld [vmem:[#allocation4 + $0x20] sm:$0xff]
  %v5558 = vld [vmem:[#allocation4 + $0x28] sm:$0xff]
  %v5559 = vld [vmem:[#allocation4 + $0x30] sm:$0xff]
  %v5560 = vld [vmem:[#allocation4 + $0x38] sm:$0xff]
  %v5561 = vld [vmem:[#allocation4 + $0x40] sm:$0xff]
  %v5562 = vld [vmem:[#allocation4 + $0x48] sm:$0xff]
  %v5563 = vld [vmem:[#allocation4 + $0x50] sm:$0xff]
  %v5564 = vld [vmem:[#allocation4 + $0x58] sm:$0xff]
  %v5565 = vld [vmem:[#allocation4 + $0x60] sm:$0xff]
  %v5566 = vld [vmem:[#allocation4 + $0x68] sm:$0xff]
  %v5567 = vld [vmem:[#allocation4 + $0x70] sm:$0xff]
  %v5568 = vld [vmem:[#allocation4 + $0x78] sm:$0xff]
  %v5569 = vld [vmem:[#allocation4 + $0x80] sm:$0xff]
  %v5570 = vld [vmem:[#allocation4 + $0x88] sm:$0xff]
  %v5571 = vld [vmem:[#allocation4 + $0x90] sm:$0xff]
  %v5572 = vld [vmem:[#allocation4 + $0x98] sm:$0xff]
  %v5573 = vld [vmem:[#allocation4 + $0xa0] sm:$0xff]
  %v5574 = vld [vmem:[#allocation4 + $0xa8] sm:$0xff]
  %v5575 = vld [vmem:[#allocation4 + $0xb0] sm:$0xff]
  %v5576 = vld [vmem:[#allocation4 + $0xb8] sm:$0xff]
  %v5577 = vld [vmem:[#allocation4 + $0xc0] sm:$0xff]
  %v5578 = vld [vmem:[#allocation4 + $0xc8] sm:$0xff]
  %v5579 = vld [vmem:[#allocation4 + $0xd0] sm:$0xff]
  %v5580 = vld [vmem:[#allocation4 + $0xd8] sm:$0xff]
  %v5581 = vld [vmem:[#allocation4 + $0xe0] sm:$0xff]
  %v5582 = vld [vmem:[#allocation4 + $0xe8] sm:$0xff]
  %v5583 = vld [vmem:[#allocation4 + $0xf0] sm:$0xff]
  %v5584 = vld [vmem:[#allocation4 + $0xf8] sm:$0xff]
  %v5585 = vld [vmem:[#allocation4 + $0x100] sm:$0xff]
  %v5586 = vld [vmem:[#allocation4 + $0x108] sm:$0xff]
  %v5587 = vld [vmem:[#allocation4 + $0x110] sm:$0xff]
  %v5588 = vld [vmem:[#allocation4 + $0x118] sm:$0xff]
  %v5589 = vld [vmem:[#allocation4 + $0x120] sm:$0xff]
  %v5590 = vld [vmem:[#allocation4 + $0x128] sm:$0xff]
  %v5591 = vld [vmem:[#allocation4 + $0x130] sm:$0xff]
  %v5592 = vld [vmem:[#allocation4 + $0x138] sm:$0xff]
  %v5593 = vld [vmem:[#allocation4 + $0x140] sm:$0xff]
  %v5594 = vld [vmem:[#allocation4 + $0x148] sm:$0xff]
  %v5595 = vld [vmem:[#allocation4 + $0x150] sm:$0xff]
  %v5596 = vld [vmem:[#allocation4 + $0x158] sm:$0xff]
  %v5597 = vld [vmem:[#allocation4 + $0x160] sm:$0xff]
  %v5598 = vld [vmem:[#allocation4 + $0x168] sm:$0xff]
  %v5599 = vld [vmem:[#allocation4 + $0x170] sm:$0xff]
  %v5600 = vld [vmem:[#allocation4 + $0x178] sm:$0xff]
  %v5601 = vld [vmem:[#allocation4 + $0x180] sm:$0xff]
  %v5602 = vld [vmem:[#allocation4 + $0x188] sm:$0xff]
  %v5603 = vld [vmem:[#allocation4 + $0x190] sm:$0xff]
  %v5604 = vld [vmem:[#allocation4 + $0x198] sm:$0xff]
  %v5605 = vld [vmem:[#allocation4 + $0x1a0] sm:$0xff]
  %v5606 = vld [vmem:[#allocation4 + $0x1a8] sm:$0xff]
  %v5607 = vld [vmem:[#allocation4 + $0x1b0] sm:$0xff]
  %v5608 = vld [vmem:[#allocation4 + $0x1b8] sm:$0xff]
  %v5609 = vld [vmem:[#allocation4 + $0x1c0] sm:$0xff]
  %v5610 = vld [vmem:[#allocation4 + $0x1c8] sm:$0xff]
  %v5611 = vld [vmem:[#allocation4 + $0x1d0] sm:$0xff]
  %v5612 = vld [vmem:[#allocation4 + $0x1d8] sm:$0xff]
  %v5613 = vld [vmem:[#allocation4 + $0x1e0] sm:$0xff]
  %v5614 = vld [vmem:[#allocation4 + $0x1e8] sm:$0xff]
  %v5615 = vld [vmem:[#allocation4 + $0x1f0] sm:$0xff]
  %v5616 = vld [vmem:[#allocation4 + $0x1f8] sm:$0xff]
  %v5617 = vld [vmem:[#allocation4 + $0x200] sm:$0xff]
  %v5618 = vld [vmem:[#allocation4 + $0x208] sm:$0xff]
  %v5619 = vld [vmem:[#allocation4 + $0x210] sm:$0xff]
  %v5620 = vld [vmem:[#allocation4 + $0x218] sm:$0xff]
  %v5621 = vld [vmem:[#allocation4 + $0x220] sm:$0xff]
  %v5622 = vld [vmem:[#allocation4 + $0x228] sm:$0xff]
  %v5623 = vld [vmem:[#allocation4 + $0x230] sm:$0xff]
  %v5624 = vld [vmem:[#allocation4 + $0x238] sm:$0xff]
  %v5625 = vld [vmem:[#allocation4 + $0x240] sm:$0xff]
  %v5626 = vld [vmem:[#allocation4 + $0x248] sm:$0xff]
  %v5627 = vld [vmem:[#allocation4 + $0x250] sm:$0xff]
  %v5628 = vld [vmem:[#allocation4 + $0x258] sm:$0xff]
  %v5629 = vld [vmem:[#allocation4 + $0x260] sm:$0xff]
  %v5630 = vld [vmem:[#allocation4 + $0x268] sm:$0xff]
  %v5631 = vld [vmem:[#allocation4 + $0x270] sm:$0xff]
  %v5632 = vld [vmem:[#allocation4 + $0x278] sm:$0xff]
  %v5633 = vld [vmem:[#allocation4 + $0x280] sm:$0xff]
  %v5634 = vld [vmem:[#allocation4 + $0x288] sm:$0xff]
  %v5635 = vld [vmem:[#allocation4 + $0x290] sm:$0xff]
  %v5636 = vld [vmem:[#allocation4 + $0x298] sm:$0xff]
  %v5637 = vld [vmem:[#allocation4 + $0x2a0] sm:$0xff]
  %v5638 = vld [vmem:[#allocation4 + $0x2a8] sm:$0xff]
  %v5639 = vld [vmem:[#allocation4 + $0x2b0] sm:$0xff]
  %v5640 = vld [vmem:[#allocation4 + $0x2b8] sm:$0xff]
  %v5641 = vld [vmem:[#allocation4 + $0x2c0] sm:$0xff]
  %v5642 = vld [vmem:[#allocation4 + $0x2c8] sm:$0xff]
  %v5643 = vld [vmem:[#allocation4 + $0x2d0] sm:$0xff]
  %v5644 = vld [vmem:[#allocation4 + $0x2d8] sm:$0xff]
  %v5645 = vld [vmem:[#allocation4 + $0x2e0] sm:$0xff]
  %v5646 = vld [vmem:[#allocation4 + $0x2e8] sm:$0xff]
  %v5647 = vld [vmem:[#allocation4 + $0x2f0] sm:$0xff]
  %v5648 = vld [vmem:[#allocation4 + $0x2f8] sm:$0xff]
  %v5649 = vld [vmem:[#allocation4 + $0x300] sm:$0xff]
  %v5650 = vld [vmem:[#allocation4 + $0x308] sm:$0xff]
  %v5651 = vld [vmem:[#allocation4 + $0x310] sm:$0xff]
  %v5652 = vld [vmem:[#allocation4 + $0x318] sm:$0xff]
  %v5653 = vld [vmem:[#allocation4 + $0x320] sm:$0xff]
  %v5654 = vld [vmem:[#allocation4 + $0x328] sm:$0xff]
  %v5655 = vld [vmem:[#allocation4 + $0x330] sm:$0xff]
  %v5656 = vld [vmem:[#allocation4 + $0x338] sm:$0xff]
  %v5657 = vld [vmem:[#allocation4 + $0x340] sm:$0xff]
  %v5658 = vld [vmem:[#allocation4 + $0x348] sm:$0xff]
  %v5659 = vld [vmem:[#allocation4 + $0x350] sm:$0xff]
  %v5660 = vld [vmem:[#allocation4 + $0x358] sm:$0xff]
  %v5661 = vld [vmem:[#allocation4 + $0x360] sm:$0xff]
  %v5662 = vld [vmem:[#allocation4 + $0x368] sm:$0xff]
  %v5663 = vld [vmem:[#allocation4 + $0x370] sm:$0xff]
  %v5664 = vld [vmem:[#allocation4 + $0x378] sm:$0xff]
  %v5665 = vld [vmem:[%s3] sm:$0xff]
  %v5666 = vld [vmem:[%s3 + $0x8] sm:$0xff]
  %v5667 = vld [vmem:[%s3 + $0x10] sm:$0xff]
  %v5668 = vld [vmem:[%s3 + $0x18] sm:$0xff]
  %v5669 = vld [vmem:[%s3 + $0x20] sm:$0xff]
  %v5670 = vld [vmem:[%s3 + $0x28] sm:$0xff]
  %v5671 = vld [vmem:[%s3 + $0x30] sm:$0xff]
  %v5672 = vld [vmem:[%s3 + $0x38] sm:$0xff]
  %v5673 = vld [vmem:[%s3 + $0x40] sm:$0xff]
  %v5674 = vld [vmem:[%s3 + $0x48] sm:$0xff]
  %v5675 = vld [vmem:[%s3 + $0x50] sm:$0xff]
  %v5676 = vld [vmem:[%s3 + $0x58] sm:$0xff]
  %v5677 = vld [vmem:[%s3 + $0x60] sm:$0xff]
  %v5678 = vld [vmem:[%s3 + $0x68] sm:$0xff]
  %v5679 = vld [vmem:[%s3 + $0x70] sm:$0xff]
  %v5680 = vld [vmem:[%s3 + $0x78] sm:$0xff]
  %v5681 = vld [vmem:[%s3 + $0x80] sm:$0xff]
  %v5682 = vld [vmem:[%s3 + $0x88] sm:$0xff]
  %v5683 = vld [vmem:[%s4] sm:$0x1]
  %v5685 = vlaneseq
  %v5686 = vshrl.u32 %v5685, 7
  %v5687 = vsub.s32 0, %v5686
  %v5688 = vrot.slane %v5683, %v5687
  %v5691 = vsel %vm1211, %v5554, 0
  %v5694 = vsel %vm1211, %v5556, 0
  %v5697 = vsel %vm1211, %v5558, 0
  %v5700 = vsel %vm1211, %v5560, 0
  %v5703 = vsel %vm1211, %v5562, 0
  %v5706 = vsel %vm1211, %v5564, 0
  %v5709 = vsel %vm1211, %v5566, 0
  %v5712 = vsel %vm1211, %v5568, 0
  %v5715 = vsel %vm1211, %v5570, 0
  %v5718 = vsel %vm1211, %v5572, 0
  %v5721 = vsel %vm1211, %v5574, 0
  %v5724 = vsel %vm1211, %v5576, 0
  %v5727 = vsel %vm1211, %v5578, 0
  %v5730 = vsel %vm1211, %v5580, 0
  %v5733 = vsel %vm1211, %v5582, 0
  %v5736 = vsel %vm1211, %v5584, 0
  %v5739 = vsel %vm1211, %v5586, 0
  %v5742 = vsel %vm1211, %v5588, 0
  %v5745 = vsel %vm1211, %v5590, 0
  %v5748 = vsel %vm1211, %v5592, 0
  %v5751 = vsel %vm1211, %v5594, 0
  %v5754 = vsel %vm1211, %v5596, 0
  %v5757 = vsel %vm1211, %v5598, 0
  %v5760 = vsel %vm1211, %v5600, 0
  %v5763 = vsel %vm1211, %v5602, 0
  %v5766 = vsel %vm1211, %v5604, 0
  %v5769 = vsel %vm1211, %v5606, 0
  %v5772 = vsel %vm1211, %v5608, 0
  %v5775 = vsel %vm1211, %v5610, 0
  %v5778 = vsel %vm1211, %v5612, 0
  %v5781 = vsel %vm1211, %v5614, 0
  %v5784 = vsel %vm1211, %v5616, 0
  %v5787 = vsel %vm1211, %v5618, 0
  %v5790 = vsel %vm1211, %v5620, 0
  %v5793 = vsel %vm1211, %v5622, 0
  %v5796 = vsel %vm1211, %v5624, 0
  %v5799 = vsel %vm1211, %v5626, 0
  %v5802 = vsel %vm1211, %v5628, 0
  %v5805 = vsel %vm1211, %v5630, 0
  %v5808 = vsel %vm1211, %v5632, 0
  %v5811 = vsel %vm1211, %v5634, 0
  %v5814 = vsel %vm1211, %v5636, 0
  %v5817 = vsel %vm1211, %v5638, 0
  %v5820 = vsel %vm1211, %v5640, 0
  %v5823 = vsel %vm1211, %v5642, 0
  %v5826 = vsel %vm1211, %v5644, 0
  %v5829 = vsel %vm1211, %v5646, 0
  %v5832 = vsel %vm1211, %v5648, 0
  %v5835 = vsel %vm1211, %v5650, 0
  %v5838 = vsel %vm1211, %v5652, 0
  %v5841 = vsel %vm1211, %v5654, 0
  %v5844 = vsel %vm1211, %v5656, 0
  %v5847 = vsel %vm1211, %v5658, 0
  %v5850 = vsel %vm1211, %v5660, 0
  %v5853 = vsel %vm1211, %v5662, 0
  %v5856 = vsel %vm1211, %v5664, 0
  %5858 = vmatprep.subr.mxu0 0.0
  %5859 = vmatpush1.msra.mxu0 %v5680
  %5860 = vmatprep.subr.mxu0 0.0
  %5861 = vmatpush1.msra.mxu0 %v5679
  %5862 = vmatprep.subr.mxu0 0.0
  %5863 = vmatpush1.msra.mxu0 %v5678
  %5864 = vmatprep.subr.mxu0 0.0
  %5865 = vmatpush1.msra.mxu0 %v5677
  %5866 = vmatprep.subr.mxu0 0.0
  %5867 = vmatpush1.msra.mxu0 %v5676
  %5868 = vmatprep.subr.mxu0 0.0
  %5869 = vmatpush1.msra.mxu0 %v5675
  %5870 = vmatprep.subr.mxu0 0.0
  %5871 = vmatpush1.msra.mxu0 %v5674
  %5872 = vmatprep.subr.mxu0 0.0
  %5873 = vmatpush1.msra.mxu0 %v5673
  %5874 = vmatprep.subr.mxu0 0.0
  %5875 = vmatpush1.msra.mxu0 %v5672
  %5876 = vmatprep.subr.mxu0 0.0
  %5877 = vmatpush1.msra.mxu0 %v5671
  %5878 = vmatprep.subr.mxu0 0.0
  %5879 = vmatpush1.msra.mxu0 %v5670
  %5880 = vmatprep.subr.mxu0 0.0
  %5881 = vmatpush1.msra.mxu0 %v5669
  %5882 = vmatprep.subr.mxu0 0.0
  %5883 = vmatpush1.msra.mxu0 %v5668
  %5884 = vmatprep.subr.mxu0 0.0
  %5885 = vmatpush1.msra.mxu0 %v5667
  %5886 = vmatprep.subr.mxu0 0.0
  %5887 = vmatpush1.msra.mxu0 %v5666
  %5888 = vmatprep.subr.mxu0 0.0
  %5889 = vmatpush1.msra.mxu0 %v5665
  %5890 = vmatprep.subr.mxu0 0.0
  %5891 = vmatpush2.msra.mxu0 0.0
  %5892 = vmatprep.subr.mxu0 0.0
  %5893 = vmatpush2.msra.mxu0 0.0
  %5894 = vmatprep.subr.mxu0 0.0
  %5895 = vmatpush2.msra.mxu0 0.0
  %5896 = vmatprep.subr.mxu0 0.0
  %5897 = vmatpush2.msra.mxu0 0.0
  %5898 = vmatprep.subr.mxu0 0.0
  %5899 = vmatpush2.msra.mxu0 0.0
  %5900 = vmatprep.subr.mxu0 0.0
  %5901 = vmatpush2.msra.mxu0 0.0
  %5902 = vmatprep.subr.mxu0 0.0
  %5903 = vmatpush2.msra.mxu0 0.0
  %5904 = vmatprep.subr.mxu0 0.0
  %5905 = vmatpush2.msra.mxu0 0.0
  %5906 = vmatprep.subr.mxu0 0.0
  %5907 = vmatpush2.msra.mxu0 0.0
  %5908 = vmatprep.subr.mxu0 0.0
  %5909 = vmatpush2.msra.mxu0 0.0
  %5910 = vmatprep.subr.mxu0 0.0
  %5911 = vmatpush2.msra.mxu0 0.0
  %5912 = vmatprep.subr.mxu0 0.0
  %5913 = vmatpush2.msra.mxu0 0.0
  %5914 = vmatprep.subr.mxu0 0.0
  %5915 = vmatpush2.msra.mxu0 0.0
  %5916 = vmatprep.subr.mxu0 0.0
  %5917 = vmatpush2.msra.mxu0 0.0
  %5918 = vmatprep.subr.mxu0 0.0
  %5919 = vmatpush2.msra.mxu0 %v5682
  %5920 = vmatprep.subr.mxu0 0.0
  %5921 = vmatpush2.msra.mxu0 %v5681
  %5922 = vmatprep.mubr.f32.mxu0 %v5691
  %5923 = vmatmul.mubr.f32.gmra.mxu0 %v5553
  %v5924 = vpop.f32.mrf.mxu0
  %v5925 = vadd.f32 %v5688, %v5924
  %v5926 = vpop.f32.mrf.mxu0
  %5927 = vmatprep.mubr.f32.mxu0 %v5694
  %5928 = vmatmul.mubr.f32.gmra.mxu0 %v5555
  %v5929 = vpop.f32.mrf.mxu0
  %v5930 = vadd.f32 %v5688, %v5929
  %v5931 = vpop.f32.mrf.mxu0
  %5932 = vmatprep.mubr.f32.mxu0 %v5697
  %5933 = vmatmul.mubr.f32.gmra.mxu0 %v5557
  %v5934 = vpop.f32.mrf.mxu0
  %v5935 = vadd.f32 %v5688, %v5934
  %v5936 = vpop.f32.mrf.mxu0
  %5937 = vmatprep.mubr.f32.mxu0 %v5700
  %5938 = vmatmul.mubr.f32.gmra.mxu0 %v5559
  %v5939 = vpop.f32.mrf.mxu0
  %v5940 = vadd.f32 %v5688, %v5939
  %v5941 = vpop.f32.mrf.mxu0
  %5942 = vmatprep.mubr.f32.mxu0 %v5703
  %5943 = vmatmul.mubr.f32.gmra.mxu0 %v5561
  %v5944 = vpop.f32.mrf.mxu0
  %v5945 = vadd.f32 %v5688, %v5944
  %v5946 = vpop.f32.mrf.mxu0
  %5947 = vmatprep.mubr.f32.mxu0 %v5706
  %5948 = vmatmul.mubr.f32.gmra.mxu0 %v5563
  %v5949 = vpop.f32.mrf.mxu0
  %v5950 = vadd.f32 %v5688, %v5949
  %v5951 = vpop.f32.mrf.mxu0
  %5952 = vmatprep.mubr.f32.mxu0 %v5709
  %5953 = vmatmul.mubr.f32.gmra.mxu0 %v5565
  %v5954 = vpop.f32.mrf.mxu0
  %v5955 = vadd.f32 %v5688, %v5954
  %v5956 = vpop.f32.mrf.mxu0
  %5957 = vmatprep.mubr.f32.mxu0 %v5712
  %5958 = vmatmul.mubr.f32.gmra.mxu0 %v5567
  %v5959 = vpop.f32.mrf.mxu0
  %v5960 = vadd.f32 %v5688, %v5959
  %v5961 = vpop.f32.mrf.mxu0
  %5962 = vmatprep.mubr.f32.mxu0 %v5715
  %5963 = vmatmul.mubr.f32.gmra.mxu0 %v5569
  %v5964 = vpop.f32.mrf.mxu0
  %v5965 = vadd.f32 %v5688, %v5964
  %v5966 = vpop.f32.mrf.mxu0
  %5967 = vmatprep.mubr.f32.mxu0 %v5718
  %5968 = vmatmul.mubr.f32.gmra.mxu0 %v5571
  %v5969 = vpop.f32.mrf.mxu0
  %v5970 = vadd.f32 %v5688, %v5969
  %v5971 = vpop.f32.mrf.mxu0
  %5972 = vmatprep.mubr.f32.mxu0 %v5721
  %5973 = vmatmul.mubr.f32.gmra.mxu0 %v5573
  %v5974 = vpop.f32.mrf.mxu0
  %v5975 = vadd.f32 %v5688, %v5974
  %v5976 = vpop.f32.mrf.mxu0
  %5977 = vmatprep.mubr.f32.mxu0 %v5724
  %5978 = vmatmul.mubr.f32.gmra.mxu0 %v5575
  %v5979 = vpop.f32.mrf.mxu0
  %v5980 = vadd.f32 %v5688, %v5979
  %v5981 = vpop.f32.mrf.mxu0
  %5982 = vmatprep.mubr.f32.mxu0 %v5727
  %5983 = vmatmul.mubr.f32.gmra.mxu0 %v5577
  %v5984 = vpop.f32.mrf.mxu0
  %v5985 = vadd.f32 %v5688, %v5984
  %v5986 = vpop.f32.mrf.mxu0
  %5987 = vmatprep.mubr.f32.mxu0 %v5730
  %5988 = vmatmul.mubr.f32.gmra.mxu0 %v5579
  %v5989 = vpop.f32.mrf.mxu0
  %v5990 = vadd.f32 %v5688, %v5989
  %v5991 = vpop.f32.mrf.mxu0
  %5992 = vmatprep.mubr.f32.mxu0 %v5733
  %5993 = vmatmul.mubr.f32.gmra.mxu0 %v5581
  %v5994 = vpop.f32.mrf.mxu0
  %v5995 = vadd.f32 %v5688, %v5994
  %v5996 = vpop.f32.mrf.mxu0
  %5997 = vmatprep.mubr.f32.mxu0 %v5736
  %5998 = vmatmul.mubr.f32.gmra.mxu0 %v5583
  %v5999 = vpop.f32.mrf.mxu0
  %v6000 = vadd.f32 %v5688, %v5999
  %v6001 = vpop.f32.mrf.mxu0
  %6002 = vmatprep.mubr.f32.mxu0 %v5739
  %6003 = vmatmul.mubr.f32.gmra.mxu0 %v5585
  %v6004 = vpop.f32.mrf.mxu0
  %v6005 = vadd.f32 %v5688, %v6004
  %v6006 = vpop.f32.mrf.mxu0
  %6007 = vmatprep.mubr.f32.mxu0 %v5742
  %6008 = vmatmul.mubr.f32.gmra.mxu0 %v5587
  %v6009 = vpop.f32.mrf.mxu0
  %v6010 = vadd.f32 %v5688, %v6009
  %v6011 = vpop.f32.mrf.mxu0
  %6012 = vmatprep.mubr.f32.mxu0 %v5745
  %6013 = vmatmul.mubr.f32.gmra.mxu0 %v5589
  %v6014 = vpop.f32.mrf.mxu0
  %v6015 = vadd.f32 %v5688, %v6014
  %v6016 = vpop.f32.mrf.mxu0
  %6017 = vmatprep.mubr.f32.mxu0 %v5748
  %6018 = vmatmul.mubr.f32.gmra.mxu0 %v5591
  %v6019 = vpop.f32.mrf.mxu0
  %v6020 = vadd.f32 %v5688, %v6019
  %v6021 = vpop.f32.mrf.mxu0
  %6022 = vmatprep.mubr.f32.mxu0 %v5751
  %6023 = vmatmul.mubr.f32.gmra.mxu0 %v5593
  %v6024 = vpop.f32.mrf.mxu0
  %v6025 = vadd.f32 %v5688, %v6024
  %v6026 = vpop.f32.mrf.mxu0
  %6027 = vmatprep.mubr.f32.mxu0 %v5754
  %6028 = vmatmul.mubr.f32.gmra.mxu0 %v5595
  %v6029 = vpop.f32.mrf.mxu0
  %v6030 = vadd.f32 %v5688, %v6029
  %v6031 = vpop.f32.mrf.mxu0
  %6032 = vmatprep.mubr.f32.mxu0 %v5757
  %6033 = vmatmul.mubr.f32.gmra.mxu0 %v5597
  %v6034 = vpop.f32.mrf.mxu0
  %v6035 = vadd.f32 %v5688, %v6034
  %v6036 = vpop.f32.mrf.mxu0
  %6037 = vmatprep.mubr.f32.mxu0 %v5760
  %6038 = vmatmul.mubr.f32.gmra.mxu0 %v5599
  %v6039 = vpop.f32.mrf.mxu0
  %v6040 = vadd.f32 %v5688, %v6039
  %v6041 = vpop.f32.mrf.mxu0
  %6042 = vmatprep.mubr.f32.mxu0 %v5763
  %6043 = vmatmul.mubr.f32.gmra.mxu0 %v5601
  %v6044 = vpop.f32.mrf.mxu0
  %v6045 = vadd.f32 %v5688, %v6044
  %v6046 = vpop.f32.mrf.mxu0
  %6047 = vmatprep.mubr.f32.mxu0 %v5766
  %6048 = vmatmul.mubr.f32.gmra.mxu0 %v5603
  %v6049 = vpop.f32.mrf.mxu0
  %v6050 = vadd.f32 %v5688, %v6049
  %v6051 = vpop.f32.mrf.mxu0
  %6052 = vmatprep.mubr.f32.mxu0 %v5769
  %6053 = vmatmul.mubr.f32.gmra.mxu0 %v5605
  %v6054 = vpop.f32.mrf.mxu0
  %v6055 = vadd.f32 %v5688, %v6054
  %v6056 = vpop.f32.mrf.mxu0
  %6057 = vmatprep.mubr.f32.mxu0 %v5772
  %6058 = vmatmul.mubr.f32.gmra.mxu0 %v5607
  %v6059 = vpop.f32.mrf.mxu0
  %v6060 = vadd.f32 %v5688, %v6059
  %v6061 = vpop.f32.mrf.mxu0
  %6062 = vmatprep.mubr.f32.mxu0 %v5775
  %6063 = vmatmul.mubr.f32.gmra.mxu0 %v5609
  %v6064 = vpop.f32.mrf.mxu0
  %v6065 = vadd.f32 %v5688, %v6064
  %v6066 = vpop.f32.mrf.mxu0
  %6067 = vmatprep.mubr.f32.mxu0 %v5778
  %6068 = vmatmul.mubr.f32.gmra.mxu0 %v5611
  %v6069 = vpop.f32.mrf.mxu0
  %v6070 = vadd.f32 %v5688, %v6069
  %v6071 = vpop.f32.mrf.mxu0
  %6072 = vmatprep.mubr.f32.mxu0 %v5781
  %6073 = vmatmul.mubr.f32.gmra.mxu0 %v5613
  %v6074 = vpop.f32.mrf.mxu0
  %v6075 = vadd.f32 %v5688, %v6074
  %v6076 = vpop.f32.mrf.mxu0
  %6077 = vmatprep.mubr.f32.mxu0 %v5784
  %6078 = vmatmul.mubr.f32.gmra.mxu0 %v5615
  %v6079 = vpop.f32.mrf.mxu0
  %v6080 = vadd.f32 %v5688, %v6079
  %v6081 = vpop.f32.mrf.mxu0
  %6082 = vmatprep.mubr.f32.mxu0 %v5787
  %6083 = vmatmul.mubr.f32.gmra.mxu0 %v5617
  %v6084 = vpop.f32.mrf.mxu0
  %v6085 = vadd.f32 %v5688, %v6084
  %v6086 = vpop.f32.mrf.mxu0
  %6087 = vmatprep.mubr.f32.mxu0 %v5790
  %6088 = vmatmul.mubr.f32.gmra.mxu0 %v5619
  %v6089 = vpop.f32.mrf.mxu0
  %v6090 = vadd.f32 %v5688, %v6089
  %v6091 = vpop.f32.mrf.mxu0
  %6092 = vmatprep.mubr.f32.mxu0 %v5793
  %6093 = vmatmul.mubr.f32.gmra.mxu0 %v5621
  %v6094 = vpop.f32.mrf.mxu0
  %v6095 = vadd.f32 %v5688, %v6094
  %v6096 = vpop.f32.mrf.mxu0
  %6097 = vmatprep.mubr.f32.mxu0 %v5796
  %6098 = vmatmul.mubr.f32.gmra.mxu0 %v5623
  %v6099 = vpop.f32.mrf.mxu0
  %v6100 = vadd.f32 %v5688, %v6099
  %v6101 = vpop.f32.mrf.mxu0
  %6102 = vmatprep.mubr.f32.mxu0 %v5799
  %6103 = vmatmul.mubr.f32.gmra.mxu0 %v5625
  %v6104 = vpop.f32.mrf.mxu0
  %v6105 = vadd.f32 %v5688, %v6104
  %v6106 = vpop.f32.mrf.mxu0
  %6107 = vmatprep.mubr.f32.mxu0 %v5802
  %6108 = vmatmul.mubr.f32.gmra.mxu0 %v5627
  %v6109 = vpop.f32.mrf.mxu0
  %v6110 = vadd.f32 %v5688, %v6109
  %v6111 = vpop.f32.mrf.mxu0
  %6112 = vmatprep.mubr.f32.mxu0 %v5805
  %6113 = vmatmul.mubr.f32.gmra.mxu0 %v5629
  %v6114 = vpop.f32.mrf.mxu0
  %v6115 = vadd.f32 %v5688, %v6114
  %v6116 = vpop.f32.mrf.mxu0
  %6117 = vmatprep.mubr.f32.mxu0 %v5808
  %6118 = vmatmul.mubr.f32.gmra.mxu0 %v5631
  %v6119 = vpop.f32.mrf.mxu0
  %v6120 = vadd.f32 %v5688, %v6119
  %v6121 = vpop.f32.mrf.mxu0
  %6122 = vmatprep.mubr.f32.mxu0 %v5811
  %6123 = vmatmul.mubr.f32.gmra.mxu0 %v5633
  %v6124 = vpop.f32.mrf.mxu0
  %v6125 = vadd.f32 %v5688, %v6124
  %v6126 = vpop.f32.mrf.mxu0
  %6127 = vmatprep.mubr.f32.mxu0 %v5814
  %6128 = vmatmul.mubr.f32.gmra.mxu0 %v5635
  %v6129 = vpop.f32.mrf.mxu0
  %v6130 = vadd.f32 %v5688, %v6129
  %v6131 = vpop.f32.mrf.mxu0
  %6132 = vmatprep.mubr.f32.mxu0 %v5817
  %6133 = vmatmul.mubr.f32.gmra.mxu0 %v5637
  %v6134 = vpop.f32.mrf.mxu0
  %v6135 = vadd.f32 %v5688, %v6134
  %v6136 = vpop.f32.mrf.mxu0
  %6137 = vmatprep.mubr.f32.mxu0 %v5820
  %6138 = vmatmul.mubr.f32.gmra.mxu0 %v5639
  %v6139 = vpop.f32.mrf.mxu0
  %v6140 = vadd.f32 %v5688, %v6139
  %v6141 = vpop.f32.mrf.mxu0
  %6142 = vmatprep.mubr.f32.mxu0 %v5823
  %6143 = vmatmul.mubr.f32.gmra.mxu0 %v5641
  %v6144 = vpop.f32.mrf.mxu0
  %v6145 = vadd.f32 %v5688, %v6144
  %v6146 = vpop.f32.mrf.mxu0
  %6147 = vmatprep.mubr.f32.mxu0 %v5826
  %6148 = vmatmul.mubr.f32.gmra.mxu0 %v5643
  %v6149 = vpop.f32.mrf.mxu0
  %v6150 = vadd.f32 %v5688, %v6149
  %v6151 = vpop.f32.mrf.mxu0
  %6152 = vmatprep.mubr.f32.mxu0 %v5829
  %6153 = vmatmul.mubr.f32.gmra.mxu0 %v5645
  %v6154 = vpop.f32.mrf.mxu0
  %v6155 = vadd.f32 %v5688, %v6154
  %v6156 = vpop.f32.mrf.mxu0
  %6157 = vmatprep.mubr.f32.mxu0 %v5832
  %6158 = vmatmul.mubr.f32.gmra.mxu0 %v5647
  %v6159 = vpop.f32.mrf.mxu0
  %v6160 = vadd.f32 %v5688, %v6159
  %v6161 = vpop.f32.mrf.mxu0
  %6162 = vmatprep.mubr.f32.mxu0 %v5835
  %6163 = vmatmul.mubr.f32.gmra.mxu0 %v5649
  %v6164 = vpop.f32.mrf.mxu0
  %v6165 = vadd.f32 %v5688, %v6164
  %v6166 = vpop.f32.mrf.mxu0
  %6167 = vmatprep.mubr.f32.mxu0 %v5838
  %6168 = vmatmul.mubr.f32.gmra.mxu0 %v5651
  %v6169 = vpop.f32.mrf.mxu0
  %v6170 = vadd.f32 %v5688, %v6169
  %v6171 = vpop.f32.mrf.mxu0
  %6172 = vmatprep.mubr.f32.mxu0 %v5841
  %6173 = vmatmul.mubr.f32.gmra.mxu0 %v5653
  %v6174 = vpop.f32.mrf.mxu0
  %v6175 = vadd.f32 %v5688, %v6174
  %v6176 = vpop.f32.mrf.mxu0
  %6177 = vmatprep.mubr.f32.mxu0 %v5844
  %6178 = vmatmul.mubr.f32.gmra.mxu0 %v5655
  %v6179 = vpop.f32.mrf.mxu0
  %v6180 = vadd.f32 %v5688, %v6179
  %v6181 = vpop.f32.mrf.mxu0
  %6182 = vmatprep.mubr.f32.mxu0 %v5847
  %6183 = vmatmul.mubr.f32.gmra.mxu0 %v5657
  %v6184 = vpop.f32.mrf.mxu0
  %v6185 = vadd.f32 %v5688, %v6184
  %v6186 = vpop.f32.mrf.mxu0
  %6187 = vmatprep.mubr.f32.mxu0 %v5850
  %6188 = vmatmul.mubr.f32.gmra.mxu0 %v5659
  %v6189 = vpop.f32.mrf.mxu0
  %v6190 = vadd.f32 %v5688, %v6189
  %v6191 = vpop.f32.mrf.mxu0
  %6192 = vmatprep.mubr.f32.mxu0 %v5853
  %6193 = vmatmul.mubr.f32.gmra.mxu0 %v5661
  %v6194 = vpop.f32.mrf.mxu0
  %v6195 = vadd.f32 %v5688, %v6194
  %v6196 = vpop.f32.mrf.mxu0
  %6197 = vmatprep.mubr.f32.mxu0 %v5856
  %6198 = vmatmul.mubr.f32.gmra.mxu0 %v5663
  %v6199 = vpop.f32.mrf.mxu0
  %v6200 = vadd.f32 %v5688, %v6199
  %v6201 = vpop.f32.mrf.mxu0
  %6202 = vdwg.mxu0
  %v6203 = vmax.f32 %v5925, 0.0
  %v6204 = vmax.f32 %v5930, 0.0
  %v6205 = vmax.f32 %v5935, 0.0
  %v6206 = vmax.f32 %v5940, 0.0
  %v6207 = vmax.f32 %v5945, 0.0
  %v6208 = vmax.f32 %v5950, 0.0
  %v6209 = vmax.f32 %v5955, 0.0
  %v6210 = vmax.f32 %v5960, 0.0
  %v6211 = vmax.f32 %v5965, 0.0
  %v6212 = vmax.f32 %v5970, 0.0
  %v6213 = vmax.f32 %v5975, 0.0
  %v6214 = vmax.f32 %v5980, 0.0
  %v6215 = vmax.f32 %v5985, 0.0
  %v6216 = vmax.f32 %v5990, 0.0
  %v6217 = vmax.f32 %v5995, 0.0
  %v6218 = vmax.f32 %v6000, 0.0
  %v6219 = vmax.f32 %v6005, 0.0
  %v6220 = vmax.f32 %v6010, 0.0
  %v6221 = vmax.f32 %v6015, 0.0
  %v6222 = vmax.f32 %v6020, 0.0
  %v6223 = vmax.f32 %v6025, 0.0
  %v6224 = vmax.f32 %v6030, 0.0
  %v6225 = vmax.f32 %v6035, 0.0
  %v6226 = vmax.f32 %v6040, 0.0
  %v6227 = vmax.f32 %v6045, 0.0
  %v6228 = vmax.f32 %v6050, 0.0
  %v6229 = vmax.f32 %v6055, 0.0
  %v6230 = vmax.f32 %v6060, 0.0
  %v6231 = vmax.f32 %v6065, 0.0
  %v6232 = vmax.f32 %v6070, 0.0
  %v6233 = vmax.f32 %v6075, 0.0
  %v6234 = vmax.f32 %v6080, 0.0
  %v6235 = vmax.f32 %v6085, 0.0
  %v6236 = vmax.f32 %v6090, 0.0
  %v6237 = vmax.f32 %v6095, 0.0
  %v6238 = vmax.f32 %v6100, 0.0
  %v6239 = vmax.f32 %v6105, 0.0
  %v6240 = vmax.f32 %v6110, 0.0
  %v6241 = vmax.f32 %v6115, 0.0
  %v6242 = vmax.f32 %v6120, 0.0
  %v6243 = vmax.f32 %v6125, 0.0
  %v6244 = vmax.f32 %v6130, 0.0
  %v6245 = vmax.f32 %v6135, 0.0
  %v6246 = vmax.f32 %v6140, 0.0
  %v6247 = vmax.f32 %v6145, 0.0
  %v6248 = vmax.f32 %v6150, 0.0
  %v6249 = vmax.f32 %v6155, 0.0
  %v6250 = vmax.f32 %v6160, 0.0
  %v6251 = vmax.f32 %v6165, 0.0
  %v6252 = vmax.f32 %v6170, 0.0
  %v6253 = vmax.f32 %v6175, 0.0
  %v6254 = vmax.f32 %v6180, 0.0
  %v6255 = vmax.f32 %v6185, 0.0
  %v6256 = vmax.f32 %v6190, 0.0
  %v6257 = vmax.f32 %v6195, 0.0
  %v6258 = vmax.f32 %v6200, 0.0
  %v6259 = vmax.f32 %v6203, %v6205
  %v6260 = vmax.f32 %v6204, %v6206
  %v6261 = vmax.f32 %v6207, %v6209
  %v6262 = vmax.f32 %v6208, %v6210
  %v6263 = vmax.f32 %v6211, %v6213
  %v6264 = vmax.f32 %v6212, %v6214
  %v6265 = vmax.f32 %v6215, %v6217
  %v6266 = vmax.f32 %v6216, %v6218
  %v6267 = vmax.f32 %v6219, %v6221
  %v6268 = vmax.f32 %v6220, %v6222
  %v6269 = vmax.f32 %v6223, %v6225
  %v6270 = vmax.f32 %v6224, %v6226
  %v6271 = vmax.f32 %v6227, %v6229
  %v6272 = vmax.f32 %v6228, %v6230
  %v6273 = vmax.f32 %v6231, %v6233
  %v6274 = vmax.f32 %v6232, %v6234
  %v6275 = vmax.f32 %v6235, %v6237
  %v6276 = vmax.f32 %v6236, %v6238
  %v6277 = vmax.f32 %v6239, %v6241
  %v6278 = vmax.f32 %v6240, %v6242
  %v6279 = vmax.f32 %v6243, %v6245
  %v6280 = vmax.f32 %v6244, %v6246
  %v6281 = vmax.f32 %v6247, %v6249
  %v6282 = vmax.f32 %v6248, %v6250
  %v6283 = vmax.f32 %v6251, %v6253
  %v6284 = vmax.f32 %v6252, %v6254
  %v6285 = vmax.f32 %v6255, %v6257
  %v6286 = vmax.f32 %v6256, %v6258
  %vm6315 = vcmask 1046528
  %v6316 = vrot.slane %v6259, 1
  %v6317 = vrot.slane %v6260, 1
  %v6318 = vsel %vm6315, %v6316, %v6317
  %v6319 = vrot.slane %v6261, 1
  %v6320 = vrot.slane %v6262, 1
  %v6321 = vsel %vm6315, %v6319, %v6320
  %v6322 = vrot.slane %v6263, 1
  %v6323 = vrot.slane %v6264, 1
  %v6324 = vsel %vm6315, %v6322, %v6323
  %v6325 = vrot.slane %v6265, 1
  %v6326 = vrot.slane %v6266, 1
  %v6327 = vsel %vm6315, %v6325, %v6326
  %v6328 = vrot.slane %v6267, 1
  %v6329 = vrot.slane %v6268, 1
  %v6330 = vsel %vm6315, %v6328, %v6329
  %v6331 = vrot.slane %v6269, 1
  %v6332 = vrot.slane %v6270, 1
  %v6333 = vsel %vm6315, %v6331, %v6332
  %v6334 = vrot.slane %v6271, 1
  %v6335 = vrot.slane %v6272, 1
  %v6336 = vsel %vm6315, %v6334, %v6335
  %v6337 = vrot.slane %v6273, 1
  %v6338 = vrot.slane %v6274, 1
  %v6339 = vsel %vm6315, %v6337, %v6338
  %v6340 = vrot.slane %v6275, 1
  %v6341 = vrot.slane %v6276, 1
  %v6342 = vsel %vm6315, %v6340, %v6341
  %v6343 = vrot.slane %v6277, 1
  %v6344 = vrot.slane %v6278, 1
  %v6345 = vsel %vm6315, %v6343, %v6344
  %v6346 = vrot.slane %v6279, 1
  %v6347 = vrot.slane %v6280, 1
  %v6348 = vsel %vm6315, %v6346, %v6347
  %v6349 = vrot.slane %v6281, 1
  %v6350 = vrot.slane %v6282, 1
  %v6351 = vsel %vm6315, %v6349, %v6350
  %v6352 = vrot.slane %v6283, 1
  %v6353 = vrot.slane %v6284, 1
  %v6354 = vsel %vm6315, %v6352, %v6353
  %v6355 = vrot.slane %v6285, 1
  %v6356 = vrot.slane %v6286, 1
  %v6357 = vsel %vm6315, %v6355, %v6356
  %v6386 = vmax.f32 %v6259, %v6318
  %v6387 = vmax.f32 %v6260, %v6317
  %v6388 = vmax.f32 %v6261, %v6321
  %v6389 = vmax.f32 %v6262, %v6320
  %v6390 = vmax.f32 %v6263, %v6324
  %v6391 = vmax.f32 %v6264, %v6323
  %v6392 = vmax.f32 %v6265, %v6327
  %v6393 = vmax.f32 %v6266, %v6326
  %v6394 = vmax.f32 %v6267, %v6330
  %v6395 = vmax.f32 %v6268, %v6329
  %v6396 = vmax.f32 %v6269, %v6333
  %v6397 = vmax.f32 %v6270, %v6332
  %v6398 = vmax.f32 %v6271, %v6336
  %v6399 = vmax.f32 %v6272, %v6335
  %v6400 = vmax.f32 %v6273, %v6339
  %v6401 = vmax.f32 %v6274, %v6338
  %v6402 = vmax.f32 %v6275, %v6342
  %v6403 = vmax.f32 %v6276, %v6341
  %v6404 = vmax.f32 %v6277, %v6345
  %v6405 = vmax.f32 %v6278, %v6344
  %v6406 = vmax.f32 %v6279, %v6348
  %v6407 = vmax.f32 %v6280, %v6347
  %v6408 = vmax.f32 %v6281, %v6351
  %v6409 = vmax.f32 %v6282, %v6350
  %v6410 = vmax.f32 %v6283, %v6354
  %v6411 = vmax.f32 %v6284, %v6353
  %v6412 = vmax.f32 %v6285, %v6357
  %v6413 = vmax.f32 %v6286, %v6356
  %vm6414 = vcmask 261120
  %6415 = vst.msk [vmem:[%s6] sm:$0xff] %vm6414, %v6386
  %vm6416 = vcmask 260096
  %6417 = vst.msk [vmem:[%s6 + $0x8] sm:$0x7f] %vm6416, %v6387
  %6418 = vst.msk [vmem:[%s6 + $0x10] sm:$0xff] %vm6414, %v6388
  %6419 = vst.msk [vmem:[%s6 + $0x18] sm:$0x7f] %vm6416, %v6389
  %6420 = vst.msk [vmem:[%s6 + $0x20] sm:$0xff] %vm6414, %v6390
  %6421 = vst.msk [vmem:[%s6 + $0x28] sm:$0x7f] %vm6416, %v6391
  %6422 = vst.msk [vmem:[%s6 + $0x30] sm:$0xff] %vm6414, %v6392
  %6423 = vst.msk [vmem:[%s6 + $0x38] sm:$0x7f] %vm6416, %v6393
  %6424 = vst.msk [vmem:[%s6 + $0x40] sm:$0xff] %vm6414, %v6394
  %6425 = vst.msk [vmem:[%s6 + $0x48] sm:$0x7f] %vm6416, %v6395
  %6426 = vst.msk [vmem:[%s6 + $0x50] sm:$0xff] %vm6414, %v6396
  %6427 = vst.msk [vmem:[%s6 + $0x58] sm:$0x7f] %vm6416, %v6397
  %6428 = vst.msk [vmem:[%s6 + $0x60] sm:$0xff] %vm6414, %v6398
  %6429 = vst.msk [vmem:[%s6 + $0x68] sm:$0x7f] %vm6416, %v6399
  %6430 = vst.msk [vmem:[%s6 + $0x70] sm:$0xff] %vm6414, %v6400
  %6431 = vst.msk [vmem:[%s6 + $0x78] sm:$0x7f] %vm6416, %v6401
  %6432 = vst.msk [vmem:[%s6 + $0x80] sm:$0xff] %vm6414, %v6402
  %6433 = vst.msk [vmem:[%s6 + $0x88] sm:$0x7f] %vm6416, %v6403
  %6434 = vst.msk [vmem:[%s6 + $0x90] sm:$0xff] %vm6414, %v6404
  %6435 = vst.msk [vmem:[%s6 + $0x98] sm:$0x7f] %vm6416, %v6405
  %6436 = vst.msk [vmem:[%s6 + $0xa0] sm:$0xff] %vm6414, %v6406
  %6437 = vst.msk [vmem:[%s6 + $0xa8] sm:$0x7f] %vm6416, %v6407
  %6438 = vst.msk [vmem:[%s6 + $0xb0] sm:$0xff] %vm6414, %v6408
  %6439 = vst.msk [vmem:[%s6 + $0xb8] sm:$0x7f] %vm6416, %v6409
  %6440 = vst.msk [vmem:[%s6 + $0xc0] sm:$0xff] %vm6414, %v6410
  %6441 = vst.msk [vmem:[%s6 + $0xc8] sm:$0x7f] %vm6416, %v6411
  %6442 = vst.msk [vmem:[%s6 + $0xd0] sm:$0xff] %vm6414, %v6412
  %6443 = vst.msk [vmem:[%s6 + $0xd8] sm:$0x7f] %vm6416, %v6413
  // Predicated region
  $region22: #{cnn_forward.2} parent=0 // pred_check
    _
  $region23: #{cnn_forward.2} parent=0 // pred_check_branch
    %6445 = sbr.rel (0) target = $region25
  $region24: #{cnn_forward.2} parent=0 // pred_region
    _
  $region25: #{cnn_forward.2} parent=0 // pred_fallthru
    _
  // Predicated region
  $region26: #{cnn_forward.2} parent=0 // pred_check
    _
  $region27: #{cnn_forward.2} parent=0 // pred_check_branch
    %6447 = sbr.rel (0) target = $region29
  $region28: #{cnn_forward.2} parent=0 // pred_region
    _
  $region29: #{cnn_forward.2} parent=0 // pred_fallthru
    _
  // Predicated region
  $region30: #{cnn_forward.2} parent=0 // pred_check
    _
  $region31: #{cnn_forward.2} parent=0 // pred_check_branch
    %6449 = sbr.rel (0) target = $region33
  $region32: #{cnn_forward.2} parent=0 // pred_region
    _
  $region33: #{cnn_forward.2} parent=0 // pred_fallthru
    _
  // Predicated region
  $region34: #{cnn_forward.2} parent=0 // pred_check
    _
  $region35: #{cnn_forward.2} parent=0 // pred_check_branch
    %6451 = sbr.rel (0) target = $region37
  $region36: #{cnn_forward.2} parent=0 // pred_region
    _
  $region37: #{cnn_forward.2} parent=0 // pred_fallthru
    _

</llo_original>
